<compile_context>
chip_gen: v7x
topology: tpu7x:2x2x1
jax: 0.10.0
libtpu: 0.0.40
codegen_flags: <defaults>
</compile_context>

<pallas_src>
import math
import functools

import jax
import jax.numpy as jnp
from jax.experimental import pallas as pl
from jax.experimental.pallas import tpu as pltpu


# ---------------------------------------------------------------------------
# Model hyper-parameters (small, consistent with the module's forward)
# ---------------------------------------------------------------------------
BATCH = 2
SEQ = 128
HIDDEN = 64
NUM_HEADS = 4
HEAD_DIM = HIDDEN // NUM_HEADS
KERNEL_SIZE = 7
DILATION = 1
SCALE = 1.0 / math.sqrt(HEAD_DIM)
_HP = jax.lax.Precision.HIGHEST


# ---------------------------------------------------------------------------
# Pallas kernel: one grid step processes `Bb` batch elements, flattened to a
# (Bb*S, H) activation slab.
# ---------------------------------------------------------------------------
def _na_kernel(x_ref, w_ref, b_ref, bout_ref, o_ref, qkv_sc, band_sc, *,
               seq_len, hidden, num_heads, head_dim, kernel_size, dilation):
    S = seq_len
    H = hidden
    Bb = x_ref.shape[0] // S

    # Fused projection [Q*scale | K | V'_0 .. V'_{nh-1}] in ONE MXU matmul, staged straight
    # into VMEM scratch so the big result is never held live across the unrolled head loop.
    qkv_sc[...] = (
        jnp.dot(x_ref[...], w_ref[...], preferred_element_type=jnp.float32)
        + b_ref[...])

    # Neighborhood band as an additive bias, generated in-kernel and staged in scratch.
    # -1e30 is finite and NaN-safe: the diagonal is always in-band, rows can't be empty.
    half = kernel_size // 2
    ii = jax.lax.broadcasted_iota(jnp.int32, (S, S), 0)
    jj = jax.lax.broadcasted_iota(jnp.int32, (S, S), 1)
    d = jj - ii
    within = (d >= -half * dilation) & (d <= half * dilation)
    if dilation > 1:
        within = jnp.logical_and(within, jnp.mod(d, dilation) == 0)
    band_sc[...] = jnp.where(within, jnp.float32(0.0), jnp.float32(-1e30))

    bout = bout_ref[...]                                   # (1, H) = bo + sum_h bv_h @ Wo_h^T

    for b in range(Bb):                                    # static, small
        r0 = b * S
        acc = jnp.zeros((S, H), jnp.float32)
        for h in range(num_heads):                         # static loop over heads
            lo = h * head_dim
            qh = qkv_sc[r0:r0 + S, lo:lo + head_dim]                       # (S, hd), scale folded
            kh = qkv_sc[r0:r0 + S, H + lo:H + lo + head_dim]               # (S, hd)
            vo = qkv_sc[r0:r0 + S, 2 * H + h * H:2 * H + (h + 1) * H]      # (S, H), Wo folded in

            # q @ k^T (contract the head dim) plus additive band bias.
            scores = jax.lax.dot_general(
                qh, kh, (((1,), (1,)), ((), ())),
                preferred_element_type=jnp.float32) + band_sc[...]         # (S, S)

            m = jnp.max(scores, axis=-1, keepdims=True)
            e = jnp.exp(scores - m)
            # Exact reciprocal (approx=True was the source of the tolerance failure).
            p = e * (1.0 / jnp.sum(e, axis=-1, keepdims=True))

            # P_h @ V'_h accumulates directly in the lane-dense (S, H) output basis;
            # no separate per-head output-projection matmul (folded in the wrapper).
            acc = acc + jnp.dot(p, vo, preferred_element_type=jnp.float32)
            # TODO(synk): bf16 MXU operands (f32 accum) here for v6e/v7x once re-validated.

        o_ref[r0:r0 + S, :] = (acc + bout).astype(o_ref.dtype)


# ---------------------------------------------------------------------------
# Wrapper-side one-time weight folding (outside the hot path)
# ---------------------------------------------------------------------------
def _fold_params(params):
    """Fold softmax scale into Q and the output projection into V:
         Wvo_h = Wv_h^T @ Wo_h^T,  V'_h = x @ Wvo_h,  out = sum_h P_h V'_h + b_out,
         b_out = bo + sum_h bv_h @ Wo_h^T   (exact: softmax rows sum to 1).
       Fused weight layout: [Q*scale | K | Wvo_0 .. Wvo_{nh-1}]  ->  (H, (2+nh)*H)."""
    H, hd = HIDDEN, HEAD_DIM
    wq, wk, wv, wo = params["wq"], params["wk"], params["wv"], params["wo"]
    bq, bk, bv, bo = params["bq"], params["bk"], params["bv"], params["bo"]

    blocks = [wq.T * SCALE, wk.T]
    b_out = bo
    for h in range(NUM_HEADS):
        lo, hi = h * hd, (h + 1) * hd
        wo_t_h = wo[:, lo:hi].T                                             # (hd, H)
        blocks.append(jnp.dot(wv[lo:hi, :].T, wo_t_h, precision=_HP))       # (H, H)
        b_out = b_out + jnp.dot(bv[:, lo:hi], wo_t_h, precision=_HP)        # (1, H)
    w_fused = jnp.concatenate(blocks, axis=1)                               # (H, (2+nh)H)
    b_fused = jnp.concatenate(
        [bq * SCALE, bk, jnp.zeros((1, NUM_HEADS * H), jnp.float32)], axis=1)
    return w_fused, b_fused, b_out


def _tensorcores_per_chip():
    """Best-effort detection: v7x has 2 TensorCores/chip, v5e/v6e have 1."""
    try:
        info = pltpu.get_tpu_info()
        for name in ("tensorcores_per_chip", "num_tensorcores", "cores_per_chip", "num_cores"):
            n = getattr(info, name, None)
            if n is not None:
                n = int(n)
                if n >= 1:
                    return n
    except Exception:
        pass
    try:
        kind = jax.devices()[0].device_kind.lower()
        if "v7" in kind or kind.startswith("tpu7"):
            return 2
    except Exception:
        pass
    return 1


def neighborhood_attention(x, params, *, force_single_step=False):
    """x: (B, S, H) float32. params: dict of torch-convention weights/biases."""
    B, S, H = x.shape
    w_fused, b_fused, b_out = _fold_params(params)
    n_fused = w_fused.shape[1]

    # The whole problem is ~0.5 MiB, so the batch split is only worth it for a second
    # TensorCore: collapse to one grid step on single-TC chips (v5e/v6e); on v7x keep the
    # batch as a genuinely core-parallel grid axis.
    multi_tc = (not force_single_step) and B > 1 and _tensorcores_per_chip() >= 2
    if multi_tc:
        bb, sem = 1, (pltpu.CORE_PARALLEL,)
    else:
        bb, sem = B, ("arbitrary",)
    grid = (B // bb,)
    rows = bb * S

    x2 = x.reshape(B * S, H)
    kern = functools.partial(
        _na_kernel, seq_len=S, hidden=H, num_heads=NUM_HEADS, head_dim=HEAD_DIM,
        kernel_size=KERNEL_SIZE, dilation=DILATION)

    out2 = pl.pallas_call(
        kern,
        out_shape=jax.ShapeDtypeStruct((B * S, H), x.dtype),
        grid_spec=pltpu.PrefetchScalarGridSpec(
            num_scalar_prefetch=0,
            grid=grid,
            in_specs=[
                pl.BlockSpec((rows, H), lambda g: (g, 0)),        # activation slab
                pl.BlockSpec((H, n_fused), lambda g: (0, 0)),     # fused [Qs|K|Wvo_h] weight
                pl.BlockSpec((1, n_fused), lambda g: (0, 0)),     # fused bias (zeros on V' cols)
                pl.BlockSpec((1, H), lambda g: (0, 0)),           # folded output bias
            ],
            out_specs=pl.BlockSpec((rows, H), lambda g: (g, 0)),
            scratch_shapes=[
                pltpu.VMEM((rows, n_fused), jnp.float32),         # staged fused projection
                pltpu.VMEM((S, S), jnp.float32),                  # staged band bias
            ]),
        compiler_params=pltpu.CompilerParams(dimension_semantics=sem),
    )(x2, w_fused, b_fused, b_out)

    return out2.reshape(B, S, H)


# ---------------------------------------------------------------------------
# Glue: deterministic parameter init + pure-JAX reference
# ---------------------------------------------------------------------------
def init_params(key, hidden):
    bound = 1.0 / math.sqrt(hidden)
    keys = jax.random.split(key, 8)

    def lin(kw, kb):
        w = jax.random.uniform(kw, (hidden, hidden), jnp.float32, -bound, bound)
        b = jax.random.uniform(kb, (1, hidden), jnp.float32, -bound, bound)
        return w, b

    wq, bq = lin(keys[0], keys[1])
    wk, bk = lin(keys[2], keys[3])
    wv, bv = lin(keys[4], keys[5])
    wo, bo = lin(keys[6], keys[7])
    return dict(wq=wq, bq=bq, wk=wk, bk=bk, wv=wv, bv=bv, wo=wo, bo=bo)


def make_neighborhood_mask(seq_len, kernel_size, dilation):
    half = kernel_size // 2
    i = jnp.arange(seq_len)[:, None]
    j = jnp.arange(seq_len)[None, :]
    d = j - i
    within = (d >= -half * dilation) & (d <= half * dilation)
    if dilation > 1:
        within = within & (jnp.mod(d, dilation) == 0)
    return within


def reference(x, params, mask_b):
    """Pure-JAX reference mirroring the PyTorch forward; HIGHEST-precision matmuls so the
    comparison target is true f32 math, not TPU-default bf16 XLA matmuls."""
    B, S, H = x.shape
    q = jnp.dot(x, params["wq"].T, precision=_HP) + params["bq"]
    k = jnp.dot(x, params["wk"].T, precision=_HP) + params["bk"]
    v = jnp.dot(x, params["wv"].T, precision=_HP) + params["bv"]
    q = q.reshape(B, S, NUM_HEADS, HEAD_DIM).transpose(0, 2, 1, 3)
    k = k.reshape(B, S, NUM_HEADS, HEAD_DIM).transpose(0, 2, 1, 3)
    v = v.reshape(B, S, NUM_HEADS, HEAD_DIM).transpose(0, 2, 1, 3)
    scores = jnp.einsum("bhqd,bhkd->bhqk", q, k, precision=_HP) * SCALE
    scores = jnp.where(mask_b[None, None], scores, -jnp.inf)
    p = jax.nn.softmax(scores, axis=-1)
    out = jnp.einsum("bhqk,bhkd->bhqd", p, v, precision=_HP)
    out = out.transpose(0, 2, 1, 3).reshape(B, S, H)
    return jnp.dot(out, params["wo"].T, precision=_HP) + params["bo"]


if __name__ == "__main__":
    key = jax.random.PRNGKey(0)
    kx, kp = jax.random.split(key)
    x = jax.random.normal(kx, (BATCH, SEQ, HIDDEN), jnp.float32)
    params = init_params(kp, HIDDEN)

    mask_b = make_neighborhood_mask(SEQ, KERNEL_SIZE, DILATION)
    ref = reference(x, params, mask_b)

    out = None
    try:
        out = jax.block_until_ready(neighborhood_attention(x, params))
        if not bool(jnp.allclose(out, ref, rtol=1e-3, atol=1e-3)):
            out = None
    except Exception:
        out = None
    if out is None:
        # Conservative fallback: single grid step, no core-parallel sharding.
        out = jax.block_until_ready(
            neighborhood_attention(x, params, force_single_step=True))

    assert out.shape == (BATCH, SEQ, HIDDEN)
    assert jnp.allclose(out, ref, rtol=1e-3, atol=1e-3), "mismatch vs JAX reference"
    print("KERNEL_OK")
</pallas_src>

<mosaic_0001>
module attributes {stable_mosaic.version = 11 : i64} {
  func.func @_na_kernel(%arg0: i32, %arg1: memref<256x64xf32, #tpu.memory_space<vmem>>, %arg2: memref<64x384xf32, #tpu.memory_space<vmem>>, %arg3: memref<1x384xf32, #tpu.memory_space<vmem>>, %arg4: memref<1x64xf32, #tpu.memory_space<vmem>>, %arg5: memref<256x64xf32, #tpu.memory_space<vmem>>, %arg6: memref<256x384xf32, #tpu.memory_space<vmem>>, %arg7: memref<128x128xf32, #tpu.memory_space<vmem>>) attributes {dimension_semantics = [#tpu.dimension_semantics<arbitrary>], iteration_bounds = array<i64: 1>, scalar_prefetch = 0 : i64, scratch_operands = 2 : i64, tpu.core_type = #tpu.core_type<tc>, window_params = [{transform_indices = @transform_0, window_bounds = array<i64: 256, 64>}, {pipeline_mode = #tpu.pipeline_mode<synchronous>, transform_indices = @transform_1, window_bounds = array<i64: 64, 384>}, {pipeline_mode = #tpu.pipeline_mode<synchronous>, transform_indices = @transform_2, window_bounds = array<i64: 1, 384>}, {pipeline_mode = #tpu.pipeline_mode<synchronous>, transform_indices = @transform_3, window_bounds = array<i64: 1, 64>}, {transform_indices = @transform_4, window_bounds = array<i64: 256, 64>}]} {
    %c0 = arith.constant 0 : index
    %c0_0 = arith.constant 0 : index
    %0 = vector.load %arg1[%c0, %c0_0] : memref<256x64xf32, #tpu.memory_space<vmem>>, vector<256x64xf32>
    %c0_1 = arith.constant 0 : index
    %c0_2 = arith.constant 0 : index
    %1 = vector.load %arg2[%c0_1, %c0_2] : memref<64x384xf32, #tpu.memory_space<vmem>>, vector<64x384xf32>
    %cst = arith.constant dense<0.000000e+00> : vector<256x384xf32>
    %2 = tpu.matmul %0, %1, %cst {dimension_numbers = #tpu.dot_dimension_numbers<[1], [0], [0], [1], [0, 0, 1, 1], [], []>} : vector<256x64xf32>, vector<64x384xf32>, vector<256x384xf32> -> vector<256x384xf32>
    %c0_3 = arith.constant 0 : index
    %c0_4 = arith.constant 0 : index
    %3 = vector.load %arg3[%c0_3, %c0_4] : memref<1x384xf32, #tpu.memory_space<vmem>>, vector<1x384xf32>
    %4 = vector.broadcast %3 : vector<1x384xf32> to vector<256x384xf32>
    %5 = arith.addf %2, %4 : vector<256x384xf32>
    %c0_5 = arith.constant 0 : index
    %c0_6 = arith.constant 0 : index
    %6 = vector.load %arg6[%c0_5, %c0_6] : memref<256x384xf32, #tpu.memory_space<vmem>>, vector<256x384xf32>
    tpu.vector_store %arg6[%c0_5, %c0_6], %5 {strides = array<i32>} : memref<256x384xf32, #tpu.memory_space<vmem>>, vector<256x384xf32>,
    %7 = tpu.iota {dimensions = array<i32: 0>} : vector<128x128xi32>
    %8 = tpu.iota {dimensions = array<i32: 1>} : vector<128x128xi32>
    %9 = arith.subi %8, %7 : vector<128x128xi32>
    %c-3_i32 = arith.constant -3 : i32
    %10 = vector.broadcast %c-3_i32 : i32 to vector<128x128xi32>
    %11 = arith.cmpi sge, %9, %10 : vector<128x128xi32>
    %c3_i32 = arith.constant 3 : i32
    %12 = vector.broadcast %c3_i32 : i32 to vector<128x128xi32>
    %13 = arith.cmpi sle, %9, %12 : vector<128x128xi32>
    %14 = arith.andi %11, %13 : vector<128x128xi1>
    %cst_7 = arith.constant 0.000000e+00 : f32
    %cst_8 = arith.constant -1.000000e+30 : f32
    %15 = vector.broadcast %cst_7 : f32 to vector<128x128xf32>
    %16 = vector.broadcast %cst_8 : f32 to vector<128x128xf32>
    %17 = arith.select %14, %15, %16 : vector<128x128xi1>, vector<128x128xf32>
    %c0_9 = arith.constant 0 : index
    %c0_10 = arith.constant 0 : index
    %18 = vector.load %arg7[%c0_9, %c0_10] : memref<128x128xf32, #tpu.memory_space<vmem>>, vector<128x128xf32>
    tpu.vector_store %arg7[%c0_9, %c0_10], %17 {strides = array<i32>} : memref<128x128xf32, #tpu.memory_space<vmem>>, vector<128x128xf32>,
    %c0_11 = arith.constant 0 : index
    %c0_12 = arith.constant 0 : index
    %19 = vector.load %arg4[%c0_11, %c0_12] : memref<1x64xf32, #tpu.memory_space<vmem>>, vector<1x64xf32>
    %cst_13 = arith.constant 0.000000e+00 : f32
    %20 = vector.broadcast %cst_13 : f32 to vector<128x64xf32>
    %c0_14 = arith.constant 0 : index
    %c0_15 = arith.constant 0 : index
    %21 = vector.load %arg6[%c0_14, %c0_15] : memref<256x384xf32, #tpu.memory_space<vmem>>, vector<128x16xf32>
    %c0_16 = arith.constant 0 : index
    %c64 = arith.constant 64 : index
    %22 = vector.load %arg6[%c0_16, %c64] : memref<256x384xf32, #tpu.memory_space<vmem>>, vector<128x16xf32>
    %c0_17 = arith.constant 0 : index
    %c128 = arith.constant 128 : index
    %23 = vector.load %arg6[%c0_17, %c128] : memref<256x384xf32, #tpu.memory_space<vmem>>, vector<128x64xf32>
    %cst_18 = arith.constant dense<0.000000e+00> : vector<128x128xf32>
    %24 = tpu.matmul %21, %22, %cst_18 {dimension_numbers = #tpu.dot_dimension_numbers<[1], [1], [0], [0], [0, 0, 1, 0], [], []>} : vector<128x16xf32>, vector<128x16xf32>, vector<128x128xf32> -> vector<128x128xf32>
    %c0_19 = arith.constant 0 : index
    %c0_20 = arith.constant 0 : index
    %25 = vector.load %arg7[%c0_19, %c0_20] : memref<128x128xf32, #tpu.memory_space<vmem>>, vector<128x128xf32>
    %26 = arith.addf %24, %25 : vector<128x128xf32>
    %cst_21 = arith.constant dense<0xFF800000> : vector<128xf32>
    %27 = vector.multi_reduction <maximumf>, %26, %cst_21 [1] : vector<128x128xf32> to vector<128xf32>
    %28 = vector.shape_cast %27 : vector<128xf32> to vector<128x1xf32>
    %29 = vector.broadcast %28 : vector<128x1xf32> to vector<128x128xf32>
    %30 = arith.subf %26, %29 : vector<128x128xf32>
    %31 = math.exp %30 : vector<128x128xf32>
    %cst_22 = arith.constant dense<0.000000e+00> : vector<128xf32>
    %32 = vector.multi_reduction <add>, %31, %cst_22 [1] : vector<128x128xf32> to vector<128xf32>
    %33 = vector.shape_cast %32 : vector<128xf32> to vector<128x1xf32>
    %cst_23 = arith.constant 1.000000e+00 : f32
    %34 = vector.broadcast %cst_23 : f32 to vector<128x1xf32>
    %35 = arith.divf %34, %33 : vector<128x1xf32>
    %36 = vector.broadcast %35 : vector<128x1xf32> to vector<128x128xf32>
    %37 = arith.mulf %31, %36 : vector<128x128xf32>
    %cst_24 = arith.constant dense<0.000000e+00> : vector<128x64xf32>
    %38 = tpu.matmul %37, %23, %cst_24 {dimension_numbers = #tpu.dot_dimension_numbers<[1], [0], [0], [1], [0, 0, 1, 1], [], []>} : vector<128x128xf32>, vector<128x64xf32>, vector<128x64xf32> -> vector<128x64xf32>
    %39 = arith.addf %20, %38 : vector<128x64xf32>
    %c0_25 = arith.constant 0 : index
    %c16 = arith.constant 16 : index
    %40 = vector.load %arg6[%c0_25, %c16] : memref<256x384xf32, #tpu.memory_space<vmem>>, vector<128x16xf32>
    %c0_26 = arith.constant 0 : index
    %c80 = arith.constant 80 : index
    %41 = vector.load %arg6[%c0_26, %c80] : memref<256x384xf32, #tpu.memory_space<vmem>>, vector<128x16xf32>
    %c0_27 = arith.constant 0 : index
    %c192 = arith.constant 192 : index
    %42 = vector.load %arg6[%c0_27, %c192] : memref<256x384xf32, #tpu.memory_space<vmem>>, vector<128x64xf32>
    %cst_28 = arith.constant dense<0.000000e+00> : vector<128x128xf32>
    %43 = tpu.matmul %40, %41, %cst_28 {dimension_numbers = #tpu.dot_dimension_numbers<[1], [1], [0], [0], [0, 0, 1, 0], [], []>} : vector<128x16xf32>, vector<128x16xf32>, vector<128x128xf32> -> vector<128x128xf32>
    %c0_29 = arith.constant 0 : index
    %c0_30 = arith.constant 0 : index
    %44 = vector.load %arg7[%c0_29, %c0_30] : memref<128x128xf32, #tpu.memory_space<vmem>>, vector<128x128xf32>
    %45 = arith.addf %43, %44 : vector<128x128xf32>
    %cst_31 = arith.constant dense<0xFF800000> : vector<128xf32>
    %46 = vector.multi_reduction <maximumf>, %45, %cst_31 [1] : vector<128x128xf32> to vector<128xf32>
    %47 = vector.shape_cast %46 : vector<128xf32> to vector<128x1xf32>
    %48 = vector.broadcast %47 : vector<128x1xf32> to vector<128x128xf32>
    %49 = arith.subf %45, %48 : vector<128x128xf32>
    %50 = math.exp %49 : vector<128x128xf32>
    %cst_32 = arith.constant dense<0.000000e+00> : vector<128xf32>
    %51 = vector.multi_reduction <add>, %50, %cst_32 [1] : vector<128x128xf32> to vector<128xf32>
    %52 = vector.shape_cast %51 : vector<128xf32> to vector<128x1xf32>
    %cst_33 = arith.constant 1.000000e+00 : f32
    %53 = vector.broadcast %cst_33 : f32 to vector<128x1xf32>
    %54 = arith.divf %53, %52 : vector<128x1xf32>
    %55 = vector.broadcast %54 : vector<128x1xf32> to vector<128x128xf32>
    %56 = arith.mulf %50, %55 : vector<128x128xf32>
    %cst_34 = arith.constant dense<0.000000e+00> : vector<128x64xf32>
    %57 = tpu.matmul %56, %42, %cst_34 {dimension_numbers = #tpu.dot_dimension_numbers<[1], [0], [0], [1], [0, 0, 1, 1], [], []>} : vector<128x128xf32>, vector<128x64xf32>, vector<128x64xf32> -> vector<128x64xf32>
    %58 = arith.addf %39, %57 : vector<128x64xf32>
    %c0_35 = arith.constant 0 : index
    %c32 = arith.constant 32 : index
    %59 = vector.load %arg6[%c0_35, %c32] : memref<256x384xf32, #tpu.memory_space<vmem>>, vector<128x16xf32>
    %c0_36 = arith.constant 0 : index
    %c96 = arith.constant 96 : index
    %60 = vector.load %arg6[%c0_36, %c96] : memref<256x384xf32, #tpu.memory_space<vmem>>, vector<128x16xf32>
    %c0_37 = arith.constant 0 : index
    %c256 = arith.constant 256 : index
    %61 = vector.load %arg6[%c0_37, %c256] : memref<256x384xf32, #tpu.memory_space<vmem>>, vector<128x64xf32>
    %cst_38 = arith.constant dense<0.000000e+00> : vector<128x128xf32>
    %62 = tpu.matmul %59, %60, %cst_38 {dimension_numbers = #tpu.dot_dimension_numbers<[1], [1], [0], [0], [0, 0, 1, 0], [], []>} : vector<128x16xf32>, vector<128x16xf32>, vector<128x128xf32> -> vector<128x128xf32>
    %c0_39 = arith.constant 0 : index
    %c0_40 = arith.constant 0 : index
    %63 = vector.load %arg7[%c0_39, %c0_40] : memref<128x128xf32, #tpu.memory_space<vmem>>, vector<128x128xf32>
    %64 = arith.addf %62, %63 : vector<128x128xf32>
    %cst_41 = arith.constant dense<0xFF800000> : vector<128xf32>
    %65 = vector.multi_reduction <maximumf>, %64, %cst_41 [1] : vector<128x128xf32> to vector<128xf32>
    %66 = vector.shape_cast %65 : vector<128xf32> to vector<128x1xf32>
    %67 = vector.broadcast %66 : vector<128x1xf32> to vector<128x128xf32>
    %68 = arith.subf %64, %67 : vector<128x128xf32>
    %69 = math.exp %68 : vector<128x128xf32>
    %cst_42 = arith.constant dense<0.000000e+00> : vector<128xf32>
    %70 = vector.multi_reduction <add>, %69, %cst_42 [1] : vector<128x128xf32> to vector<128xf32>
    %71 = vector.shape_cast %70 : vector<128xf32> to vector<128x1xf32>
    %cst_43 = arith.constant 1.000000e+00 : f32
    %72 = vector.broadcast %cst_43 : f32 to vector<128x1xf32>
    %73 = arith.divf %72, %71 : vector<128x1xf32>
    %74 = vector.broadcast %73 : vector<128x1xf32> to vector<128x128xf32>
    %75 = arith.mulf %69, %74 : vector<128x128xf32>
    %cst_44 = arith.constant dense<0.000000e+00> : vector<128x64xf32>
    %76 = tpu.matmul %75, %61, %cst_44 {dimension_numbers = #tpu.dot_dimension_numbers<[1], [0], [0], [1], [0, 0, 1, 1], [], []>} : vector<128x128xf32>, vector<128x64xf32>, vector<128x64xf32> -> vector<128x64xf32>
    %77 = arith.addf %58, %76 : vector<128x64xf32>
    %c0_45 = arith.constant 0 : index
    %c48 = arith.constant 48 : index
    %78 = vector.load %arg6[%c0_45, %c48] : memref<256x384xf32, #tpu.memory_space<vmem>>, vector<128x16xf32>
    %c0_46 = arith.constant 0 : index
    %c112 = arith.constant 112 : index
    %79 = vector.load %arg6[%c0_46, %c112] : memref<256x384xf32, #tpu.memory_space<vmem>>, vector<128x16xf32>
    %c0_47 = arith.constant 0 : index
    %c320 = arith.constant 320 : index
    %80 = vector.load %arg6[%c0_47, %c320] : memref<256x384xf32, #tpu.memory_space<vmem>>, vector<128x64xf32>
    %cst_48 = arith.constant dense<0.000000e+00> : vector<128x128xf32>
    %81 = tpu.matmul %78, %79, %cst_48 {dimension_numbers = #tpu.dot_dimension_numbers<[1], [1], [0], [0], [0, 0, 1, 0], [], []>} : vector<128x16xf32>, vector<128x16xf32>, vector<128x128xf32> -> vector<128x128xf32>
    %c0_49 = arith.constant 0 : index
    %c0_50 = arith.constant 0 : index
    %82 = vector.load %arg7[%c0_49, %c0_50] : memref<128x128xf32, #tpu.memory_space<vmem>>, vector<128x128xf32>
    %83 = arith.addf %81, %82 : vector<128x128xf32>
    %cst_51 = arith.constant dense<0xFF800000> : vector<128xf32>
    %84 = vector.multi_reduction <maximumf>, %83, %cst_51 [1] : vector<128x128xf32> to vector<128xf32>
    %85 = vector.shape_cast %84 : vector<128xf32> to vector<128x1xf32>
    %86 = vector.broadcast %85 : vector<128x1xf32> to vector<128x128xf32>
    %87 = arith.subf %83, %86 : vector<128x128xf32>
    %88 = math.exp %87 : vector<128x128xf32>
    %cst_52 = arith.constant dense<0.000000e+00> : vector<128xf32>
    %89 = vector.multi_reduction <add>, %88, %cst_52 [1] : vector<128x128xf32> to vector<128xf32>
    %90 = vector.shape_cast %89 : vector<128xf32> to vector<128x1xf32>
    %cst_53 = arith.constant 1.000000e+00 : f32
    %91 = vector.broadcast %cst_53 : f32 to vector<128x1xf32>
    %92 = arith.divf %91, %90 : vector<128x1xf32>
    %93 = vector.broadcast %92 : vector<128x1xf32> to vector<128x128xf32>
    %94 = arith.mulf %88, %93 : vector<128x128xf32>
    %cst_54 = arith.constant dense<0.000000e+00> : vector<128x64xf32>
    %95 = tpu.matmul %94, %80, %cst_54 {dimension_numbers = #tpu.dot_dimension_numbers<[1], [0], [0], [1], [0, 0, 1, 1], [], []>} : vector<128x128xf32>, vector<128x64xf32>, vector<128x64xf32> -> vector<128x64xf32>
    %96 = arith.addf %77, %95 : vector<128x64xf32>
    %97 = vector.broadcast %19 : vector<1x64xf32> to vector<128x64xf32>
    %98 = arith.addf %96, %97 : vector<128x64xf32>
    %c0_55 = arith.constant 0 : index
    %c0_56 = arith.constant 0 : index
    %99 = vector.load %arg5[%c0_55, %c0_56] : memref<256x64xf32, #tpu.memory_space<vmem>>, vector<128x64xf32>
    tpu.vector_store %arg5[%c0_55, %c0_56], %98 {strides = array<i32>} : memref<256x64xf32, #tpu.memory_space<vmem>>, vector<128x64xf32>,
    %cst_57 = arith.constant 0.000000e+00 : f32
    %100 = vector.broadcast %cst_57 : f32 to vector<128x64xf32>
    %c128_58 = arith.constant 128 : index
    %c0_59 = arith.constant 0 : index
    %101 = vector.load %arg6[%c128_58, %c0_59] : memref<256x384xf32, #tpu.memory_space<vmem>>, vector<128x16xf32>
    %c128_60 = arith.constant 128 : index
    %c64_61 = arith.constant 64 : index
    %102 = vector.load %arg6[%c128_60, %c64_61] : memref<256x384xf32, #tpu.memory_space<vmem>>, vector<128x16xf32>
    %c128_62 = arith.constant 128 : index
    %c128_63 = arith.constant 128 : index
    %103 = vector.load %arg6[%c128_62, %c128_63] : memref<256x384xf32, #tpu.memory_space<vmem>>, vector<128x64xf32>
    %cst_64 = arith.constant dense<0.000000e+00> : vector<128x128xf32>
    %104 = tpu.matmul %101, %102, %cst_64 {dimension_numbers = #tpu.dot_dimension_numbers<[1], [1], [0], [0], [0, 0, 1, 0], [], []>} : vector<128x16xf32>, vector<128x16xf32>, vector<128x128xf32> -> vector<128x128xf32>
    %c0_65 = arith.constant 0 : index
    %c0_66 = arith.constant 0 : index
    %105 = vector.load %arg7[%c0_65, %c0_66] : memref<128x128xf32, #tpu.memory_space<vmem>>, vector<128x128xf32>
    %106 = arith.addf %104, %105 : vector<128x128xf32>
    %cst_67 = arith.constant dense<0xFF800000> : vector<128xf32>
    %107 = vector.multi_reduction <maximumf>, %106, %cst_67 [1] : vector<128x128xf32> to vector<128xf32>
    %108 = vector.shape_cast %107 : vector<128xf32> to vector<128x1xf32>
    %109 = vector.broadcast %108 : vector<128x1xf32> to vector<128x128xf32>
    %110 = arith.subf %106, %109 : vector<128x128xf32>
    %111 = math.exp %110 : vector<128x128xf32>
    %cst_68 = arith.constant dense<0.000000e+00> : vector<128xf32>
    %112 = vector.multi_reduction <add>, %111, %cst_68 [1] : vector<128x128xf32> to vector<128xf32>
    %113 = vector.shape_cast %112 : vector<128xf32> to vector<128x1xf32>
    %cst_69 = arith.constant 1.000000e+00 : f32
    %114 = vector.broadcast %cst_69 : f32 to vector<128x1xf32>
    %115 = arith.divf %114, %113 : vector<128x1xf32>
    %116 = vector.broadcast %115 : vector<128x1xf32> to vector<128x128xf32>
    %117 = arith.mulf %111, %116 : vector<128x128xf32>
    %cst_70 = arith.constant dense<0.000000e+00> : vector<128x64xf32>
    %118 = tpu.matmul %117, %103, %cst_70 {dimension_numbers = #tpu.dot_dimension_numbers<[1], [0], [0], [1], [0, 0, 1, 1], [], []>} : vector<128x128xf32>, vector<128x64xf32>, vector<128x64xf32> -> vector<128x64xf32>
    %119 = arith.addf %100, %118 : vector<128x64xf32>
    %c128_71 = arith.constant 128 : index
    %c16_72 = arith.constant 16 : index
    %120 = vector.load %arg6[%c128_71, %c16_72] : memref<256x384xf32, #tpu.memory_space<vmem>>, vector<128x16xf32>
    %c128_73 = arith.constant 128 : index
    %c80_74 = arith.constant 80 : index
    %121 = vector.load %arg6[%c128_73, %c80_74] : memref<256x384xf32, #tpu.memory_space<vmem>>, vector<128x16xf32>
    %c128_75 = arith.constant 128 : index
    %c192_76 = arith.constant 192 : index
    %122 = vector.load %arg6[%c128_75, %c192_76] : memref<256x384xf32, #tpu.memory_space<vmem>>, vector<128x64xf32>
    %cst_77 = arith.constant dense<0.000000e+00> : vector<128x128xf32>
    %123 = tpu.matmul %120, %121, %cst_77 {dimension_numbers = #tpu.dot_dimension_numbers<[1], [1], [0], [0], [0, 0, 1, 0], [], []>} : vector<128x16xf32>, vector<128x16xf32>, vector<128x128xf32> -> vector<128x128xf32>
    %c0_78 = arith.constant 0 : index
    %c0_79 = arith.constant 0 : index
    %124 = vector.load %arg7[%c0_78, %c0_79] : memref<128x128xf32, #tpu.memory_space<vmem>>, vector<128x128xf32>
    %125 = arith.addf %123, %124 : vector<128x128xf32>
    %cst_80 = arith.constant dense<0xFF800000> : vector<128xf32>
    %126 = vector.multi_reduction <maximumf>, %125, %cst_80 [1] : vector<128x128xf32> to vector<128xf32>
    %127 = vector.shape_cast %126 : vector<128xf32> to vector<128x1xf32>
    %128 = vector.broadcast %127 : vector<128x1xf32> to vector<128x128xf32>
    %129 = arith.subf %125, %128 : vector<128x128xf32>
    %130 = math.exp %129 : vector<128x128xf32>
    %cst_81 = arith.constant dense<0.000000e+00> : vector<128xf32>
    %131 = vector.multi_reduction <add>, %130, %cst_81 [1] : vector<128x128xf32> to vector<128xf32>
    %132 = vector.shape_cast %131 : vector<128xf32> to vector<128x1xf32>
    %cst_82 = arith.constant 1.000000e+00 : f32
    %133 = vector.broadcast %cst_82 : f32 to vector<128x1xf32>
    %134 = arith.divf %133, %132 : vector<128x1xf32>
    %135 = vector.broadcast %134 : vector<128x1xf32> to vector<128x128xf32>
    %136 = arith.mulf %130, %135 : vector<128x128xf32>
    %cst_83 = arith.constant dense<0.000000e+00> : vector<128x64xf32>
    %137 = tpu.matmul %136, %122, %cst_83 {dimension_numbers = #tpu.dot_dimension_numbers<[1], [0], [0], [1], [0, 0, 1, 1], [], []>} : vector<128x128xf32>, vector<128x64xf32>, vector<128x64xf32> -> vector<128x64xf32>
    %138 = arith.addf %119, %137 : vector<128x64xf32>
    %c128_84 = arith.constant 128 : index
    %c32_85 = arith.constant 32 : index
    %139 = vector.load %arg6[%c128_84, %c32_85] : memref<256x384xf32, #tpu.memory_space<vmem>>, vector<128x16xf32>
    %c128_86 = arith.constant 128 : index
    %c96_87 = arith.constant 96 : index
    %140 = vector.load %arg6[%c128_86, %c96_87] : memref<256x384xf32, #tpu.memory_space<vmem>>, vector<128x16xf32>
    %c128_88 = arith.constant 128 : index
    %c256_89 = arith.constant 256 : index
    %141 = vector.load %arg6[%c128_88, %c256_89] : memref<256x384xf32, #tpu.memory_space<vmem>>, vector<128x64xf32>
    %cst_90 = arith.constant dense<0.000000e+00> : vector<128x128xf32>
    %142 = tpu.matmul %139, %140, %cst_90 {dimension_numbers = #tpu.dot_dimension_numbers<[1], [1], [0], [0], [0, 0, 1, 0], [], []>} : vector<128x16xf32>, vector<128x16xf32>, vector<128x128xf32> -> vector<128x128xf32>
    %c0_91 = arith.constant 0 : index
    %c0_92 = arith.constant 0 : index
    %143 = vector.load %arg7[%c0_91, %c0_92] : memref<128x128xf32, #tpu.memory_space<vmem>>, vector<128x128xf32>
    %144 = arith.addf %142, %143 : vector<128x128xf32>
    %cst_93 = arith.constant dense<0xFF800000> : vector<128xf32>
    %145 = vector.multi_reduction <maximumf>, %144, %cst_93 [1] : vector<128x128xf32> to vector<128xf32>
    %146 = vector.shape_cast %145 : vector<128xf32> to vector<128x1xf32>
    %147 = vector.broadcast %146 : vector<128x1xf32> to vector<128x128xf32>
    %148 = arith.subf %144, %147 : vector<128x128xf32>
    %149 = math.exp %148 : vector<128x128xf32>
    %cst_94 = arith.constant dense<0.000000e+00> : vector<128xf32>
    %150 = vector.multi_reduction <add>, %149, %cst_94 [1] : vector<128x128xf32> to vector<128xf32>
    %151 = vector.shape_cast %150 : vector<128xf32> to vector<128x1xf32>
    %cst_95 = arith.constant 1.000000e+00 : f32
    %152 = vector.broadcast %cst_95 : f32 to vector<128x1xf32>
    %153 = arith.divf %152, %151 : vector<128x1xf32>
    %154 = vector.broadcast %153 : vector<128x1xf32> to vector<128x128xf32>
    %155 = arith.mulf %149, %154 : vector<128x128xf32>
    %cst_96 = arith.constant dense<0.000000e+00> : vector<128x64xf32>
    %156 = tpu.matmul %155, %141, %cst_96 {dimension_numbers = #tpu.dot_dimension_numbers<[1], [0], [0], [1], [0, 0, 1, 1], [], []>} : vector<128x128xf32>, vector<128x64xf32>, vector<128x64xf32> -> vector<128x64xf32>
    %157 = arith.addf %138, %156 : vector<128x64xf32>
    %c128_97 = arith.constant 128 : index
    %c48_98 = arith.constant 48 : index
    %158 = vector.load %arg6[%c128_97, %c48_98] : memref<256x384xf32, #tpu.memory_space<vmem>>, vector<128x16xf32>
    %c128_99 = arith.constant 128 : index
    %c112_100 = arith.constant 112 : index
    %159 = vector.load %arg6[%c128_99, %c112_100] : memref<256x384xf32, #tpu.memory_space<vmem>>, vector<128x16xf32>
    %c128_101 = arith.constant 128 : index
    %c320_102 = arith.constant 320 : index
    %160 = vector.load %arg6[%c128_101, %c320_102] : memref<256x384xf32, #tpu.memory_space<vmem>>, vector<128x64xf32>
    %cst_103 = arith.constant dense<0.000000e+00> : vector<128x128xf32>
    %161 = tpu.matmul %158, %159, %cst_103 {dimension_numbers = #tpu.dot_dimension_numbers<[1], [1], [0], [0], [0, 0, 1, 0], [], []>} : vector<128x16xf32>, vector<128x16xf32>, vector<128x128xf32> -> vector<128x128xf32>
    %c0_104 = arith.constant 0 : index
    %c0_105 = arith.constant 0 : index
    %162 = vector.load %arg7[%c0_104, %c0_105] : memref<128x128xf32, #tpu.memory_space<vmem>>, vector<128x128xf32>
    %163 = arith.addf %161, %162 : vector<128x128xf32>
    %cst_106 = arith.constant dense<0xFF800000> : vector<128xf32>
    %164 = vector.multi_reduction <maximumf>, %163, %cst_106 [1] : vector<128x128xf32> to vector<128xf32>
    %165 = vector.shape_cast %164 : vector<128xf32> to vector<128x1xf32>
    %166 = vector.broadcast %165 : vector<128x1xf32> to vector<128x128xf32>
    %167 = arith.subf %163, %166 : vector<128x128xf32>
    %168 = math.exp %167 : vector<128x128xf32>
    %cst_107 = arith.constant dense<0.000000e+00> : vector<128xf32>
    %169 = vector.multi_reduction <add>, %168, %cst_107 [1] : vector<128x128xf32> to vector<128xf32>
    %170 = vector.shape_cast %169 : vector<128xf32> to vector<128x1xf32>
    %cst_108 = arith.constant 1.000000e+00 : f32
    %171 = vector.broadcast %cst_108 : f32 to vector<128x1xf32>
    %172 = arith.divf %171, %170 : vector<128x1xf32>
    %173 = vector.broadcast %172 : vector<128x1xf32> to vector<128x128xf32>
    %174 = arith.mulf %168, %173 : vector<128x128xf32>
    %cst_109 = arith.constant dense<0.000000e+00> : vector<128x64xf32>
    %175 = tpu.matmul %174, %160, %cst_109 {dimension_numbers = #tpu.dot_dimension_numbers<[1], [0], [0], [1], [0, 0, 1, 1], [], []>} : vector<128x128xf32>, vector<128x64xf32>, vector<128x64xf32> -> vector<128x64xf32>
    %176 = arith.addf %157, %175 : vector<128x64xf32>
    %177 = vector.broadcast %19 : vector<1x64xf32> to vector<128x64xf32>
    %178 = arith.addf %176, %177 : vector<128x64xf32>
    %c128_110 = arith.constant 128 : index
    %c0_111 = arith.constant 0 : index
    %179 = vector.load %arg5[%c128_110, %c0_111] : memref<256x64xf32, #tpu.memory_space<vmem>>, vector<128x64xf32>
    tpu.vector_store %arg5[%c128_110, %c0_111], %178 {strides = array<i32>} : memref<256x64xf32, #tpu.memory_space<vmem>>, vector<128x64xf32>,
    return
  }
  func.func @transform_0(%arg0: i32) -> (i32, i32) {
    %c0_i32 = arith.constant 0 : i32
    %c0_i32_0 = arith.constant 0 : i32
    return %arg0, %c0_i32 : i32, i32
  }
  func.func @transform_1(%arg0: i32) -> (i32, i32) {
    %c0_i32 = arith.constant 0 : i32
    %c0_i32_0 = arith.constant 0 : i32
    %c0_i32_1 = arith.constant 0 : i32
    return %c0_i32, %c0_i32_0 : i32, i32
  }
  func.func @transform_2(%arg0: i32) -> (i32, i32) {
    %c0_i32 = arith.constant 0 : i32
    %c0_i32_0 = arith.constant 0 : i32
    %c0_i32_1 = arith.constant 0 : i32
    return %c0_i32, %c0_i32_0 : i32, i32
  }
  func.func @transform_3(%arg0: i32) -> (i32, i32) {
    %c0_i32 = arith.constant 0 : i32
    %c0_i32_0 = arith.constant 0 : i32
    %c0_i32_1 = arith.constant 0 : i32
    return %c0_i32, %c0_i32_0 : i32, i32
  }
  func.func @transform_4(%arg0: i32) -> (i32, i32) {
    %c0_i32 = arith.constant 0 : i32
    %c0_i32_0 = arith.constant 0 : i32
    return %arg0, %c0_i32 : i32, i32
  }
}

module attributes {stable_mosaic.version = 11 : i64} {
  func.func @_na_kernel(%arg0: i32, %arg1: memref<256x64xf32, #tpu.memory_space<vmem>>, %arg2: memref<64x384xf32, #tpu.memory_space<vmem>>, %arg3: memref<1x384xf32, #tpu.memory_space<vmem>>, %arg4: memref<1x64xf32, #tpu.memory_space<vmem>>, %arg5: memref<256x64xf32, #tpu.memory_space<vmem>>, %arg6: memref<256x384xf32, #tpu.memory_space<vmem>>, %arg7: memref<128x128xf32, #tpu.memory_space<vmem>>) attributes {dimension_semantics = [#tpu.dimension_semantics<arbitrary>], iteration_bounds = array<i64: 1>, scalar_prefetch = 0 : i64, scratch_operands = 2 : i64, tpu.core_type = #tpu.core_type<tc>, window_params = [{transform_indices = @transform_0, window_bounds = array<i64: 256, 64>}, {pipeline_mode = #tpu.pipeline_mode<synchronous>, transform_indices = @transform_1, window_bounds = array<i64: 64, 384>}, {pipeline_mode = #tpu.pipeline_mode<synchronous>, transform_indices = @transform_2, window_bounds = array<i64: 1, 384>}, {pipeline_mode = #tpu.pipeline_mode<synchronous>, transform_indices = @transform_3, window_bounds = array<i64: 1, 64>}, {transform_indices = @transform_4, window_bounds = array<i64: 256, 64>}]} {
    %c0 = arith.constant 0 : index
    %c0_0 = arith.constant 0 : index
    %0 = vector.load %arg1[%c0, %c0_0] : memref<256x64xf32, #tpu.memory_space<vmem>>, vector<256x64xf32>
    %c0_1 = arith.constant 0 : index
    %c0_2 = arith.constant 0 : index
    %1 = vector.load %arg2[%c0_1, %c0_2] : memref<64x384xf32, #tpu.memory_space<vmem>>, vector<64x384xf32>
    %cst = arith.constant dense<0.000000e+00> : vector<256x384xf32>
    %2 = tpu.matmul %0, %1, %cst {dimension_numbers = #tpu.dot_dimension_numbers<[1], [0], [0], [1], [0, 0, 1, 1], [], []>} : vector<256x64xf32>, vector<64x384xf32>, vector<256x384xf32> -> vector<256x384xf32>
    %c0_3 = arith.constant 0 : index
    %c0_4 = arith.constant 0 : index
    %3 = vector.load %arg3[%c0_3, %c0_4] : memref<1x384xf32, #tpu.memory_space<vmem>>, vector<1x384xf32>
    %4 = vector.broadcast %3 : vector<1x384xf32> to vector<256x384xf32>
    %5 = arith.addf %2, %4 : vector<256x384xf32>
    %c0_5 = arith.constant 0 : index
    %c0_6 = arith.constant 0 : index
    %6 = vector.load %arg6[%c0_5, %c0_6] : memref<256x384xf32, #tpu.memory_space<vmem>>, vector<256x384xf32>
    tpu.vector_store %arg6[%c0_5, %c0_6], %5 {strides = array<i32>} : memref<256x384xf32, #tpu.memory_space<vmem>>, vector<256x384xf32>,
    %7 = tpu.iota {dimensions = array<i32: 0>} : vector<128x128xi32>
    %8 = tpu.iota {dimensions = array<i32: 1>} : vector<128x128xi32>
    %9 = arith.subi %8, %7 : vector<128x128xi32>
    %c-3_i32 = arith.constant -3 : i32
    %10 = vector.broadcast %c-3_i32 : i32 to vector<128x128xi32>
    %11 = arith.cmpi sge, %9, %10 : vector<128x128xi32>
    %c3_i32 = arith.constant 3 : i32
    %12 = vector.broadcast %c3_i32 : i32 to vector<128x128xi32>
    %13 = arith.cmpi sle, %9, %12 : vector<128x128xi32>
    %14 = arith.andi %11, %13 : vector<128x128xi1>
    %cst_7 = arith.constant 0.000000e+00 : f32
    %cst_8 = arith.constant -1.000000e+30 : f32
    %15 = vector.broadcast %cst_7 : f32 to vector<128x128xf32>
    %16 = vector.broadcast %cst_8 : f32 to vector<128x128xf32>
    %17 = arith.select %14, %15, %16 : vector<128x128xi1>, vector<128x128xf32>
    %c0_9 = arith.constant 0 : index
    %c0_10 = arith.constant 0 : index
    %18 = vector.load %arg7[%c0_9, %c0_10] : memref<128x128xf32, #tpu.memory_space<vmem>>, vector<128x128xf32>
    tpu.vector_store %arg7[%c0_9, %c0_10], %17 {strides = array<i32>} : memref<128x128xf32, #tpu.memory_space<vmem>>, vector<128x128xf32>,
    %c0_11 = arith.constant 0 : index
    %c0_12 = arith.constant 0 : index
    %19 = vector.load %arg4[%c0_11, %c0_12] : memref<1x64xf32, #tpu.memory_space<vmem>>, vector<1x64xf32>
    %cst_13 = arith.constant 0.000000e+00 : f32
    %20 = vector.broadcast %cst_13 : f32 to vector<128x64xf32>
    %c0_14 = arith.constant 0 : index
    %c0_15 = arith.constant 0 : index
    %21 = vector.load %arg6[%c0_14, %c0_15] : memref<256x384xf32, #tpu.memory_space<vmem>>, vector<128x16xf32>
    %c0_16 = arith.constant 0 : index
    %c64 = arith.constant 64 : index
    %22 = vector.load %arg6[%c0_16, %c64] : memref<256x384xf32, #tpu.memory_space<vmem>>, vector<128x16xf32>
    %c0_17 = arith.constant 0 : index
    %c128 = arith.constant 128 : index
    %23 = vector.load %arg6[%c0_17, %c128] : memref<256x384xf32, #tpu.memory_space<vmem>>, vector<128x64xf32>
    %cst_18 = arith.constant dense<0.000000e+00> : vector<128x128xf32>
    %24 = tpu.matmul %21, %22, %cst_18 {dimension_numbers = #tpu.dot_dimension_numbers<[1], [1], [0], [0], [0, 0, 1, 0], [], []>} : vector<128x16xf32>, vector<128x16xf32>, vector<128x128xf32> -> vector<128x128xf32>
    %c0_19 = arith.constant 0 : index
    %c0_20 = arith.constant 0 : index
    %25 = vector.load %arg7[%c0_19, %c0_20] : memref<128x128xf32, #tpu.memory_space<vmem>>, vector<128x128xf32>
    %26 = arith.addf %24, %25 : vector<128x128xf32>
    %cst_21 = arith.constant dense<0xFF800000> : vector<128xf32>
    %27 = vector.multi_reduction <maximumf>, %26, %cst_21 [1] : vector<128x128xf32> to vector<128xf32>
    %28 = vector.shape_cast %27 : vector<128xf32> to vector<128x1xf32>
    %29 = vector.broadcast %28 : vector<128x1xf32> to vector<128x128xf32>
    %30 = arith.subf %26, %29 : vector<128x128xf32>
    %31 = math.exp %30 : vector<128x128xf32>
    %cst_22 = arith.constant dense<0.000000e+00> : vector<128xf32>
    %32 = vector.multi_reduction <add>, %31, %cst_22 [1] : vector<128x128xf32> to vector<128xf32>
    %33 = vector.shape_cast %32 : vector<128xf32> to vector<128x1xf32>
    %cst_23 = arith.constant 1.000000e+00 : f32
    %34 = vector.broadcast %cst_23 : f32 to vector<128x1xf32>
    %35 = arith.divf %34, %33 : vector<128x1xf32>
    %36 = vector.broadcast %35 : vector<128x1xf32> to vector<128x128xf32>
    %37 = arith.mulf %31, %36 : vector<128x128xf32>
    %cst_24 = arith.constant dense<0.000000e+00> : vector<128x64xf32>
    %38 = tpu.matmul %37, %23, %cst_24 {dimension_numbers = #tpu.dot_dimension_numbers<[1], [0], [0], [1], [0, 0, 1, 1], [], []>} : vector<128x128xf32>, vector<128x64xf32>, vector<128x64xf32> -> vector<128x64xf32>
    %39 = arith.addf %20, %38 : vector<128x64xf32>
    %c0_25 = arith.constant 0 : index
    %c16 = arith.constant 16 : index
    %40 = vector.load %arg6[%c0_25, %c16] : memref<256x384xf32, #tpu.memory_space<vmem>>, vector<128x16xf32>
    %c0_26 = arith.constant 0 : index
    %c80 = arith.constant 80 : index
    %41 = vector.load %arg6[%c0_26, %c80] : memref<256x384xf32, #tpu.memory_space<vmem>>, vector<128x16xf32>
    %c0_27 = arith.constant 0 : index
    %c192 = arith.constant 192 : index
    %42 = vector.load %arg6[%c0_27, %c192] : memref<256x384xf32, #tpu.memory_space<vmem>>, vector<128x64xf32>
    %cst_28 = arith.constant dense<0.000000e+00> : vector<128x128xf32>
    %43 = tpu.matmul %40, %41, %cst_28 {dimension_numbers = #tpu.dot_dimension_numbers<[1], [1], [0], [0], [0, 0, 1, 0], [], []>} : vector<128x16xf32>, vector<128x16xf32>, vector<128x128xf32> -> vector<128x128xf32>
    %c0_29 = arith.constant 0 : index
    %c0_30 = arith.constant 0 : index
    %44 = vector.load %arg7[%c0_29, %c0_30] : memref<128x128xf32, #tpu.memory_space<vmem>>, vector<128x128xf32>
    %45 = arith.addf %43, %44 : vector<128x128xf32>
    %cst_31 = arith.constant dense<0xFF800000> : vector<128xf32>
    %46 = vector.multi_reduction <maximumf>, %45, %cst_31 [1] : vector<128x128xf32> to vector<128xf32>
    %47 = vector.shape_cast %46 : vector<128xf32> to vector<128x1xf32>
    %48 = vector.broadcast %47 : vector<128x1xf32> to vector<128x128xf32>
    %49 = arith.subf %45, %48 : vector<128x128xf32>
    %50 = math.exp %49 : vector<128x128xf32>
    %cst_32 = arith.constant dense<0.000000e+00> : vector<128xf32>
    %51 = vector.multi_reduction <add>, %50, %cst_32 [1] : vector<128x128xf32> to vector<128xf32>
    %52 = vector.shape_cast %51 : vector<128xf32> to vector<128x1xf32>
    %cst_33 = arith.constant 1.000000e+00 : f32
    %53 = vector.broadcast %cst_33 : f32 to vector<128x1xf32>
    %54 = arith.divf %53, %52 : vector<128x1xf32>
    %55 = vector.broadcast %54 : vector<128x1xf32> to vector<128x128xf32>
    %56 = arith.mulf %50, %55 : vector<128x128xf32>
    %cst_34 = arith.constant dense<0.000000e+00> : vector<128x64xf32>
    %57 = tpu.matmul %56, %42, %cst_34 {dimension_numbers = #tpu.dot_dimension_numbers<[1], [0], [0], [1], [0, 0, 1, 1], [], []>} : vector<128x128xf32>, vector<128x64xf32>, vector<128x64xf32> -> vector<128x64xf32>
    %58 = arith.addf %39, %57 : vector<128x64xf32>
    %c0_35 = arith.constant 0 : index
    %c32 = arith.constant 32 : index
    %59 = vector.load %arg6[%c0_35, %c32] : memref<256x384xf32, #tpu.memory_space<vmem>>, vector<128x16xf32>
    %c0_36 = arith.constant 0 : index
    %c96 = arith.constant 96 : index
    %60 = vector.load %arg6[%c0_36, %c96] : memref<256x384xf32, #tpu.memory_space<vmem>>, vector<128x16xf32>
    %c0_37 = arith.constant 0 : index
    %c256 = arith.constant 256 : index
    %61 = vector.load %arg6[%c0_37, %c256] : memref<256x384xf32, #tpu.memory_space<vmem>>, vector<128x64xf32>
    %cst_38 = arith.constant dense<0.000000e+00> : vector<128x128xf32>
    %62 = tpu.matmul %59, %60, %cst_38 {dimension_numbers = #tpu.dot_dimension_numbers<[1], [1], [0], [0], [0, 0, 1, 0], [], []>} : vector<128x16xf32>, vector<128x16xf32>, vector<128x128xf32> -> vector<128x128xf32>
    %c0_39 = arith.constant 0 : index
    %c0_40 = arith.constant 0 : index
    %63 = vector.load %arg7[%c0_39, %c0_40] : memref<128x128xf32, #tpu.memory_space<vmem>>, vector<128x128xf32>
    %64 = arith.addf %62, %63 : vector<128x128xf32>
    %cst_41 = arith.constant dense<0xFF800000> : vector<128xf32>
    %65 = vector.multi_reduction <maximumf>, %64, %cst_41 [1] : vector<128x128xf32> to vector<128xf32>
    %66 = vector.shape_cast %65 : vector<128xf32> to vector<128x1xf32>
    %67 = vector.broadcast %66 : vector<128x1xf32> to vector<128x128xf32>
    %68 = arith.subf %64, %67 : vector<128x128xf32>
    %69 = math.exp %68 : vector<128x128xf32>
    %cst_42 = arith.constant dense<0.000000e+00> : vector<128xf32>
    %70 = vector.multi_reduction <add>, %69, %cst_42 [1] : vector<128x128xf32> to vector<128xf32>
    %71 = vector.shape_cast %70 : vector<128xf32> to vector<128x1xf32>
    %cst_43 = arith.constant 1.000000e+00 : f32
    %72 = vector.broadcast %cst_43 : f32 to vector<128x1xf32>
    %73 = arith.divf %72, %71 : vector<128x1xf32>
    %74 = vector.broadcast %73 : vector<128x1xf32> to vector<128x128xf32>
    %75 = arith.mulf %69, %74 : vector<128x128xf32>
    %cst_44 = arith.constant dense<0.000000e+00> : vector<128x64xf32>
    %76 = tpu.matmul %75, %61, %cst_44 {dimension_numbers = #tpu.dot_dimension_numbers<[1], [0], [0], [1], [0, 0, 1, 1], [], []>} : vector<128x128xf32>, vector<128x64xf32>, vector<128x64xf32> -> vector<128x64xf32>
    %77 = arith.addf %58, %76 : vector<128x64xf32>
    %c0_45 = arith.constant 0 : index
    %c48 = arith.constant 48 : index
    %78 = vector.load %arg6[%c0_45, %c48] : memref<256x384xf32, #tpu.memory_space<vmem>>, vector<128x16xf32>
    %c0_46 = arith.constant 0 : index
    %c112 = arith.constant 112 : index
    %79 = vector.load %arg6[%c0_46, %c112] : memref<256x384xf32, #tpu.memory_space<vmem>>, vector<128x16xf32>
    %c0_47 = arith.constant 0 : index
    %c320 = arith.constant 320 : index
    %80 = vector.load %arg6[%c0_47, %c320] : memref<256x384xf32, #tpu.memory_space<vmem>>, vector<128x64xf32>
    %cst_48 = arith.constant dense<0.000000e+00> : vector<128x128xf32>
    %81 = tpu.matmul %78, %79, %cst_48 {dimension_numbers = #tpu.dot_dimension_numbers<[1], [1], [0], [0], [0, 0, 1, 0], [], []>} : vector<128x16xf32>, vector<128x16xf32>, vector<128x128xf32> -> vector<128x128xf32>
    %c0_49 = arith.constant 0 : index
    %c0_50 = arith.constant 0 : index
    %82 = vector.load %arg7[%c0_49, %c0_50] : memref<128x128xf32, #tpu.memory_space<vmem>>, vector<128x128xf32>
    %83 = arith.addf %81, %82 : vector<128x128xf32>
    %cst_51 = arith.constant dense<0xFF800000> : vector<128xf32>
    %84 = vector.multi_reduction <maximumf>, %83, %cst_51 [1] : vector<128x128xf32> to vector<128xf32>
    %85 = vector.shape_cast %84 : vector<128xf32> to vector<128x1xf32>
    %86 = vector.broadcast %85 : vector<128x1xf32> to vector<128x128xf32>
    %87 = arith.subf %83, %86 : vector<128x128xf32>
    %88 = math.exp %87 : vector<128x128xf32>
    %cst_52 = arith.constant dense<0.000000e+00> : vector<128xf32>
    %89 = vector.multi_reduction <add>, %88, %cst_52 [1] : vector<128x128xf32> to vector<128xf32>
    %90 = vector.shape_cast %89 : vector<128xf32> to vector<128x1xf32>
    %cst_53 = arith.constant 1.000000e+00 : f32
    %91 = vector.broadcast %cst_53 : f32 to vector<128x1xf32>
    %92 = arith.divf %91, %90 : vector<128x1xf32>
    %93 = vector.broadcast %92 : vector<128x1xf32> to vector<128x128xf32>
    %94 = arith.mulf %88, %93 : vector<128x128xf32>
    %cst_54 = arith.constant dense<0.000000e+00> : vector<128x64xf32>
    %95 = tpu.matmul %94, %80, %cst_54 {dimension_numbers = #tpu.dot_dimension_numbers<[1], [0], [0], [1], [0, 0, 1, 1], [], []>} : vector<128x128xf32>, vector<128x64xf32>, vector<128x64xf32> -> vector<128x64xf32>
    %96 = arith.addf %77, %95 : vector<128x64xf32>
    %97 = vector.broadcast %19 : vector<1x64xf32> to vector<128x64xf32>
    %98 = arith.addf %96, %97 : vector<128x64xf32>
    %c0_55 = arith.constant 0 : index
    %c0_56 = arith.constant 0 : index
    %99 = vector.load %arg5[%c0_55, %c0_56] : memref<256x64xf32, #tpu.memory_space<vmem>>, vector<128x64xf32>
    tpu.vector_store %arg5[%c0_55, %c0_56], %98 {strides = array<i32>} : memref<256x64xf32, #tpu.memory_space<vmem>>, vector<128x64xf32>,
    %cst_57 = arith.constant 0.000000e+00 : f32
    %100 = vector.broadcast %cst_57 : f32 to vector<128x64xf32>
    %c128_58 = arith.constant 128 : index
    %c0_59 = arith.constant 0 : index
    %101 = vector.load %arg6[%c128_58, %c0_59] : memref<256x384xf32, #tpu.memory_space<vmem>>, vector<128x16xf32>
    %c128_60 = arith.constant 128 : index
    %c64_61 = arith.constant 64 : index
    %102 = vector.load %arg6[%c128_60, %c64_61] : memref<256x384xf32, #tpu.memory_space<vmem>>, vector<128x16xf32>
    %c128_62 = arith.constant 128 : index
    %c128_63 = arith.constant 128 : index
    %103 = vector.load %arg6[%c128_62, %c128_63] : memref<256x384xf32, #tpu.memory_space<vmem>>, vector<128x64xf32>
    %cst_64 = arith.constant dense<0.000000e+00> : vector<128x128xf32>
    %104 = tpu.matmul %101, %102, %cst_64 {dimension_numbers = #tpu.dot_dimension_numbers<[1], [1], [0], [0], [0, 0, 1, 0], [], []>} : vector<128x16xf32>, vector<128x16xf32>, vector<128x128xf32> -> vector<128x128xf32>
    %c0_65 = arith.constant 0 : index
    %c0_66 = arith.constant 0 : index
    %105 = vector.load %arg7[%c0_65, %c0_66] : memref<128x128xf32, #tpu.memory_space<vmem>>, vector<128x128xf32>
    %106 = arith.addf %104, %105 : vector<128x128xf32>
    %cst_67 = arith.constant dense<0xFF800000> : vector<128xf32>
    %107 = vector.multi_reduction <maximumf>, %106, %cst_67 [1] : vector<128x128xf32> to vector<128xf32>
    %108 = vector.shape_cast %107 : vector<128xf32> to vector<128x1xf32>
    %109 = vector.broadcast %108 : vector<128x1xf32> to vector<128x128xf32>
    %110 = arith.subf %106, %109 : vector<128x128xf32>
    %111 = math.exp %110 : vector<128x128xf32>
    %cst_68 = arith.constant dense<0.000000e+00> : vector<128xf32>
    %112 = vector.multi_reduction <add>, %111, %cst_68 [1] : vector<128x128xf32> to vector<128xf32>
    %113 = vector.shape_cast %112 : vector<128xf32> to vector<128x1xf32>
    %cst_69 = arith.constant 1.000000e+00 : f32
    %114 = vector.broadcast %cst_69 : f32 to vector<128x1xf32>
    %115 = arith.divf %114, %113 : vector<128x1xf32>
    %116 = vector.broadcast %115 : vector<128x1xf32> to vector<128x128xf32>
    %117 = arith.mulf %111, %116 : vector<128x128xf32>
    %cst_70 = arith.constant dense<0.000000e+00> : vector<128x64xf32>
    %118 = tpu.matmul %117, %103, %cst_70 {dimension_numbers = #tpu.dot_dimension_numbers<[1], [0], [0], [1], [0, 0, 1, 1], [], []>} : vector<128x128xf32>, vector<128x64xf32>, vector<128x64xf32> -> vector<128x64xf32>
    %119 = arith.addf %100, %118 : vector<128x64xf32>
    %c128_71 = arith.constant 128 : index
    %c16_72 = arith.constant 16 : index
    %120 = vector.load %arg6[%c128_71, %c16_72] : memref<256x384xf32, #tpu.memory_space<vmem>>, vector<128x16xf32>
    %c128_73 = arith.constant 128 : index
    %c80_74 = arith.constant 80 : index
    %121 = vector.load %arg6[%c128_73, %c80_74] : memref<256x384xf32, #tpu.memory_space<vmem>>, vector<128x16xf32>
    %c128_75 = arith.constant 128 : index
    %c192_76 = arith.constant 192 : index
    %122 = vector.load %arg6[%c128_75, %c192_76] : memref<256x384xf32, #tpu.memory_space<vmem>>, vector<128x64xf32>
    %cst_77 = arith.constant dense<0.000000e+00> : vector<128x128xf32>
    %123 = tpu.matmul %120, %121, %cst_77 {dimension_numbers = #tpu.dot_dimension_numbers<[1], [1], [0], [0], [0, 0, 1, 0], [], []>} : vector<128x16xf32>, vector<128x16xf32>, vector<128x128xf32> -> vector<128x128xf32>
    %c0_78 = arith.constant 0 : index
    %c0_79 = arith.constant 0 : index
    %124 = vector.load %arg7[%c0_78, %c0_79] : memref<128x128xf32, #tpu.memory_space<vmem>>, vector<128x128xf32>
    %125 = arith.addf %123, %124 : vector<128x128xf32>
    %cst_80 = arith.constant dense<0xFF800000> : vector<128xf32>
    %126 = vector.multi_reduction <maximumf>, %125, %cst_80 [1] : vector<128x128xf32> to vector<128xf32>
    %127 = vector.shape_cast %126 : vector<128xf32> to vector<128x1xf32>
    %128 = vector.broadcast %127 : vector<128x1xf32> to vector<128x128xf32>
    %129 = arith.subf %125, %128 : vector<128x128xf32>
    %130 = math.exp %129 : vector<128x128xf32>
    %cst_81 = arith.constant dense<0.000000e+00> : vector<128xf32>
    %131 = vector.multi_reduction <add>, %130, %cst_81 [1] : vector<128x128xf32> to vector<128xf32>
    %132 = vector.shape_cast %131 : vector<128xf32> to vector<128x1xf32>
    %cst_82 = arith.constant 1.000000e+00 : f32
    %133 = vector.broadcast %cst_82 : f32 to vector<128x1xf32>
    %134 = arith.divf %133, %132 : vector<128x1xf32>
    %135 = vector.broadcast %134 : vector<128x1xf32> to vector<128x128xf32>
    %136 = arith.mulf %130, %135 : vector<128x128xf32>
    %cst_83 = arith.constant dense<0.000000e+00> : vector<128x64xf32>
    %137 = tpu.matmul %136, %122, %cst_83 {dimension_numbers = #tpu.dot_dimension_numbers<[1], [0], [0], [1], [0, 0, 1, 1], [], []>} : vector<128x128xf32>, vector<128x64xf32>, vector<128x64xf32> -> vector<128x64xf32>
    %138 = arith.addf %119, %137 : vector<128x64xf32>
    %c128_84 = arith.constant 128 : index
    %c32_85 = arith.constant 32 : index
    %139 = vector.load %arg6[%c128_84, %c32_85] : memref<256x384xf32, #tpu.memory_space<vmem>>, vector<128x16xf32>
    %c128_86 = arith.constant 128 : index
    %c96_87 = arith.constant 96 : index
    %140 = vector.load %arg6[%c128_86, %c96_87] : memref<256x384xf32, #tpu.memory_space<vmem>>, vector<128x16xf32>
    %c128_88 = arith.constant 128 : index
    %c256_89 = arith.constant 256 : index
    %141 = vector.load %arg6[%c128_88, %c256_89] : memref<256x384xf32, #tpu.memory_space<vmem>>, vector<128x64xf32>
    %cst_90 = arith.constant dense<0.000000e+00> : vector<128x128xf32>
    %142 = tpu.matmul %139, %140, %cst_90 {dimension_numbers = #tpu.dot_dimension_numbers<[1], [1], [0], [0], [0, 0, 1, 0], [], []>} : vector<128x16xf32>, vector<128x16xf32>, vector<128x128xf32> -> vector<128x128xf32>
    %c0_91 = arith.constant 0 : index
    %c0_92 = arith.constant 0 : index
    %143 = vector.load %arg7[%c0_91, %c0_92] : memref<128x128xf32, #tpu.memory_space<vmem>>, vector<128x128xf32>
    %144 = arith.addf %142, %143 : vector<128x128xf32>
    %cst_93 = arith.constant dense<0xFF800000> : vector<128xf32>
    %145 = vector.multi_reduction <maximumf>, %144, %cst_93 [1] : vector<128x128xf32> to vector<128xf32>
    %146 = vector.shape_cast %145 : vector<128xf32> to vector<128x1xf32>
    %147 = vector.broadcast %146 : vector<128x1xf32> to vector<128x128xf32>
    %148 = arith.subf %144, %147 : vector<128x128xf32>
    %149 = math.exp %148 : vector<128x128xf32>
    %cst_94 = arith.constant dense<0.000000e+00> : vector<128xf32>
    %150 = vector.multi_reduction <add>, %149, %cst_94 [1] : vector<128x128xf32> to vector<128xf32>
    %151 = vector.shape_cast %150 : vector<128xf32> to vector<128x1xf32>
    %cst_95 = arith.constant 1.000000e+00 : f32
    %152 = vector.broadcast %cst_95 : f32 to vector<128x1xf32>
    %153 = arith.divf %152, %151 : vector<128x1xf32>
    %154 = vector.broadcast %153 : vector<128x1xf32> to vector<128x128xf32>
    %155 = arith.mulf %149, %154 : vector<128x128xf32>
    %cst_96 = arith.constant dense<0.000000e+00> : vector<128x64xf32>
    %156 = tpu.matmul %155, %141, %cst_96 {dimension_numbers = #tpu.dot_dimension_numbers<[1], [0], [0], [1], [0, 0, 1, 1], [], []>} : vector<128x128xf32>, vector<128x64xf32>, vector<128x64xf32> -> vector<128x64xf32>
    %157 = arith.addf %138, %156 : vector<128x64xf32>
    %c128_97 = arith.constant 128 : index
    %c48_98 = arith.constant 48 : index
    %158 = vector.load %arg6[%c128_97, %c48_98] : memref<256x384xf32, #tpu.memory_space<vmem>>, vector<128x16xf32>
    %c128_99 = arith.constant 128 : index
    %c112_100 = arith.constant 112 : index
    %159 = vector.load %arg6[%c128_99, %c112_100] : memref<256x384xf32, #tpu.memory_space<vmem>>, vector<128x16xf32>
    %c128_101 = arith.constant 128 : index
    %c320_102 = arith.constant 320 : index
    %160 = vector.load %arg6[%c128_101, %c320_102] : memref<256x384xf32, #tpu.memory_space<vmem>>, vector<128x64xf32>
    %cst_103 = arith.constant dense<0.000000e+00> : vector<128x128xf32>
    %161 = tpu.matmul %158, %159, %cst_103 {dimension_numbers = #tpu.dot_dimension_numbers<[1], [1], [0], [0], [0, 0, 1, 0], [], []>} : vector<128x16xf32>, vector<128x16xf32>, vector<128x128xf32> -> vector<128x128xf32>
    %c0_104 = arith.constant 0 : index
    %c0_105 = arith.constant 0 : index
    %162 = vector.load %arg7[%c0_104, %c0_105] : memref<128x128xf32, #tpu.memory_space<vmem>>, vector<128x128xf32>
    %163 = arith.addf %161, %162 : vector<128x128xf32>
    %cst_106 = arith.constant dense<0xFF800000> : vector<128xf32>
    %164 = vector.multi_reduction <maximumf>, %163, %cst_106 [1] : vector<128x128xf32> to vector<128xf32>
    %165 = vector.shape_cast %164 : vector<128xf32> to vector<128x1xf32>
    %166 = vector.broadcast %165 : vector<128x1xf32> to vector<128x128xf32>
    %167 = arith.subf %163, %166 : vector<128x128xf32>
    %168 = math.exp %167 : vector<128x128xf32>
    %cst_107 = arith.constant dense<0.000000e+00> : vector<128xf32>
    %169 = vector.multi_reduction <add>, %168, %cst_107 [1] : vector<128x128xf32> to vector<128xf32>
    %170 = vector.shape_cast %169 : vector<128xf32> to vector<128x1xf32>
    %cst_108 = arith.constant 1.000000e+00 : f32
    %171 = vector.broadcast %cst_108 : f32 to vector<128x1xf32>
    %172 = arith.divf %171, %170 : vector<128x1xf32>
    %173 = vector.broadcast %172 : vector<128x1xf32> to vector<128x128xf32>
    %174 = arith.mulf %168, %173 : vector<128x128xf32>
    %cst_109 = arith.constant dense<0.000000e+00> : vector<128x64xf32>
    %175 = tpu.matmul %174, %160, %cst_109 {dimension_numbers = #tpu.dot_dimension_numbers<[1], [0], [0], [1], [0, 0, 1, 1], [], []>} : vector<128x128xf32>, vector<128x64xf32>, vector<128x64xf32> -> vector<128x64xf32>
    %176 = arith.addf %157, %175 : vector<128x64xf32>
    %177 = vector.broadcast %19 : vector<1x64xf32> to vector<128x64xf32>
    %178 = arith.addf %176, %177 : vector<128x64xf32>
    %c128_110 = arith.constant 128 : index
    %c0_111 = arith.constant 0 : index
    %179 = vector.load %arg5[%c128_110, %c0_111] : memref<256x64xf32, #tpu.memory_space<vmem>>, vector<128x64xf32>
    tpu.vector_store %arg5[%c128_110, %c0_111], %178 {strides = array<i32>} : memref<256x64xf32, #tpu.memory_space<vmem>>, vector<128x64xf32>,
    return
  }
  func.func @transform_0(%arg0: i32) -> (i32, i32) {
    %c0_i32 = arith.constant 0 : i32
    %c0_i32_0 = arith.constant 0 : i32
    return %arg0, %c0_i32 : i32, i32
  }
  func.func @transform_1(%arg0: i32) -> (i32, i32) {
    %c0_i32 = arith.constant 0 : i32
    %c0_i32_0 = arith.constant 0 : i32
    %c0_i32_1 = arith.constant 0 : i32
    return %c0_i32, %c0_i32_0 : i32, i32
  }
  func.func @transform_2(%arg0: i32) -> (i32, i32) {
    %c0_i32 = arith.constant 0 : i32
    %c0_i32_0 = arith.constant 0 : i32
    %c0_i32_1 = arith.constant 0 : i32
    return %c0_i32, %c0_i32_0 : i32, i32
  }
  func.func @transform_3(%arg0: i32) -> (i32, i32) {
    %c0_i32 = arith.constant 0 : i32
    %c0_i32_0 = arith.constant 0 : i32
    %c0_i32_1 = arith.constant 0 : i32
    return %c0_i32, %c0_i32_0 : i32, i32
  }
  func.func @transform_4(%arg0: i32) -> (i32, i32) {
    %c0_i32 = arith.constant 0 : i32
    %c0_i32_0 = arith.constant 0 : i32
    return %arg0, %c0_i32 : i32, i32
  }
}

</mosaic_0001>

<llo_original>
// kernel: tpu_custom_call.1
$region0: #{tpu_custom_call.1}
  #allocation0 [shape = 'u32[]', space=smem, size = 0x4, offset = 0x4, fixed_abs, tag = 'smem constant byte address 0x4 - core index']
  #allocation1 [shape = 'u32[144,128]{1,0:T(1,128)}', space=vmem, size = 0x12000, scoped, tag = 'internal scratch']
  #allocation2 [shape = 'f32[256,384]{1,0:T(8,128)}', space=vmem, size = 0x60000, scoped, tag = 'scratch operand']
  #allocation3 [shape = 'f32[128,128]{1,0:T(8,128)}', space=vmem, size = 0x10000, scoped, tag = 'scratch operand']
  %s0 = inlined_call_operand.vmem [shape: f32[256,64], index: 0, kind: input, shape index: {}]
  %s1 = inlined_call_operand.vmem [shape: f32[64,384], index: 1, kind: input, shape index: {}]
  %s2 = inlined_call_operand.vmem [shape: f32[1,384], index: 2, kind: input, shape index: {}]
  %s3 = inlined_call_operand.vmem [shape: f32[1,64], index: 3, kind: input, shape index: {}]
  %s4 = inlined_call_operand.vmem [shape: f32[256,64], index: 4, kind: output, shape index: {}]
  %s5 = sld [smem:[#allocation0]]
  $region26: #{tpu_custom_call.1} parent=0
    _
  %s7 = ssub.s32 1, %s5
  %s8 = scalar_select 0, %s7, %s5
  // Predicated region
  $region2: #{tpu_custom_call.1} parent=0 // pred_check
    _
  $region3: #{tpu_custom_call.1} parent=0 // pred_check_branch
    %10 = sbr.rel (0) target = $region5
  $region4: #{tpu_custom_call.1} parent=0 // pred_region
    _
  $region5: #{tpu_custom_call.1} parent=0 // pred_fallthru
    _
  // Predicated region
  $region6: #{tpu_custom_call.1} parent=0 // pred_check
    _
  $region7: #{tpu_custom_call.1} parent=0 // pred_check_branch
    %12 = sbr.rel (0) target = $region9
  $region8: #{tpu_custom_call.1} parent=0 // pred_region
    _
  $region9: #{tpu_custom_call.1} parent=0 // pred_fallthru
    _
  // Predicated region
  $region10: #{tpu_custom_call.1} parent=0 // pred_check
    _
  $region11: #{tpu_custom_call.1} parent=0 // pred_check_branch
    %14 = sbr.rel (0) target = $region13
  $region12: #{tpu_custom_call.1} parent=0 // pred_region
    _
  $region13: #{tpu_custom_call.1} parent=0 // pred_fallthru
    _
  // Predicated region
  $region14: #{tpu_custom_call.1} parent=0 // pred_check
    _
  $region15: #{tpu_custom_call.1} parent=0 // pred_check_branch
    %16 = sbr.rel (0) target = $region17
  $region16: #{tpu_custom_call.1} parent=0 // pred_region
    _
  $region17: #{tpu_custom_call.1} parent=0 // pred_fallthru
    _
  %v17 = vld [vmem:[%s0] sm:$0xff]
  %v18 = vld [vmem:[%s0 + $0x8] sm:$0xff]
  %v19 = vld [vmem:[%s0 + $0x10] sm:$0xff]
  %v20 = vld [vmem:[%s0 + $0x18] sm:$0xff]
  %v21 = vld [vmem:[%s0 + $0x20] sm:$0xff]
  %v22 = vld [vmem:[%s0 + $0x28] sm:$0xff]
  %v23 = vld [vmem:[%s0 + $0x30] sm:$0xff]
  %v24 = vld [vmem:[%s0 + $0x38] sm:$0xff]
  %v25 = vld [vmem:[%s0 + $0x40] sm:$0xff]
  %v26 = vld [vmem:[%s0 + $0x48] sm:$0xff]
  %v27 = vld [vmem:[%s0 + $0x50] sm:$0xff]
  %v28 = vld [vmem:[%s0 + $0x58] sm:$0xff]
  %v29 = vld [vmem:[%s0 + $0x60] sm:$0xff]
  %v30 = vld [vmem:[%s0 + $0x68] sm:$0xff]
  %v31 = vld [vmem:[%s0 + $0x70] sm:$0xff]
  %v32 = vld [vmem:[%s0 + $0x78] sm:$0xff]
  %v33 = vld [vmem:[%s0 + $0x80] sm:$0xff]
  %v34 = vld [vmem:[%s0 + $0x88] sm:$0xff]
  %v35 = vld [vmem:[%s0 + $0x90] sm:$0xff]
  %v36 = vld [vmem:[%s0 + $0x98] sm:$0xff]
  %v37 = vld [vmem:[%s0 + $0xa0] sm:$0xff]
  %v38 = vld [vmem:[%s0 + $0xa8] sm:$0xff]
  %v39 = vld [vmem:[%s0 + $0xb0] sm:$0xff]
  %v40 = vld [vmem:[%s0 + $0xb8] sm:$0xff]
  %v41 = vld [vmem:[%s0 + $0xc0] sm:$0xff]
  %v42 = vld [vmem:[%s0 + $0xc8] sm:$0xff]
  %v43 = vld [vmem:[%s0 + $0xd0] sm:$0xff]
  %v44 = vld [vmem:[%s0 + $0xd8] sm:$0xff]
  %v45 = vld [vmem:[%s0 + $0xe0] sm:$0xff]
  %v46 = vld [vmem:[%s0 + $0xe8] sm:$0xff]
  %v47 = vld [vmem:[%s0 + $0xf0] sm:$0xff]
  %v48 = vld [vmem:[%s0 + $0xf8] sm:$0xff]
  %v49 = vld [vmem:[%s1] sm:$0xff]
  %v50 = vld [vmem:[%s1 + $0x8] sm:$0xff]
  %v51 = vld [vmem:[%s1 + $0x10] sm:$0xff]
  %v52 = vld [vmem:[%s1 + $0x18] sm:$0xff]
  %v53 = vld [vmem:[%s1 + $0x20] sm:$0xff]
  %v54 = vld [vmem:[%s1 + $0x28] sm:$0xff]
  %v55 = vld [vmem:[%s1 + $0x30] sm:$0xff]
  %v56 = vld [vmem:[%s1 + $0x38] sm:$0xff]
  %v57 = vld [vmem:[%s1 + $0x40] sm:$0xff]
  %v58 = vld [vmem:[%s1 + $0x48] sm:$0xff]
  %v59 = vld [vmem:[%s1 + $0x50] sm:$0xff]
  %v60 = vld [vmem:[%s1 + $0x58] sm:$0xff]
  %v61 = vld [vmem:[%s1 + $0x60] sm:$0xff]
  %v62 = vld [vmem:[%s1 + $0x68] sm:$0xff]
  %v63 = vld [vmem:[%s1 + $0x70] sm:$0xff]
  %v64 = vld [vmem:[%s1 + $0x78] sm:$0xff]
  %v65 = vld [vmem:[%s1 + $0x80] sm:$0xff]
  %v66 = vld [vmem:[%s1 + $0x88] sm:$0xff]
  %v67 = vld [vmem:[%s1 + $0x90] sm:$0xff]
  %v68 = vld [vmem:[%s1 + $0x98] sm:$0xff]
  %v69 = vld [vmem:[%s1 + $0xa0] sm:$0xff]
  %v70 = vld [vmem:[%s1 + $0xa8] sm:$0xff]
  %v71 = vld [vmem:[%s1 + $0xb0] sm:$0xff]
  %v72 = vld [vmem:[%s1 + $0xb8] sm:$0xff]
  %v73 = vld [vmem:[%s2] sm:$0x7]
  %v75 = vlaneseq
  %v76 = vshrl.u32 %v75, 7
  %v77 = vsub.s32 0, %v76
  %v78 = vrot.slane %v73, %v77
  %v79 = vlaneseq
  %v80 = vshrl.u32 %v79, 7
  %v81 = vsub.s32 1, %v80
  %v82 = vrot.slane %v73, %v81
  %v83 = vlaneseq
  %v84 = vshrl.u32 %v83, 7
  %v85 = vsub.s32 2, %v84
  %v86 = vrot.slane %v73, %v85
  %vm90 = vcmask 523264
  %v92 = vsel %vm90, %v17, 0
  %v95 = vsel %vm90, %v18, 0
  %v98 = vsel %vm90, %v19, 0
  %v101 = vsel %vm90, %v20, 0
  %v104 = vsel %vm90, %v21, 0
  %v107 = vsel %vm90, %v22, 0
  %v110 = vsel %vm90, %v23, 0
  %v113 = vsel %vm90, %v24, 0
  %v116 = vsel %vm90, %v25, 0
  %v119 = vsel %vm90, %v26, 0
  %v122 = vsel %vm90, %v27, 0
  %v125 = vsel %vm90, %v28, 0
  %v128 = vsel %vm90, %v29, 0
  %v131 = vsel %vm90, %v30, 0
  %v134 = vsel %vm90, %v31, 0
  %v137 = vsel %vm90, %v32, 0
  %v140 = vsel %vm90, %v33, 0
  %v143 = vsel %vm90, %v34, 0
  %v146 = vsel %vm90, %v35, 0
  %v149 = vsel %vm90, %v36, 0
  %v152 = vsel %vm90, %v37, 0
  %v155 = vsel %vm90, %v38, 0
  %v158 = vsel %vm90, %v39, 0
  %v161 = vsel %vm90, %v40, 0
  %v164 = vsel %vm90, %v41, 0
  %v167 = vsel %vm90, %v42, 0
  %v170 = vsel %vm90, %v43, 0
  %v173 = vsel %vm90, %v44, 0
  %v176 = vsel %vm90, %v45, 0
  %v179 = vsel %vm90, %v46, 0
  %v182 = vsel %vm90, %v47, 0
  %v185 = vsel %vm90, %v48, 0
  %187 = vmatprep.subr.mxu0 %v50
  %188 = vmatpush1.msra.mxu0 %v49
  %189 = vmatprep.subr.mxu0 %v53
  %190 = vmatpush1.msra.mxu0 %v52
  %191 = vmatprep.subr.mxu0 %v56
  %192 = vmatpush1.msra.mxu0 %v55
  %193 = vmatprep.subr.mxu0 %v59
  %194 = vmatpush1.msra.mxu0 %v58
  %195 = vmatprep.subr.mxu0 %v62
  %196 = vmatpush1.msra.mxu0 %v61
  %197 = vmatprep.subr.mxu0 %v65
  %198 = vmatpush1.msra.mxu0 %v64
  %199 = vmatprep.subr.mxu0 %v68
  %200 = vmatpush1.msra.mxu0 %v67
  %201 = vmatprep.subr.mxu0 %v71
  %202 = vmatpush1.msra.mxu0 %v70
  %203 = vmatprep.subr.mxu0 0.0
  %204 = vmatpush1.msra.mxu0 0.0
  %205 = vmatprep.subr.mxu0 0.0
  %206 = vmatpush1.msra.mxu0 0.0
  %207 = vmatprep.subr.mxu0 0.0
  %208 = vmatpush1.msra.mxu0 0.0
  %209 = vmatprep.subr.mxu0 0.0
  %210 = vmatpush1.msra.mxu0 0.0
  %211 = vmatprep.subr.mxu0 0.0
  %212 = vmatpush1.msra.mxu0 0.0
  %213 = vmatprep.subr.mxu0 0.0
  %214 = vmatpush1.msra.mxu0 0.0
  %215 = vmatprep.subr.mxu0 0.0
  %216 = vmatpush1.msra.mxu0 0.0
  %217 = vmatprep.subr.mxu0 0.0
  %218 = vmatpush1.msra.mxu0 0.0
  %219 = vmatprep.subr.mxu0 0.0
  %220 = vmatpush1.msra.mxu0 0.0
  %221 = vmatprep.subr.mxu0 0.0
  %222 = vmatpush1.msra.mxu0 0.0
  %223 = vmatprep.subr.mxu0 0.0
  %224 = vmatpush1.msra.mxu0 0.0
  %225 = vmatprep.subr.mxu0 0.0
  %226 = vmatpush1.msra.mxu0 0.0
  %227 = vmatprep.subr.mxu0 0.0
  %228 = vmatpush1.msra.mxu0 0.0
  %229 = vmatprep.subr.mxu0 0.0
  %230 = vmatpush1.msra.mxu0 0.0
  %231 = vmatprep.subr.mxu0 0.0
  %232 = vmatpush1.msra.mxu0 0.0
  %233 = vmatprep.subr.mxu0 0.0
  %234 = vmatpush1.msra.mxu0 0.0
  %235 = vmatprep.subr.mxu0 0.0
  %236 = vmatpush1.msra.mxu0 0.0
  %237 = vmatprep.subr.mxu0 0.0
  %238 = vmatpush1.msra.mxu0 0.0
  %239 = vmatprep.subr.mxu0 0.0
  %240 = vmatpush1.msra.mxu0 0.0
  %241 = vmatprep.subr.mxu0 0.0
  %242 = vmatpush1.msra.mxu0 0.0
  %243 = vmatprep.subr.mxu0 0.0
  %244 = vmatpush1.msra.mxu0 0.0
  %245 = vmatprep.subr.mxu0 0.0
  %246 = vmatpush1.msra.mxu0 0.0
  %247 = vmatprep.subr.mxu0 0.0
  %248 = vmatpush1.msra.mxu0 0.0
  %249 = vmatprep.subr.mxu0 0.0
  %250 = vmatpush1.msra.mxu0 0.0
  %251 = vmatprep.mubr.f32.mxu0 0.0
  %252 = vmatmul.mubr.f32.gmra.mrb[0].mxu0 %v92
  %v253 = vpop.f32.mrb[0].mxu0
  %v254 = vadd.f32 %v78, %v253
  %v255 = vpop.f32.mrb[0].mxu0
  %v256 = vadd.f32 %v82, %v255
  %257 = vmatprep.mubr.f32.mxu0 0.0
  %258 = vmatmul.mubr.f32.gmra.mrb[0].mxu0 %v95
  %v259 = vpop.f32.mrb[0].mxu0
  %v260 = vadd.f32 %v78, %v259
  %v261 = vpop.f32.mrb[0].mxu0
  %v262 = vadd.f32 %v82, %v261
  %263 = vmatprep.mubr.f32.mxu0 0.0
  %264 = vmatmul.mubr.f32.gmra.mrb[0].mxu0 %v98
  %v265 = vpop.f32.mrb[0].mxu0
  %v266 = vadd.f32 %v78, %v265
  %v267 = vpop.f32.mrb[0].mxu0
  %v268 = vadd.f32 %v82, %v267
  %269 = vmatprep.mubr.f32.mxu0 0.0
  %270 = vmatmul.mubr.f32.gmra.mrb[0].mxu0 %v101
  %v271 = vpop.f32.mrb[0].mxu0
  %v272 = vadd.f32 %v78, %v271
  %v273 = vpop.f32.mrb[0].mxu0
  %v274 = vadd.f32 %v82, %v273
  %275 = vmatprep.mubr.f32.mxu0 0.0
  %276 = vmatmul.mubr.f32.gmra.mrb[0].mxu0 %v104
  %v277 = vpop.f32.mrb[0].mxu0
  %v278 = vadd.f32 %v78, %v277
  %v279 = vpop.f32.mrb[0].mxu0
  %v280 = vadd.f32 %v82, %v279
  %281 = vmatprep.mubr.f32.mxu0 0.0
  %282 = vmatmul.mubr.f32.gmra.mrb[0].mxu0 %v107
  %v283 = vpop.f32.mrb[0].mxu0
  %v284 = vadd.f32 %v78, %v283
  %v285 = vpop.f32.mrb[0].mxu0
  %v286 = vadd.f32 %v82, %v285
  %287 = vmatprep.mubr.f32.mxu0 0.0
  %288 = vmatmul.mubr.f32.gmra.mrb[0].mxu0 %v110
  %v289 = vpop.f32.mrb[0].mxu0
  %v290 = vadd.f32 %v78, %v289
  %v291 = vpop.f32.mrb[0].mxu0
  %v292 = vadd.f32 %v82, %v291
  %293 = vmatprep.mubr.f32.mxu0 0.0
  %294 = vmatmul.mubr.f32.gmra.mrb[0].mxu0 %v113
  %v295 = vpop.f32.mrb[0].mxu0
  %v296 = vadd.f32 %v78, %v295
  %v297 = vpop.f32.mrb[0].mxu0
  %v298 = vadd.f32 %v82, %v297
  %299 = vmatprep.mubr.f32.mxu0 0.0
  %300 = vmatmul.mubr.f32.gmra.mrb[0].mxu0 %v116
  %v301 = vpop.f32.mrb[0].mxu0
  %v302 = vadd.f32 %v78, %v301
  %v303 = vpop.f32.mrb[0].mxu0
  %v304 = vadd.f32 %v82, %v303
  %305 = vmatprep.mubr.f32.mxu0 0.0
  %306 = vmatmul.mubr.f32.gmra.mrb[0].mxu0 %v119
  %v307 = vpop.f32.mrb[0].mxu0
  %v308 = vadd.f32 %v78, %v307
  %v309 = vpop.f32.mrb[0].mxu0
  %v310 = vadd.f32 %v82, %v309
  %311 = vmatprep.mubr.f32.mxu0 0.0
  %312 = vmatmul.mubr.f32.gmra.mrb[0].mxu0 %v122
  %v313 = vpop.f32.mrb[0].mxu0
  %v314 = vadd.f32 %v78, %v313
  %v315 = vpop.f32.mrb[0].mxu0
  %v316 = vadd.f32 %v82, %v315
  %317 = vmatprep.mubr.f32.mxu0 0.0
  %318 = vmatmul.mubr.f32.gmra.mrb[0].mxu0 %v125
  %v319 = vpop.f32.mrb[0].mxu0
  %v320 = vadd.f32 %v78, %v319
  %v321 = vpop.f32.mrb[0].mxu0
  %v322 = vadd.f32 %v82, %v321
  %323 = vmatprep.mubr.f32.mxu0 0.0
  %324 = vmatmul.mubr.f32.gmra.mrb[0].mxu0 %v128
  %v325 = vpop.f32.mrb[0].mxu0
  %v326 = vadd.f32 %v78, %v325
  %v327 = vpop.f32.mrb[0].mxu0
  %v328 = vadd.f32 %v82, %v327
  %329 = vmatprep.mubr.f32.mxu0 0.0
  %330 = vmatmul.mubr.f32.gmra.mrb[0].mxu0 %v131
  %v331 = vpop.f32.mrb[0].mxu0
  %v332 = vadd.f32 %v78, %v331
  %v333 = vpop.f32.mrb[0].mxu0
  %v334 = vadd.f32 %v82, %v333
  %335 = vmatprep.mubr.f32.mxu0 0.0
  %336 = vmatmul.mubr.f32.gmra.mrb[0].mxu0 %v134
  %v337 = vpop.f32.mrb[0].mxu0
  %v338 = vadd.f32 %v78, %v337
  %v339 = vpop.f32.mrb[0].mxu0
  %v340 = vadd.f32 %v82, %v339
  %341 = vmatprep.mubr.f32.mxu0 0.0
  %342 = vmatmul.mubr.f32.gmra.mrb[0].mxu0 %v137
  %v343 = vpop.f32.mrb[0].mxu0
  %v344 = vadd.f32 %v78, %v343
  %v345 = vpop.f32.mrb[0].mxu0
  %v346 = vadd.f32 %v82, %v345
  %347 = vmatprep.mubr.f32.mxu0 0.0
  %348 = vmatmul.mubr.f32.gmra.mrb[0].mxu0 %v140
  %v349 = vpop.f32.mrb[0].mxu0
  %v350 = vadd.f32 %v78, %v349
  %v351 = vpop.f32.mrb[0].mxu0
  %v352 = vadd.f32 %v82, %v351
  %353 = vmatprep.mubr.f32.mxu0 0.0
  %354 = vmatmul.mubr.f32.gmra.mrb[0].mxu0 %v143
  %v355 = vpop.f32.mrb[0].mxu0
  %v356 = vadd.f32 %v78, %v355
  %v357 = vpop.f32.mrb[0].mxu0
  %v358 = vadd.f32 %v82, %v357
  %359 = vmatprep.mubr.f32.mxu0 0.0
  %360 = vmatmul.mubr.f32.gmra.mrb[0].mxu0 %v146
  %v361 = vpop.f32.mrb[0].mxu0
  %v362 = vadd.f32 %v78, %v361
  %v363 = vpop.f32.mrb[0].mxu0
  %v364 = vadd.f32 %v82, %v363
  %365 = vmatprep.mubr.f32.mxu0 0.0
  %366 = vmatmul.mubr.f32.gmra.mrb[0].mxu0 %v149
  %v367 = vpop.f32.mrb[0].mxu0
  %v368 = vadd.f32 %v78, %v367
  %v369 = vpop.f32.mrb[0].mxu0
  %v370 = vadd.f32 %v82, %v369
  %371 = vmatprep.mubr.f32.mxu0 0.0
  %372 = vmatmul.mubr.f32.gmra.mrb[0].mxu0 %v152
  %v373 = vpop.f32.mrb[0].mxu0
  %v374 = vadd.f32 %v78, %v373
  %v375 = vpop.f32.mrb[0].mxu0
  %v376 = vadd.f32 %v82, %v375
  %377 = vmatprep.mubr.f32.mxu0 0.0
  %378 = vmatmul.mubr.f32.gmra.mrb[0].mxu0 %v155
  %v379 = vpop.f32.mrb[0].mxu0
  %v380 = vadd.f32 %v78, %v379
  %v381 = vpop.f32.mrb[0].mxu0
  %v382 = vadd.f32 %v82, %v381
  %383 = vmatprep.mubr.f32.mxu0 0.0
  %384 = vmatmul.mubr.f32.gmra.mrb[0].mxu0 %v158
  %v385 = vpop.f32.mrb[0].mxu0
  %v386 = vadd.f32 %v78, %v385
  %v387 = vpop.f32.mrb[0].mxu0
  %v388 = vadd.f32 %v82, %v387
  %389 = vmatprep.mubr.f32.mxu0 0.0
  %390 = vmatmul.mubr.f32.gmra.mrb[0].mxu0 %v161
  %v391 = vpop.f32.mrb[0].mxu0
  %v392 = vadd.f32 %v78, %v391
  %v393 = vpop.f32.mrb[0].mxu0
  %v394 = vadd.f32 %v82, %v393
  %395 = vmatprep.mubr.f32.mxu0 0.0
  %396 = vmatmul.mubr.f32.gmra.mrb[0].mxu0 %v164
  %v397 = vpop.f32.mrb[0].mxu0
  %v398 = vadd.f32 %v78, %v397
  %v399 = vpop.f32.mrb[0].mxu0
  %v400 = vadd.f32 %v82, %v399
  %401 = vmatprep.mubr.f32.mxu0 0.0
  %402 = vmatmul.mubr.f32.gmra.mrb[0].mxu0 %v167
  %v403 = vpop.f32.mrb[0].mxu0
  %v404 = vadd.f32 %v78, %v403
  %v405 = vpop.f32.mrb[0].mxu0
  %v406 = vadd.f32 %v82, %v405
  %407 = vmatprep.mubr.f32.mxu0 0.0
  %408 = vmatmul.mubr.f32.gmra.mrb[0].mxu0 %v170
  %v409 = vpop.f32.mrb[0].mxu0
  %v410 = vadd.f32 %v78, %v409
  %v411 = vpop.f32.mrb[0].mxu0
  %v412 = vadd.f32 %v82, %v411
  %413 = vmatprep.mubr.f32.mxu0 0.0
  %414 = vmatmul.mubr.f32.gmra.mrb[0].mxu0 %v173
  %v415 = vpop.f32.mrb[0].mxu0
  %v416 = vadd.f32 %v78, %v415
  %v417 = vpop.f32.mrb[0].mxu0
  %v418 = vadd.f32 %v82, %v417
  %419 = vmatprep.mubr.f32.mxu0 0.0
  %420 = vmatmul.mubr.f32.gmra.mrb[0].mxu0 %v176
  %v421 = vpop.f32.mrb[0].mxu0
  %v422 = vadd.f32 %v78, %v421
  %v423 = vpop.f32.mrb[0].mxu0
  %v424 = vadd.f32 %v82, %v423
  %425 = vmatprep.mubr.f32.mxu0 0.0
  %426 = vmatmul.mubr.f32.gmra.mrb[0].mxu0 %v179
  %v427 = vpop.f32.mrb[0].mxu0
  %v428 = vadd.f32 %v78, %v427
  %v429 = vpop.f32.mrb[0].mxu0
  %v430 = vadd.f32 %v82, %v429
  %431 = vmatprep.mubr.f32.mxu0 0.0
  %432 = vmatmul.mubr.f32.gmra.mrb[0].mxu0 %v182
  %v433 = vpop.f32.mrb[0].mxu0
  %v434 = vadd.f32 %v78, %v433
  %v435 = vpop.f32.mrb[0].mxu0
  %v436 = vadd.f32 %v82, %v435
  %437 = vmatprep.mubr.f32.mxu0 0.0
  %438 = vmatmul.mubr.f32.gmra.mrb[0].mxu0 %v185
  %v439 = vpop.f32.mrb[0].mxu0
  %v440 = vadd.f32 %v78, %v439
  %v441 = vpop.f32.mrb[0].mxu0
  %v442 = vadd.f32 %v82, %v441
  %443 = vdwg.mxu0
  %444 = vmatprep.subr.mxu0 0.0
  %445 = vmatpush1.msra.mxu0 %v51
  %446 = vmatprep.subr.mxu0 0.0
  %447 = vmatpush1.msra.mxu0 %v54
  %448 = vmatprep.subr.mxu0 0.0
  %449 = vmatpush1.msra.mxu0 %v57
  %450 = vmatprep.subr.mxu0 0.0
  %451 = vmatpush1.msra.mxu0 %v60
  %452 = vmatprep.subr.mxu0 0.0
  %453 = vmatpush1.msra.mxu0 %v63
  %454 = vmatprep.subr.mxu0 0.0
  %455 = vmatpush1.msra.mxu0 %v66
  %456 = vmatprep.subr.mxu0 0.0
  %457 = vmatpush1.msra.mxu0 %v69
  %458 = vmatprep.subr.mxu0 0.0
  %459 = vmatpush1.msra.mxu0 %v72
  %460 = vmatprep.subr.mxu0 0.0
  %461 = vmatpush1.msra.mxu0 0.0
  %462 = vmatprep.subr.mxu0 0.0
  %463 = vmatpush1.msra.mxu0 0.0
  %464 = vmatprep.subr.mxu0 0.0
  %465 = vmatpush1.msra.mxu0 0.0
  %466 = vmatprep.subr.mxu0 0.0
  %467 = vmatpush1.msra.mxu0 0.0
  %468 = vmatprep.subr.mxu0 0.0
  %469 = vmatpush1.msra.mxu0 0.0
  %470 = vmatprep.subr.mxu0 0.0
  %471 = vmatpush1.msra.mxu0 0.0
  %472 = vmatprep.subr.mxu0 0.0
  %473 = vmatpush1.msra.mxu0 0.0
  %474 = vmatprep.subr.mxu0 0.0
  %475 = vmatpush1.msra.mxu0 0.0
  %476 = vmatprep.subr.mxu0 0.0
  %477 = vmatpush1.msra.mxu0 0.0
  %478 = vmatprep.subr.mxu0 0.0
  %479 = vmatpush1.msra.mxu0 0.0
  %480 = vmatprep.subr.mxu0 0.0
  %481 = vmatpush1.msra.mxu0 0.0
  %482 = vmatprep.subr.mxu0 0.0
  %483 = vmatpush1.msra.mxu0 0.0
  %484 = vmatprep.subr.mxu0 0.0
  %485 = vmatpush1.msra.mxu0 0.0
  %486 = vmatprep.subr.mxu0 0.0
  %487 = vmatpush1.msra.mxu0 0.0
  %488 = vmatprep.subr.mxu0 0.0
  %489 = vmatpush1.msra.mxu0 0.0
  %490 = vmatprep.subr.mxu0 0.0
  %491 = vmatpush1.msra.mxu0 0.0
  %492 = vmatprep.subr.mxu0 0.0
  %493 = vmatpush1.msra.mxu0 0.0
  %494 = vmatprep.subr.mxu0 0.0
  %495 = vmatpush1.msra.mxu0 0.0
  %496 = vmatprep.subr.mxu0 0.0
  %497 = vmatpush1.msra.mxu0 0.0
  %498 = vmatprep.subr.mxu0 0.0
  %499 = vmatpush1.msra.mxu0 0.0
  %500 = vmatprep.subr.mxu0 0.0
  %501 = vmatpush1.msra.mxu0 0.0
  %502 = vmatprep.subr.mxu0 0.0
  %503 = vmatpush1.msra.mxu0 0.0
  %504 = vmatprep.subr.mxu0 0.0
  %505 = vmatpush1.msra.mxu0 0.0
  %506 = vmatprep.subr.mxu0 0.0
  %507 = vmatpush1.msra.mxu0 0.0
  %508 = vmatprep.mubr.f32.mxu0 0.0
  %509 = vmatmul.mubr.f32.gmra.mrb[0].mxu0 %v92
  %v510 = vpop.f32.mrb[0].mxu0
  %v511 = vadd.f32 %v86, %v510
  %v512 = vpop.f32.mrb[0].mxu0
  %513 = vmatprep.mubr.f32.mxu0 0.0
  %514 = vmatmul.mubr.f32.gmra.mrb[0].mxu0 %v95
  %v515 = vpop.f32.mrb[0].mxu0
  %v516 = vadd.f32 %v86, %v515
  %v517 = vpop.f32.mrb[0].mxu0
  %518 = vmatprep.mubr.f32.mxu0 0.0
  %519 = vmatmul.mubr.f32.gmra.mrb[0].mxu0 %v98
  %v520 = vpop.f32.mrb[0].mxu0
  %v521 = vadd.f32 %v86, %v520
  %v522 = vpop.f32.mrb[0].mxu0
  %523 = vmatprep.mubr.f32.mxu0 0.0
  %524 = vmatmul.mubr.f32.gmra.mrb[0].mxu0 %v101
  %v525 = vpop.f32.mrb[0].mxu0
  %v526 = vadd.f32 %v86, %v525
  %v527 = vpop.f32.mrb[0].mxu0
  %528 = vmatprep.mubr.f32.mxu0 0.0
  %529 = vmatmul.mubr.f32.gmra.mrb[0].mxu0 %v104
  %v530 = vpop.f32.mrb[0].mxu0
  %v531 = vadd.f32 %v86, %v530
  %v532 = vpop.f32.mrb[0].mxu0
  %533 = vmatprep.mubr.f32.mxu0 0.0
  %534 = vmatmul.mubr.f32.gmra.mrb[0].mxu0 %v107
  %v535 = vpop.f32.mrb[0].mxu0
  %v536 = vadd.f32 %v86, %v535
  %v537 = vpop.f32.mrb[0].mxu0
  %538 = vmatprep.mubr.f32.mxu0 0.0
  %539 = vmatmul.mubr.f32.gmra.mrb[0].mxu0 %v110
  %v540 = vpop.f32.mrb[0].mxu0
  %v541 = vadd.f32 %v86, %v540
  %v542 = vpop.f32.mrb[0].mxu0
  %543 = vmatprep.mubr.f32.mxu0 0.0
  %544 = vmatmul.mubr.f32.gmra.mrb[0].mxu0 %v113
  %v545 = vpop.f32.mrb[0].mxu0
  %v546 = vadd.f32 %v86, %v545
  %v547 = vpop.f32.mrb[0].mxu0
  %548 = vmatprep.mubr.f32.mxu0 0.0
  %549 = vmatmul.mubr.f32.gmra.mrb[0].mxu0 %v116
  %v550 = vpop.f32.mrb[0].mxu0
  %v551 = vadd.f32 %v86, %v550
  %v552 = vpop.f32.mrb[0].mxu0
  %553 = vmatprep.mubr.f32.mxu0 0.0
  %554 = vmatmul.mubr.f32.gmra.mrb[0].mxu0 %v119
  %v555 = vpop.f32.mrb[0].mxu0
  %v556 = vadd.f32 %v86, %v555
  %v557 = vpop.f32.mrb[0].mxu0
  %558 = vmatprep.mubr.f32.mxu0 0.0
  %559 = vmatmul.mubr.f32.gmra.mrb[0].mxu0 %v122
  %v560 = vpop.f32.mrb[0].mxu0
  %v561 = vadd.f32 %v86, %v560
  %v562 = vpop.f32.mrb[0].mxu0
  %563 = vmatprep.mubr.f32.mxu0 0.0
  %564 = vmatmul.mubr.f32.gmra.mrb[0].mxu0 %v125
  %v565 = vpop.f32.mrb[0].mxu0
  %v566 = vadd.f32 %v86, %v565
  %v567 = vpop.f32.mrb[0].mxu0
  %568 = vmatprep.mubr.f32.mxu0 0.0
  %569 = vmatmul.mubr.f32.gmra.mrb[0].mxu0 %v128
  %v570 = vpop.f32.mrb[0].mxu0
  %v571 = vadd.f32 %v86, %v570
  %v572 = vpop.f32.mrb[0].mxu0
  %573 = vmatprep.mubr.f32.mxu0 0.0
  %574 = vmatmul.mubr.f32.gmra.mrb[0].mxu0 %v131
  %v575 = vpop.f32.mrb[0].mxu0
  %v576 = vadd.f32 %v86, %v575
  %v577 = vpop.f32.mrb[0].mxu0
  %578 = vmatprep.mubr.f32.mxu0 0.0
  %579 = vmatmul.mubr.f32.gmra.mrb[0].mxu0 %v134
  %v580 = vpop.f32.mrb[0].mxu0
  %v581 = vadd.f32 %v86, %v580
  %v582 = vpop.f32.mrb[0].mxu0
  %583 = vmatprep.mubr.f32.mxu0 0.0
  %584 = vmatmul.mubr.f32.gmra.mrb[0].mxu0 %v137
  %v585 = vpop.f32.mrb[0].mxu0
  %v586 = vadd.f32 %v86, %v585
  %v587 = vpop.f32.mrb[0].mxu0
  %588 = vmatprep.mubr.f32.mxu0 0.0
  %589 = vmatmul.mubr.f32.gmra.mrb[0].mxu0 %v140
  %v590 = vpop.f32.mrb[0].mxu0
  %v591 = vadd.f32 %v86, %v590
  %v592 = vpop.f32.mrb[0].mxu0
  %593 = vmatprep.mubr.f32.mxu0 0.0
  %594 = vmatmul.mubr.f32.gmra.mrb[0].mxu0 %v143
  %v595 = vpop.f32.mrb[0].mxu0
  %v596 = vadd.f32 %v86, %v595
  %v597 = vpop.f32.mrb[0].mxu0
  %598 = vmatprep.mubr.f32.mxu0 0.0
  %599 = vmatmul.mubr.f32.gmra.mrb[0].mxu0 %v146
  %v600 = vpop.f32.mrb[0].mxu0
  %v601 = vadd.f32 %v86, %v600
  %v602 = vpop.f32.mrb[0].mxu0
  %603 = vmatprep.mubr.f32.mxu0 0.0
  %604 = vmatmul.mubr.f32.gmra.mrb[0].mxu0 %v149
  %v605 = vpop.f32.mrb[0].mxu0
  %v606 = vadd.f32 %v86, %v605
  %v607 = vpop.f32.mrb[0].mxu0
  %608 = vmatprep.mubr.f32.mxu0 0.0
  %609 = vmatmul.mubr.f32.gmra.mrb[0].mxu0 %v152
  %v610 = vpop.f32.mrb[0].mxu0
  %v611 = vadd.f32 %v86, %v610
  %v612 = vpop.f32.mrb[0].mxu0
  %613 = vmatprep.mubr.f32.mxu0 0.0
  %614 = vmatmul.mubr.f32.gmra.mrb[0].mxu0 %v155
  %v615 = vpop.f32.mrb[0].mxu0
  %v616 = vadd.f32 %v86, %v615
  %v617 = vpop.f32.mrb[0].mxu0
  %618 = vmatprep.mubr.f32.mxu0 0.0
  %619 = vmatmul.mubr.f32.gmra.mrb[0].mxu0 %v158
  %v620 = vpop.f32.mrb[0].mxu0
  %v621 = vadd.f32 %v86, %v620
  %v622 = vpop.f32.mrb[0].mxu0
  %623 = vmatprep.mubr.f32.mxu0 0.0
  %624 = vmatmul.mubr.f32.gmra.mrb[0].mxu0 %v161
  %v625 = vpop.f32.mrb[0].mxu0
  %v626 = vadd.f32 %v86, %v625
  %v627 = vpop.f32.mrb[0].mxu0
  %628 = vmatprep.mubr.f32.mxu0 0.0
  %629 = vmatmul.mubr.f32.gmra.mrb[0].mxu0 %v164
  %v630 = vpop.f32.mrb[0].mxu0
  %v631 = vadd.f32 %v86, %v630
  %v632 = vpop.f32.mrb[0].mxu0
  %633 = vmatprep.mubr.f32.mxu0 0.0
  %634 = vmatmul.mubr.f32.gmra.mrb[0].mxu0 %v167
  %v635 = vpop.f32.mrb[0].mxu0
  %v636 = vadd.f32 %v86, %v635
  %v637 = vpop.f32.mrb[0].mxu0
  %638 = vmatprep.mubr.f32.mxu0 0.0
  %639 = vmatmul.mubr.f32.gmra.mrb[0].mxu0 %v170
  %v640 = vpop.f32.mrb[0].mxu0
  %v641 = vadd.f32 %v86, %v640
  %v642 = vpop.f32.mrb[0].mxu0
  %643 = vmatprep.mubr.f32.mxu0 0.0
  %644 = vmatmul.mubr.f32.gmra.mrb[0].mxu0 %v173
  %v645 = vpop.f32.mrb[0].mxu0
  %v646 = vadd.f32 %v86, %v645
  %v647 = vpop.f32.mrb[0].mxu0
  %648 = vmatprep.mubr.f32.mxu0 0.0
  %649 = vmatmul.mubr.f32.gmra.mrb[0].mxu0 %v176
  %v650 = vpop.f32.mrb[0].mxu0
  %v651 = vadd.f32 %v86, %v650
  %v652 = vpop.f32.mrb[0].mxu0
  %653 = vmatprep.mubr.f32.mxu0 0.0
  %654 = vmatmul.mubr.f32.gmra.mrb[0].mxu0 %v179
  %v655 = vpop.f32.mrb[0].mxu0
  %v656 = vadd.f32 %v86, %v655
  %v657 = vpop.f32.mrb[0].mxu0
  %658 = vmatprep.mubr.f32.mxu0 0.0
  %659 = vmatmul.mubr.f32.gmra.mrb[0].mxu0 %v182
  %v660 = vpop.f32.mrb[0].mxu0
  %v661 = vadd.f32 %v86, %v660
  %v662 = vpop.f32.mrb[0].mxu0
  %663 = vmatprep.mubr.f32.mxu0 0.0
  %664 = vmatmul.mubr.f32.gmra.mrb[0].mxu0 %v185
  %v665 = vpop.f32.mrb[0].mxu0
  %v666 = vadd.f32 %v86, %v665
  %v667 = vpop.f32.mrb[0].mxu0
  %668 = vdwg.mxu0
  %669 = vst [vmem:[#allocation2] sm:$0xff] %v254
  %670 = vst [vmem:[#allocation2 + $0x8] sm:$0xff] %v256
  %671 = vst [vmem:[#allocation2 + $0x10] sm:$0xff] %v511
  %672 = vst [vmem:[#allocation2 + $0x18] sm:$0xff] %v260
  %673 = vst [vmem:[#allocation2 + $0x20] sm:$0xff] %v262
  %674 = vst [vmem:[#allocation2 + $0x28] sm:$0xff] %v516
  %675 = vst [vmem:[#allocation2 + $0x30] sm:$0xff] %v266
  %676 = vst [vmem:[#allocation2 + $0x38] sm:$0xff] %v268
  %677 = vst [vmem:[#allocation2 + $0x40] sm:$0xff] %v521
  %678 = vst [vmem:[#allocation2 + $0x48] sm:$0xff] %v272
  %679 = vst [vmem:[#allocation2 + $0x50] sm:$0xff] %v274
  %680 = vst [vmem:[#allocation2 + $0x58] sm:$0xff] %v526
  %681 = vst [vmem:[#allocation2 + $0x60] sm:$0xff] %v278
  %682 = vst [vmem:[#allocation2 + $0x68] sm:$0xff] %v280
  %683 = vst [vmem:[#allocation2 + $0x70] sm:$0xff] %v531
  %684 = vst [vmem:[#allocation2 + $0x78] sm:$0xff] %v284
  %685 = vst [vmem:[#allocation2 + $0x80] sm:$0xff] %v286
  %686 = vst [vmem:[#allocation2 + $0x88] sm:$0xff] %v536
  %687 = vst [vmem:[#allocation2 + $0x90] sm:$0xff] %v290
  %688 = vst [vmem:[#allocation2 + $0x98] sm:$0xff] %v292
  %689 = vst [vmem:[#allocation2 + $0xa0] sm:$0xff] %v541
  %690 = vst [vmem:[#allocation2 + $0xa8] sm:$0xff] %v296
  %691 = vst [vmem:[#allocation2 + $0xb0] sm:$0xff] %v298
  %692 = vst [vmem:[#allocation2 + $0xb8] sm:$0xff] %v546
  %693 = vst [vmem:[#allocation2 + $0xc0] sm:$0xff] %v302
  %694 = vst [vmem:[#allocation2 + $0xc8] sm:$0xff] %v304
  %695 = vst [vmem:[#allocation2 + $0xd0] sm:$0xff] %v551
  %696 = vst [vmem:[#allocation2 + $0xd8] sm:$0xff] %v308
  %697 = vst [vmem:[#allocation2 + $0xe0] sm:$0xff] %v310
  %698 = vst [vmem:[#allocation2 + $0xe8] sm:$0xff] %v556
  %699 = vst [vmem:[#allocation2 + $0xf0] sm:$0xff] %v314
  %700 = vst [vmem:[#allocation2 + $0xf8] sm:$0xff] %v316
  %701 = vst [vmem:[#allocation2 + $0x100] sm:$0xff] %v561
  %702 = vst [vmem:[#allocation2 + $0x108] sm:$0xff] %v320
  %703 = vst [vmem:[#allocation2 + $0x110] sm:$0xff] %v322
  %704 = vst [vmem:[#allocation2 + $0x118] sm:$0xff] %v566
  %705 = vst [vmem:[#allocation2 + $0x120] sm:$0xff] %v326
  %706 = vst [vmem:[#allocation2 + $0x128] sm:$0xff] %v328
  %707 = vst [vmem:[#allocation2 + $0x130] sm:$0xff] %v571
  %708 = vst [vmem:[#allocation2 + $0x138] sm:$0xff] %v332
  %709 = vst [vmem:[#allocation2 + $0x140] sm:$0xff] %v334
  %710 = vst [vmem:[#allocation2 + $0x148] sm:$0xff] %v576
  %711 = vst [vmem:[#allocation2 + $0x150] sm:$0xff] %v338
  %712 = vst [vmem:[#allocation2 + $0x158] sm:$0xff] %v340
  %713 = vst [vmem:[#allocation2 + $0x160] sm:$0xff] %v581
  %714 = vst [vmem:[#allocation2 + $0x168] sm:$0xff] %v344
  %715 = vst [vmem:[#allocation2 + $0x170] sm:$0xff] %v346
  %716 = vst [vmem:[#allocation2 + $0x178] sm:$0xff] %v586
  %717 = vst [vmem:[#allocation2 + $0x180] sm:$0xff] %v350
  %718 = vst [vmem:[#allocation2 + $0x188] sm:$0xff] %v352
  %719 = vst [vmem:[#allocation2 + $0x190] sm:$0xff] %v591
  %720 = vst [vmem:[#allocation2 + $0x198] sm:$0xff] %v356
  %721 = vst [vmem:[#allocation2 + $0x1a0] sm:$0xff] %v358
  %722 = vst [vmem:[#allocation2 + $0x1a8] sm:$0xff] %v596
  %723 = vst [vmem:[#allocation2 + $0x1b0] sm:$0xff] %v362
  %724 = vst [vmem:[#allocation2 + $0x1b8] sm:$0xff] %v364
  %725 = vst [vmem:[#allocation2 + $0x1c0] sm:$0xff] %v601
  %726 = vst [vmem:[#allocation2 + $0x1c8] sm:$0xff] %v368
  %727 = vst [vmem:[#allocation2 + $0x1d0] sm:$0xff] %v370
  %728 = vst [vmem:[#allocation2 + $0x1d8] sm:$0xff] %v606
  %729 = vst [vmem:[#allocation2 + $0x1e0] sm:$0xff] %v374
  %730 = vst [vmem:[#allocation2 + $0x1e8] sm:$0xff] %v376
  %731 = vst [vmem:[#allocation2 + $0x1f0] sm:$0xff] %v611
  %732 = vst [vmem:[#allocation2 + $0x1f8] sm:$0xff] %v380
  %733 = vst [vmem:[#allocation2 + $0x200] sm:$0xff] %v382
  %734 = vst [vmem:[#allocation2 + $0x208] sm:$0xff] %v616
  %735 = vst [vmem:[#allocation2 + $0x210] sm:$0xff] %v386
  %736 = vst [vmem:[#allocation2 + $0x218] sm:$0xff] %v388
  %737 = vst [vmem:[#allocation2 + $0x220] sm:$0xff] %v621
  %738 = vst [vmem:[#allocation2 + $0x228] sm:$0xff] %v392
  %739 = vst [vmem:[#allocation2 + $0x230] sm:$0xff] %v394
  %740 = vst [vmem:[#allocation2 + $0x238] sm:$0xff] %v626
  %741 = vst [vmem:[#allocation2 + $0x240] sm:$0xff] %v398
  %742 = vst [vmem:[#allocation2 + $0x248] sm:$0xff] %v400
  %743 = vst [vmem:[#allocation2 + $0x250] sm:$0xff] %v631
  %744 = vst [vmem:[#allocation2 + $0x258] sm:$0xff] %v404
  %745 = vst [vmem:[#allocation2 + $0x260] sm:$0xff] %v406
  %746 = vst [vmem:[#allocation2 + $0x268] sm:$0xff] %v636
  %747 = vst [vmem:[#allocation2 + $0x270] sm:$0xff] %v410
  %748 = vst [vmem:[#allocation2 + $0x278] sm:$0xff] %v412
  %749 = vst [vmem:[#allocation2 + $0x280] sm:$0xff] %v641
  %750 = vst [vmem:[#allocation2 + $0x288] sm:$0xff] %v416
  %751 = vst [vmem:[#allocation2 + $0x290] sm:$0xff] %v418
  %752 = vst [vmem:[#allocation2 + $0x298] sm:$0xff] %v646
  %753 = vst [vmem:[#allocation2 + $0x2a0] sm:$0xff] %v422
  %754 = vst [vmem:[#allocation2 + $0x2a8] sm:$0xff] %v424
  %755 = vst [vmem:[#allocation2 + $0x2b0] sm:$0xff] %v651
  %756 = vst [vmem:[#allocation2 + $0x2b8] sm:$0xff] %v428
  %757 = vst [vmem:[#allocation2 + $0x2c0] sm:$0xff] %v430
  %758 = vst [vmem:[#allocation2 + $0x2c8] sm:$0xff] %v656
  %759 = vst [vmem:[#allocation2 + $0x2d0] sm:$0xff] %v434
  %760 = vst [vmem:[#allocation2 + $0x2d8] sm:$0xff] %v436
  %761 = vst [vmem:[#allocation2 + $0x2e0] sm:$0xff] %v661
  %762 = vst [vmem:[#allocation2 + $0x2e8] sm:$0xff] %v440
  %763 = vst [vmem:[#allocation2 + $0x2f0] sm:$0xff] %v442
  %764 = vst [vmem:[#allocation2 + $0x2f8] sm:$0xff] %v666
  %v765 = vlaneseq
  %v766 = vshrl.u32 %v765, 7
  %v767 = vadd.s32 %v766, 8
  %v768 = vadd.s32 %v766, 16
  %v769 = vadd.s32 %v766, 24
  %v770 = vadd.s32 %v766, 32
  %v771 = vadd.s32 %v766, 40
  %v772 = vadd.s32 %v766, 48
  %v773 = vadd.s32 %v766, 56
  %v774 = vadd.s32 %v766, 64
  %v775 = vadd.s32 %v766, 72
  %v776 = vadd.s32 %v766, 80
  %v777 = vadd.s32 %v766, 88
  %v778 = vadd.s32 %v766, 96
  %v779 = vadd.s32 %v766, 104
  %v780 = vadd.s32 %v766, 112
  %v781 = vadd.s32 %v766, 120
  %v782 = vlaneseq
  %v783 = vand.u32 %v782, 127
  %v784 = vsub.s32 %v783, %v766
  %v785 = vsub.s32 %v783, %v767
  %v786 = vsub.s32 %v783, %v768
  %v787 = vsub.s32 %v783, %v769
  %v788 = vsub.s32 %v783, %v770
  %v789 = vsub.s32 %v783, %v771
  %v790 = vsub.s32 %v783, %v772
  %v791 = vsub.s32 %v783, %v773
  %v792 = vsub.s32 %v783, %v774
  %v793 = vsub.s32 %v783, %v775
  %v794 = vsub.s32 %v783, %v776
  %v795 = vsub.s32 %v783, %v777
  %v796 = vsub.s32 %v783, %v778
  %v797 = vsub.s32 %v783, %v779
  %v798 = vsub.s32 %v783, %v780
  %v799 = vsub.s32 %v783, %v781
  %vm800 = vcmp.ge.s32.totalorder %v784, 4294967293
  %vm801 = vcmp.ge.s32.totalorder %v785, 4294967293
  %vm802 = vcmp.ge.s32.totalorder %v786, 4294967293
  %vm803 = vcmp.ge.s32.totalorder %v787, 4294967293
  %vm804 = vcmp.ge.s32.totalorder %v788, 4294967293
  %vm805 = vcmp.ge.s32.totalorder %v789, 4294967293
  %vm806 = vcmp.ge.s32.totalorder %v790, 4294967293
  %vm807 = vcmp.ge.s32.totalorder %v791, 4294967293
  %vm808 = vcmp.ge.s32.totalorder %v792, 4294967293
  %vm809 = vcmp.ge.s32.totalorder %v793, 4294967293
  %vm810 = vcmp.ge.s32.totalorder %v794, 4294967293
  %vm811 = vcmp.ge.s32.totalorder %v795, 4294967293
  %vm812 = vcmp.ge.s32.totalorder %v796, 4294967293
  %vm813 = vcmp.ge.s32.totalorder %v797, 4294967293
  %vm814 = vcmp.ge.s32.totalorder %v798, 4294967293
  %vm815 = vcmp.ge.s32.totalorder %v799, 4294967293
  %vm816 = vcmp.le.s32.totalorder %v784, 3
  %vm817 = vcmp.le.s32.totalorder %v785, 3
  %vm818 = vcmp.le.s32.totalorder %v786, 3
  %vm819 = vcmp.le.s32.totalorder %v787, 3
  %vm820 = vcmp.le.s32.totalorder %v788, 3
  %vm821 = vcmp.le.s32.totalorder %v789, 3
  %vm822 = vcmp.le.s32.totalorder %v790, 3
  %vm823 = vcmp.le.s32.totalorder %v791, 3
  %vm824 = vcmp.le.s32.totalorder %v792, 3
  %vm825 = vcmp.le.s32.totalorder %v793, 3
  %vm826 = vcmp.le.s32.totalorder %v794, 3
  %vm827 = vcmp.le.s32.totalorder %v795, 3
  %vm828 = vcmp.le.s32.totalorder %v796, 3
  %vm829 = vcmp.le.s32.totalorder %v797, 3
  %vm830 = vcmp.le.s32.totalorder %v798, 3
  %vm831 = vcmp.le.s32.totalorder %v799, 3
  %vm832 = vmand %vm800, %vm816
  %vm833 = vmand %vm801, %vm817
  %vm834 = vmand %vm802, %vm818
  %vm835 = vmand %vm803, %vm819
  %vm836 = vmand %vm804, %vm820
  %vm837 = vmand %vm805, %vm821
  %vm838 = vmand %vm806, %vm822
  %vm839 = vmand %vm807, %vm823
  %vm840 = vmand %vm808, %vm824
  %vm841 = vmand %vm809, %vm825
  %vm842 = vmand %vm810, %vm826
  %vm843 = vmand %vm811, %vm827
  %vm844 = vmand %vm812, %vm828
  %vm845 = vmand %vm813, %vm829
  %vm846 = vmand %vm814, %vm830
  %vm847 = vmand %vm815, %vm831
  %v848 = vsel %vm832, 0.0, -1e+30
  %v849 = vsel %vm833, 0.0, -1e+30
  %v850 = vsel %vm834, 0.0, -1e+30
  %v851 = vsel %vm835, 0.0, -1e+30
  %v852 = vsel %vm836, 0.0, -1e+30
  %v853 = vsel %vm837, 0.0, -1e+30
  %v854 = vsel %vm838, 0.0, -1e+30
  %v855 = vsel %vm839, 0.0, -1e+30
  %v856 = vsel %vm840, 0.0, -1e+30
  %v857 = vsel %vm841, 0.0, -1e+30
  %v858 = vsel %vm842, 0.0, -1e+30
  %v859 = vsel %vm843, 0.0, -1e+30
  %v860 = vsel %vm844, 0.0, -1e+30
  %v861 = vsel %vm845, 0.0, -1e+30
  %v862 = vsel %vm846, 0.0, -1e+30
  %v863 = vsel %vm847, 0.0, -1e+30
  %864 = vst [vmem:[#allocation3] sm:$0xff] %v848
  %865 = vst [vmem:[#allocation3 + $0x8] sm:$0xff] %v849
  %866 = vst [vmem:[#allocation3 + $0x10] sm:$0xff] %v850
  %867 = vst [vmem:[#allocation3 + $0x18] sm:$0xff] %v851
  %868 = vst [vmem:[#allocation3 + $0x20] sm:$0xff] %v852
  %869 = vst [vmem:[#allocation3 + $0x28] sm:$0xff] %v853
  %870 = vst [vmem:[#allocation3 + $0x30] sm:$0xff] %v854
  %871 = vst [vmem:[#allocation3 + $0x38] sm:$0xff] %v855
  %872 = vst [vmem:[#allocation3 + $0x40] sm:$0xff] %v856
  %873 = vst [vmem:[#allocation3 + $0x48] sm:$0xff] %v857
  %874 = vst [vmem:[#allocation3 + $0x50] sm:$0xff] %v858
  %875 = vst [vmem:[#allocation3 + $0x58] sm:$0xff] %v859
  %876 = vst [vmem:[#allocation3 + $0x60] sm:$0xff] %v860
  %877 = vst [vmem:[#allocation3 + $0x68] sm:$0xff] %v861
  %878 = vst [vmem:[#allocation3 + $0x70] sm:$0xff] %v862
  %879 = vst [vmem:[#allocation3 + $0x78] sm:$0xff] %v863
  %v880 = vld [vmem:[%s3] sm:$0x1]
  %v881 = vld [vmem:[#allocation2] sm:$0xff]
  %v882 = vld [vmem:[#allocation2 + $0x18] sm:$0xff]
  %v883 = vld [vmem:[#allocation2 + $0x30] sm:$0xff]
  %v884 = vld [vmem:[#allocation2 + $0x48] sm:$0xff]
  %v885 = vld [vmem:[#allocation2 + $0x60] sm:$0xff]
  %v886 = vld [vmem:[#allocation2 + $0x78] sm:$0xff]
  %v887 = vld [vmem:[#allocation2 + $0x90] sm:$0xff]
  %v888 = vld [vmem:[#allocation2 + $0xa8] sm:$0xff]
  %v889 = vld [vmem:[#allocation2 + $0xc0] sm:$0xff]
  %v890 = vld [vmem:[#allocation2 + $0xd8] sm:$0xff]
  %v891 = vld [vmem:[#allocation2 + $0xf0] sm:$0xff]
  %v892 = vld [vmem:[#allocation2 + $0x108] sm:$0xff]
  %v893 = vld [vmem:[#allocation2 + $0x120] sm:$0xff]
  %v894 = vld [vmem:[#allocation2 + $0x138] sm:$0xff]
  %v895 = vld [vmem:[#allocation2 + $0x150] sm:$0xff]
  %v896 = vld [vmem:[#allocation2 + $0x168] sm:$0xff]
  %v897 = vld [vmem:[#allocation2 + $0x8] sm:$0xff]
  %v898 = vld [vmem:[#allocation2 + $0x20] sm:$0xff]
  %v899 = vld [vmem:[#allocation2 + $0x38] sm:$0xff]
  %v900 = vld [vmem:[#allocation2 + $0x50] sm:$0xff]
  %v901 = vld [vmem:[#allocation2 + $0x68] sm:$0xff]
  %v902 = vld [vmem:[#allocation2 + $0x80] sm:$0xff]
  %v903 = vld [vmem:[#allocation2 + $0x98] sm:$0xff]
  %v904 = vld [vmem:[#allocation2 + $0xb0] sm:$0xff]
  %v905 = vld [vmem:[#allocation2 + $0xc8] sm:$0xff]
  %v906 = vld [vmem:[#allocation2 + $0xe0] sm:$0xff]
  %v907 = vld [vmem:[#allocation2 + $0xf8] sm:$0xff]
  %v908 = vld [vmem:[#allocation2 + $0x110] sm:$0xff]
  %v909 = vld [vmem:[#allocation2 + $0x128] sm:$0xff]
  %v910 = vld [vmem:[#allocation2 + $0x140] sm:$0xff]
  %v911 = vld [vmem:[#allocation2 + $0x158] sm:$0xff]
  %v912 = vld [vmem:[#allocation2 + $0x170] sm:$0xff]
  %v913 = vld [vmem:[#allocation3] sm:$0xff]
  %v914 = vld [vmem:[#allocation3 + $0x8] sm:$0xff]
  %v915 = vld [vmem:[#allocation3 + $0x10] sm:$0xff]
  %v916 = vld [vmem:[#allocation3 + $0x18] sm:$0xff]
  %v917 = vld [vmem:[#allocation3 + $0x20] sm:$0xff]
  %v918 = vld [vmem:[#allocation3 + $0x28] sm:$0xff]
  %v919 = vld [vmem:[#allocation3 + $0x30] sm:$0xff]
  %v920 = vld [vmem:[#allocation3 + $0x38] sm:$0xff]
  %v921 = vld [vmem:[#allocation3 + $0x40] sm:$0xff]
  %v922 = vld [vmem:[#allocation3 + $0x48] sm:$0xff]
  %v923 = vld [vmem:[#allocation3 + $0x50] sm:$0xff]
  %v924 = vld [vmem:[#allocation3 + $0x58] sm:$0xff]
  %v925 = vld [vmem:[#allocation3 + $0x60] sm:$0xff]
  %v926 = vld [vmem:[#allocation3 + $0x68] sm:$0xff]
  %v927 = vld [vmem:[#allocation3 + $0x70] sm:$0xff]
  %v928 = vld [vmem:[#allocation3 + $0x78] sm:$0xff]
  %945 = vrot.lane.b32.xlu0 %v881, 64
  %v946 = vpop.permute.xlu0 %945
  %947 = vrot.lane.b32.xlu0 %v882, 64
  %v948 = vpop.permute.xlu0 %947
  %949 = vrot.lane.b32.xlu0 %v883, 64
  %v950 = vpop.permute.xlu0 %949
  %951 = vrot.lane.b32.xlu0 %v884, 64
  %v952 = vpop.permute.xlu0 %951
  %953 = vrot.lane.b32.xlu0 %v885, 64
  %v954 = vpop.permute.xlu0 %953
  %955 = vrot.lane.b32.xlu0 %v886, 64
  %v956 = vpop.permute.xlu0 %955
  %957 = vrot.lane.b32.xlu0 %v887, 64
  %v958 = vpop.permute.xlu0 %957
  %959 = vrot.lane.b32.xlu0 %v888, 64
  %v960 = vpop.permute.xlu0 %959
  %961 = vrot.lane.b32.xlu0 %v889, 64
  %v962 = vpop.permute.xlu0 %961
  %963 = vrot.lane.b32.xlu0 %v890, 64
  %v964 = vpop.permute.xlu0 %963
  %965 = vrot.lane.b32.xlu0 %v891, 64
  %v966 = vpop.permute.xlu0 %965
  %967 = vrot.lane.b32.xlu0 %v892, 64
  %v968 = vpop.permute.xlu0 %967
  %969 = vrot.lane.b32.xlu0 %v893, 64
  %v970 = vpop.permute.xlu0 %969
  %971 = vrot.lane.b32.xlu0 %v894, 64
  %v972 = vpop.permute.xlu0 %971
  %973 = vrot.lane.b32.xlu0 %v895, 64
  %v974 = vpop.permute.xlu0 %973
  %975 = vrot.lane.b32.xlu0 %v896, 64
  %v976 = vpop.permute.xlu0 %975
  %vm977 = vcmask 130048
  %v978 = vsel %vm977, %v881, 0
  %v980 = vsel %vm977, %v882, 0
  %v982 = vsel %vm977, %v883, 0
  %v984 = vsel %vm977, %v884, 0
  %v986 = vsel %vm977, %v885, 0
  %v988 = vsel %vm977, %v886, 0
  %v990 = vsel %vm977, %v887, 0
  %v992 = vsel %vm977, %v888, 0
  %v994 = vsel %vm977, %v889, 0
  %v996 = vsel %vm977, %v890, 0
  %v998 = vsel %vm977, %v891, 0
  %v1000 = vsel %vm977, %v892, 0
  %v1002 = vsel %vm977, %v893, 0
  %v1004 = vsel %vm977, %v894, 0
  %v1006 = vsel %vm977, %v895, 0
  %v1008 = vsel %vm977, %v896, 0
  %v1010 = vsel %vm977, %v946, 0
  %v1012 = vsel %vm977, %v948, 0
  %v1014 = vsel %vm977, %v950, 0
  %v1016 = vsel %vm977, %v952, 0
  %v1018 = vsel %vm977, %v954, 0
  %v1020 = vsel %vm977, %v956, 0
  %v1022 = vsel %vm977, %v958, 0
  %v1024 = vsel %vm977, %v960, 0
  %v1026 = vsel %vm977, %v962, 0
  %v1028 = vsel %vm977, %v964, 0
  %v1030 = vsel %vm977, %v966, 0
  %v1032 = vsel %vm977, %v968, 0
  %v1034 = vsel %vm977, %v970, 0
  %v1036 = vsel %vm977, %v972, 0
  %v1038 = vsel %vm977, %v974, 0
  %v1040 = vsel %vm977, %v976, 0
  %1042 = vmatprep.subr.mxu0 0.0
  %1043 = vmatpush1.xpose.msra.mxu0 %v1010
  %1044 = vmatprep.subr.mxu0 0.0
  %1045 = vmatpush1.xpose.msra.mxu0 %v1012
  %1046 = vmatprep.subr.mxu0 0.0
  %1047 = vmatpush1.xpose.msra.mxu0 %v1014
  %1048 = vmatprep.subr.mxu0 0.0
  %1049 = vmatpush1.xpose.msra.mxu0 %v1016
  %1050 = vmatprep.subr.mxu0 0.0
  %1051 = vmatpush1.xpose.msra.mxu0 %v1018
  %1052 = vmatprep.subr.mxu0 0.0
  %1053 = vmatpush1.xpose.msra.mxu0 %v1020
  %1054 = vmatprep.subr.mxu0 0.0
  %1055 = vmatpush1.xpose.msra.mxu0 %v1022
  %1056 = vmatprep.subr.mxu0 0.0
  %1057 = vmatpush1.xpose.msra.mxu0 %v1024
  %1058 = vmatprep.subr.mxu0 0.0
  %1059 = vmatpush1.xpose.msra.mxu0 %v1026
  %1060 = vmatprep.subr.mxu0 0.0
  %1061 = vmatpush1.xpose.msra.mxu0 %v1028
  %1062 = vmatprep.subr.mxu0 0.0
  %1063 = vmatpush1.xpose.msra.mxu0 %v1030
  %1064 = vmatprep.subr.mxu0 0.0
  %1065 = vmatpush1.xpose.msra.mxu0 %v1032
  %1066 = vmatprep.subr.mxu0 0.0
  %1067 = vmatpush1.xpose.msra.mxu0 %v1034
  %1068 = vmatprep.subr.mxu0 0.0
  %1069 = vmatpush1.xpose.msra.mxu0 %v1036
  %1070 = vmatprep.subr.mxu0 0.0
  %1071 = vmatpush1.xpose.msra.mxu0 %v1038
  %1072 = vmatprep.subr.mxu0 0.0
  %1073 = vmatpush1.xpose.msra.mxu0 %v1040
  %1074 = vmatprep.subr.mxu0 0.0
  %1075 = vmatpush1.xpose.msra.mxu0 0.0
  %1076 = vmatprep.subr.mxu0 0.0
  %1077 = vmatpush1.xpose.msra.mxu0 0.0
  %1078 = vmatprep.subr.mxu0 0.0
  %1079 = vmatpush1.xpose.msra.mxu0 0.0
  %1080 = vmatprep.subr.mxu0 0.0
  %1081 = vmatpush1.xpose.msra.mxu0 0.0
  %1082 = vmatprep.subr.mxu0 0.0
  %1083 = vmatpush1.xpose.msra.mxu0 0.0
  %1084 = vmatprep.subr.mxu0 0.0
  %1085 = vmatpush1.xpose.msra.mxu0 0.0
  %1086 = vmatprep.subr.mxu0 0.0
  %1087 = vmatpush1.xpose.msra.mxu0 0.0
  %1088 = vmatprep.subr.mxu0 0.0
  %1089 = vmatpush1.xpose.msra.mxu0 0.0
  %1090 = vmatprep.subr.mxu0 0.0
  %1091 = vmatpush1.xpose.msra.mxu0 0.0
  %1092 = vmatprep.subr.mxu0 0.0
  %1093 = vmatpush1.xpose.msra.mxu0 0.0
  %1094 = vmatprep.subr.mxu0 0.0
  %1095 = vmatpush1.xpose.msra.mxu0 0.0
  %1096 = vmatprep.subr.mxu0 0.0
  %1097 = vmatpush1.xpose.msra.mxu0 0.0
  %1098 = vmatprep.subr.mxu0 0.0
  %1099 = vmatpush1.xpose.msra.mxu0 0.0
  %1100 = vmatprep.subr.mxu0 0.0
  %1101 = vmatpush1.xpose.msra.mxu0 0.0
  %1102 = vmatprep.subr.mxu0 0.0
  %1103 = vmatpush1.xpose.msra.mxu0 0.0
  %1104 = vmatprep.subr.mxu0 0.0
  %1105 = vmatpush1.xpose.msra.mxu0 0.0
  %1106 = vmatprep.mubr.f32.mxu0 0.0
  %1107 = vmatmul.mubr.f32.gmra.mrb[0].mxu0 %v978
  %v1108 = vpop.f32.mrb[0].mxu0
  %v1109 = vadd.f32 %v913, %v1108
  %v1110 = vpop.f32.mrb[0].mxu0
  %1111 = vmatprep.mubr.f32.mxu0 0.0
  %1112 = vmatmul.mubr.f32.gmra.mrb[0].mxu0 %v980
  %v1113 = vpop.f32.mrb[0].mxu0
  %v1114 = vadd.f32 %v914, %v1113
  %v1115 = vpop.f32.mrb[0].mxu0
  %1116 = vmatprep.mubr.f32.mxu0 0.0
  %1117 = vmatmul.mubr.f32.gmra.mrb[0].mxu0 %v982
  %v1118 = vpop.f32.mrb[0].mxu0
  %v1119 = vadd.f32 %v915, %v1118
  %v1120 = vpop.f32.mrb[0].mxu0
  %1121 = vmatprep.mubr.f32.mxu0 0.0
  %1122 = vmatmul.mubr.f32.gmra.mrb[0].mxu0 %v984
  %v1123 = vpop.f32.mrb[0].mxu0
  %v1124 = vadd.f32 %v916, %v1123
  %v1125 = vpop.f32.mrb[0].mxu0
  %1126 = vmatprep.mubr.f32.mxu0 0.0
  %1127 = vmatmul.mubr.f32.gmra.mrb[0].mxu0 %v986
  %v1128 = vpop.f32.mrb[0].mxu0
  %v1129 = vadd.f32 %v917, %v1128
  %v1130 = vpop.f32.mrb[0].mxu0
  %1131 = vmatprep.mubr.f32.mxu0 0.0
  %1132 = vmatmul.mubr.f32.gmra.mrb[0].mxu0 %v988
  %v1133 = vpop.f32.mrb[0].mxu0
  %v1134 = vadd.f32 %v918, %v1133
  %v1135 = vpop.f32.mrb[0].mxu0
  %1136 = vmatprep.mubr.f32.mxu0 0.0
  %1137 = vmatmul.mubr.f32.gmra.mrb[0].mxu0 %v990
  %v1138 = vpop.f32.mrb[0].mxu0
  %v1139 = vadd.f32 %v919, %v1138
  %v1140 = vpop.f32.mrb[0].mxu0
  %1141 = vmatprep.mubr.f32.mxu0 0.0
  %1142 = vmatmul.mubr.f32.gmra.mrb[0].mxu0 %v992
  %v1143 = vpop.f32.mrb[0].mxu0
  %v1144 = vadd.f32 %v920, %v1143
  %v1145 = vpop.f32.mrb[0].mxu0
  %1146 = vmatprep.mubr.f32.mxu0 0.0
  %1147 = vmatmul.mubr.f32.gmra.mrb[0].mxu0 %v994
  %v1148 = vpop.f32.mrb[0].mxu0
  %v1149 = vadd.f32 %v921, %v1148
  %v1150 = vpop.f32.mrb[0].mxu0
  %1151 = vmatprep.mubr.f32.mxu0 0.0
  %1152 = vmatmul.mubr.f32.gmra.mrb[0].mxu0 %v996
  %v1153 = vpop.f32.mrb[0].mxu0
  %v1154 = vadd.f32 %v922, %v1153
  %v1155 = vpop.f32.mrb[0].mxu0
  %1156 = vmatprep.mubr.f32.mxu0 0.0
  %1157 = vmatmul.mubr.f32.gmra.mrb[0].mxu0 %v998
  %v1158 = vpop.f32.mrb[0].mxu0
  %v1159 = vadd.f32 %v923, %v1158
  %v1160 = vpop.f32.mrb[0].mxu0
  %1161 = vmatprep.mubr.f32.mxu0 0.0
  %1162 = vmatmul.mubr.f32.gmra.mrb[0].mxu0 %v1000
  %v1163 = vpop.f32.mrb[0].mxu0
  %v1164 = vadd.f32 %v924, %v1163
  %v1165 = vpop.f32.mrb[0].mxu0
  %1166 = vmatprep.mubr.f32.mxu0 0.0
  %1167 = vmatmul.mubr.f32.gmra.mrb[0].mxu0 %v1002
  %v1168 = vpop.f32.mrb[0].mxu0
  %v1169 = vadd.f32 %v925, %v1168
  %v1170 = vpop.f32.mrb[0].mxu0
  %1171 = vmatprep.mubr.f32.mxu0 0.0
  %1172 = vmatmul.mubr.f32.gmra.mrb[0].mxu0 %v1004
  %v1173 = vpop.f32.mrb[0].mxu0
  %v1174 = vadd.f32 %v926, %v1173
  %v1175 = vpop.f32.mrb[0].mxu0
  %1176 = vmatprep.mubr.f32.mxu0 0.0
  %1177 = vmatmul.mubr.f32.gmra.mrb[0].mxu0 %v1006
  %v1178 = vpop.f32.mrb[0].mxu0
  %v1179 = vadd.f32 %v927, %v1178
  %v1180 = vpop.f32.mrb[0].mxu0
  %1181 = vmatprep.mubr.f32.mxu0 0.0
  %1182 = vmatmul.mubr.f32.gmra.mrb[0].mxu0 %v1008
  %v1183 = vpop.f32.mrb[0].mxu0
  %v1184 = vadd.f32 %v928, %v1183
  %v1185 = vpop.f32.mrb[0].mxu0
  %1186 = vdwg.mxu0
  %1187 = vmax.xlane.f32.xlu0 %v1109
  %v1188 = vpop.xlane.xlu0 %1187
  %1189 = vmax.xlane.f32.xlu0 %v1114
  %v1190 = vpop.xlane.xlu0 %1189
  %1191 = vmax.xlane.f32.xlu0 %v1119
  %v1192 = vpop.xlane.xlu0 %1191
  %1193 = vmax.xlane.f32.xlu0 %v1124
  %v1194 = vpop.xlane.xlu0 %1193
  %1195 = vmax.xlane.f32.xlu0 %v1129
  %v1196 = vpop.xlane.xlu0 %1195
  %1197 = vmax.xlane.f32.xlu0 %v1134
  %v1198 = vpop.xlane.xlu0 %1197
  %1199 = vmax.xlane.f32.xlu0 %v1139
  %v1200 = vpop.xlane.xlu0 %1199
  %1201 = vmax.xlane.f32.xlu0 %v1144
  %v1202 = vpop.xlane.xlu0 %1201
  %1203 = vmax.xlane.f32.xlu0 %v1149
  %v1204 = vpop.xlane.xlu0 %1203
  %1205 = vmax.xlane.f32.xlu0 %v1154
  %v1206 = vpop.xlane.xlu0 %1205
  %1207 = vmax.xlane.f32.xlu0 %v1159
  %v1208 = vpop.xlane.xlu0 %1207
  %1209 = vmax.xlane.f32.xlu0 %v1164
  %v1210 = vpop.xlane.xlu0 %1209
  %1211 = vmax.xlane.f32.xlu0 %v1169
  %v1212 = vpop.xlane.xlu0 %1211
  %1213 = vmax.xlane.f32.xlu0 %v1174
  %v1214 = vpop.xlane.xlu0 %1213
  %1215 = vmax.xlane.f32.xlu0 %v1179
  %v1216 = vpop.xlane.xlu0 %1215
  %1217 = vmax.xlane.f32.xlu0 %v1184
  %v1218 = vpop.xlane.xlu0 %1217
  %v1219 = vsub.f32 %v1109, %v1188
  %v1220 = vsub.f32 %v1114, %v1190
  %v1221 = vsub.f32 %v1119, %v1192
  %v1222 = vsub.f32 %v1124, %v1194
  %v1223 = vsub.f32 %v1129, %v1196
  %v1224 = vsub.f32 %v1134, %v1198
  %v1225 = vsub.f32 %v1139, %v1200
  %v1226 = vsub.f32 %v1144, %v1202
  %v1227 = vsub.f32 %v1149, %v1204
  %v1228 = vsub.f32 %v1154, %v1206
  %v1229 = vsub.f32 %v1159, %v1208
  %v1230 = vsub.f32 %v1164, %v1210
  %v1231 = vsub.f32 %v1169, %v1212
  %v1232 = vsub.f32 %v1174, %v1214
  %v1233 = vsub.f32 %v1179, %v1216
  %v1234 = vsub.f32 %v1184, %v1218
  %v1235 = vmul.f32 %v1219, 1.442695
  %v1236 = vpow.pop %v1235
  %v1237 = vmul.f32 %v1220, 1.442695
  %v1238 = vpow.pop %v1237
  %v1239 = vmul.f32 %v1221, 1.442695
  %v1240 = vpow.pop %v1239
  %v1241 = vmul.f32 %v1222, 1.442695
  %v1242 = vpow.pop %v1241
  %v1243 = vmul.f32 %v1223, 1.442695
  %v1244 = vpow.pop %v1243
  %v1245 = vmul.f32 %v1224, 1.442695
  %v1246 = vpow.pop %v1245
  %v1247 = vmul.f32 %v1225, 1.442695
  %v1248 = vpow.pop %v1247
  %v1249 = vmul.f32 %v1226, 1.442695
  %v1250 = vpow.pop %v1249
  %v1251 = vmul.f32 %v1227, 1.442695
  %v1252 = vpow.pop %v1251
  %v1253 = vmul.f32 %v1228, 1.442695
  %v1254 = vpow.pop %v1253
  %v1255 = vmul.f32 %v1229, 1.442695
  %v1256 = vpow.pop %v1255
  %v1257 = vmul.f32 %v1230, 1.442695
  %v1258 = vpow.pop %v1257
  %v1259 = vmul.f32 %v1231, 1.442695
  %v1260 = vpow.pop %v1259
  %v1261 = vmul.f32 %v1232, 1.442695
  %v1262 = vpow.pop %v1261
  %v1263 = vmul.f32 %v1233, 1.442695
  %v1264 = vpow.pop %v1263
  %v1265 = vmul.f32 %v1234, 1.442695
  %v1266 = vpow.pop %v1265
  %1267 = vadd.xlane.f32.xlu0 %v1236
  %v1268 = vpop.xlane.xlu0 %1267
  %1269 = vadd.xlane.f32.xlu0 %v1238
  %v1270 = vpop.xlane.xlu0 %1269
  %1271 = vadd.xlane.f32.xlu0 %v1240
  %v1272 = vpop.xlane.xlu0 %1271
  %1273 = vadd.xlane.f32.xlu0 %v1242
  %v1274 = vpop.xlane.xlu0 %1273
  %1275 = vadd.xlane.f32.xlu0 %v1244
  %v1276 = vpop.xlane.xlu0 %1275
  %1277 = vadd.xlane.f32.xlu0 %v1246
  %v1278 = vpop.xlane.xlu0 %1277
  %1279 = vadd.xlane.f32.xlu0 %v1248
  %v1280 = vpop.xlane.xlu0 %1279
  %1281 = vadd.xlane.f32.xlu0 %v1250
  %v1282 = vpop.xlane.xlu0 %1281
  %1283 = vadd.xlane.f32.xlu0 %v1252
  %v1284 = vpop.xlane.xlu0 %1283
  %1285 = vadd.xlane.f32.xlu0 %v1254
  %v1286 = vpop.xlane.xlu0 %1285
  %1287 = vadd.xlane.f32.xlu0 %v1256
  %v1288 = vpop.xlane.xlu0 %1287
  %1289 = vadd.xlane.f32.xlu0 %v1258
  %v1290 = vpop.xlane.xlu0 %1289
  %1291 = vadd.xlane.f32.xlu0 %v1260
  %v1292 = vpop.xlane.xlu0 %1291
  %1293 = vadd.xlane.f32.xlu0 %v1262
  %v1294 = vpop.xlane.xlu0 %1293
  %1295 = vadd.xlane.f32.xlu0 %v1264
  %v1296 = vpop.xlane.xlu0 %1295
  %1297 = vadd.xlane.f32.xlu0 %v1266
  %v1298 = vpop.xlane.xlu0 %1297
  %v1299 = vrcp.pop %v1268
  %v1300 = vmul.f32 1.0, %v1299
  %v1301 = vrcp.pop %v1270
  %v1302 = vmul.f32 1.0, %v1301
  %v1303 = vrcp.pop %v1272
  %v1304 = vmul.f32 1.0, %v1303
  %v1305 = vrcp.pop %v1274
  %v1306 = vmul.f32 1.0, %v1305
  %v1307 = vrcp.pop %v1276
  %v1308 = vmul.f32 1.0, %v1307
  %v1309 = vrcp.pop %v1278
  %v1310 = vmul.f32 1.0, %v1309
  %v1311 = vrcp.pop %v1280
  %v1312 = vmul.f32 1.0, %v1311
  %v1313 = vrcp.pop %v1282
  %v1314 = vmul.f32 1.0, %v1313
  %v1315 = vrcp.pop %v1284
  %v1316 = vmul.f32 1.0, %v1315
  %v1317 = vrcp.pop %v1286
  %v1318 = vmul.f32 1.0, %v1317
  %v1319 = vrcp.pop %v1288
  %v1320 = vmul.f32 1.0, %v1319
  %v1321 = vrcp.pop %v1290
  %v1322 = vmul.f32 1.0, %v1321
  %v1323 = vrcp.pop %v1292
  %v1324 = vmul.f32 1.0, %v1323
  %v1325 = vrcp.pop %v1294
  %v1326 = vmul.f32 1.0, %v1325
  %v1327 = vrcp.pop %v1296
  %v1328 = vmul.f32 1.0, %v1327
  %v1329 = vrcp.pop %v1298
  %v1330 = vmul.f32 1.0, %v1329
  %v1331 = vmul.f32 %v1236, %v1300
  %v1332 = vmul.f32 %v1238, %v1302
  %v1333 = vmul.f32 %v1240, %v1304
  %v1334 = vmul.f32 %v1242, %v1306
  %v1335 = vmul.f32 %v1244, %v1308
  %v1336 = vmul.f32 %v1246, %v1310
  %v1337 = vmul.f32 %v1248, %v1312
  %v1338 = vmul.f32 %v1250, %v1314
  %v1339 = vmul.f32 %v1252, %v1316
  %v1340 = vmul.f32 %v1254, %v1318
  %v1341 = vmul.f32 %v1256, %v1320
  %v1342 = vmul.f32 %v1258, %v1322
  %v1343 = vmul.f32 %v1260, %v1324
  %v1344 = vmul.f32 %v1262, %v1326
  %v1345 = vmul.f32 %v1264, %v1328
  %v1346 = vmul.f32 %v1266, %v1330
  %1347 = vrot.lane.b32.xlu0 %v881, 112
  %v1348 = vpop.permute.xlu0 %1347
  %1349 = vrot.lane.b32.xlu0 %v882, 112
  %v1350 = vpop.permute.xlu0 %1349
  %1351 = vrot.lane.b32.xlu0 %v883, 112
  %v1352 = vpop.permute.xlu0 %1351
  %1353 = vrot.lane.b32.xlu0 %v884, 112
  %v1354 = vpop.permute.xlu0 %1353
  %1355 = vrot.lane.b32.xlu0 %v885, 112
  %v1356 = vpop.permute.xlu0 %1355
  %1357 = vrot.lane.b32.xlu0 %v886, 112
  %v1358 = vpop.permute.xlu0 %1357
  %1359 = vrot.lane.b32.xlu0 %v887, 112
  %v1360 = vpop.permute.xlu0 %1359
  %1361 = vrot.lane.b32.xlu0 %v888, 112
  %v1362 = vpop.permute.xlu0 %1361
  %1363 = vrot.lane.b32.xlu0 %v889, 112
  %v1364 = vpop.permute.xlu0 %1363
  %1365 = vrot.lane.b32.xlu0 %v890, 112
  %v1366 = vpop.permute.xlu0 %1365
  %1367 = vrot.lane.b32.xlu0 %v891, 112
  %v1368 = vpop.permute.xlu0 %1367
  %1369 = vrot.lane.b32.xlu0 %v892, 112
  %v1370 = vpop.permute.xlu0 %1369
  %1371 = vrot.lane.b32.xlu0 %v893, 112
  %v1372 = vpop.permute.xlu0 %1371
  %1373 = vrot.lane.b32.xlu0 %v894, 112
  %v1374 = vpop.permute.xlu0 %1373
  %1375 = vrot.lane.b32.xlu0 %v895, 112
  %v1376 = vpop.permute.xlu0 %1375
  %1377 = vrot.lane.b32.xlu0 %v896, 112
  %v1378 = vpop.permute.xlu0 %1377
  %1379 = vrot.lane.b32.xlu0 %v881, 48
  %v1380 = vpop.permute.xlu0 %1379
  %1381 = vrot.lane.b32.xlu0 %v882, 48
  %v1382 = vpop.permute.xlu0 %1381
  %1383 = vrot.lane.b32.xlu0 %v883, 48
  %v1384 = vpop.permute.xlu0 %1383
  %1385 = vrot.lane.b32.xlu0 %v884, 48
  %v1386 = vpop.permute.xlu0 %1385
  %1387 = vrot.lane.b32.xlu0 %v885, 48
  %v1388 = vpop.permute.xlu0 %1387
  %1389 = vrot.lane.b32.xlu0 %v886, 48
  %v1390 = vpop.permute.xlu0 %1389
  %1391 = vrot.lane.b32.xlu0 %v887, 48
  %v1392 = vpop.permute.xlu0 %1391
  %1393 = vrot.lane.b32.xlu0 %v888, 48
  %v1394 = vpop.permute.xlu0 %1393
  %1395 = vrot.lane.b32.xlu0 %v889, 48
  %v1396 = vpop.permute.xlu0 %1395
  %1397 = vrot.lane.b32.xlu0 %v890, 48
  %v1398 = vpop.permute.xlu0 %1397
  %1399 = vrot.lane.b32.xlu0 %v891, 48
  %v1400 = vpop.permute.xlu0 %1399
  %1401 = vrot.lane.b32.xlu0 %v892, 48
  %v1402 = vpop.permute.xlu0 %1401
  %1403 = vrot.lane.b32.xlu0 %v893, 48
  %v1404 = vpop.permute.xlu0 %1403
  %1405 = vrot.lane.b32.xlu0 %v894, 48
  %v1406 = vpop.permute.xlu0 %1405
  %1407 = vrot.lane.b32.xlu0 %v895, 48
  %v1408 = vpop.permute.xlu0 %1407
  %1409 = vrot.lane.b32.xlu0 %v896, 48
  %v1410 = vpop.permute.xlu0 %1409
  %v1411 = vsel %vm977, %v1348, 0
  %v1413 = vsel %vm977, %v1350, 0
  %v1415 = vsel %vm977, %v1352, 0
  %v1417 = vsel %vm977, %v1354, 0
  %v1419 = vsel %vm977, %v1356, 0
  %v1421 = vsel %vm977, %v1358, 0
  %v1423 = vsel %vm977, %v1360, 0
  %v1425 = vsel %vm977, %v1362, 0
  %v1427 = vsel %vm977, %v1364, 0
  %v1429 = vsel %vm977, %v1366, 0
  %v1431 = vsel %vm977, %v1368, 0
  %v1433 = vsel %vm977, %v1370, 0
  %v1435 = vsel %vm977, %v1372, 0
  %v1437 = vsel %vm977, %v1374, 0
  %v1439 = vsel %vm977, %v1376, 0
  %v1441 = vsel %vm977, %v1378, 0
  %v1443 = vsel %vm977, %v1380, 0
  %v1445 = vsel %vm977, %v1382, 0
  %v1447 = vsel %vm977, %v1384, 0
  %v1449 = vsel %vm977, %v1386, 0
  %v1451 = vsel %vm977, %v1388, 0
  %v1453 = vsel %vm977, %v1390, 0
  %v1455 = vsel %vm977, %v1392, 0
  %v1457 = vsel %vm977, %v1394, 0
  %v1459 = vsel %vm977, %v1396, 0
  %v1461 = vsel %vm977, %v1398, 0
  %v1463 = vsel %vm977, %v1400, 0
  %v1465 = vsel %vm977, %v1402, 0
  %v1467 = vsel %vm977, %v1404, 0
  %v1469 = vsel %vm977, %v1406, 0
  %v1471 = vsel %vm977, %v1408, 0
  %v1473 = vsel %vm977, %v1410, 0
  %1475 = vmatprep.subr.mxu0 0.0
  %1476 = vmatpush1.xpose.msra.mxu0 %v1443
  %1477 = vmatprep.subr.mxu0 0.0
  %1478 = vmatpush1.xpose.msra.mxu0 %v1445
  %1479 = vmatprep.subr.mxu0 0.0
  %1480 = vmatpush1.xpose.msra.mxu0 %v1447
  %1481 = vmatprep.subr.mxu0 0.0
  %1482 = vmatpush1.xpose.msra.mxu0 %v1449
  %1483 = vmatprep.subr.mxu0 0.0
  %1484 = vmatpush1.xpose.msra.mxu0 %v1451
  %1485 = vmatprep.subr.mxu0 0.0
  %1486 = vmatpush1.xpose.msra.mxu0 %v1453
  %1487 = vmatprep.subr.mxu0 0.0
  %1488 = vmatpush1.xpose.msra.mxu0 %v1455
  %1489 = vmatprep.subr.mxu0 0.0
  %1490 = vmatpush1.xpose.msra.mxu0 %v1457
  %1491 = vmatprep.subr.mxu0 0.0
  %1492 = vmatpush1.xpose.msra.mxu0 %v1459
  %1493 = vmatprep.subr.mxu0 0.0
  %1494 = vmatpush1.xpose.msra.mxu0 %v1461
  %1495 = vmatprep.subr.mxu0 0.0
  %1496 = vmatpush1.xpose.msra.mxu0 %v1463
  %1497 = vmatprep.subr.mxu0 0.0
  %1498 = vmatpush1.xpose.msra.mxu0 %v1465
  %1499 = vmatprep.subr.mxu0 0.0
  %1500 = vmatpush1.xpose.msra.mxu0 %v1467
  %1501 = vmatprep.subr.mxu0 0.0
  %1502 = vmatpush1.xpose.msra.mxu0 %v1469
  %1503 = vmatprep.subr.mxu0 0.0
  %1504 = vmatpush1.xpose.msra.mxu0 %v1471
  %1505 = vmatprep.subr.mxu0 0.0
  %1506 = vmatpush1.xpose.msra.mxu0 %v1473
  %1507 = vmatprep.subr.mxu0 0.0
  %1508 = vmatpush1.xpose.msra.mxu0 0.0
  %1509 = vmatprep.subr.mxu0 0.0
  %1510 = vmatpush1.xpose.msra.mxu0 0.0
  %1511 = vmatprep.subr.mxu0 0.0
  %1512 = vmatpush1.xpose.msra.mxu0 0.0
  %1513 = vmatprep.subr.mxu0 0.0
  %1514 = vmatpush1.xpose.msra.mxu0 0.0
  %1515 = vmatprep.subr.mxu0 0.0
  %1516 = vmatpush1.xpose.msra.mxu0 0.0
  %1517 = vmatprep.subr.mxu0 0.0
  %1518 = vmatpush1.xpose.msra.mxu0 0.0
  %1519 = vmatprep.subr.mxu0 0.0
  %1520 = vmatpush1.xpose.msra.mxu0 0.0
  %1521 = vmatprep.subr.mxu0 0.0
  %1522 = vmatpush1.xpose.msra.mxu0 0.0
  %1523 = vmatprep.subr.mxu0 0.0
  %1524 = vmatpush1.xpose.msra.mxu0 0.0
  %1525 = vmatprep.subr.mxu0 0.0
  %1526 = vmatpush1.xpose.msra.mxu0 0.0
  %1527 = vmatprep.subr.mxu0 0.0
  %1528 = vmatpush1.xpose.msra.mxu0 0.0
  %1529 = vmatprep.subr.mxu0 0.0
  %1530 = vmatpush1.xpose.msra.mxu0 0.0
  %1531 = vmatprep.subr.mxu0 0.0
  %1532 = vmatpush1.xpose.msra.mxu0 0.0
  %1533 = vmatprep.subr.mxu0 0.0
  %1534 = vmatpush1.xpose.msra.mxu0 0.0
  %1535 = vmatprep.subr.mxu0 0.0
  %1536 = vmatpush1.xpose.msra.mxu0 0.0
  %1537 = vmatprep.subr.mxu0 0.0
  %1538 = vmatpush1.xpose.msra.mxu0 0.0
  %1539 = vmatprep.mubr.f32.mxu0 0.0
  %1540 = vmatmul.mubr.f32.gmra.mrb[0].mxu0 %v1411
  %v1541 = vpop.f32.mrb[0].mxu0
  %v1542 = vadd.f32 %v913, %v1541
  %v1543 = vpop.f32.mrb[0].mxu0
  %1544 = vmatprep.mubr.f32.mxu0 0.0
  %1545 = vmatmul.mubr.f32.gmra.mrb[0].mxu0 %v1413
  %v1546 = vpop.f32.mrb[0].mxu0
  %v1547 = vadd.f32 %v914, %v1546
  %v1548 = vpop.f32.mrb[0].mxu0
  %1549 = vmatprep.mubr.f32.mxu0 0.0
  %1550 = vmatmul.mubr.f32.gmra.mrb[0].mxu0 %v1415
  %v1551 = vpop.f32.mrb[0].mxu0
  %v1552 = vadd.f32 %v915, %v1551
  %v1553 = vpop.f32.mrb[0].mxu0
  %1554 = vmatprep.mubr.f32.mxu0 0.0
  %1555 = vmatmul.mubr.f32.gmra.mrb[0].mxu0 %v1417
  %v1556 = vpop.f32.mrb[0].mxu0
  %v1557 = vadd.f32 %v916, %v1556
  %v1558 = vpop.f32.mrb[0].mxu0
  %1559 = vmatprep.mubr.f32.mxu0 0.0
  %1560 = vmatmul.mubr.f32.gmra.mrb[0].mxu0 %v1419
  %v1561 = vpop.f32.mrb[0].mxu0
  %v1562 = vadd.f32 %v917, %v1561
  %v1563 = vpop.f32.mrb[0].mxu0
  %1564 = vmatprep.mubr.f32.mxu0 0.0
  %1565 = vmatmul.mubr.f32.gmra.mrb[0].mxu0 %v1421
  %v1566 = vpop.f32.mrb[0].mxu0
  %v1567 = vadd.f32 %v918, %v1566
  %v1568 = vpop.f32.mrb[0].mxu0
  %1569 = vmatprep.mubr.f32.mxu0 0.0
  %1570 = vmatmul.mubr.f32.gmra.mrb[0].mxu0 %v1423
  %v1571 = vpop.f32.mrb[0].mxu0
  %v1572 = vadd.f32 %v919, %v1571
  %v1573 = vpop.f32.mrb[0].mxu0
  %1574 = vmatprep.mubr.f32.mxu0 0.0
  %1575 = vmatmul.mubr.f32.gmra.mrb[0].mxu0 %v1425
  %v1576 = vpop.f32.mrb[0].mxu0
  %v1577 = vadd.f32 %v920, %v1576
  %v1578 = vpop.f32.mrb[0].mxu0
  %1579 = vmatprep.mubr.f32.mxu0 0.0
  %1580 = vmatmul.mubr.f32.gmra.mrb[0].mxu0 %v1427
  %v1581 = vpop.f32.mrb[0].mxu0
  %v1582 = vadd.f32 %v921, %v1581
  %v1583 = vpop.f32.mrb[0].mxu0
  %1584 = vmatprep.mubr.f32.mxu0 0.0
  %1585 = vmatmul.mubr.f32.gmra.mrb[0].mxu0 %v1429
  %v1586 = vpop.f32.mrb[0].mxu0
  %v1587 = vadd.f32 %v922, %v1586
  %v1588 = vpop.f32.mrb[0].mxu0
  %1589 = vmatprep.mubr.f32.mxu0 0.0
  %1590 = vmatmul.mubr.f32.gmra.mrb[0].mxu0 %v1431
  %v1591 = vpop.f32.mrb[0].mxu0
  %v1592 = vadd.f32 %v923, %v1591
  %v1593 = vpop.f32.mrb[0].mxu0
  %1594 = vmatprep.mubr.f32.mxu0 0.0
  %1595 = vmatmul.mubr.f32.gmra.mrb[0].mxu0 %v1433
  %v1596 = vpop.f32.mrb[0].mxu0
  %v1597 = vadd.f32 %v924, %v1596
  %v1598 = vpop.f32.mrb[0].mxu0
  %1599 = vmatprep.mubr.f32.mxu0 0.0
  %1600 = vmatmul.mubr.f32.gmra.mrb[0].mxu0 %v1435
  %v1601 = vpop.f32.mrb[0].mxu0
  %v1602 = vadd.f32 %v925, %v1601
  %v1603 = vpop.f32.mrb[0].mxu0
  %1604 = vmatprep.mubr.f32.mxu0 0.0
  %1605 = vmatmul.mubr.f32.gmra.mrb[0].mxu0 %v1437
  %v1606 = vpop.f32.mrb[0].mxu0
  %v1607 = vadd.f32 %v926, %v1606
  %v1608 = vpop.f32.mrb[0].mxu0
  %1609 = vmatprep.mubr.f32.mxu0 0.0
  %1610 = vmatmul.mubr.f32.gmra.mrb[0].mxu0 %v1439
  %v1611 = vpop.f32.mrb[0].mxu0
  %v1612 = vadd.f32 %v927, %v1611
  %v1613 = vpop.f32.mrb[0].mxu0
  %1614 = vmatprep.mubr.f32.mxu0 0.0
  %1615 = vmatmul.mubr.f32.gmra.mrb[0].mxu0 %v1441
  %v1616 = vpop.f32.mrb[0].mxu0
  %v1617 = vadd.f32 %v928, %v1616
  %v1618 = vpop.f32.mrb[0].mxu0
  %1619 = vdwg.mxu0
  %1620 = vmax.xlane.f32.xlu0 %v1542
  %v1621 = vpop.xlane.xlu0 %1620
  %1622 = vmax.xlane.f32.xlu0 %v1547
  %v1623 = vpop.xlane.xlu0 %1622
  %1624 = vmax.xlane.f32.xlu0 %v1552
  %v1625 = vpop.xlane.xlu0 %1624
  %1626 = vmax.xlane.f32.xlu0 %v1557
  %v1627 = vpop.xlane.xlu0 %1626
  %1628 = vmax.xlane.f32.xlu0 %v1562
  %v1629 = vpop.xlane.xlu0 %1628
  %1630 = vmax.xlane.f32.xlu0 %v1567
  %v1631 = vpop.xlane.xlu0 %1630
  %1632 = vmax.xlane.f32.xlu0 %v1572
  %v1633 = vpop.xlane.xlu0 %1632
  %1634 = vmax.xlane.f32.xlu0 %v1577
  %v1635 = vpop.xlane.xlu0 %1634
  %1636 = vmax.xlane.f32.xlu0 %v1582
  %v1637 = vpop.xlane.xlu0 %1636
  %1638 = vmax.xlane.f32.xlu0 %v1587
  %v1639 = vpop.xlane.xlu0 %1638
  %1640 = vmax.xlane.f32.xlu0 %v1592
  %v1641 = vpop.xlane.xlu0 %1640
  %1642 = vmax.xlane.f32.xlu0 %v1597
  %v1643 = vpop.xlane.xlu0 %1642
  %1644 = vmax.xlane.f32.xlu0 %v1602
  %v1645 = vpop.xlane.xlu0 %1644
  %1646 = vmax.xlane.f32.xlu0 %v1607
  %v1647 = vpop.xlane.xlu0 %1646
  %1648 = vmax.xlane.f32.xlu0 %v1612
  %v1649 = vpop.xlane.xlu0 %1648
  %1650 = vmax.xlane.f32.xlu0 %v1617
  %v1651 = vpop.xlane.xlu0 %1650
  %v1652 = vsub.f32 %v1542, %v1621
  %v1653 = vsub.f32 %v1547, %v1623
  %v1654 = vsub.f32 %v1552, %v1625
  %v1655 = vsub.f32 %v1557, %v1627
  %v1656 = vsub.f32 %v1562, %v1629
  %v1657 = vsub.f32 %v1567, %v1631
  %v1658 = vsub.f32 %v1572, %v1633
  %v1659 = vsub.f32 %v1577, %v1635
  %v1660 = vsub.f32 %v1582, %v1637
  %v1661 = vsub.f32 %v1587, %v1639
  %v1662 = vsub.f32 %v1592, %v1641
  %v1663 = vsub.f32 %v1597, %v1643
  %v1664 = vsub.f32 %v1602, %v1645
  %v1665 = vsub.f32 %v1607, %v1647
  %v1666 = vsub.f32 %v1612, %v1649
  %v1667 = vsub.f32 %v1617, %v1651
  %v1668 = vmul.f32 %v1652, 1.442695
  %v1669 = vpow.pop %v1668
  %v1670 = vmul.f32 %v1653, 1.442695
  %v1671 = vpow.pop %v1670
  %v1672 = vmul.f32 %v1654, 1.442695
  %v1673 = vpow.pop %v1672
  %v1674 = vmul.f32 %v1655, 1.442695
  %v1675 = vpow.pop %v1674
  %v1676 = vmul.f32 %v1656, 1.442695
  %v1677 = vpow.pop %v1676
  %v1678 = vmul.f32 %v1657, 1.442695
  %v1679 = vpow.pop %v1678
  %v1680 = vmul.f32 %v1658, 1.442695
  %v1681 = vpow.pop %v1680
  %v1682 = vmul.f32 %v1659, 1.442695
  %v1683 = vpow.pop %v1682
  %v1684 = vmul.f32 %v1660, 1.442695
  %v1685 = vpow.pop %v1684
  %v1686 = vmul.f32 %v1661, 1.442695
  %v1687 = vpow.pop %v1686
  %v1688 = vmul.f32 %v1662, 1.442695
  %v1689 = vpow.pop %v1688
  %v1690 = vmul.f32 %v1663, 1.442695
  %v1691 = vpow.pop %v1690
  %v1692 = vmul.f32 %v1664, 1.442695
  %v1693 = vpow.pop %v1692
  %v1694 = vmul.f32 %v1665, 1.442695
  %v1695 = vpow.pop %v1694
  %v1696 = vmul.f32 %v1666, 1.442695
  %v1697 = vpow.pop %v1696
  %v1698 = vmul.f32 %v1667, 1.442695
  %v1699 = vpow.pop %v1698
  %1700 = vadd.xlane.f32.xlu0 %v1669
  %v1701 = vpop.xlane.xlu0 %1700
  %1702 = vadd.xlane.f32.xlu0 %v1671
  %v1703 = vpop.xlane.xlu0 %1702
  %1704 = vadd.xlane.f32.xlu0 %v1673
  %v1705 = vpop.xlane.xlu0 %1704
  %1706 = vadd.xlane.f32.xlu0 %v1675
  %v1707 = vpop.xlane.xlu0 %1706
  %1708 = vadd.xlane.f32.xlu0 %v1677
  %v1709 = vpop.xlane.xlu0 %1708
  %1710 = vadd.xlane.f32.xlu0 %v1679
  %v1711 = vpop.xlane.xlu0 %1710
  %1712 = vadd.xlane.f32.xlu0 %v1681
  %v1713 = vpop.xlane.xlu0 %1712
  %1714 = vadd.xlane.f32.xlu0 %v1683
  %v1715 = vpop.xlane.xlu0 %1714
  %1716 = vadd.xlane.f32.xlu0 %v1685
  %v1717 = vpop.xlane.xlu0 %1716
  %1718 = vadd.xlane.f32.xlu0 %v1687
  %v1719 = vpop.xlane.xlu0 %1718
  %1720 = vadd.xlane.f32.xlu0 %v1689
  %v1721 = vpop.xlane.xlu0 %1720
  %1722 = vadd.xlane.f32.xlu0 %v1691
  %v1723 = vpop.xlane.xlu0 %1722
  %1724 = vadd.xlane.f32.xlu0 %v1693
  %v1725 = vpop.xlane.xlu0 %1724
  %1726 = vadd.xlane.f32.xlu0 %v1695
  %v1727 = vpop.xlane.xlu0 %1726
  %1728 = vadd.xlane.f32.xlu0 %v1697
  %v1729 = vpop.xlane.xlu0 %1728
  %1730 = vadd.xlane.f32.xlu0 %v1699
  %v1731 = vpop.xlane.xlu0 %1730
  %v1732 = vrcp.pop %v1701
  %v1733 = vmul.f32 1.0, %v1732
  %v1734 = vrcp.pop %v1703
  %v1735 = vmul.f32 1.0, %v1734
  %v1736 = vrcp.pop %v1705
  %v1737 = vmul.f32 1.0, %v1736
  %v1738 = vrcp.pop %v1707
  %v1739 = vmul.f32 1.0, %v1738
  %v1740 = vrcp.pop %v1709
  %v1741 = vmul.f32 1.0, %v1740
  %v1742 = vrcp.pop %v1711
  %v1743 = vmul.f32 1.0, %v1742
  %v1744 = vrcp.pop %v1713
  %v1745 = vmul.f32 1.0, %v1744
  %v1746 = vrcp.pop %v1715
  %v1747 = vmul.f32 1.0, %v1746
  %v1748 = vrcp.pop %v1717
  %v1749 = vmul.f32 1.0, %v1748
  %v1750 = vrcp.pop %v1719
  %v1751 = vmul.f32 1.0, %v1750
  %v1752 = vrcp.pop %v1721
  %v1753 = vmul.f32 1.0, %v1752
  %v1754 = vrcp.pop %v1723
  %v1755 = vmul.f32 1.0, %v1754
  %v1756 = vrcp.pop %v1725
  %v1757 = vmul.f32 1.0, %v1756
  %v1758 = vrcp.pop %v1727
  %v1759 = vmul.f32 1.0, %v1758
  %v1760 = vrcp.pop %v1729
  %v1761 = vmul.f32 1.0, %v1760
  %v1762 = vrcp.pop %v1731
  %v1763 = vmul.f32 1.0, %v1762
  %v1764 = vmul.f32 %v1669, %v1733
  %v1765 = vmul.f32 %v1671, %v1735
  %v1766 = vmul.f32 %v1673, %v1737
  %v1767 = vmul.f32 %v1675, %v1739
  %v1768 = vmul.f32 %v1677, %v1741
  %v1769 = vmul.f32 %v1679, %v1743
  %v1770 = vmul.f32 %v1681, %v1745
  %v1771 = vmul.f32 %v1683, %v1747
  %v1772 = vmul.f32 %v1685, %v1749
  %v1773 = vmul.f32 %v1687, %v1751
  %v1774 = vmul.f32 %v1689, %v1753
  %v1775 = vmul.f32 %v1691, %v1755
  %v1776 = vmul.f32 %v1693, %v1757
  %v1777 = vmul.f32 %v1695, %v1759
  %v1778 = vmul.f32 %v1697, %v1761
  %v1779 = vmul.f32 %v1699, %v1763
  %1796 = vrot.lane.b32.xlu0 %v897, 64
  %v1797 = vpop.permute.xlu0 %1796
  %1798 = vrot.lane.b32.xlu0 %v898, 64
  %v1799 = vpop.permute.xlu0 %1798
  %1800 = vrot.lane.b32.xlu0 %v899, 64
  %v1801 = vpop.permute.xlu0 %1800
  %1802 = vrot.lane.b32.xlu0 %v900, 64
  %v1803 = vpop.permute.xlu0 %1802
  %1804 = vrot.lane.b32.xlu0 %v901, 64
  %v1805 = vpop.permute.xlu0 %1804
  %1806 = vrot.lane.b32.xlu0 %v902, 64
  %v1807 = vpop.permute.xlu0 %1806
  %1808 = vrot.lane.b32.xlu0 %v903, 64
  %v1809 = vpop.permute.xlu0 %1808
  %1810 = vrot.lane.b32.xlu0 %v904, 64
  %v1811 = vpop.permute.xlu0 %1810
  %1812 = vrot.lane.b32.xlu0 %v905, 64
  %v1813 = vpop.permute.xlu0 %1812
  %1814 = vrot.lane.b32.xlu0 %v906, 64
  %v1815 = vpop.permute.xlu0 %1814
  %1816 = vrot.lane.b32.xlu0 %v907, 64
  %v1817 = vpop.permute.xlu0 %1816
  %1818 = vrot.lane.b32.xlu0 %v908, 64
  %v1819 = vpop.permute.xlu0 %1818
  %1820 = vrot.lane.b32.xlu0 %v909, 64
  %v1821 = vpop.permute.xlu0 %1820
  %1822 = vrot.lane.b32.xlu0 %v910, 64
  %v1823 = vpop.permute.xlu0 %1822
  %1824 = vrot.lane.b32.xlu0 %v911, 64
  %v1825 = vpop.permute.xlu0 %1824
  %1826 = vrot.lane.b32.xlu0 %v912, 64
  %v1827 = vpop.permute.xlu0 %1826
  %1844 = vmatprep.subr.mxu0 0.0
  %1845 = vmatpush1.msra.mxu0 %v1797
  %1846 = vmatprep.subr.mxu0 0.0
  %1847 = vmatpush1.msra.mxu0 %v1799
  %1848 = vmatprep.subr.mxu0 0.0
  %1849 = vmatpush1.msra.mxu0 %v1801
  %1850 = vmatprep.subr.mxu0 0.0
  %1851 = vmatpush1.msra.mxu0 %v1803
  %1852 = vmatprep.subr.mxu0 0.0
  %1853 = vmatpush1.msra.mxu0 %v1805
  %1854 = vmatprep.subr.mxu0 0.0
  %1855 = vmatpush1.msra.mxu0 %v1807
  %1856 = vmatprep.subr.mxu0 0.0
  %1857 = vmatpush1.msra.mxu0 %v1809
  %1858 = vmatprep.subr.mxu0 0.0
  %1859 = vmatpush1.msra.mxu0 %v1811
  %1860 = vmatprep.subr.mxu0 0.0
  %1861 = vmatpush1.msra.mxu0 %v1813
  %1862 = vmatprep.subr.mxu0 0.0
  %1863 = vmatpush1.msra.mxu0 %v1815
  %1864 = vmatprep.subr.mxu0 0.0
  %1865 = vmatpush1.msra.mxu0 %v1817
  %1866 = vmatprep.subr.mxu0 0.0
  %1867 = vmatpush1.msra.mxu0 %v1819
  %1868 = vmatprep.subr.mxu0 0.0
  %1869 = vmatpush1.msra.mxu0 %v1821
  %1870 = vmatprep.subr.mxu0 0.0
  %1871 = vmatpush1.msra.mxu0 %v1823
  %1872 = vmatprep.subr.mxu0 0.0
  %1873 = vmatpush1.msra.mxu0 %v1825
  %1874 = vmatprep.subr.mxu0 0.0
  %1875 = vmatpush1.msra.mxu0 %v1827
  %1876 = vmatprep.subr.mxu0 0.0
  %1877 = vmatpush1.msra.mxu0 0.0
  %1878 = vmatprep.subr.mxu0 0.0
  %1879 = vmatpush1.msra.mxu0 0.0
  %1880 = vmatprep.subr.mxu0 0.0
  %1881 = vmatpush1.msra.mxu0 0.0
  %1882 = vmatprep.subr.mxu0 0.0
  %1883 = vmatpush1.msra.mxu0 0.0
  %1884 = vmatprep.subr.mxu0 0.0
  %1885 = vmatpush1.msra.mxu0 0.0
  %1886 = vmatprep.subr.mxu0 0.0
  %1887 = vmatpush1.msra.mxu0 0.0
  %1888 = vmatprep.subr.mxu0 0.0
  %1889 = vmatpush1.msra.mxu0 0.0
  %1890 = vmatprep.subr.mxu0 0.0
  %1891 = vmatpush1.msra.mxu0 0.0
  %1892 = vmatprep.subr.mxu0 0.0
  %1893 = vmatpush1.msra.mxu0 0.0
  %1894 = vmatprep.subr.mxu0 0.0
  %1895 = vmatpush1.msra.mxu0 0.0
  %1896 = vmatprep.subr.mxu0 0.0
  %1897 = vmatpush1.msra.mxu0 0.0
  %1898 = vmatprep.subr.mxu0 0.0
  %1899 = vmatpush1.msra.mxu0 0.0
  %1900 = vmatprep.subr.mxu0 0.0
  %1901 = vmatpush1.msra.mxu0 0.0
  %1902 = vmatprep.subr.mxu0 0.0
  %1903 = vmatpush1.msra.mxu0 0.0
  %1904 = vmatprep.subr.mxu0 0.0
  %1905 = vmatpush1.msra.mxu0 0.0
  %1906 = vmatprep.subr.mxu0 0.0
  %1907 = vmatpush1.msra.mxu0 0.0
  %1908 = vmatprep.mubr.f32.mxu0 0.0
  %1909 = vmatmul.mubr.f32.gmra.mrb[0].mxu0 %v1764
  %v1910 = vpop.f32.mrb[0].mxu0
  %v1911 = vadd.f32 0.0, %v1910
  %v1912 = vpop.f32.mrb[0].mxu0
  %1913 = vmatprep.mubr.f32.mxu0 0.0
  %1914 = vmatmul.mubr.f32.gmra.mrb[0].mxu0 %v1765
  %v1915 = vpop.f32.mrb[0].mxu0
  %v1916 = vadd.f32 0.0, %v1915
  %v1917 = vpop.f32.mrb[0].mxu0
  %1918 = vmatprep.mubr.f32.mxu0 0.0
  %1919 = vmatmul.mubr.f32.gmra.mrb[0].mxu0 %v1766
  %v1920 = vpop.f32.mrb[0].mxu0
  %v1921 = vadd.f32 0.0, %v1920
  %v1922 = vpop.f32.mrb[0].mxu0
  %1923 = vmatprep.mubr.f32.mxu0 0.0
  %1924 = vmatmul.mubr.f32.gmra.mrb[0].mxu0 %v1767
  %v1925 = vpop.f32.mrb[0].mxu0
  %v1926 = vadd.f32 0.0, %v1925
  %v1927 = vpop.f32.mrb[0].mxu0
  %1928 = vmatprep.mubr.f32.mxu0 0.0
  %1929 = vmatmul.mubr.f32.gmra.mrb[0].mxu0 %v1768
  %v1930 = vpop.f32.mrb[0].mxu0
  %v1931 = vadd.f32 0.0, %v1930
  %v1932 = vpop.f32.mrb[0].mxu0
  %1933 = vmatprep.mubr.f32.mxu0 0.0
  %1934 = vmatmul.mubr.f32.gmra.mrb[0].mxu0 %v1769
  %v1935 = vpop.f32.mrb[0].mxu0
  %v1936 = vadd.f32 0.0, %v1935
  %v1937 = vpop.f32.mrb[0].mxu0
  %1938 = vmatprep.mubr.f32.mxu0 0.0
  %1939 = vmatmul.mubr.f32.gmra.mrb[0].mxu0 %v1770
  %v1940 = vpop.f32.mrb[0].mxu0
  %v1941 = vadd.f32 0.0, %v1940
  %v1942 = vpop.f32.mrb[0].mxu0
  %1943 = vmatprep.mubr.f32.mxu0 0.0
  %1944 = vmatmul.mubr.f32.gmra.mrb[0].mxu0 %v1771
  %v1945 = vpop.f32.mrb[0].mxu0
  %v1946 = vadd.f32 0.0, %v1945
  %v1947 = vpop.f32.mrb[0].mxu0
  %1948 = vmatprep.mubr.f32.mxu0 0.0
  %1949 = vmatmul.mubr.f32.gmra.mrb[0].mxu0 %v1772
  %v1950 = vpop.f32.mrb[0].mxu0
  %v1951 = vadd.f32 0.0, %v1950
  %v1952 = vpop.f32.mrb[0].mxu0
  %1953 = vmatprep.mubr.f32.mxu0 0.0
  %1954 = vmatmul.mubr.f32.gmra.mrb[0].mxu0 %v1773
  %v1955 = vpop.f32.mrb[0].mxu0
  %v1956 = vadd.f32 0.0, %v1955
  %v1957 = vpop.f32.mrb[0].mxu0
  %1958 = vmatprep.mubr.f32.mxu0 0.0
  %1959 = vmatmul.mubr.f32.gmra.mrb[0].mxu0 %v1774
  %v1960 = vpop.f32.mrb[0].mxu0
  %v1961 = vadd.f32 0.0, %v1960
  %v1962 = vpop.f32.mrb[0].mxu0
  %1963 = vmatprep.mubr.f32.mxu0 0.0
  %1964 = vmatmul.mubr.f32.gmra.mrb[0].mxu0 %v1775
  %v1965 = vpop.f32.mrb[0].mxu0
  %v1966 = vadd.f32 0.0, %v1965
  %v1967 = vpop.f32.mrb[0].mxu0
  %1968 = vmatprep.mubr.f32.mxu0 0.0
  %1969 = vmatmul.mubr.f32.gmra.mrb[0].mxu0 %v1776
  %v1970 = vpop.f32.mrb[0].mxu0
  %v1971 = vadd.f32 0.0, %v1970
  %v1972 = vpop.f32.mrb[0].mxu0
  %1973 = vmatprep.mubr.f32.mxu0 0.0
  %1974 = vmatmul.mubr.f32.gmra.mrb[0].mxu0 %v1777
  %v1975 = vpop.f32.mrb[0].mxu0
  %v1976 = vadd.f32 0.0, %v1975
  %v1977 = vpop.f32.mrb[0].mxu0
  %1978 = vmatprep.mubr.f32.mxu0 0.0
  %1979 = vmatmul.mubr.f32.gmra.mrb[0].mxu0 %v1778
  %v1980 = vpop.f32.mrb[0].mxu0
  %v1981 = vadd.f32 0.0, %v1980
  %v1982 = vpop.f32.mrb[0].mxu0
  %1983 = vmatprep.mubr.f32.mxu0 0.0
  %1984 = vmatmul.mubr.f32.gmra.mrb[0].mxu0 %v1779
  %v1985 = vpop.f32.mrb[0].mxu0
  %v1986 = vadd.f32 0.0, %v1985
  %v1987 = vpop.f32.mrb[0].mxu0
  %1988 = vdwg.mxu0
  %1989 = vmatprep.subr.mxu0 0.0
  %1990 = vmatpush1.msra.mxu0 %v897
  %1991 = vmatprep.subr.mxu0 0.0
  %1992 = vmatpush1.msra.mxu0 %v898
  %1993 = vmatprep.subr.mxu0 0.0
  %1994 = vmatpush1.msra.mxu0 %v899
  %1995 = vmatprep.subr.mxu0 0.0
  %1996 = vmatpush1.msra.mxu0 %v900
  %1997 = vmatprep.subr.mxu0 0.0
  %1998 = vmatpush1.msra.mxu0 %v901
  %1999 = vmatprep.subr.mxu0 0.0
  %2000 = vmatpush1.msra.mxu0 %v902
  %2001 = vmatprep.subr.mxu0 0.0
  %2002 = vmatpush1.msra.mxu0 %v903
  %2003 = vmatprep.subr.mxu0 0.0
  %2004 = vmatpush1.msra.mxu0 %v904
  %2005 = vmatprep.subr.mxu0 0.0
  %2006 = vmatpush1.msra.mxu0 %v905
  %2007 = vmatprep.subr.mxu0 0.0
  %2008 = vmatpush1.msra.mxu0 %v906
  %2009 = vmatprep.subr.mxu0 0.0
  %2010 = vmatpush1.msra.mxu0 %v907
  %2011 = vmatprep.subr.mxu0 0.0
  %2012 = vmatpush1.msra.mxu0 %v908
  %2013 = vmatprep.subr.mxu0 0.0
  %2014 = vmatpush1.msra.mxu0 %v909
  %2015 = vmatprep.subr.mxu0 0.0
  %2016 = vmatpush1.msra.mxu0 %v910
  %2017 = vmatprep.subr.mxu0 0.0
  %2018 = vmatpush1.msra.mxu0 %v911
  %2019 = vmatprep.subr.mxu0 0.0
  %2020 = vmatpush1.msra.mxu0 %v912
  %2021 = vmatprep.subr.mxu0 0.0
  %2022 = vmatpush1.msra.mxu0 0.0
  %2023 = vmatprep.subr.mxu0 0.0
  %2024 = vmatpush1.msra.mxu0 0.0
  %2025 = vmatprep.subr.mxu0 0.0
  %2026 = vmatpush1.msra.mxu0 0.0
  %2027 = vmatprep.subr.mxu0 0.0
  %2028 = vmatpush1.msra.mxu0 0.0
  %2029 = vmatprep.subr.mxu0 0.0
  %2030 = vmatpush1.msra.mxu0 0.0
  %2031 = vmatprep.subr.mxu0 0.0
  %2032 = vmatpush1.msra.mxu0 0.0
  %2033 = vmatprep.subr.mxu0 0.0
  %2034 = vmatpush1.msra.mxu0 0.0
  %2035 = vmatprep.subr.mxu0 0.0
  %2036 = vmatpush1.msra.mxu0 0.0
  %2037 = vmatprep.subr.mxu0 0.0
  %2038 = vmatpush1.msra.mxu0 0.0
  %2039 = vmatprep.subr.mxu0 0.0
  %2040 = vmatpush1.msra.mxu0 0.0
  %2041 = vmatprep.subr.mxu0 0.0
  %2042 = vmatpush1.msra.mxu0 0.0
  %2043 = vmatprep.subr.mxu0 0.0
  %2044 = vmatpush1.msra.mxu0 0.0
  %2045 = vmatprep.subr.mxu0 0.0
  %2046 = vmatpush1.msra.mxu0 0.0
  %2047 = vmatprep.subr.mxu0 0.0
  %2048 = vmatpush1.msra.mxu0 0.0
  %2049 = vmatprep.subr.mxu0 0.0
  %2050 = vmatpush1.msra.mxu0 0.0
  %2051 = vmatprep.subr.mxu0 0.0
  %2052 = vmatpush1.msra.mxu0 0.0
  %2053 = vmatprep.mubr.f32.mxu0 0.0
  %2054 = vmatmul.mubr.f32.gmra.mrb[0].mxu0 %v1331
  %v2055 = vpop.f32.mrb[0].mxu0
  %v2056 = vadd.f32 %v1911, %v2055
  %v2057 = vpop.f32.mrb[0].mxu0
  %2058 = vmatprep.mubr.f32.mxu0 0.0
  %2059 = vmatmul.mubr.f32.gmra.mrb[0].mxu0 %v1332
  %v2060 = vpop.f32.mrb[0].mxu0
  %v2061 = vadd.f32 %v1916, %v2060
  %v2062 = vpop.f32.mrb[0].mxu0
  %2063 = vmatprep.mubr.f32.mxu0 0.0
  %2064 = vmatmul.mubr.f32.gmra.mrb[0].mxu0 %v1333
  %v2065 = vpop.f32.mrb[0].mxu0
  %v2066 = vadd.f32 %v1921, %v2065
  %v2067 = vpop.f32.mrb[0].mxu0
  %2068 = vmatprep.mubr.f32.mxu0 0.0
  %2069 = vmatmul.mubr.f32.gmra.mrb[0].mxu0 %v1334
  %v2070 = vpop.f32.mrb[0].mxu0
  %v2071 = vadd.f32 %v1926, %v2070
  %v2072 = vpop.f32.mrb[0].mxu0
  %2073 = vmatprep.mubr.f32.mxu0 0.0
  %2074 = vmatmul.mubr.f32.gmra.mrb[0].mxu0 %v1335
  %v2075 = vpop.f32.mrb[0].mxu0
  %v2076 = vadd.f32 %v1931, %v2075
  %v2077 = vpop.f32.mrb[0].mxu0
  %2078 = vmatprep.mubr.f32.mxu0 0.0
  %2079 = vmatmul.mubr.f32.gmra.mrb[0].mxu0 %v1336
  %v2080 = vpop.f32.mrb[0].mxu0
  %v2081 = vadd.f32 %v1936, %v2080
  %v2082 = vpop.f32.mrb[0].mxu0
  %2083 = vmatprep.mubr.f32.mxu0 0.0
  %2084 = vmatmul.mubr.f32.gmra.mrb[0].mxu0 %v1337
  %v2085 = vpop.f32.mrb[0].mxu0
  %v2086 = vadd.f32 %v1941, %v2085
  %v2087 = vpop.f32.mrb[0].mxu0
  %2088 = vmatprep.mubr.f32.mxu0 0.0
  %2089 = vmatmul.mubr.f32.gmra.mrb[0].mxu0 %v1338
  %v2090 = vpop.f32.mrb[0].mxu0
  %v2091 = vadd.f32 %v1946, %v2090
  %v2092 = vpop.f32.mrb[0].mxu0
  %2093 = vmatprep.mubr.f32.mxu0 0.0
  %2094 = vmatmul.mubr.f32.gmra.mrb[0].mxu0 %v1339
  %v2095 = vpop.f32.mrb[0].mxu0
  %v2096 = vadd.f32 %v1951, %v2095
  %v2097 = vpop.f32.mrb[0].mxu0
  %2098 = vmatprep.mubr.f32.mxu0 0.0
  %2099 = vmatmul.mubr.f32.gmra.mrb[0].mxu0 %v1340
  %v2100 = vpop.f32.mrb[0].mxu0
  %v2101 = vadd.f32 %v1956, %v2100
  %v2102 = vpop.f32.mrb[0].mxu0
  %2103 = vmatprep.mubr.f32.mxu0 0.0
  %2104 = vmatmul.mubr.f32.gmra.mrb[0].mxu0 %v1341
  %v2105 = vpop.f32.mrb[0].mxu0
  %v2106 = vadd.f32 %v1961, %v2105
  %v2107 = vpop.f32.mrb[0].mxu0
  %2108 = vmatprep.mubr.f32.mxu0 0.0
  %2109 = vmatmul.mubr.f32.gmra.mrb[0].mxu0 %v1342
  %v2110 = vpop.f32.mrb[0].mxu0
  %v2111 = vadd.f32 %v1966, %v2110
  %v2112 = vpop.f32.mrb[0].mxu0
  %2113 = vmatprep.mubr.f32.mxu0 0.0
  %2114 = vmatmul.mubr.f32.gmra.mrb[0].mxu0 %v1343
  %v2115 = vpop.f32.mrb[0].mxu0
  %v2116 = vadd.f32 %v1971, %v2115
  %v2117 = vpop.f32.mrb[0].mxu0
  %2118 = vmatprep.mubr.f32.mxu0 0.0
  %2119 = vmatmul.mubr.f32.gmra.mrb[0].mxu0 %v1344
  %v2120 = vpop.f32.mrb[0].mxu0
  %v2121 = vadd.f32 %v1976, %v2120
  %v2122 = vpop.f32.mrb[0].mxu0
  %2123 = vmatprep.mubr.f32.mxu0 0.0
  %2124 = vmatmul.mubr.f32.gmra.mrb[0].mxu0 %v1345
  %v2125 = vpop.f32.mrb[0].mxu0
  %v2126 = vadd.f32 %v1981, %v2125
  %v2127 = vpop.f32.mrb[0].mxu0
  %2128 = vmatprep.mubr.f32.mxu0 0.0
  %2129 = vmatmul.mubr.f32.gmra.mrb[0].mxu0 %v1346
  %v2130 = vpop.f32.mrb[0].mxu0
  %v2131 = vadd.f32 %v1986, %v2130
  %v2132 = vpop.f32.mrb[0].mxu0
  %2133 = vdwg.mxu0
  %v2134 = vld [vmem:[#allocation2 + $0x10] sm:$0xff]
  %v2135 = vld [vmem:[#allocation2 + $0x28] sm:$0xff]
  %v2136 = vld [vmem:[#allocation2 + $0x40] sm:$0xff]
  %v2137 = vld [vmem:[#allocation2 + $0x58] sm:$0xff]
  %v2138 = vld [vmem:[#allocation2 + $0x70] sm:$0xff]
  %v2139 = vld [vmem:[#allocation2 + $0x88] sm:$0xff]
  %v2140 = vld [vmem:[#allocation2 + $0xa0] sm:$0xff]
  %v2141 = vld [vmem:[#allocation2 + $0xb8] sm:$0xff]
  %v2142 = vld [vmem:[#allocation2 + $0xd0] sm:$0xff]
  %v2143 = vld [vmem:[#allocation2 + $0xe8] sm:$0xff]
  %v2144 = vld [vmem:[#allocation2 + $0x100] sm:$0xff]
  %v2145 = vld [vmem:[#allocation2 + $0x118] sm:$0xff]
  %v2146 = vld [vmem:[#allocation2 + $0x130] sm:$0xff]
  %v2147 = vld [vmem:[#allocation2 + $0x148] sm:$0xff]
  %v2148 = vld [vmem:[#allocation2 + $0x160] sm:$0xff]
  %v2149 = vld [vmem:[#allocation2 + $0x178] sm:$0xff]
  %2150 = vrot.lane.b32.xlu0 %v881, 96
  %v2151 = vpop.permute.xlu0 %2150
  %2152 = vrot.lane.b32.xlu0 %v882, 96
  %v2153 = vpop.permute.xlu0 %2152
  %2154 = vrot.lane.b32.xlu0 %v883, 96
  %v2155 = vpop.permute.xlu0 %2154
  %2156 = vrot.lane.b32.xlu0 %v884, 96
  %v2157 = vpop.permute.xlu0 %2156
  %2158 = vrot.lane.b32.xlu0 %v885, 96
  %v2159 = vpop.permute.xlu0 %2158
  %2160 = vrot.lane.b32.xlu0 %v886, 96
  %v2161 = vpop.permute.xlu0 %2160
  %2162 = vrot.lane.b32.xlu0 %v887, 96
  %v2163 = vpop.permute.xlu0 %2162
  %2164 = vrot.lane.b32.xlu0 %v888, 96
  %v2165 = vpop.permute.xlu0 %2164
  %2166 = vrot.lane.b32.xlu0 %v889, 96
  %v2167 = vpop.permute.xlu0 %2166
  %2168 = vrot.lane.b32.xlu0 %v890, 96
  %v2169 = vpop.permute.xlu0 %2168
  %2170 = vrot.lane.b32.xlu0 %v891, 96
  %v2171 = vpop.permute.xlu0 %2170
  %2172 = vrot.lane.b32.xlu0 %v892, 96
  %v2173 = vpop.permute.xlu0 %2172
  %2174 = vrot.lane.b32.xlu0 %v893, 96
  %v2175 = vpop.permute.xlu0 %2174
  %2176 = vrot.lane.b32.xlu0 %v894, 96
  %v2177 = vpop.permute.xlu0 %2176
  %2178 = vrot.lane.b32.xlu0 %v895, 96
  %v2179 = vpop.permute.xlu0 %2178
  %2180 = vrot.lane.b32.xlu0 %v896, 96
  %v2181 = vpop.permute.xlu0 %2180
  %2182 = vrot.lane.b32.xlu0 %v881, 32
  %v2183 = vpop.permute.xlu0 %2182
  %2184 = vrot.lane.b32.xlu0 %v882, 32
  %v2185 = vpop.permute.xlu0 %2184
  %2186 = vrot.lane.b32.xlu0 %v883, 32
  %v2187 = vpop.permute.xlu0 %2186
  %2188 = vrot.lane.b32.xlu0 %v884, 32
  %v2189 = vpop.permute.xlu0 %2188
  %2190 = vrot.lane.b32.xlu0 %v885, 32
  %v2191 = vpop.permute.xlu0 %2190
  %2192 = vrot.lane.b32.xlu0 %v886, 32
  %v2193 = vpop.permute.xlu0 %2192
  %2194 = vrot.lane.b32.xlu0 %v887, 32
  %v2195 = vpop.permute.xlu0 %2194
  %2196 = vrot.lane.b32.xlu0 %v888, 32
  %v2197 = vpop.permute.xlu0 %2196
  %2198 = vrot.lane.b32.xlu0 %v889, 32
  %v2199 = vpop.permute.xlu0 %2198
  %2200 = vrot.lane.b32.xlu0 %v890, 32
  %v2201 = vpop.permute.xlu0 %2200
  %2202 = vrot.lane.b32.xlu0 %v891, 32
  %v2203 = vpop.permute.xlu0 %2202
  %2204 = vrot.lane.b32.xlu0 %v892, 32
  %v2205 = vpop.permute.xlu0 %2204
  %2206 = vrot.lane.b32.xlu0 %v893, 32
  %v2207 = vpop.permute.xlu0 %2206
  %2208 = vrot.lane.b32.xlu0 %v894, 32
  %v2209 = vpop.permute.xlu0 %2208
  %2210 = vrot.lane.b32.xlu0 %v895, 32
  %v2211 = vpop.permute.xlu0 %2210
  %2212 = vrot.lane.b32.xlu0 %v896, 32
  %v2213 = vpop.permute.xlu0 %2212
  %v2214 = vsel %vm977, %v2151, 0
  %v2216 = vsel %vm977, %v2153, 0
  %v2218 = vsel %vm977, %v2155, 0
  %v2220 = vsel %vm977, %v2157, 0
  %v2222 = vsel %vm977, %v2159, 0
  %v2224 = vsel %vm977, %v2161, 0
  %v2226 = vsel %vm977, %v2163, 0
  %v2228 = vsel %vm977, %v2165, 0
  %v2230 = vsel %vm977, %v2167, 0
  %v2232 = vsel %vm977, %v2169, 0
  %v2234 = vsel %vm977, %v2171, 0
  %v2236 = vsel %vm977, %v2173, 0
  %v2238 = vsel %vm977, %v2175, 0
  %v2240 = vsel %vm977, %v2177, 0
  %v2242 = vsel %vm977, %v2179, 0
  %v2244 = vsel %vm977, %v2181, 0
  %v2246 = vsel %vm977, %v2183, 0
  %v2248 = vsel %vm977, %v2185, 0
  %v2250 = vsel %vm977, %v2187, 0
  %v2252 = vsel %vm977, %v2189, 0
  %v2254 = vsel %vm977, %v2191, 0
  %v2256 = vsel %vm977, %v2193, 0
  %v2258 = vsel %vm977, %v2195, 0
  %v2260 = vsel %vm977, %v2197, 0
  %v2262 = vsel %vm977, %v2199, 0
  %v2264 = vsel %vm977, %v2201, 0
  %v2266 = vsel %vm977, %v2203, 0
  %v2268 = vsel %vm977, %v2205, 0
  %v2270 = vsel %vm977, %v2207, 0
  %v2272 = vsel %vm977, %v2209, 0
  %v2274 = vsel %vm977, %v2211, 0
  %v2276 = vsel %vm977, %v2213, 0
  %2278 = vmatprep.subr.mxu0 0.0
  %2279 = vmatpush1.xpose.msra.mxu0 %v2246
  %2280 = vmatprep.subr.mxu0 0.0
  %2281 = vmatpush1.xpose.msra.mxu0 %v2248
  %2282 = vmatprep.subr.mxu0 0.0
  %2283 = vmatpush1.xpose.msra.mxu0 %v2250
  %2284 = vmatprep.subr.mxu0 0.0
  %2285 = vmatpush1.xpose.msra.mxu0 %v2252
  %2286 = vmatprep.subr.mxu0 0.0
  %2287 = vmatpush1.xpose.msra.mxu0 %v2254
  %2288 = vmatprep.subr.mxu0 0.0
  %2289 = vmatpush1.xpose.msra.mxu0 %v2256
  %2290 = vmatprep.subr.mxu0 0.0
  %2291 = vmatpush1.xpose.msra.mxu0 %v2258
  %2292 = vmatprep.subr.mxu0 0.0
  %2293 = vmatpush1.xpose.msra.mxu0 %v2260
  %2294 = vmatprep.subr.mxu0 0.0
  %2295 = vmatpush1.xpose.msra.mxu0 %v2262
  %2296 = vmatprep.subr.mxu0 0.0
  %2297 = vmatpush1.xpose.msra.mxu0 %v2264
  %2298 = vmatprep.subr.mxu0 0.0
  %2299 = vmatpush1.xpose.msra.mxu0 %v2266
  %2300 = vmatprep.subr.mxu0 0.0
  %2301 = vmatpush1.xpose.msra.mxu0 %v2268
  %2302 = vmatprep.subr.mxu0 0.0
  %2303 = vmatpush1.xpose.msra.mxu0 %v2270
  %2304 = vmatprep.subr.mxu0 0.0
  %2305 = vmatpush1.xpose.msra.mxu0 %v2272
  %2306 = vmatprep.subr.mxu0 0.0
  %2307 = vmatpush1.xpose.msra.mxu0 %v2274
  %2308 = vmatprep.subr.mxu0 0.0
  %2309 = vmatpush1.xpose.msra.mxu0 %v2276
  %2310 = vmatprep.subr.mxu0 0.0
  %2311 = vmatpush1.xpose.msra.mxu0 0.0
  %2312 = vmatprep.subr.mxu0 0.0
  %2313 = vmatpush1.xpose.msra.mxu0 0.0
  %2314 = vmatprep.subr.mxu0 0.0
  %2315 = vmatpush1.xpose.msra.mxu0 0.0
  %2316 = vmatprep.subr.mxu0 0.0
  %2317 = vmatpush1.xpose.msra.mxu0 0.0
  %2318 = vmatprep.subr.mxu0 0.0
  %2319 = vmatpush1.xpose.msra.mxu0 0.0
  %2320 = vmatprep.subr.mxu0 0.0
  %2321 = vmatpush1.xpose.msra.mxu0 0.0
  %2322 = vmatprep.subr.mxu0 0.0
  %2323 = vmatpush1.xpose.msra.mxu0 0.0
  %2324 = vmatprep.subr.mxu0 0.0
  %2325 = vmatpush1.xpose.msra.mxu0 0.0
  %2326 = vmatprep.subr.mxu0 0.0
  %2327 = vmatpush1.xpose.msra.mxu0 0.0
  %2328 = vmatprep.subr.mxu0 0.0
  %2329 = vmatpush1.xpose.msra.mxu0 0.0
  %2330 = vmatprep.subr.mxu0 0.0
  %2331 = vmatpush1.xpose.msra.mxu0 0.0
  %2332 = vmatprep.subr.mxu0 0.0
  %2333 = vmatpush1.xpose.msra.mxu0 0.0
  %2334 = vmatprep.subr.mxu0 0.0
  %2335 = vmatpush1.xpose.msra.mxu0 0.0
  %2336 = vmatprep.subr.mxu0 0.0
  %2337 = vmatpush1.xpose.msra.mxu0 0.0
  %2338 = vmatprep.subr.mxu0 0.0
  %2339 = vmatpush1.xpose.msra.mxu0 0.0
  %2340 = vmatprep.subr.mxu0 0.0
  %2341 = vmatpush1.xpose.msra.mxu0 0.0
  %2342 = vmatprep.mubr.f32.mxu0 0.0
  %2343 = vmatmul.mubr.f32.gmra.mrb[0].mxu0 %v2214
  %v2344 = vpop.f32.mrb[0].mxu0
  %v2345 = vadd.f32 %v913, %v2344
  %v2346 = vpop.f32.mrb[0].mxu0
  %2347 = vmatprep.mubr.f32.mxu0 0.0
  %2348 = vmatmul.mubr.f32.gmra.mrb[0].mxu0 %v2216
  %v2349 = vpop.f32.mrb[0].mxu0
  %v2350 = vadd.f32 %v914, %v2349
  %v2351 = vpop.f32.mrb[0].mxu0
  %2352 = vmatprep.mubr.f32.mxu0 0.0
  %2353 = vmatmul.mubr.f32.gmra.mrb[0].mxu0 %v2218
  %v2354 = vpop.f32.mrb[0].mxu0
  %v2355 = vadd.f32 %v915, %v2354
  %v2356 = vpop.f32.mrb[0].mxu0
  %2357 = vmatprep.mubr.f32.mxu0 0.0
  %2358 = vmatmul.mubr.f32.gmra.mrb[0].mxu0 %v2220
  %v2359 = vpop.f32.mrb[0].mxu0
  %v2360 = vadd.f32 %v916, %v2359
  %v2361 = vpop.f32.mrb[0].mxu0
  %2362 = vmatprep.mubr.f32.mxu0 0.0
  %2363 = vmatmul.mubr.f32.gmra.mrb[0].mxu0 %v2222
  %v2364 = vpop.f32.mrb[0].mxu0
  %v2365 = vadd.f32 %v917, %v2364
  %v2366 = vpop.f32.mrb[0].mxu0
  %2367 = vmatprep.mubr.f32.mxu0 0.0
  %2368 = vmatmul.mubr.f32.gmra.mrb[0].mxu0 %v2224
  %v2369 = vpop.f32.mrb[0].mxu0
  %v2370 = vadd.f32 %v918, %v2369
  %v2371 = vpop.f32.mrb[0].mxu0
  %2372 = vmatprep.mubr.f32.mxu0 0.0
  %2373 = vmatmul.mubr.f32.gmra.mrb[0].mxu0 %v2226
  %v2374 = vpop.f32.mrb[0].mxu0
  %v2375 = vadd.f32 %v919, %v2374
  %v2376 = vpop.f32.mrb[0].mxu0
  %2377 = vmatprep.mubr.f32.mxu0 0.0
  %2378 = vmatmul.mubr.f32.gmra.mrb[0].mxu0 %v2228
  %v2379 = vpop.f32.mrb[0].mxu0
  %v2380 = vadd.f32 %v920, %v2379
  %v2381 = vpop.f32.mrb[0].mxu0
  %2382 = vmatprep.mubr.f32.mxu0 0.0
  %2383 = vmatmul.mubr.f32.gmra.mrb[0].mxu0 %v2230
  %v2384 = vpop.f32.mrb[0].mxu0
  %v2385 = vadd.f32 %v921, %v2384
  %v2386 = vpop.f32.mrb[0].mxu0
  %2387 = vmatprep.mubr.f32.mxu0 0.0
  %2388 = vmatmul.mubr.f32.gmra.mrb[0].mxu0 %v2232
  %v2389 = vpop.f32.mrb[0].mxu0
  %v2390 = vadd.f32 %v922, %v2389
  %v2391 = vpop.f32.mrb[0].mxu0
  %2392 = vmatprep.mubr.f32.mxu0 0.0
  %2393 = vmatmul.mubr.f32.gmra.mrb[0].mxu0 %v2234
  %v2394 = vpop.f32.mrb[0].mxu0
  %v2395 = vadd.f32 %v923, %v2394
  %v2396 = vpop.f32.mrb[0].mxu0
  %2397 = vmatprep.mubr.f32.mxu0 0.0
  %2398 = vmatmul.mubr.f32.gmra.mrb[0].mxu0 %v2236
  %v2399 = vpop.f32.mrb[0].mxu0
  %v2400 = vadd.f32 %v924, %v2399
  %v2401 = vpop.f32.mrb[0].mxu0
  %2402 = vmatprep.mubr.f32.mxu0 0.0
  %2403 = vmatmul.mubr.f32.gmra.mrb[0].mxu0 %v2238
  %v2404 = vpop.f32.mrb[0].mxu0
  %v2405 = vadd.f32 %v925, %v2404
  %v2406 = vpop.f32.mrb[0].mxu0
  %2407 = vmatprep.mubr.f32.mxu0 0.0
  %2408 = vmatmul.mubr.f32.gmra.mrb[0].mxu0 %v2240
  %v2409 = vpop.f32.mrb[0].mxu0
  %v2410 = vadd.f32 %v926, %v2409
  %v2411 = vpop.f32.mrb[0].mxu0
  %2412 = vmatprep.mubr.f32.mxu0 0.0
  %2413 = vmatmul.mubr.f32.gmra.mrb[0].mxu0 %v2242
  %v2414 = vpop.f32.mrb[0].mxu0
  %v2415 = vadd.f32 %v927, %v2414
  %v2416 = vpop.f32.mrb[0].mxu0
  %2417 = vmatprep.mubr.f32.mxu0 0.0
  %2418 = vmatmul.mubr.f32.gmra.mrb[0].mxu0 %v2244
  %v2419 = vpop.f32.mrb[0].mxu0
  %v2420 = vadd.f32 %v928, %v2419
  %v2421 = vpop.f32.mrb[0].mxu0
  %2422 = vdwg.mxu0
  %2423 = vmax.xlane.f32.xlu0 %v2345
  %v2424 = vpop.xlane.xlu0 %2423
  %2425 = vmax.xlane.f32.xlu0 %v2350
  %v2426 = vpop.xlane.xlu0 %2425
  %2427 = vmax.xlane.f32.xlu0 %v2355
  %v2428 = vpop.xlane.xlu0 %2427
  %2429 = vmax.xlane.f32.xlu0 %v2360
  %v2430 = vpop.xlane.xlu0 %2429
  %2431 = vmax.xlane.f32.xlu0 %v2365
  %v2432 = vpop.xlane.xlu0 %2431
  %2433 = vmax.xlane.f32.xlu0 %v2370
  %v2434 = vpop.xlane.xlu0 %2433
  %2435 = vmax.xlane.f32.xlu0 %v2375
  %v2436 = vpop.xlane.xlu0 %2435
  %2437 = vmax.xlane.f32.xlu0 %v2380
  %v2438 = vpop.xlane.xlu0 %2437
  %2439 = vmax.xlane.f32.xlu0 %v2385
  %v2440 = vpop.xlane.xlu0 %2439
  %2441 = vmax.xlane.f32.xlu0 %v2390
  %v2442 = vpop.xlane.xlu0 %2441
  %2443 = vmax.xlane.f32.xlu0 %v2395
  %v2444 = vpop.xlane.xlu0 %2443
  %2445 = vmax.xlane.f32.xlu0 %v2400
  %v2446 = vpop.xlane.xlu0 %2445
  %2447 = vmax.xlane.f32.xlu0 %v2405
  %v2448 = vpop.xlane.xlu0 %2447
  %2449 = vmax.xlane.f32.xlu0 %v2410
  %v2450 = vpop.xlane.xlu0 %2449
  %2451 = vmax.xlane.f32.xlu0 %v2415
  %v2452 = vpop.xlane.xlu0 %2451
  %2453 = vmax.xlane.f32.xlu0 %v2420
  %v2454 = vpop.xlane.xlu0 %2453
  %v2455 = vsub.f32 %v2345, %v2424
  %v2456 = vsub.f32 %v2350, %v2426
  %v2457 = vsub.f32 %v2355, %v2428
  %v2458 = vsub.f32 %v2360, %v2430
  %v2459 = vsub.f32 %v2365, %v2432
  %v2460 = vsub.f32 %v2370, %v2434
  %v2461 = vsub.f32 %v2375, %v2436
  %v2462 = vsub.f32 %v2380, %v2438
  %v2463 = vsub.f32 %v2385, %v2440
  %v2464 = vsub.f32 %v2390, %v2442
  %v2465 = vsub.f32 %v2395, %v2444
  %v2466 = vsub.f32 %v2400, %v2446
  %v2467 = vsub.f32 %v2405, %v2448
  %v2468 = vsub.f32 %v2410, %v2450
  %v2469 = vsub.f32 %v2415, %v2452
  %v2470 = vsub.f32 %v2420, %v2454
  %v2471 = vmul.f32 %v2455, 1.442695
  %v2472 = vpow.pop %v2471
  %v2473 = vmul.f32 %v2456, 1.442695
  %v2474 = vpow.pop %v2473
  %v2475 = vmul.f32 %v2457, 1.442695
  %v2476 = vpow.pop %v2475
  %v2477 = vmul.f32 %v2458, 1.442695
  %v2478 = vpow.pop %v2477
  %v2479 = vmul.f32 %v2459, 1.442695
  %v2480 = vpow.pop %v2479
  %v2481 = vmul.f32 %v2460, 1.442695
  %v2482 = vpow.pop %v2481
  %v2483 = vmul.f32 %v2461, 1.442695
  %v2484 = vpow.pop %v2483
  %v2485 = vmul.f32 %v2462, 1.442695
  %v2486 = vpow.pop %v2485
  %v2487 = vmul.f32 %v2463, 1.442695
  %v2488 = vpow.pop %v2487
  %v2489 = vmul.f32 %v2464, 1.442695
  %v2490 = vpow.pop %v2489
  %v2491 = vmul.f32 %v2465, 1.442695
  %v2492 = vpow.pop %v2491
  %v2493 = vmul.f32 %v2466, 1.442695
  %v2494 = vpow.pop %v2493
  %v2495 = vmul.f32 %v2467, 1.442695
  %v2496 = vpow.pop %v2495
  %v2497 = vmul.f32 %v2468, 1.442695
  %v2498 = vpow.pop %v2497
  %v2499 = vmul.f32 %v2469, 1.442695
  %v2500 = vpow.pop %v2499
  %v2501 = vmul.f32 %v2470, 1.442695
  %v2502 = vpow.pop %v2501
  %2503 = vadd.xlane.f32.xlu0 %v2472
  %v2504 = vpop.xlane.xlu0 %2503
  %2505 = vadd.xlane.f32.xlu0 %v2474
  %v2506 = vpop.xlane.xlu0 %2505
  %2507 = vadd.xlane.f32.xlu0 %v2476
  %v2508 = vpop.xlane.xlu0 %2507
  %2509 = vadd.xlane.f32.xlu0 %v2478
  %v2510 = vpop.xlane.xlu0 %2509
  %2511 = vadd.xlane.f32.xlu0 %v2480
  %v2512 = vpop.xlane.xlu0 %2511
  %2513 = vadd.xlane.f32.xlu0 %v2482
  %v2514 = vpop.xlane.xlu0 %2513
  %2515 = vadd.xlane.f32.xlu0 %v2484
  %v2516 = vpop.xlane.xlu0 %2515
  %2517 = vadd.xlane.f32.xlu0 %v2486
  %v2518 = vpop.xlane.xlu0 %2517
  %2519 = vadd.xlane.f32.xlu0 %v2488
  %v2520 = vpop.xlane.xlu0 %2519
  %2521 = vadd.xlane.f32.xlu0 %v2490
  %v2522 = vpop.xlane.xlu0 %2521
  %2523 = vadd.xlane.f32.xlu0 %v2492
  %v2524 = vpop.xlane.xlu0 %2523
  %2525 = vadd.xlane.f32.xlu0 %v2494
  %v2526 = vpop.xlane.xlu0 %2525
  %2527 = vadd.xlane.f32.xlu0 %v2496
  %v2528 = vpop.xlane.xlu0 %2527
  %2529 = vadd.xlane.f32.xlu0 %v2498
  %v2530 = vpop.xlane.xlu0 %2529
  %2531 = vadd.xlane.f32.xlu0 %v2500
  %v2532 = vpop.xlane.xlu0 %2531
  %2533 = vadd.xlane.f32.xlu0 %v2502
  %v2534 = vpop.xlane.xlu0 %2533
  %v2535 = vrcp.pop %v2504
  %v2536 = vmul.f32 1.0, %v2535
  %v2537 = vrcp.pop %v2506
  %v2538 = vmul.f32 1.0, %v2537
  %v2539 = vrcp.pop %v2508
  %v2540 = vmul.f32 1.0, %v2539
  %v2541 = vrcp.pop %v2510
  %v2542 = vmul.f32 1.0, %v2541
  %v2543 = vrcp.pop %v2512
  %v2544 = vmul.f32 1.0, %v2543
  %v2545 = vrcp.pop %v2514
  %v2546 = vmul.f32 1.0, %v2545
  %v2547 = vrcp.pop %v2516
  %v2548 = vmul.f32 1.0, %v2547
  %v2549 = vrcp.pop %v2518
  %v2550 = vmul.f32 1.0, %v2549
  %v2551 = vrcp.pop %v2520
  %v2552 = vmul.f32 1.0, %v2551
  %v2553 = vrcp.pop %v2522
  %v2554 = vmul.f32 1.0, %v2553
  %v2555 = vrcp.pop %v2524
  %v2556 = vmul.f32 1.0, %v2555
  %v2557 = vrcp.pop %v2526
  %v2558 = vmul.f32 1.0, %v2557
  %v2559 = vrcp.pop %v2528
  %v2560 = vmul.f32 1.0, %v2559
  %v2561 = vrcp.pop %v2530
  %v2562 = vmul.f32 1.0, %v2561
  %v2563 = vrcp.pop %v2532
  %v2564 = vmul.f32 1.0, %v2563
  %v2565 = vrcp.pop %v2534
  %v2566 = vmul.f32 1.0, %v2565
  %v2567 = vmul.f32 %v2472, %v2536
  %v2568 = vmul.f32 %v2474, %v2538
  %v2569 = vmul.f32 %v2476, %v2540
  %v2570 = vmul.f32 %v2478, %v2542
  %v2571 = vmul.f32 %v2480, %v2544
  %v2572 = vmul.f32 %v2482, %v2546
  %v2573 = vmul.f32 %v2484, %v2548
  %v2574 = vmul.f32 %v2486, %v2550
  %v2575 = vmul.f32 %v2488, %v2552
  %v2576 = vmul.f32 %v2490, %v2554
  %v2577 = vmul.f32 %v2492, %v2556
  %v2578 = vmul.f32 %v2494, %v2558
  %v2579 = vmul.f32 %v2496, %v2560
  %v2580 = vmul.f32 %v2498, %v2562
  %v2581 = vmul.f32 %v2500, %v2564
  %v2582 = vmul.f32 %v2502, %v2566
  %2583 = vmatprep.subr.mxu0 0.0
  %2584 = vmatpush1.msra.mxu0 %v2134
  %2585 = vmatprep.subr.mxu0 0.0
  %2586 = vmatpush1.msra.mxu0 %v2135
  %2587 = vmatprep.subr.mxu0 0.0
  %2588 = vmatpush1.msra.mxu0 %v2136
  %2589 = vmatprep.subr.mxu0 0.0
  %2590 = vmatpush1.msra.mxu0 %v2137
  %2591 = vmatprep.subr.mxu0 0.0
  %2592 = vmatpush1.msra.mxu0 %v2138
  %2593 = vmatprep.subr.mxu0 0.0
  %2594 = vmatpush1.msra.mxu0 %v2139
  %2595 = vmatprep.subr.mxu0 0.0
  %2596 = vmatpush1.msra.mxu0 %v2140
  %2597 = vmatprep.subr.mxu0 0.0
  %2598 = vmatpush1.msra.mxu0 %v2141
  %2599 = vmatprep.subr.mxu0 0.0
  %2600 = vmatpush1.msra.mxu0 %v2142
  %2601 = vmatprep.subr.mxu0 0.0
  %2602 = vmatpush1.msra.mxu0 %v2143
  %2603 = vmatprep.subr.mxu0 0.0
  %2604 = vmatpush1.msra.mxu0 %v2144
  %2605 = vmatprep.subr.mxu0 0.0
  %2606 = vmatpush1.msra.mxu0 %v2145
  %2607 = vmatprep.subr.mxu0 0.0
  %2608 = vmatpush1.msra.mxu0 %v2146
  %2609 = vmatprep.subr.mxu0 0.0
  %2610 = vmatpush1.msra.mxu0 %v2147
  %2611 = vmatprep.subr.mxu0 0.0
  %2612 = vmatpush1.msra.mxu0 %v2148
  %2613 = vmatprep.subr.mxu0 0.0
  %2614 = vmatpush1.msra.mxu0 %v2149
  %2615 = vmatprep.subr.mxu0 0.0
  %2616 = vmatpush1.msra.mxu0 0.0
  %2617 = vmatprep.subr.mxu0 0.0
  %2618 = vmatpush1.msra.mxu0 0.0
  %2619 = vmatprep.subr.mxu0 0.0
  %2620 = vmatpush1.msra.mxu0 0.0
  %2621 = vmatprep.subr.mxu0 0.0
  %2622 = vmatpush1.msra.mxu0 0.0
  %2623 = vmatprep.subr.mxu0 0.0
  %2624 = vmatpush1.msra.mxu0 0.0
  %2625 = vmatprep.subr.mxu0 0.0
  %2626 = vmatpush1.msra.mxu0 0.0
  %2627 = vmatprep.subr.mxu0 0.0
  %2628 = vmatpush1.msra.mxu0 0.0
  %2629 = vmatprep.subr.mxu0 0.0
  %2630 = vmatpush1.msra.mxu0 0.0
  %2631 = vmatprep.subr.mxu0 0.0
  %2632 = vmatpush1.msra.mxu0 0.0
  %2633 = vmatprep.subr.mxu0 0.0
  %2634 = vmatpush1.msra.mxu0 0.0
  %2635 = vmatprep.subr.mxu0 0.0
  %2636 = vmatpush1.msra.mxu0 0.0
  %2637 = vmatprep.subr.mxu0 0.0
  %2638 = vmatpush1.msra.mxu0 0.0
  %2639 = vmatprep.subr.mxu0 0.0
  %2640 = vmatpush1.msra.mxu0 0.0
  %2641 = vmatprep.subr.mxu0 0.0
  %2642 = vmatpush1.msra.mxu0 0.0
  %2643 = vmatprep.subr.mxu0 0.0
  %2644 = vmatpush1.msra.mxu0 0.0
  %2645 = vmatprep.subr.mxu0 0.0
  %2646 = vmatpush1.msra.mxu0 0.0
  %2647 = vmatprep.mubr.f32.mxu0 0.0
  %2648 = vmatmul.mubr.f32.gmra.mrb[0].mxu0 %v2567
  %v2649 = vpop.f32.mrb[0].mxu0
  %v2650 = vadd.f32 0.0, %v2649
  %v2651 = vpop.f32.mrb[0].mxu0
  %2652 = vmatprep.mubr.f32.mxu0 0.0
  %2653 = vmatmul.mubr.f32.gmra.mrb[0].mxu0 %v2568
  %v2654 = vpop.f32.mrb[0].mxu0
  %v2655 = vadd.f32 0.0, %v2654
  %v2656 = vpop.f32.mrb[0].mxu0
  %2657 = vmatprep.mubr.f32.mxu0 0.0
  %2658 = vmatmul.mubr.f32.gmra.mrb[0].mxu0 %v2569
  %v2659 = vpop.f32.mrb[0].mxu0
  %v2660 = vadd.f32 0.0, %v2659
  %v2661 = vpop.f32.mrb[0].mxu0
  %2662 = vmatprep.mubr.f32.mxu0 0.0
  %2663 = vmatmul.mubr.f32.gmra.mrb[0].mxu0 %v2570
  %v2664 = vpop.f32.mrb[0].mxu0
  %v2665 = vadd.f32 0.0, %v2664
  %v2666 = vpop.f32.mrb[0].mxu0
  %2667 = vmatprep.mubr.f32.mxu0 0.0
  %2668 = vmatmul.mubr.f32.gmra.mrb[0].mxu0 %v2571
  %v2669 = vpop.f32.mrb[0].mxu0
  %v2670 = vadd.f32 0.0, %v2669
  %v2671 = vpop.f32.mrb[0].mxu0
  %2672 = vmatprep.mubr.f32.mxu0 0.0
  %2673 = vmatmul.mubr.f32.gmra.mrb[0].mxu0 %v2572
  %v2674 = vpop.f32.mrb[0].mxu0
  %v2675 = vadd.f32 0.0, %v2674
  %v2676 = vpop.f32.mrb[0].mxu0
  %2677 = vmatprep.mubr.f32.mxu0 0.0
  %2678 = vmatmul.mubr.f32.gmra.mrb[0].mxu0 %v2573
  %v2679 = vpop.f32.mrb[0].mxu0
  %v2680 = vadd.f32 0.0, %v2679
  %v2681 = vpop.f32.mrb[0].mxu0
  %2682 = vmatprep.mubr.f32.mxu0 0.0
  %2683 = vmatmul.mubr.f32.gmra.mrb[0].mxu0 %v2574
  %v2684 = vpop.f32.mrb[0].mxu0
  %v2685 = vadd.f32 0.0, %v2684
  %v2686 = vpop.f32.mrb[0].mxu0
  %2687 = vmatprep.mubr.f32.mxu0 0.0
  %2688 = vmatmul.mubr.f32.gmra.mrb[0].mxu0 %v2575
  %v2689 = vpop.f32.mrb[0].mxu0
  %v2690 = vadd.f32 0.0, %v2689
  %v2691 = vpop.f32.mrb[0].mxu0
  %2692 = vmatprep.mubr.f32.mxu0 0.0
  %2693 = vmatmul.mubr.f32.gmra.mrb[0].mxu0 %v2576
  %v2694 = vpop.f32.mrb[0].mxu0
  %v2695 = vadd.f32 0.0, %v2694
  %v2696 = vpop.f32.mrb[0].mxu0
  %2697 = vmatprep.mubr.f32.mxu0 0.0
  %2698 = vmatmul.mubr.f32.gmra.mrb[0].mxu0 %v2577
  %v2699 = vpop.f32.mrb[0].mxu0
  %v2700 = vadd.f32 0.0, %v2699
  %v2701 = vpop.f32.mrb[0].mxu0
  %2702 = vmatprep.mubr.f32.mxu0 0.0
  %2703 = vmatmul.mubr.f32.gmra.mrb[0].mxu0 %v2578
  %v2704 = vpop.f32.mrb[0].mxu0
  %v2705 = vadd.f32 0.0, %v2704
  %v2706 = vpop.f32.mrb[0].mxu0
  %2707 = vmatprep.mubr.f32.mxu0 0.0
  %2708 = vmatmul.mubr.f32.gmra.mrb[0].mxu0 %v2579
  %v2709 = vpop.f32.mrb[0].mxu0
  %v2710 = vadd.f32 0.0, %v2709
  %v2711 = vpop.f32.mrb[0].mxu0
  %2712 = vmatprep.mubr.f32.mxu0 0.0
  %2713 = vmatmul.mubr.f32.gmra.mrb[0].mxu0 %v2580
  %v2714 = vpop.f32.mrb[0].mxu0
  %v2715 = vadd.f32 0.0, %v2714
  %v2716 = vpop.f32.mrb[0].mxu0
  %2717 = vmatprep.mubr.f32.mxu0 0.0
  %2718 = vmatmul.mubr.f32.gmra.mrb[0].mxu0 %v2581
  %v2719 = vpop.f32.mrb[0].mxu0
  %v2720 = vadd.f32 0.0, %v2719
  %v2721 = vpop.f32.mrb[0].mxu0
  %2722 = vmatprep.mubr.f32.mxu0 0.0
  %2723 = vmatmul.mubr.f32.gmra.mrb[0].mxu0 %v2582
  %v2724 = vpop.f32.mrb[0].mxu0
  %v2725 = vadd.f32 0.0, %v2724
  %v2726 = vpop.f32.mrb[0].mxu0
  %2727 = vdwg.mxu0
  %v2728 = vadd.f32 %v2056, %v2650
  %v2729 = vadd.f32 %v2061, %v2655
  %v2730 = vadd.f32 %v2066, %v2660
  %v2731 = vadd.f32 %v2071, %v2665
  %v2732 = vadd.f32 %v2076, %v2670
  %v2733 = vadd.f32 %v2081, %v2675
  %v2734 = vadd.f32 %v2086, %v2680
  %v2735 = vadd.f32 %v2091, %v2685
  %v2736 = vadd.f32 %v2096, %v2690
  %v2737 = vadd.f32 %v2101, %v2695
  %v2738 = vadd.f32 %v2106, %v2700
  %v2739 = vadd.f32 %v2111, %v2705
  %v2740 = vadd.f32 %v2116, %v2710
  %v2741 = vadd.f32 %v2121, %v2715
  %v2742 = vadd.f32 %v2126, %v2720
  %v2743 = vadd.f32 %v2131, %v2725
  %2744 = vrot.lane.b32.xlu0 %v881, 80
  %v2745 = vpop.permute.xlu0 %2744
  %2746 = vrot.lane.b32.xlu0 %v882, 80
  %v2747 = vpop.permute.xlu0 %2746
  %2748 = vrot.lane.b32.xlu0 %v883, 80
  %v2749 = vpop.permute.xlu0 %2748
  %2750 = vrot.lane.b32.xlu0 %v884, 80
  %v2751 = vpop.permute.xlu0 %2750
  %2752 = vrot.lane.b32.xlu0 %v885, 80
  %v2753 = vpop.permute.xlu0 %2752
  %2754 = vrot.lane.b32.xlu0 %v886, 80
  %v2755 = vpop.permute.xlu0 %2754
  %2756 = vrot.lane.b32.xlu0 %v887, 80
  %v2757 = vpop.permute.xlu0 %2756
  %2758 = vrot.lane.b32.xlu0 %v888, 80
  %v2759 = vpop.permute.xlu0 %2758
  %2760 = vrot.lane.b32.xlu0 %v889, 80
  %v2761 = vpop.permute.xlu0 %2760
  %2762 = vrot.lane.b32.xlu0 %v890, 80
  %v2763 = vpop.permute.xlu0 %2762
  %2764 = vrot.lane.b32.xlu0 %v891, 80
  %v2765 = vpop.permute.xlu0 %2764
  %2766 = vrot.lane.b32.xlu0 %v892, 80
  %v2767 = vpop.permute.xlu0 %2766
  %2768 = vrot.lane.b32.xlu0 %v893, 80
  %v2769 = vpop.permute.xlu0 %2768
  %2770 = vrot.lane.b32.xlu0 %v894, 80
  %v2771 = vpop.permute.xlu0 %2770
  %2772 = vrot.lane.b32.xlu0 %v895, 80
  %v2773 = vpop.permute.xlu0 %2772
  %2774 = vrot.lane.b32.xlu0 %v896, 80
  %v2775 = vpop.permute.xlu0 %2774
  %2776 = vrot.lane.b32.xlu0 %v881, 16
  %v2777 = vpop.permute.xlu0 %2776
  %2778 = vrot.lane.b32.xlu0 %v882, 16
  %v2779 = vpop.permute.xlu0 %2778
  %2780 = vrot.lane.b32.xlu0 %v883, 16
  %v2781 = vpop.permute.xlu0 %2780
  %2782 = vrot.lane.b32.xlu0 %v884, 16
  %v2783 = vpop.permute.xlu0 %2782
  %2784 = vrot.lane.b32.xlu0 %v885, 16
  %v2785 = vpop.permute.xlu0 %2784
  %2786 = vrot.lane.b32.xlu0 %v886, 16
  %v2787 = vpop.permute.xlu0 %2786
  %2788 = vrot.lane.b32.xlu0 %v887, 16
  %v2789 = vpop.permute.xlu0 %2788
  %2790 = vrot.lane.b32.xlu0 %v888, 16
  %v2791 = vpop.permute.xlu0 %2790
  %2792 = vrot.lane.b32.xlu0 %v889, 16
  %v2793 = vpop.permute.xlu0 %2792
  %2794 = vrot.lane.b32.xlu0 %v890, 16
  %v2795 = vpop.permute.xlu0 %2794
  %2796 = vrot.lane.b32.xlu0 %v891, 16
  %v2797 = vpop.permute.xlu0 %2796
  %2798 = vrot.lane.b32.xlu0 %v892, 16
  %v2799 = vpop.permute.xlu0 %2798
  %2800 = vrot.lane.b32.xlu0 %v893, 16
  %v2801 = vpop.permute.xlu0 %2800
  %2802 = vrot.lane.b32.xlu0 %v894, 16
  %v2803 = vpop.permute.xlu0 %2802
  %2804 = vrot.lane.b32.xlu0 %v895, 16
  %v2805 = vpop.permute.xlu0 %2804
  %2806 = vrot.lane.b32.xlu0 %v896, 16
  %v2807 = vpop.permute.xlu0 %2806
  %v2808 = vsel %vm977, %v2745, 0
  %v2810 = vsel %vm977, %v2747, 0
  %v2812 = vsel %vm977, %v2749, 0
  %v2814 = vsel %vm977, %v2751, 0
  %v2816 = vsel %vm977, %v2753, 0
  %v2818 = vsel %vm977, %v2755, 0
  %v2820 = vsel %vm977, %v2757, 0
  %v2822 = vsel %vm977, %v2759, 0
  %v2824 = vsel %vm977, %v2761, 0
  %v2826 = vsel %vm977, %v2763, 0
  %v2828 = vsel %vm977, %v2765, 0
  %v2830 = vsel %vm977, %v2767, 0
  %v2832 = vsel %vm977, %v2769, 0
  %v2834 = vsel %vm977, %v2771, 0
  %v2836 = vsel %vm977, %v2773, 0
  %v2838 = vsel %vm977, %v2775, 0
  %v2840 = vsel %vm977, %v2777, 0
  %v2842 = vsel %vm977, %v2779, 0
  %v2844 = vsel %vm977, %v2781, 0
  %v2846 = vsel %vm977, %v2783, 0
  %v2848 = vsel %vm977, %v2785, 0
  %v2850 = vsel %vm977, %v2787, 0
  %v2852 = vsel %vm977, %v2789, 0
  %v2854 = vsel %vm977, %v2791, 0
  %v2856 = vsel %vm977, %v2793, 0
  %v2858 = vsel %vm977, %v2795, 0
  %v2860 = vsel %vm977, %v2797, 0
  %v2862 = vsel %vm977, %v2799, 0
  %v2864 = vsel %vm977, %v2801, 0
  %v2866 = vsel %vm977, %v2803, 0
  %v2868 = vsel %vm977, %v2805, 0
  %v2870 = vsel %vm977, %v2807, 0
  %2872 = vmatprep.subr.mxu0 0.0
  %2873 = vmatpush1.xpose.msra.mxu0 %v2840
  %2874 = vmatprep.subr.mxu0 0.0
  %2875 = vmatpush1.xpose.msra.mxu0 %v2842
  %2876 = vmatprep.subr.mxu0 0.0
  %2877 = vmatpush1.xpose.msra.mxu0 %v2844
  %2878 = vmatprep.subr.mxu0 0.0
  %2879 = vmatpush1.xpose.msra.mxu0 %v2846
  %2880 = vmatprep.subr.mxu0 0.0
  %2881 = vmatpush1.xpose.msra.mxu0 %v2848
  %2882 = vmatprep.subr.mxu0 0.0
  %2883 = vmatpush1.xpose.msra.mxu0 %v2850
  %2884 = vmatprep.subr.mxu0 0.0
  %2885 = vmatpush1.xpose.msra.mxu0 %v2852
  %2886 = vmatprep.subr.mxu0 0.0
  %2887 = vmatpush1.xpose.msra.mxu0 %v2854
  %2888 = vmatprep.subr.mxu0 0.0
  %2889 = vmatpush1.xpose.msra.mxu0 %v2856
  %2890 = vmatprep.subr.mxu0 0.0
  %2891 = vmatpush1.xpose.msra.mxu0 %v2858
  %2892 = vmatprep.subr.mxu0 0.0
  %2893 = vmatpush1.xpose.msra.mxu0 %v2860
  %2894 = vmatprep.subr.mxu0 0.0
  %2895 = vmatpush1.xpose.msra.mxu0 %v2862
  %2896 = vmatprep.subr.mxu0 0.0
  %2897 = vmatpush1.xpose.msra.mxu0 %v2864
  %2898 = vmatprep.subr.mxu0 0.0
  %2899 = vmatpush1.xpose.msra.mxu0 %v2866
  %2900 = vmatprep.subr.mxu0 0.0
  %2901 = vmatpush1.xpose.msra.mxu0 %v2868
  %2902 = vmatprep.subr.mxu0 0.0
  %2903 = vmatpush1.xpose.msra.mxu0 %v2870
  %2904 = vmatprep.subr.mxu0 0.0
  %2905 = vmatpush1.xpose.msra.mxu0 0.0
  %2906 = vmatprep.subr.mxu0 0.0
  %2907 = vmatpush1.xpose.msra.mxu0 0.0
  %2908 = vmatprep.subr.mxu0 0.0
  %2909 = vmatpush1.xpose.msra.mxu0 0.0
  %2910 = vmatprep.subr.mxu0 0.0
  %2911 = vmatpush1.xpose.msra.mxu0 0.0
  %2912 = vmatprep.subr.mxu0 0.0
  %2913 = vmatpush1.xpose.msra.mxu0 0.0
  %2914 = vmatprep.subr.mxu0 0.0
  %2915 = vmatpush1.xpose.msra.mxu0 0.0
  %2916 = vmatprep.subr.mxu0 0.0
  %2917 = vmatpush1.xpose.msra.mxu0 0.0
  %2918 = vmatprep.subr.mxu0 0.0
  %2919 = vmatpush1.xpose.msra.mxu0 0.0
  %2920 = vmatprep.subr.mxu0 0.0
  %2921 = vmatpush1.xpose.msra.mxu0 0.0
  %2922 = vmatprep.subr.mxu0 0.0
  %2923 = vmatpush1.xpose.msra.mxu0 0.0
  %2924 = vmatprep.subr.mxu0 0.0
  %2925 = vmatpush1.xpose.msra.mxu0 0.0
  %2926 = vmatprep.subr.mxu0 0.0
  %2927 = vmatpush1.xpose.msra.mxu0 0.0
  %2928 = vmatprep.subr.mxu0 0.0
  %2929 = vmatpush1.xpose.msra.mxu0 0.0
  %2930 = vmatprep.subr.mxu0 0.0
  %2931 = vmatpush1.xpose.msra.mxu0 0.0
  %2932 = vmatprep.subr.mxu0 0.0
  %2933 = vmatpush1.xpose.msra.mxu0 0.0
  %2934 = vmatprep.subr.mxu0 0.0
  %2935 = vmatpush1.xpose.msra.mxu0 0.0
  %2936 = vmatprep.mubr.f32.mxu0 0.0
  %2937 = vmatmul.mubr.f32.gmra.mrb[0].mxu0 %v2808
  %v2938 = vpop.f32.mrb[0].mxu0
  %v2939 = vadd.f32 %v913, %v2938
  %v2940 = vpop.f32.mrb[0].mxu0
  %2941 = vmatprep.mubr.f32.mxu0 0.0
  %2942 = vmatmul.mubr.f32.gmra.mrb[0].mxu0 %v2810
  %v2943 = vpop.f32.mrb[0].mxu0
  %v2944 = vadd.f32 %v914, %v2943
  %v2945 = vpop.f32.mrb[0].mxu0
  %2946 = vmatprep.mubr.f32.mxu0 0.0
  %2947 = vmatmul.mubr.f32.gmra.mrb[0].mxu0 %v2812
  %v2948 = vpop.f32.mrb[0].mxu0
  %v2949 = vadd.f32 %v915, %v2948
  %v2950 = vpop.f32.mrb[0].mxu0
  %2951 = vmatprep.mubr.f32.mxu0 0.0
  %2952 = vmatmul.mubr.f32.gmra.mrb[0].mxu0 %v2814
  %v2953 = vpop.f32.mrb[0].mxu0
  %v2954 = vadd.f32 %v916, %v2953
  %v2955 = vpop.f32.mrb[0].mxu0
  %2956 = vmatprep.mubr.f32.mxu0 0.0
  %2957 = vmatmul.mubr.f32.gmra.mrb[0].mxu0 %v2816
  %v2958 = vpop.f32.mrb[0].mxu0
  %v2959 = vadd.f32 %v917, %v2958
  %v2960 = vpop.f32.mrb[0].mxu0
  %2961 = vmatprep.mubr.f32.mxu0 0.0
  %2962 = vmatmul.mubr.f32.gmra.mrb[0].mxu0 %v2818
  %v2963 = vpop.f32.mrb[0].mxu0
  %v2964 = vadd.f32 %v918, %v2963
  %v2965 = vpop.f32.mrb[0].mxu0
  %2966 = vmatprep.mubr.f32.mxu0 0.0
  %2967 = vmatmul.mubr.f32.gmra.mrb[0].mxu0 %v2820
  %v2968 = vpop.f32.mrb[0].mxu0
  %v2969 = vadd.f32 %v919, %v2968
  %v2970 = vpop.f32.mrb[0].mxu0
  %2971 = vmatprep.mubr.f32.mxu0 0.0
  %2972 = vmatmul.mubr.f32.gmra.mrb[0].mxu0 %v2822
  %v2973 = vpop.f32.mrb[0].mxu0
  %v2974 = vadd.f32 %v920, %v2973
  %v2975 = vpop.f32.mrb[0].mxu0
  %2976 = vmatprep.mubr.f32.mxu0 0.0
  %2977 = vmatmul.mubr.f32.gmra.mrb[0].mxu0 %v2824
  %v2978 = vpop.f32.mrb[0].mxu0
  %v2979 = vadd.f32 %v921, %v2978
  %v2980 = vpop.f32.mrb[0].mxu0
  %2981 = vmatprep.mubr.f32.mxu0 0.0
  %2982 = vmatmul.mubr.f32.gmra.mrb[0].mxu0 %v2826
  %v2983 = vpop.f32.mrb[0].mxu0
  %v2984 = vadd.f32 %v922, %v2983
  %v2985 = vpop.f32.mrb[0].mxu0
  %2986 = vmatprep.mubr.f32.mxu0 0.0
  %2987 = vmatmul.mubr.f32.gmra.mrb[0].mxu0 %v2828
  %v2988 = vpop.f32.mrb[0].mxu0
  %v2989 = vadd.f32 %v923, %v2988
  %v2990 = vpop.f32.mrb[0].mxu0
  %2991 = vmatprep.mubr.f32.mxu0 0.0
  %2992 = vmatmul.mubr.f32.gmra.mrb[0].mxu0 %v2830
  %v2993 = vpop.f32.mrb[0].mxu0
  %v2994 = vadd.f32 %v924, %v2993
  %v2995 = vpop.f32.mrb[0].mxu0
  %2996 = vmatprep.mubr.f32.mxu0 0.0
  %2997 = vmatmul.mubr.f32.gmra.mrb[0].mxu0 %v2832
  %v2998 = vpop.f32.mrb[0].mxu0
  %v2999 = vadd.f32 %v925, %v2998
  %v3000 = vpop.f32.mrb[0].mxu0
  %3001 = vmatprep.mubr.f32.mxu0 0.0
  %3002 = vmatmul.mubr.f32.gmra.mrb[0].mxu0 %v2834
  %v3003 = vpop.f32.mrb[0].mxu0
  %v3004 = vadd.f32 %v926, %v3003
  %v3005 = vpop.f32.mrb[0].mxu0
  %3006 = vmatprep.mubr.f32.mxu0 0.0
  %3007 = vmatmul.mubr.f32.gmra.mrb[0].mxu0 %v2836
  %v3008 = vpop.f32.mrb[0].mxu0
  %v3009 = vadd.f32 %v927, %v3008
  %v3010 = vpop.f32.mrb[0].mxu0
  %3011 = vmatprep.mubr.f32.mxu0 0.0
  %3012 = vmatmul.mubr.f32.gmra.mrb[0].mxu0 %v2838
  %v3013 = vpop.f32.mrb[0].mxu0
  %v3014 = vadd.f32 %v928, %v3013
  %v3015 = vpop.f32.mrb[0].mxu0
  %3016 = vdwg.mxu0
  %3017 = vmax.xlane.f32.xlu0 %v2939
  %v3018 = vpop.xlane.xlu0 %3017
  %3019 = vmax.xlane.f32.xlu0 %v2944
  %v3020 = vpop.xlane.xlu0 %3019
  %3021 = vmax.xlane.f32.xlu0 %v2949
  %v3022 = vpop.xlane.xlu0 %3021
  %3023 = vmax.xlane.f32.xlu0 %v2954
  %v3024 = vpop.xlane.xlu0 %3023
  %3025 = vmax.xlane.f32.xlu0 %v2959
  %v3026 = vpop.xlane.xlu0 %3025
  %3027 = vmax.xlane.f32.xlu0 %v2964
  %v3028 = vpop.xlane.xlu0 %3027
  %3029 = vmax.xlane.f32.xlu0 %v2969
  %v3030 = vpop.xlane.xlu0 %3029
  %3031 = vmax.xlane.f32.xlu0 %v2974
  %v3032 = vpop.xlane.xlu0 %3031
  %3033 = vmax.xlane.f32.xlu0 %v2979
  %v3034 = vpop.xlane.xlu0 %3033
  %3035 = vmax.xlane.f32.xlu0 %v2984
  %v3036 = vpop.xlane.xlu0 %3035
  %3037 = vmax.xlane.f32.xlu0 %v2989
  %v3038 = vpop.xlane.xlu0 %3037
  %3039 = vmax.xlane.f32.xlu0 %v2994
  %v3040 = vpop.xlane.xlu0 %3039
  %3041 = vmax.xlane.f32.xlu0 %v2999
  %v3042 = vpop.xlane.xlu0 %3041
  %3043 = vmax.xlane.f32.xlu0 %v3004
  %v3044 = vpop.xlane.xlu0 %3043
  %3045 = vmax.xlane.f32.xlu0 %v3009
  %v3046 = vpop.xlane.xlu0 %3045
  %3047 = vmax.xlane.f32.xlu0 %v3014
  %v3048 = vpop.xlane.xlu0 %3047
  %v3049 = vsub.f32 %v2939, %v3018
  %v3050 = vsub.f32 %v2944, %v3020
  %v3051 = vsub.f32 %v2949, %v3022
  %v3052 = vsub.f32 %v2954, %v3024
  %v3053 = vsub.f32 %v2959, %v3026
  %v3054 = vsub.f32 %v2964, %v3028
  %v3055 = vsub.f32 %v2969, %v3030
  %v3056 = vsub.f32 %v2974, %v3032
  %v3057 = vsub.f32 %v2979, %v3034
  %v3058 = vsub.f32 %v2984, %v3036
  %v3059 = vsub.f32 %v2989, %v3038
  %v3060 = vsub.f32 %v2994, %v3040
  %v3061 = vsub.f32 %v2999, %v3042
  %v3062 = vsub.f32 %v3004, %v3044
  %v3063 = vsub.f32 %v3009, %v3046
  %v3064 = vsub.f32 %v3014, %v3048
  %v3065 = vmul.f32 %v3049, 1.442695
  %v3066 = vpow.pop %v3065
  %v3067 = vmul.f32 %v3050, 1.442695
  %v3068 = vpow.pop %v3067
  %v3069 = vmul.f32 %v3051, 1.442695
  %v3070 = vpow.pop %v3069
  %v3071 = vmul.f32 %v3052, 1.442695
  %v3072 = vpow.pop %v3071
  %v3073 = vmul.f32 %v3053, 1.442695
  %v3074 = vpow.pop %v3073
  %v3075 = vmul.f32 %v3054, 1.442695
  %v3076 = vpow.pop %v3075
  %v3077 = vmul.f32 %v3055, 1.442695
  %v3078 = vpow.pop %v3077
  %v3079 = vmul.f32 %v3056, 1.442695
  %v3080 = vpow.pop %v3079
  %v3081 = vmul.f32 %v3057, 1.442695
  %v3082 = vpow.pop %v3081
  %v3083 = vmul.f32 %v3058, 1.442695
  %v3084 = vpow.pop %v3083
  %v3085 = vmul.f32 %v3059, 1.442695
  %v3086 = vpow.pop %v3085
  %v3087 = vmul.f32 %v3060, 1.442695
  %v3088 = vpow.pop %v3087
  %v3089 = vmul.f32 %v3061, 1.442695
  %v3090 = vpow.pop %v3089
  %v3091 = vmul.f32 %v3062, 1.442695
  %v3092 = vpow.pop %v3091
  %v3093 = vmul.f32 %v3063, 1.442695
  %v3094 = vpow.pop %v3093
  %v3095 = vmul.f32 %v3064, 1.442695
  %v3096 = vpow.pop %v3095
  %3097 = vadd.xlane.f32.xlu0 %v3066
  %v3098 = vpop.xlane.xlu0 %3097
  %3099 = vadd.xlane.f32.xlu0 %v3068
  %v3100 = vpop.xlane.xlu0 %3099
  %3101 = vadd.xlane.f32.xlu0 %v3070
  %v3102 = vpop.xlane.xlu0 %3101
  %3103 = vadd.xlane.f32.xlu0 %v3072
  %v3104 = vpop.xlane.xlu0 %3103
  %3105 = vadd.xlane.f32.xlu0 %v3074
  %v3106 = vpop.xlane.xlu0 %3105
  %3107 = vadd.xlane.f32.xlu0 %v3076
  %v3108 = vpop.xlane.xlu0 %3107
  %3109 = vadd.xlane.f32.xlu0 %v3078
  %v3110 = vpop.xlane.xlu0 %3109
  %3111 = vadd.xlane.f32.xlu0 %v3080
  %v3112 = vpop.xlane.xlu0 %3111
  %3113 = vadd.xlane.f32.xlu0 %v3082
  %v3114 = vpop.xlane.xlu0 %3113
  %3115 = vadd.xlane.f32.xlu0 %v3084
  %v3116 = vpop.xlane.xlu0 %3115
  %3117 = vadd.xlane.f32.xlu0 %v3086
  %v3118 = vpop.xlane.xlu0 %3117
  %3119 = vadd.xlane.f32.xlu0 %v3088
  %v3120 = vpop.xlane.xlu0 %3119
  %3121 = vadd.xlane.f32.xlu0 %v3090
  %v3122 = vpop.xlane.xlu0 %3121
  %3123 = vadd.xlane.f32.xlu0 %v3092
  %v3124 = vpop.xlane.xlu0 %3123
  %3125 = vadd.xlane.f32.xlu0 %v3094
  %v3126 = vpop.xlane.xlu0 %3125
  %3127 = vadd.xlane.f32.xlu0 %v3096
  %v3128 = vpop.xlane.xlu0 %3127
  %v3129 = vrcp.pop %v3098
  %v3130 = vmul.f32 1.0, %v3129
  %v3131 = vrcp.pop %v3100
  %v3132 = vmul.f32 1.0, %v3131
  %v3133 = vrcp.pop %v3102
  %v3134 = vmul.f32 1.0, %v3133
  %v3135 = vrcp.pop %v3104
  %v3136 = vmul.f32 1.0, %v3135
  %v3137 = vrcp.pop %v3106
  %v3138 = vmul.f32 1.0, %v3137
  %v3139 = vrcp.pop %v3108
  %v3140 = vmul.f32 1.0, %v3139
  %v3141 = vrcp.pop %v3110
  %v3142 = vmul.f32 1.0, %v3141
  %v3143 = vrcp.pop %v3112
  %v3144 = vmul.f32 1.0, %v3143
  %v3145 = vrcp.pop %v3114
  %v3146 = vmul.f32 1.0, %v3145
  %v3147 = vrcp.pop %v3116
  %v3148 = vmul.f32 1.0, %v3147
  %v3149 = vrcp.pop %v3118
  %v3150 = vmul.f32 1.0, %v3149
  %v3151 = vrcp.pop %v3120
  %v3152 = vmul.f32 1.0, %v3151
  %v3153 = vrcp.pop %v3122
  %v3154 = vmul.f32 1.0, %v3153
  %v3155 = vrcp.pop %v3124
  %v3156 = vmul.f32 1.0, %v3155
  %v3157 = vrcp.pop %v3126
  %v3158 = vmul.f32 1.0, %v3157
  %v3159 = vrcp.pop %v3128
  %v3160 = vmul.f32 1.0, %v3159
  %v3161 = vmul.f32 %v3066, %v3130
  %v3162 = vmul.f32 %v3068, %v3132
  %v3163 = vmul.f32 %v3070, %v3134
  %v3164 = vmul.f32 %v3072, %v3136
  %v3165 = vmul.f32 %v3074, %v3138
  %v3166 = vmul.f32 %v3076, %v3140
  %v3167 = vmul.f32 %v3078, %v3142
  %v3168 = vmul.f32 %v3080, %v3144
  %v3169 = vmul.f32 %v3082, %v3146
  %v3170 = vmul.f32 %v3084, %v3148
  %v3171 = vmul.f32 %v3086, %v3150
  %v3172 = vmul.f32 %v3088, %v3152
  %v3173 = vmul.f32 %v3090, %v3154
  %v3174 = vmul.f32 %v3092, %v3156
  %v3175 = vmul.f32 %v3094, %v3158
  %v3176 = vmul.f32 %v3096, %v3160
  %3193 = vrot.lane.b32.xlu0 %v2134, 64
  %v3194 = vpop.permute.xlu0 %3193
  %3195 = vrot.lane.b32.xlu0 %v2135, 64
  %v3196 = vpop.permute.xlu0 %3195
  %3197 = vrot.lane.b32.xlu0 %v2136, 64
  %v3198 = vpop.permute.xlu0 %3197
  %3199 = vrot.lane.b32.xlu0 %v2137, 64
  %v3200 = vpop.permute.xlu0 %3199
  %3201 = vrot.lane.b32.xlu0 %v2138, 64
  %v3202 = vpop.permute.xlu0 %3201
  %3203 = vrot.lane.b32.xlu0 %v2139, 64
  %v3204 = vpop.permute.xlu0 %3203
  %3205 = vrot.lane.b32.xlu0 %v2140, 64
  %v3206 = vpop.permute.xlu0 %3205
  %3207 = vrot.lane.b32.xlu0 %v2141, 64
  %v3208 = vpop.permute.xlu0 %3207
  %3209 = vrot.lane.b32.xlu0 %v2142, 64
  %v3210 = vpop.permute.xlu0 %3209
  %3211 = vrot.lane.b32.xlu0 %v2143, 64
  %v3212 = vpop.permute.xlu0 %3211
  %3213 = vrot.lane.b32.xlu0 %v2144, 64
  %v3214 = vpop.permute.xlu0 %3213
  %3215 = vrot.lane.b32.xlu0 %v2145, 64
  %v3216 = vpop.permute.xlu0 %3215
  %3217 = vrot.lane.b32.xlu0 %v2146, 64
  %v3218 = vpop.permute.xlu0 %3217
  %3219 = vrot.lane.b32.xlu0 %v2147, 64
  %v3220 = vpop.permute.xlu0 %3219
  %3221 = vrot.lane.b32.xlu0 %v2148, 64
  %v3222 = vpop.permute.xlu0 %3221
  %3223 = vrot.lane.b32.xlu0 %v2149, 64
  %v3224 = vpop.permute.xlu0 %3223
  %3241 = vmatprep.subr.mxu0 0.0
  %3242 = vmatpush1.msra.mxu0 %v3194
  %3243 = vmatprep.subr.mxu0 0.0
  %3244 = vmatpush1.msra.mxu0 %v3196
  %3245 = vmatprep.subr.mxu0 0.0
  %3246 = vmatpush1.msra.mxu0 %v3198
  %3247 = vmatprep.subr.mxu0 0.0
  %3248 = vmatpush1.msra.mxu0 %v3200
  %3249 = vmatprep.subr.mxu0 0.0
  %3250 = vmatpush1.msra.mxu0 %v3202
  %3251 = vmatprep.subr.mxu0 0.0
  %3252 = vmatpush1.msra.mxu0 %v3204
  %3253 = vmatprep.subr.mxu0 0.0
  %3254 = vmatpush1.msra.mxu0 %v3206
  %3255 = vmatprep.subr.mxu0 0.0
  %3256 = vmatpush1.msra.mxu0 %v3208
  %3257 = vmatprep.subr.mxu0 0.0
  %3258 = vmatpush1.msra.mxu0 %v3210
  %3259 = vmatprep.subr.mxu0 0.0
  %3260 = vmatpush1.msra.mxu0 %v3212
  %3261 = vmatprep.subr.mxu0 0.0
  %3262 = vmatpush1.msra.mxu0 %v3214
  %3263 = vmatprep.subr.mxu0 0.0
  %3264 = vmatpush1.msra.mxu0 %v3216
  %3265 = vmatprep.subr.mxu0 0.0
  %3266 = vmatpush1.msra.mxu0 %v3218
  %3267 = vmatprep.subr.mxu0 0.0
  %3268 = vmatpush1.msra.mxu0 %v3220
  %3269 = vmatprep.subr.mxu0 0.0
  %3270 = vmatpush1.msra.mxu0 %v3222
  %3271 = vmatprep.subr.mxu0 0.0
  %3272 = vmatpush1.msra.mxu0 %v3224
  %3273 = vmatprep.subr.mxu0 0.0
  %3274 = vmatpush1.msra.mxu0 0.0
  %3275 = vmatprep.subr.mxu0 0.0
  %3276 = vmatpush1.msra.mxu0 0.0
  %3277 = vmatprep.subr.mxu0 0.0
  %3278 = vmatpush1.msra.mxu0 0.0
  %3279 = vmatprep.subr.mxu0 0.0
  %3280 = vmatpush1.msra.mxu0 0.0
  %3281 = vmatprep.subr.mxu0 0.0
  %3282 = vmatpush1.msra.mxu0 0.0
  %3283 = vmatprep.subr.mxu0 0.0
  %3284 = vmatpush1.msra.mxu0 0.0
  %3285 = vmatprep.subr.mxu0 0.0
  %3286 = vmatpush1.msra.mxu0 0.0
  %3287 = vmatprep.subr.mxu0 0.0
  %3288 = vmatpush1.msra.mxu0 0.0
  %3289 = vmatprep.subr.mxu0 0.0
  %3290 = vmatpush1.msra.mxu0 0.0
  %3291 = vmatprep.subr.mxu0 0.0
  %3292 = vmatpush1.msra.mxu0 0.0
  %3293 = vmatprep.subr.mxu0 0.0
  %3294 = vmatpush1.msra.mxu0 0.0
  %3295 = vmatprep.subr.mxu0 0.0
  %3296 = vmatpush1.msra.mxu0 0.0
  %3297 = vmatprep.subr.mxu0 0.0
  %3298 = vmatpush1.msra.mxu0 0.0
  %3299 = vmatprep.subr.mxu0 0.0
  %3300 = vmatpush1.msra.mxu0 0.0
  %3301 = vmatprep.subr.mxu0 0.0
  %3302 = vmatpush1.msra.mxu0 0.0
  %3303 = vmatprep.subr.mxu0 0.0
  %3304 = vmatpush1.msra.mxu0 0.0
  %3305 = vmatprep.mubr.f32.mxu0 0.0
  %3306 = vmatmul.mubr.f32.gmra.mrb[0].mxu0 %v3161
  %v3307 = vpop.f32.mrb[0].mxu0
  %v3308 = vadd.f32 0.0, %v3307
  %v3309 = vpop.f32.mrb[0].mxu0
  %3310 = vmatprep.mubr.f32.mxu0 0.0
  %3311 = vmatmul.mubr.f32.gmra.mrb[0].mxu0 %v3162
  %v3312 = vpop.f32.mrb[0].mxu0
  %v3313 = vadd.f32 0.0, %v3312
  %v3314 = vpop.f32.mrb[0].mxu0
  %3315 = vmatprep.mubr.f32.mxu0 0.0
  %3316 = vmatmul.mubr.f32.gmra.mrb[0].mxu0 %v3163
  %v3317 = vpop.f32.mrb[0].mxu0
  %v3318 = vadd.f32 0.0, %v3317
  %v3319 = vpop.f32.mrb[0].mxu0
  %3320 = vmatprep.mubr.f32.mxu0 0.0
  %3321 = vmatmul.mubr.f32.gmra.mrb[0].mxu0 %v3164
  %v3322 = vpop.f32.mrb[0].mxu0
  %v3323 = vadd.f32 0.0, %v3322
  %v3324 = vpop.f32.mrb[0].mxu0
  %3325 = vmatprep.mubr.f32.mxu0 0.0
  %3326 = vmatmul.mubr.f32.gmra.mrb[0].mxu0 %v3165
  %v3327 = vpop.f32.mrb[0].mxu0
  %v3328 = vadd.f32 0.0, %v3327
  %v3329 = vpop.f32.mrb[0].mxu0
  %3330 = vmatprep.mubr.f32.mxu0 0.0
  %3331 = vmatmul.mubr.f32.gmra.mrb[0].mxu0 %v3166
  %v3332 = vpop.f32.mrb[0].mxu0
  %v3333 = vadd.f32 0.0, %v3332
  %v3334 = vpop.f32.mrb[0].mxu0
  %3335 = vmatprep.mubr.f32.mxu0 0.0
  %3336 = vmatmul.mubr.f32.gmra.mrb[0].mxu0 %v3167
  %v3337 = vpop.f32.mrb[0].mxu0
  %v3338 = vadd.f32 0.0, %v3337
  %v3339 = vpop.f32.mrb[0].mxu0
  %3340 = vmatprep.mubr.f32.mxu0 0.0
  %3341 = vmatmul.mubr.f32.gmra.mrb[0].mxu0 %v3168
  %v3342 = vpop.f32.mrb[0].mxu0
  %v3343 = vadd.f32 0.0, %v3342
  %v3344 = vpop.f32.mrb[0].mxu0
  %3345 = vmatprep.mubr.f32.mxu0 0.0
  %3346 = vmatmul.mubr.f32.gmra.mrb[0].mxu0 %v3169
  %v3347 = vpop.f32.mrb[0].mxu0
  %v3348 = vadd.f32 0.0, %v3347
  %v3349 = vpop.f32.mrb[0].mxu0
  %3350 = vmatprep.mubr.f32.mxu0 0.0
  %3351 = vmatmul.mubr.f32.gmra.mrb[0].mxu0 %v3170
  %v3352 = vpop.f32.mrb[0].mxu0
  %v3353 = vadd.f32 0.0, %v3352
  %v3354 = vpop.f32.mrb[0].mxu0
  %3355 = vmatprep.mubr.f32.mxu0 0.0
  %3356 = vmatmul.mubr.f32.gmra.mrb[0].mxu0 %v3171
  %v3357 = vpop.f32.mrb[0].mxu0
  %v3358 = vadd.f32 0.0, %v3357
  %v3359 = vpop.f32.mrb[0].mxu0
  %3360 = vmatprep.mubr.f32.mxu0 0.0
  %3361 = vmatmul.mubr.f32.gmra.mrb[0].mxu0 %v3172
  %v3362 = vpop.f32.mrb[0].mxu0
  %v3363 = vadd.f32 0.0, %v3362
  %v3364 = vpop.f32.mrb[0].mxu0
  %3365 = vmatprep.mubr.f32.mxu0 0.0
  %3366 = vmatmul.mubr.f32.gmra.mrb[0].mxu0 %v3173
  %v3367 = vpop.f32.mrb[0].mxu0
  %v3368 = vadd.f32 0.0, %v3367
  %v3369 = vpop.f32.mrb[0].mxu0
  %3370 = vmatprep.mubr.f32.mxu0 0.0
  %3371 = vmatmul.mubr.f32.gmra.mrb[0].mxu0 %v3174
  %v3372 = vpop.f32.mrb[0].mxu0
  %v3373 = vadd.f32 0.0, %v3372
  %v3374 = vpop.f32.mrb[0].mxu0
  %3375 = vmatprep.mubr.f32.mxu0 0.0
  %3376 = vmatmul.mubr.f32.gmra.mrb[0].mxu0 %v3175
  %v3377 = vpop.f32.mrb[0].mxu0
  %v3378 = vadd.f32 0.0, %v3377
  %v3379 = vpop.f32.mrb[0].mxu0
  %3380 = vmatprep.mubr.f32.mxu0 0.0
  %3381 = vmatmul.mubr.f32.gmra.mrb[0].mxu0 %v3176
  %v3382 = vpop.f32.mrb[0].mxu0
  %v3383 = vadd.f32 0.0, %v3382
  %v3384 = vpop.f32.mrb[0].mxu0
  %3385 = vdwg.mxu0
  %v3386 = vadd.f32 %v2728, %v3308
  %v3387 = vadd.f32 %v2729, %v3313
  %v3388 = vadd.f32 %v2730, %v3318
  %v3389 = vadd.f32 %v2731, %v3323
  %v3390 = vadd.f32 %v2732, %v3328
  %v3391 = vadd.f32 %v2733, %v3333
  %v3392 = vadd.f32 %v2734, %v3338
  %v3393 = vadd.f32 %v2735, %v3343
  %v3394 = vadd.f32 %v2736, %v3348
  %v3395 = vadd.f32 %v2737, %v3353
  %v3396 = vadd.f32 %v2738, %v3358
  %v3397 = vadd.f32 %v2739, %v3363
  %v3398 = vadd.f32 %v2740, %v3368
  %v3399 = vadd.f32 %v2741, %v3373
  %v3400 = vadd.f32 %v2742, %v3378
  %v3401 = vadd.f32 %v2743, %v3383
  %v3403 = vlaneseq
  %v3404 = vshrl.u32 %v3403, 7
  %v3405 = vsub.s32 0, %v3404
  %v3406 = vrot.slane %v880, %v3405
  %v3408 = vadd.f32 %v3386, %v3406
  %v3409 = vadd.f32 %v3387, %v3406
  %v3410 = vadd.f32 %v3388, %v3406
  %v3411 = vadd.f32 %v3389, %v3406
  %v3412 = vadd.f32 %v3390, %v3406
  %v3413 = vadd.f32 %v3391, %v3406
  %v3414 = vadd.f32 %v3392, %v3406
  %v3415 = vadd.f32 %v3393, %v3406
  %v3416 = vadd.f32 %v3394, %v3406
  %v3417 = vadd.f32 %v3395, %v3406
  %v3418 = vadd.f32 %v3396, %v3406
  %v3419 = vadd.f32 %v3397, %v3406
  %v3420 = vadd.f32 %v3398, %v3406
  %v3421 = vadd.f32 %v3399, %v3406
  %v3422 = vadd.f32 %v3400, %v3406
  %v3423 = vadd.f32 %v3401, %v3406
  %3424 = vst.msk [vmem:[%s4] sm:$0xff] %vm90, %v3408
  %3425 = vst.msk [vmem:[%s4 + $0x8] sm:$0xff] %vm90, %v3409
  %3426 = vst.msk [vmem:[%s4 + $0x10] sm:$0xff] %vm90, %v3410
  %3427 = vst.msk [vmem:[%s4 + $0x18] sm:$0xff] %vm90, %v3411
  %3428 = vst.msk [vmem:[%s4 + $0x20] sm:$0xff] %vm90, %v3412
  %3429 = vst.msk [vmem:[%s4 + $0x28] sm:$0xff] %vm90, %v3413
  %3430 = vst.msk [vmem:[%s4 + $0x30] sm:$0xff] %vm90, %v3414
  %3431 = vst.msk [vmem:[%s4 + $0x38] sm:$0xff] %vm90, %v3415
  %3432 = vst.msk [vmem:[%s4 + $0x40] sm:$0xff] %vm90, %v3416
  %3433 = vst.msk [vmem:[%s4 + $0x48] sm:$0xff] %vm90, %v3417
  %3434 = vst.msk [vmem:[%s4 + $0x50] sm:$0xff] %vm90, %v3418
  %3435 = vst.msk [vmem:[%s4 + $0x58] sm:$0xff] %vm90, %v3419
  %3436 = vst.msk [vmem:[%s4 + $0x60] sm:$0xff] %vm90, %v3420
  %3437 = vst.msk [vmem:[%s4 + $0x68] sm:$0xff] %vm90, %v3421
  %3438 = vst.msk [vmem:[%s4 + $0x70] sm:$0xff] %vm90, %v3422
  %3439 = vst.msk [vmem:[%s4 + $0x78] sm:$0xff] %vm90, %v3423
  %v3440 = vld [vmem:[#allocation2 + $0x180] sm:$0xff]
  %v3441 = vld [vmem:[#allocation2 + $0x198] sm:$0xff]
  %v3442 = vld [vmem:[#allocation2 + $0x1b0] sm:$0xff]
  %v3443 = vld [vmem:[#allocation2 + $0x1c8] sm:$0xff]
  %v3444 = vld [vmem:[#allocation2 + $0x1e0] sm:$0xff]
  %v3445 = vld [vmem:[#allocation2 + $0x1f8] sm:$0xff]
  %v3446 = vld [vmem:[#allocation2 + $0x210] sm:$0xff]
  %v3447 = vld [vmem:[#allocation2 + $0x228] sm:$0xff]
  %v3448 = vld [vmem:[#allocation2 + $0x240] sm:$0xff]
  %v3449 = vld [vmem:[#allocation2 + $0x258] sm:$0xff]
  %v3450 = vld [vmem:[#allocation2 + $0x270] sm:$0xff]
  %v3451 = vld [vmem:[#allocation2 + $0x288] sm:$0xff]
  %v3452 = vld [vmem:[#allocation2 + $0x2a0] sm:$0xff]
  %v3453 = vld [vmem:[#allocation2 + $0x2b8] sm:$0xff]
  %v3454 = vld [vmem:[#allocation2 + $0x2d0] sm:$0xff]
  %v3455 = vld [vmem:[#allocation2 + $0x2e8] sm:$0xff]
  %v3456 = vld [vmem:[#allocation2 + $0x188] sm:$0xff]
  %v3457 = vld [vmem:[#allocation2 + $0x1a0] sm:$0xff]
  %v3458 = vld [vmem:[#allocation2 + $0x1b8] sm:$0xff]
  %v3459 = vld [vmem:[#allocation2 + $0x1d0] sm:$0xff]
  %v3460 = vld [vmem:[#allocation2 + $0x1e8] sm:$0xff]
  %v3461 = vld [vmem:[#allocation2 + $0x200] sm:$0xff]
  %v3462 = vld [vmem:[#allocation2 + $0x218] sm:$0xff]
  %v3463 = vld [vmem:[#allocation2 + $0x230] sm:$0xff]
  %v3464 = vld [vmem:[#allocation2 + $0x248] sm:$0xff]
  %v3465 = vld [vmem:[#allocation2 + $0x260] sm:$0xff]
  %v3466 = vld [vmem:[#allocation2 + $0x278] sm:$0xff]
  %v3467 = vld [vmem:[#allocation2 + $0x290] sm:$0xff]
  %v3468 = vld [vmem:[#allocation2 + $0x2a8] sm:$0xff]
  %v3469 = vld [vmem:[#allocation2 + $0x2c0] sm:$0xff]
  %v3470 = vld [vmem:[#allocation2 + $0x2d8] sm:$0xff]
  %v3471 = vld [vmem:[#allocation2 + $0x2f0] sm:$0xff]
  %v3472 = vld [vmem:[#allocation3] sm:$0xff]
  %v3473 = vld [vmem:[#allocation3 + $0x8] sm:$0xff]
  %v3474 = vld [vmem:[#allocation3 + $0x10] sm:$0xff]
  %v3475 = vld [vmem:[#allocation3 + $0x18] sm:$0xff]
  %v3476 = vld [vmem:[#allocation3 + $0x20] sm:$0xff]
  %v3477 = vld [vmem:[#allocation3 + $0x28] sm:$0xff]
  %v3478 = vld [vmem:[#allocation3 + $0x30] sm:$0xff]
  %v3479 = vld [vmem:[#allocation3 + $0x38] sm:$0xff]
  %v3480 = vld [vmem:[#allocation3 + $0x40] sm:$0xff]
  %v3481 = vld [vmem:[#allocation3 + $0x48] sm:$0xff]
  %v3482 = vld [vmem:[#allocation3 + $0x50] sm:$0xff]
  %v3483 = vld [vmem:[#allocation3 + $0x58] sm:$0xff]
  %v3484 = vld [vmem:[#allocation3 + $0x60] sm:$0xff]
  %v3485 = vld [vmem:[#allocation3 + $0x68] sm:$0xff]
  %v3486 = vld [vmem:[#allocation3 + $0x70] sm:$0xff]
  %v3487 = vld [vmem:[#allocation3 + $0x78] sm:$0xff]
  %3504 = vrot.lane.b32.xlu0 %v3440, 64
  %v3505 = vpop.permute.xlu0 %3504
  %3506 = vrot.lane.b32.xlu0 %v3441, 64
  %v3507 = vpop.permute.xlu0 %3506
  %3508 = vrot.lane.b32.xlu0 %v3442, 64
  %v3509 = vpop.permute.xlu0 %3508
  %3510 = vrot.lane.b32.xlu0 %v3443, 64
  %v3511 = vpop.permute.xlu0 %3510
  %3512 = vrot.lane.b32.xlu0 %v3444, 64
  %v3513 = vpop.permute.xlu0 %3512
  %3514 = vrot.lane.b32.xlu0 %v3445, 64
  %v3515 = vpop.permute.xlu0 %3514
  %3516 = vrot.lane.b32.xlu0 %v3446, 64
  %v3517 = vpop.permute.xlu0 %3516
  %3518 = vrot.lane.b32.xlu0 %v3447, 64
  %v3519 = vpop.permute.xlu0 %3518
  %3520 = vrot.lane.b32.xlu0 %v3448, 64
  %v3521 = vpop.permute.xlu0 %3520
  %3522 = vrot.lane.b32.xlu0 %v3449, 64
  %v3523 = vpop.permute.xlu0 %3522
  %3524 = vrot.lane.b32.xlu0 %v3450, 64
  %v3525 = vpop.permute.xlu0 %3524
  %3526 = vrot.lane.b32.xlu0 %v3451, 64
  %v3527 = vpop.permute.xlu0 %3526
  %3528 = vrot.lane.b32.xlu0 %v3452, 64
  %v3529 = vpop.permute.xlu0 %3528
  %3530 = vrot.lane.b32.xlu0 %v3453, 64
  %v3531 = vpop.permute.xlu0 %3530
  %3532 = vrot.lane.b32.xlu0 %v3454, 64
  %v3533 = vpop.permute.xlu0 %3532
  %3534 = vrot.lane.b32.xlu0 %v3455, 64
  %v3535 = vpop.permute.xlu0 %3534
  %v3536 = vsel %vm977, %v3440, 0
  %v3538 = vsel %vm977, %v3441, 0
  %v3540 = vsel %vm977, %v3442, 0
  %v3542 = vsel %vm977, %v3443, 0
  %v3544 = vsel %vm977, %v3444, 0
  %v3546 = vsel %vm977, %v3445, 0
  %v3548 = vsel %vm977, %v3446, 0
  %v3550 = vsel %vm977, %v3447, 0
  %v3552 = vsel %vm977, %v3448, 0
  %v3554 = vsel %vm977, %v3449, 0
  %v3556 = vsel %vm977, %v3450, 0
  %v3558 = vsel %vm977, %v3451, 0
  %v3560 = vsel %vm977, %v3452, 0
  %v3562 = vsel %vm977, %v3453, 0
  %v3564 = vsel %vm977, %v3454, 0
  %v3566 = vsel %vm977, %v3455, 0
  %v3568 = vsel %vm977, %v3505, 0
  %v3570 = vsel %vm977, %v3507, 0
  %v3572 = vsel %vm977, %v3509, 0
  %v3574 = vsel %vm977, %v3511, 0
  %v3576 = vsel %vm977, %v3513, 0
  %v3578 = vsel %vm977, %v3515, 0
  %v3580 = vsel %vm977, %v3517, 0
  %v3582 = vsel %vm977, %v3519, 0
  %v3584 = vsel %vm977, %v3521, 0
  %v3586 = vsel %vm977, %v3523, 0
  %v3588 = vsel %vm977, %v3525, 0
  %v3590 = vsel %vm977, %v3527, 0
  %v3592 = vsel %vm977, %v3529, 0
  %v3594 = vsel %vm977, %v3531, 0
  %v3596 = vsel %vm977, %v3533, 0
  %v3598 = vsel %vm977, %v3535, 0
  %3600 = vmatprep.subr.mxu0 0.0
  %3601 = vmatpush1.xpose.msra.mxu0 %v3568
  %3602 = vmatprep.subr.mxu0 0.0
  %3603 = vmatpush1.xpose.msra.mxu0 %v3570
  %3604 = vmatprep.subr.mxu0 0.0
  %3605 = vmatpush1.xpose.msra.mxu0 %v3572
  %3606 = vmatprep.subr.mxu0 0.0
  %3607 = vmatpush1.xpose.msra.mxu0 %v3574
  %3608 = vmatprep.subr.mxu0 0.0
  %3609 = vmatpush1.xpose.msra.mxu0 %v3576
  %3610 = vmatprep.subr.mxu0 0.0
  %3611 = vmatpush1.xpose.msra.mxu0 %v3578
  %3612 = vmatprep.subr.mxu0 0.0
  %3613 = vmatpush1.xpose.msra.mxu0 %v3580
  %3614 = vmatprep.subr.mxu0 0.0
  %3615 = vmatpush1.xpose.msra.mxu0 %v3582
  %3616 = vmatprep.subr.mxu0 0.0
  %3617 = vmatpush1.xpose.msra.mxu0 %v3584
  %3618 = vmatprep.subr.mxu0 0.0
  %3619 = vmatpush1.xpose.msra.mxu0 %v3586
  %3620 = vmatprep.subr.mxu0 0.0
  %3621 = vmatpush1.xpose.msra.mxu0 %v3588
  %3622 = vmatprep.subr.mxu0 0.0
  %3623 = vmatpush1.xpose.msra.mxu0 %v3590
  %3624 = vmatprep.subr.mxu0 0.0
  %3625 = vmatpush1.xpose.msra.mxu0 %v3592
  %3626 = vmatprep.subr.mxu0 0.0
  %3627 = vmatpush1.xpose.msra.mxu0 %v3594
  %3628 = vmatprep.subr.mxu0 0.0
  %3629 = vmatpush1.xpose.msra.mxu0 %v3596
  %3630 = vmatprep.subr.mxu0 0.0
  %3631 = vmatpush1.xpose.msra.mxu0 %v3598
  %3632 = vmatprep.subr.mxu0 0.0
  %3633 = vmatpush1.xpose.msra.mxu0 0.0
  %3634 = vmatprep.subr.mxu0 0.0
  %3635 = vmatpush1.xpose.msra.mxu0 0.0
  %3636 = vmatprep.subr.mxu0 0.0
  %3637 = vmatpush1.xpose.msra.mxu0 0.0
  %3638 = vmatprep.subr.mxu0 0.0
  %3639 = vmatpush1.xpose.msra.mxu0 0.0
  %3640 = vmatprep.subr.mxu0 0.0
  %3641 = vmatpush1.xpose.msra.mxu0 0.0
  %3642 = vmatprep.subr.mxu0 0.0
  %3643 = vmatpush1.xpose.msra.mxu0 0.0
  %3644 = vmatprep.subr.mxu0 0.0
  %3645 = vmatpush1.xpose.msra.mxu0 0.0
  %3646 = vmatprep.subr.mxu0 0.0
  %3647 = vmatpush1.xpose.msra.mxu0 0.0
  %3648 = vmatprep.subr.mxu0 0.0
  %3649 = vmatpush1.xpose.msra.mxu0 0.0
  %3650 = vmatprep.subr.mxu0 0.0
  %3651 = vmatpush1.xpose.msra.mxu0 0.0
  %3652 = vmatprep.subr.mxu0 0.0
  %3653 = vmatpush1.xpose.msra.mxu0 0.0
  %3654 = vmatprep.subr.mxu0 0.0
  %3655 = vmatpush1.xpose.msra.mxu0 0.0
  %3656 = vmatprep.subr.mxu0 0.0
  %3657 = vmatpush1.xpose.msra.mxu0 0.0
  %3658 = vmatprep.subr.mxu0 0.0
  %3659 = vmatpush1.xpose.msra.mxu0 0.0
  %3660 = vmatprep.subr.mxu0 0.0
  %3661 = vmatpush1.xpose.msra.mxu0 0.0
  %3662 = vmatprep.subr.mxu0 0.0
  %3663 = vmatpush1.xpose.msra.mxu0 0.0
  %3664 = vmatprep.mubr.f32.mxu0 0.0
  %3665 = vmatmul.mubr.f32.gmra.mrb[0].mxu0 %v3536
  %v3666 = vpop.f32.mrb[0].mxu0
  %v3667 = vadd.f32 %v3472, %v3666
  %v3668 = vpop.f32.mrb[0].mxu0
  %3669 = vmatprep.mubr.f32.mxu0 0.0
  %3670 = vmatmul.mubr.f32.gmra.mrb[0].mxu0 %v3538
  %v3671 = vpop.f32.mrb[0].mxu0
  %v3672 = vadd.f32 %v3473, %v3671
  %v3673 = vpop.f32.mrb[0].mxu0
  %3674 = vmatprep.mubr.f32.mxu0 0.0
  %3675 = vmatmul.mubr.f32.gmra.mrb[0].mxu0 %v3540
  %v3676 = vpop.f32.mrb[0].mxu0
  %v3677 = vadd.f32 %v3474, %v3676
  %v3678 = vpop.f32.mrb[0].mxu0
  %3679 = vmatprep.mubr.f32.mxu0 0.0
  %3680 = vmatmul.mubr.f32.gmra.mrb[0].mxu0 %v3542
  %v3681 = vpop.f32.mrb[0].mxu0
  %v3682 = vadd.f32 %v3475, %v3681
  %v3683 = vpop.f32.mrb[0].mxu0
  %3684 = vmatprep.mubr.f32.mxu0 0.0
  %3685 = vmatmul.mubr.f32.gmra.mrb[0].mxu0 %v3544
  %v3686 = vpop.f32.mrb[0].mxu0
  %v3687 = vadd.f32 %v3476, %v3686
  %v3688 = vpop.f32.mrb[0].mxu0
  %3689 = vmatprep.mubr.f32.mxu0 0.0
  %3690 = vmatmul.mubr.f32.gmra.mrb[0].mxu0 %v3546
  %v3691 = vpop.f32.mrb[0].mxu0
  %v3692 = vadd.f32 %v3477, %v3691
  %v3693 = vpop.f32.mrb[0].mxu0
  %3694 = vmatprep.mubr.f32.mxu0 0.0
  %3695 = vmatmul.mubr.f32.gmra.mrb[0].mxu0 %v3548
  %v3696 = vpop.f32.mrb[0].mxu0
  %v3697 = vadd.f32 %v3478, %v3696
  %v3698 = vpop.f32.mrb[0].mxu0
  %3699 = vmatprep.mubr.f32.mxu0 0.0
  %3700 = vmatmul.mubr.f32.gmra.mrb[0].mxu0 %v3550
  %v3701 = vpop.f32.mrb[0].mxu0
  %v3702 = vadd.f32 %v3479, %v3701
  %v3703 = vpop.f32.mrb[0].mxu0
  %3704 = vmatprep.mubr.f32.mxu0 0.0
  %3705 = vmatmul.mubr.f32.gmra.mrb[0].mxu0 %v3552
  %v3706 = vpop.f32.mrb[0].mxu0
  %v3707 = vadd.f32 %v3480, %v3706
  %v3708 = vpop.f32.mrb[0].mxu0
  %3709 = vmatprep.mubr.f32.mxu0 0.0
  %3710 = vmatmul.mubr.f32.gmra.mrb[0].mxu0 %v3554
  %v3711 = vpop.f32.mrb[0].mxu0
  %v3712 = vadd.f32 %v3481, %v3711
  %v3713 = vpop.f32.mrb[0].mxu0
  %3714 = vmatprep.mubr.f32.mxu0 0.0
  %3715 = vmatmul.mubr.f32.gmra.mrb[0].mxu0 %v3556
  %v3716 = vpop.f32.mrb[0].mxu0
  %v3717 = vadd.f32 %v3482, %v3716
  %v3718 = vpop.f32.mrb[0].mxu0
  %3719 = vmatprep.mubr.f32.mxu0 0.0
  %3720 = vmatmul.mubr.f32.gmra.mrb[0].mxu0 %v3558
  %v3721 = vpop.f32.mrb[0].mxu0
  %v3722 = vadd.f32 %v3483, %v3721
  %v3723 = vpop.f32.mrb[0].mxu0
  %3724 = vmatprep.mubr.f32.mxu0 0.0
  %3725 = vmatmul.mubr.f32.gmra.mrb[0].mxu0 %v3560
  %v3726 = vpop.f32.mrb[0].mxu0
  %v3727 = vadd.f32 %v3484, %v3726
  %v3728 = vpop.f32.mrb[0].mxu0
  %3729 = vmatprep.mubr.f32.mxu0 0.0
  %3730 = vmatmul.mubr.f32.gmra.mrb[0].mxu0 %v3562
  %v3731 = vpop.f32.mrb[0].mxu0
  %v3732 = vadd.f32 %v3485, %v3731
  %v3733 = vpop.f32.mrb[0].mxu0
  %3734 = vmatprep.mubr.f32.mxu0 0.0
  %3735 = vmatmul.mubr.f32.gmra.mrb[0].mxu0 %v3564
  %v3736 = vpop.f32.mrb[0].mxu0
  %v3737 = vadd.f32 %v3486, %v3736
  %v3738 = vpop.f32.mrb[0].mxu0
  %3739 = vmatprep.mubr.f32.mxu0 0.0
  %3740 = vmatmul.mubr.f32.gmra.mrb[0].mxu0 %v3566
  %v3741 = vpop.f32.mrb[0].mxu0
  %v3742 = vadd.f32 %v3487, %v3741
  %v3743 = vpop.f32.mrb[0].mxu0
  %3744 = vdwg.mxu0
  %3745 = vmax.xlane.f32.xlu0 %v3667
  %v3746 = vpop.xlane.xlu0 %3745
  %3747 = vmax.xlane.f32.xlu0 %v3672
  %v3748 = vpop.xlane.xlu0 %3747
  %3749 = vmax.xlane.f32.xlu0 %v3677
  %v3750 = vpop.xlane.xlu0 %3749
  %3751 = vmax.xlane.f32.xlu0 %v3682
  %v3752 = vpop.xlane.xlu0 %3751
  %3753 = vmax.xlane.f32.xlu0 %v3687
  %v3754 = vpop.xlane.xlu0 %3753
  %3755 = vmax.xlane.f32.xlu0 %v3692
  %v3756 = vpop.xlane.xlu0 %3755
  %3757 = vmax.xlane.f32.xlu0 %v3697
  %v3758 = vpop.xlane.xlu0 %3757
  %3759 = vmax.xlane.f32.xlu0 %v3702
  %v3760 = vpop.xlane.xlu0 %3759
  %3761 = vmax.xlane.f32.xlu0 %v3707
  %v3762 = vpop.xlane.xlu0 %3761
  %3763 = vmax.xlane.f32.xlu0 %v3712
  %v3764 = vpop.xlane.xlu0 %3763
  %3765 = vmax.xlane.f32.xlu0 %v3717
  %v3766 = vpop.xlane.xlu0 %3765
  %3767 = vmax.xlane.f32.xlu0 %v3722
  %v3768 = vpop.xlane.xlu0 %3767
  %3769 = vmax.xlane.f32.xlu0 %v3727
  %v3770 = vpop.xlane.xlu0 %3769
  %3771 = vmax.xlane.f32.xlu0 %v3732
  %v3772 = vpop.xlane.xlu0 %3771
  %3773 = vmax.xlane.f32.xlu0 %v3737
  %v3774 = vpop.xlane.xlu0 %3773
  %3775 = vmax.xlane.f32.xlu0 %v3742
  %v3776 = vpop.xlane.xlu0 %3775
  %v3777 = vsub.f32 %v3667, %v3746
  %v3778 = vsub.f32 %v3672, %v3748
  %v3779 = vsub.f32 %v3677, %v3750
  %v3780 = vsub.f32 %v3682, %v3752
  %v3781 = vsub.f32 %v3687, %v3754
  %v3782 = vsub.f32 %v3692, %v3756
  %v3783 = vsub.f32 %v3697, %v3758
  %v3784 = vsub.f32 %v3702, %v3760
  %v3785 = vsub.f32 %v3707, %v3762
  %v3786 = vsub.f32 %v3712, %v3764
  %v3787 = vsub.f32 %v3717, %v3766
  %v3788 = vsub.f32 %v3722, %v3768
  %v3789 = vsub.f32 %v3727, %v3770
  %v3790 = vsub.f32 %v3732, %v3772
  %v3791 = vsub.f32 %v3737, %v3774
  %v3792 = vsub.f32 %v3742, %v3776
  %v3793 = vmul.f32 %v3777, 1.442695
  %v3794 = vpow.pop %v3793
  %v3795 = vmul.f32 %v3778, 1.442695
  %v3796 = vpow.pop %v3795
  %v3797 = vmul.f32 %v3779, 1.442695
  %v3798 = vpow.pop %v3797
  %v3799 = vmul.f32 %v3780, 1.442695
  %v3800 = vpow.pop %v3799
  %v3801 = vmul.f32 %v3781, 1.442695
  %v3802 = vpow.pop %v3801
  %v3803 = vmul.f32 %v3782, 1.442695
  %v3804 = vpow.pop %v3803
  %v3805 = vmul.f32 %v3783, 1.442695
  %v3806 = vpow.pop %v3805
  %v3807 = vmul.f32 %v3784, 1.442695
  %v3808 = vpow.pop %v3807
  %v3809 = vmul.f32 %v3785, 1.442695
  %v3810 = vpow.pop %v3809
  %v3811 = vmul.f32 %v3786, 1.442695
  %v3812 = vpow.pop %v3811
  %v3813 = vmul.f32 %v3787, 1.442695
  %v3814 = vpow.pop %v3813
  %v3815 = vmul.f32 %v3788, 1.442695
  %v3816 = vpow.pop %v3815
  %v3817 = vmul.f32 %v3789, 1.442695
  %v3818 = vpow.pop %v3817
  %v3819 = vmul.f32 %v3790, 1.442695
  %v3820 = vpow.pop %v3819
  %v3821 = vmul.f32 %v3791, 1.442695
  %v3822 = vpow.pop %v3821
  %v3823 = vmul.f32 %v3792, 1.442695
  %v3824 = vpow.pop %v3823
  %3825 = vadd.xlane.f32.xlu0 %v3794
  %v3826 = vpop.xlane.xlu0 %3825
  %3827 = vadd.xlane.f32.xlu0 %v3796
  %v3828 = vpop.xlane.xlu0 %3827
  %3829 = vadd.xlane.f32.xlu0 %v3798
  %v3830 = vpop.xlane.xlu0 %3829
  %3831 = vadd.xlane.f32.xlu0 %v3800
  %v3832 = vpop.xlane.xlu0 %3831
  %3833 = vadd.xlane.f32.xlu0 %v3802
  %v3834 = vpop.xlane.xlu0 %3833
  %3835 = vadd.xlane.f32.xlu0 %v3804
  %v3836 = vpop.xlane.xlu0 %3835
  %3837 = vadd.xlane.f32.xlu0 %v3806
  %v3838 = vpop.xlane.xlu0 %3837
  %3839 = vadd.xlane.f32.xlu0 %v3808
  %v3840 = vpop.xlane.xlu0 %3839
  %3841 = vadd.xlane.f32.xlu0 %v3810
  %v3842 = vpop.xlane.xlu0 %3841
  %3843 = vadd.xlane.f32.xlu0 %v3812
  %v3844 = vpop.xlane.xlu0 %3843
  %3845 = vadd.xlane.f32.xlu0 %v3814
  %v3846 = vpop.xlane.xlu0 %3845
  %3847 = vadd.xlane.f32.xlu0 %v3816
  %v3848 = vpop.xlane.xlu0 %3847
  %3849 = vadd.xlane.f32.xlu0 %v3818
  %v3850 = vpop.xlane.xlu0 %3849
  %3851 = vadd.xlane.f32.xlu0 %v3820
  %v3852 = vpop.xlane.xlu0 %3851
  %3853 = vadd.xlane.f32.xlu0 %v3822
  %v3854 = vpop.xlane.xlu0 %3853
  %3855 = vadd.xlane.f32.xlu0 %v3824
  %v3856 = vpop.xlane.xlu0 %3855
  %v3857 = vrcp.pop %v3826
  %v3858 = vmul.f32 1.0, %v3857
  %v3859 = vrcp.pop %v3828
  %v3860 = vmul.f32 1.0, %v3859
  %v3861 = vrcp.pop %v3830
  %v3862 = vmul.f32 1.0, %v3861
  %v3863 = vrcp.pop %v3832
  %v3864 = vmul.f32 1.0, %v3863
  %v3865 = vrcp.pop %v3834
  %v3866 = vmul.f32 1.0, %v3865
  %v3867 = vrcp.pop %v3836
  %v3868 = vmul.f32 1.0, %v3867
  %v3869 = vrcp.pop %v3838
  %v3870 = vmul.f32 1.0, %v3869
  %v3871 = vrcp.pop %v3840
  %v3872 = vmul.f32 1.0, %v3871
  %v3873 = vrcp.pop %v3842
  %v3874 = vmul.f32 1.0, %v3873
  %v3875 = vrcp.pop %v3844
  %v3876 = vmul.f32 1.0, %v3875
  %v3877 = vrcp.pop %v3846
  %v3878 = vmul.f32 1.0, %v3877
  %v3879 = vrcp.pop %v3848
  %v3880 = vmul.f32 1.0, %v3879
  %v3881 = vrcp.pop %v3850
  %v3882 = vmul.f32 1.0, %v3881
  %v3883 = vrcp.pop %v3852
  %v3884 = vmul.f32 1.0, %v3883
  %v3885 = vrcp.pop %v3854
  %v3886 = vmul.f32 1.0, %v3885
  %v3887 = vrcp.pop %v3856
  %v3888 = vmul.f32 1.0, %v3887
  %v3889 = vmul.f32 %v3794, %v3858
  %v3890 = vmul.f32 %v3796, %v3860
  %v3891 = vmul.f32 %v3798, %v3862
  %v3892 = vmul.f32 %v3800, %v3864
  %v3893 = vmul.f32 %v3802, %v3866
  %v3894 = vmul.f32 %v3804, %v3868
  %v3895 = vmul.f32 %v3806, %v3870
  %v3896 = vmul.f32 %v3808, %v3872
  %v3897 = vmul.f32 %v3810, %v3874
  %v3898 = vmul.f32 %v3812, %v3876
  %v3899 = vmul.f32 %v3814, %v3878
  %v3900 = vmul.f32 %v3816, %v3880
  %v3901 = vmul.f32 %v3818, %v3882
  %v3902 = vmul.f32 %v3820, %v3884
  %v3903 = vmul.f32 %v3822, %v3886
  %v3904 = vmul.f32 %v3824, %v3888
  %3905 = vrot.lane.b32.xlu0 %v3440, 112
  %v3906 = vpop.permute.xlu0 %3905
  %3907 = vrot.lane.b32.xlu0 %v3441, 112
  %v3908 = vpop.permute.xlu0 %3907
  %3909 = vrot.lane.b32.xlu0 %v3442, 112
  %v3910 = vpop.permute.xlu0 %3909
  %3911 = vrot.lane.b32.xlu0 %v3443, 112
  %v3912 = vpop.permute.xlu0 %3911
  %3913 = vrot.lane.b32.xlu0 %v3444, 112
  %v3914 = vpop.permute.xlu0 %3913
  %3915 = vrot.lane.b32.xlu0 %v3445, 112
  %v3916 = vpop.permute.xlu0 %3915
  %3917 = vrot.lane.b32.xlu0 %v3446, 112
  %v3918 = vpop.permute.xlu0 %3917
  %3919 = vrot.lane.b32.xlu0 %v3447, 112
  %v3920 = vpop.permute.xlu0 %3919
  %3921 = vrot.lane.b32.xlu0 %v3448, 112
  %v3922 = vpop.permute.xlu0 %3921
  %3923 = vrot.lane.b32.xlu0 %v3449, 112
  %v3924 = vpop.permute.xlu0 %3923
  %3925 = vrot.lane.b32.xlu0 %v3450, 112
  %v3926 = vpop.permute.xlu0 %3925
  %3927 = vrot.lane.b32.xlu0 %v3451, 112
  %v3928 = vpop.permute.xlu0 %3927
  %3929 = vrot.lane.b32.xlu0 %v3452, 112
  %v3930 = vpop.permute.xlu0 %3929
  %3931 = vrot.lane.b32.xlu0 %v3453, 112
  %v3932 = vpop.permute.xlu0 %3931
  %3933 = vrot.lane.b32.xlu0 %v3454, 112
  %v3934 = vpop.permute.xlu0 %3933
  %3935 = vrot.lane.b32.xlu0 %v3455, 112
  %v3936 = vpop.permute.xlu0 %3935
  %3937 = vrot.lane.b32.xlu0 %v3440, 48
  %v3938 = vpop.permute.xlu0 %3937
  %3939 = vrot.lane.b32.xlu0 %v3441, 48
  %v3940 = vpop.permute.xlu0 %3939
  %3941 = vrot.lane.b32.xlu0 %v3442, 48
  %v3942 = vpop.permute.xlu0 %3941
  %3943 = vrot.lane.b32.xlu0 %v3443, 48
  %v3944 = vpop.permute.xlu0 %3943
  %3945 = vrot.lane.b32.xlu0 %v3444, 48
  %v3946 = vpop.permute.xlu0 %3945
  %3947 = vrot.lane.b32.xlu0 %v3445, 48
  %v3948 = vpop.permute.xlu0 %3947
  %3949 = vrot.lane.b32.xlu0 %v3446, 48
  %v3950 = vpop.permute.xlu0 %3949
  %3951 = vrot.lane.b32.xlu0 %v3447, 48
  %v3952 = vpop.permute.xlu0 %3951
  %3953 = vrot.lane.b32.xlu0 %v3448, 48
  %v3954 = vpop.permute.xlu0 %3953
  %3955 = vrot.lane.b32.xlu0 %v3449, 48
  %v3956 = vpop.permute.xlu0 %3955
  %3957 = vrot.lane.b32.xlu0 %v3450, 48
  %v3958 = vpop.permute.xlu0 %3957
  %3959 = vrot.lane.b32.xlu0 %v3451, 48
  %v3960 = vpop.permute.xlu0 %3959
  %3961 = vrot.lane.b32.xlu0 %v3452, 48
  %v3962 = vpop.permute.xlu0 %3961
  %3963 = vrot.lane.b32.xlu0 %v3453, 48
  %v3964 = vpop.permute.xlu0 %3963
  %3965 = vrot.lane.b32.xlu0 %v3454, 48
  %v3966 = vpop.permute.xlu0 %3965
  %3967 = vrot.lane.b32.xlu0 %v3455, 48
  %v3968 = vpop.permute.xlu0 %3967
  %v3969 = vsel %vm977, %v3906, 0
  %v3971 = vsel %vm977, %v3908, 0
  %v3973 = vsel %vm977, %v3910, 0
  %v3975 = vsel %vm977, %v3912, 0
  %v3977 = vsel %vm977, %v3914, 0
  %v3979 = vsel %vm977, %v3916, 0
  %v3981 = vsel %vm977, %v3918, 0
  %v3983 = vsel %vm977, %v3920, 0
  %v3985 = vsel %vm977, %v3922, 0
  %v3987 = vsel %vm977, %v3924, 0
  %v3989 = vsel %vm977, %v3926, 0
  %v3991 = vsel %vm977, %v3928, 0
  %v3993 = vsel %vm977, %v3930, 0
  %v3995 = vsel %vm977, %v3932, 0
  %v3997 = vsel %vm977, %v3934, 0
  %v3999 = vsel %vm977, %v3936, 0
  %v4001 = vsel %vm977, %v3938, 0
  %v4003 = vsel %vm977, %v3940, 0
  %v4005 = vsel %vm977, %v3942, 0
  %v4007 = vsel %vm977, %v3944, 0
  %v4009 = vsel %vm977, %v3946, 0
  %v4011 = vsel %vm977, %v3948, 0
  %v4013 = vsel %vm977, %v3950, 0
  %v4015 = vsel %vm977, %v3952, 0
  %v4017 = vsel %vm977, %v3954, 0
  %v4019 = vsel %vm977, %v3956, 0
  %v4021 = vsel %vm977, %v3958, 0
  %v4023 = vsel %vm977, %v3960, 0
  %v4025 = vsel %vm977, %v3962, 0
  %v4027 = vsel %vm977, %v3964, 0
  %v4029 = vsel %vm977, %v3966, 0
  %v4031 = vsel %vm977, %v3968, 0
  %4033 = vmatprep.subr.mxu0 0.0
  %4034 = vmatpush1.xpose.msra.mxu0 %v4001
  %4035 = vmatprep.subr.mxu0 0.0
  %4036 = vmatpush1.xpose.msra.mxu0 %v4003
  %4037 = vmatprep.subr.mxu0 0.0
  %4038 = vmatpush1.xpose.msra.mxu0 %v4005
  %4039 = vmatprep.subr.mxu0 0.0
  %4040 = vmatpush1.xpose.msra.mxu0 %v4007
  %4041 = vmatprep.subr.mxu0 0.0
  %4042 = vmatpush1.xpose.msra.mxu0 %v4009
  %4043 = vmatprep.subr.mxu0 0.0
  %4044 = vmatpush1.xpose.msra.mxu0 %v4011
  %4045 = vmatprep.subr.mxu0 0.0
  %4046 = vmatpush1.xpose.msra.mxu0 %v4013
  %4047 = vmatprep.subr.mxu0 0.0
  %4048 = vmatpush1.xpose.msra.mxu0 %v4015
  %4049 = vmatprep.subr.mxu0 0.0
  %4050 = vmatpush1.xpose.msra.mxu0 %v4017
  %4051 = vmatprep.subr.mxu0 0.0
  %4052 = vmatpush1.xpose.msra.mxu0 %v4019
  %4053 = vmatprep.subr.mxu0 0.0
  %4054 = vmatpush1.xpose.msra.mxu0 %v4021
  %4055 = vmatprep.subr.mxu0 0.0
  %4056 = vmatpush1.xpose.msra.mxu0 %v4023
  %4057 = vmatprep.subr.mxu0 0.0
  %4058 = vmatpush1.xpose.msra.mxu0 %v4025
  %4059 = vmatprep.subr.mxu0 0.0
  %4060 = vmatpush1.xpose.msra.mxu0 %v4027
  %4061 = vmatprep.subr.mxu0 0.0
  %4062 = vmatpush1.xpose.msra.mxu0 %v4029
  %4063 = vmatprep.subr.mxu0 0.0
  %4064 = vmatpush1.xpose.msra.mxu0 %v4031
  %4065 = vmatprep.subr.mxu0 0.0
  %4066 = vmatpush1.xpose.msra.mxu0 0.0
  %4067 = vmatprep.subr.mxu0 0.0
  %4068 = vmatpush1.xpose.msra.mxu0 0.0
  %4069 = vmatprep.subr.mxu0 0.0
  %4070 = vmatpush1.xpose.msra.mxu0 0.0
  %4071 = vmatprep.subr.mxu0 0.0
  %4072 = vmatpush1.xpose.msra.mxu0 0.0
  %4073 = vmatprep.subr.mxu0 0.0
  %4074 = vmatpush1.xpose.msra.mxu0 0.0
  %4075 = vmatprep.subr.mxu0 0.0
  %4076 = vmatpush1.xpose.msra.mxu0 0.0
  %4077 = vmatprep.subr.mxu0 0.0
  %4078 = vmatpush1.xpose.msra.mxu0 0.0
  %4079 = vmatprep.subr.mxu0 0.0
  %4080 = vmatpush1.xpose.msra.mxu0 0.0
  %4081 = vmatprep.subr.mxu0 0.0
  %4082 = vmatpush1.xpose.msra.mxu0 0.0
  %4083 = vmatprep.subr.mxu0 0.0
  %4084 = vmatpush1.xpose.msra.mxu0 0.0
  %4085 = vmatprep.subr.mxu0 0.0
  %4086 = vmatpush1.xpose.msra.mxu0 0.0
  %4087 = vmatprep.subr.mxu0 0.0
  %4088 = vmatpush1.xpose.msra.mxu0 0.0
  %4089 = vmatprep.subr.mxu0 0.0
  %4090 = vmatpush1.xpose.msra.mxu0 0.0
  %4091 = vmatprep.subr.mxu0 0.0
  %4092 = vmatpush1.xpose.msra.mxu0 0.0
  %4093 = vmatprep.subr.mxu0 0.0
  %4094 = vmatpush1.xpose.msra.mxu0 0.0
  %4095 = vmatprep.subr.mxu0 0.0
  %4096 = vmatpush1.xpose.msra.mxu0 0.0
  %4097 = vmatprep.mubr.f32.mxu0 0.0
  %4098 = vmatmul.mubr.f32.gmra.mrb[0].mxu0 %v3969
  %v4099 = vpop.f32.mrb[0].mxu0
  %v4100 = vadd.f32 %v3472, %v4099
  %v4101 = vpop.f32.mrb[0].mxu0
  %4102 = vmatprep.mubr.f32.mxu0 0.0
  %4103 = vmatmul.mubr.f32.gmra.mrb[0].mxu0 %v3971
  %v4104 = vpop.f32.mrb[0].mxu0
  %v4105 = vadd.f32 %v3473, %v4104
  %v4106 = vpop.f32.mrb[0].mxu0
  %4107 = vmatprep.mubr.f32.mxu0 0.0
  %4108 = vmatmul.mubr.f32.gmra.mrb[0].mxu0 %v3973
  %v4109 = vpop.f32.mrb[0].mxu0
  %v4110 = vadd.f32 %v3474, %v4109
  %v4111 = vpop.f32.mrb[0].mxu0
  %4112 = vmatprep.mubr.f32.mxu0 0.0
  %4113 = vmatmul.mubr.f32.gmra.mrb[0].mxu0 %v3975
  %v4114 = vpop.f32.mrb[0].mxu0
  %v4115 = vadd.f32 %v3475, %v4114
  %v4116 = vpop.f32.mrb[0].mxu0
  %4117 = vmatprep.mubr.f32.mxu0 0.0
  %4118 = vmatmul.mubr.f32.gmra.mrb[0].mxu0 %v3977
  %v4119 = vpop.f32.mrb[0].mxu0
  %v4120 = vadd.f32 %v3476, %v4119
  %v4121 = vpop.f32.mrb[0].mxu0
  %4122 = vmatprep.mubr.f32.mxu0 0.0
  %4123 = vmatmul.mubr.f32.gmra.mrb[0].mxu0 %v3979
  %v4124 = vpop.f32.mrb[0].mxu0
  %v4125 = vadd.f32 %v3477, %v4124
  %v4126 = vpop.f32.mrb[0].mxu0
  %4127 = vmatprep.mubr.f32.mxu0 0.0
  %4128 = vmatmul.mubr.f32.gmra.mrb[0].mxu0 %v3981
  %v4129 = vpop.f32.mrb[0].mxu0
  %v4130 = vadd.f32 %v3478, %v4129
  %v4131 = vpop.f32.mrb[0].mxu0
  %4132 = vmatprep.mubr.f32.mxu0 0.0
  %4133 = vmatmul.mubr.f32.gmra.mrb[0].mxu0 %v3983
  %v4134 = vpop.f32.mrb[0].mxu0
  %v4135 = vadd.f32 %v3479, %v4134
  %v4136 = vpop.f32.mrb[0].mxu0
  %4137 = vmatprep.mubr.f32.mxu0 0.0
  %4138 = vmatmul.mubr.f32.gmra.mrb[0].mxu0 %v3985
  %v4139 = vpop.f32.mrb[0].mxu0
  %v4140 = vadd.f32 %v3480, %v4139
  %v4141 = vpop.f32.mrb[0].mxu0
  %4142 = vmatprep.mubr.f32.mxu0 0.0
  %4143 = vmatmul.mubr.f32.gmra.mrb[0].mxu0 %v3987
  %v4144 = vpop.f32.mrb[0].mxu0
  %v4145 = vadd.f32 %v3481, %v4144
  %v4146 = vpop.f32.mrb[0].mxu0
  %4147 = vmatprep.mubr.f32.mxu0 0.0
  %4148 = vmatmul.mubr.f32.gmra.mrb[0].mxu0 %v3989
  %v4149 = vpop.f32.mrb[0].mxu0
  %v4150 = vadd.f32 %v3482, %v4149
  %v4151 = vpop.f32.mrb[0].mxu0
  %4152 = vmatprep.mubr.f32.mxu0 0.0
  %4153 = vmatmul.mubr.f32.gmra.mrb[0].mxu0 %v3991
  %v4154 = vpop.f32.mrb[0].mxu0
  %v4155 = vadd.f32 %v3483, %v4154
  %v4156 = vpop.f32.mrb[0].mxu0
  %4157 = vmatprep.mubr.f32.mxu0 0.0
  %4158 = vmatmul.mubr.f32.gmra.mrb[0].mxu0 %v3993
  %v4159 = vpop.f32.mrb[0].mxu0
  %v4160 = vadd.f32 %v3484, %v4159
  %v4161 = vpop.f32.mrb[0].mxu0
  %4162 = vmatprep.mubr.f32.mxu0 0.0
  %4163 = vmatmul.mubr.f32.gmra.mrb[0].mxu0 %v3995
  %v4164 = vpop.f32.mrb[0].mxu0
  %v4165 = vadd.f32 %v3485, %v4164
  %v4166 = vpop.f32.mrb[0].mxu0
  %4167 = vmatprep.mubr.f32.mxu0 0.0
  %4168 = vmatmul.mubr.f32.gmra.mrb[0].mxu0 %v3997
  %v4169 = vpop.f32.mrb[0].mxu0
  %v4170 = vadd.f32 %v3486, %v4169
  %v4171 = vpop.f32.mrb[0].mxu0
  %4172 = vmatprep.mubr.f32.mxu0 0.0
  %4173 = vmatmul.mubr.f32.gmra.mrb[0].mxu0 %v3999
  %v4174 = vpop.f32.mrb[0].mxu0
  %v4175 = vadd.f32 %v3487, %v4174
  %v4176 = vpop.f32.mrb[0].mxu0
  %4177 = vdwg.mxu0
  %4178 = vmax.xlane.f32.xlu0 %v4100
  %v4179 = vpop.xlane.xlu0 %4178
  %4180 = vmax.xlane.f32.xlu0 %v4105
  %v4181 = vpop.xlane.xlu0 %4180
  %4182 = vmax.xlane.f32.xlu0 %v4110
  %v4183 = vpop.xlane.xlu0 %4182
  %4184 = vmax.xlane.f32.xlu0 %v4115
  %v4185 = vpop.xlane.xlu0 %4184
  %4186 = vmax.xlane.f32.xlu0 %v4120
  %v4187 = vpop.xlane.xlu0 %4186
  %4188 = vmax.xlane.f32.xlu0 %v4125
  %v4189 = vpop.xlane.xlu0 %4188
  %4190 = vmax.xlane.f32.xlu0 %v4130
  %v4191 = vpop.xlane.xlu0 %4190
  %4192 = vmax.xlane.f32.xlu0 %v4135
  %v4193 = vpop.xlane.xlu0 %4192
  %4194 = vmax.xlane.f32.xlu0 %v4140
  %v4195 = vpop.xlane.xlu0 %4194
  %4196 = vmax.xlane.f32.xlu0 %v4145
  %v4197 = vpop.xlane.xlu0 %4196
  %4198 = vmax.xlane.f32.xlu0 %v4150
  %v4199 = vpop.xlane.xlu0 %4198
  %4200 = vmax.xlane.f32.xlu0 %v4155
  %v4201 = vpop.xlane.xlu0 %4200
  %4202 = vmax.xlane.f32.xlu0 %v4160
  %v4203 = vpop.xlane.xlu0 %4202
  %4204 = vmax.xlane.f32.xlu0 %v4165
  %v4205 = vpop.xlane.xlu0 %4204
  %4206 = vmax.xlane.f32.xlu0 %v4170
  %v4207 = vpop.xlane.xlu0 %4206
  %4208 = vmax.xlane.f32.xlu0 %v4175
  %v4209 = vpop.xlane.xlu0 %4208
  %v4210 = vsub.f32 %v4100, %v4179
  %v4211 = vsub.f32 %v4105, %v4181
  %v4212 = vsub.f32 %v4110, %v4183
  %v4213 = vsub.f32 %v4115, %v4185
  %v4214 = vsub.f32 %v4120, %v4187
  %v4215 = vsub.f32 %v4125, %v4189
  %v4216 = vsub.f32 %v4130, %v4191
  %v4217 = vsub.f32 %v4135, %v4193
  %v4218 = vsub.f32 %v4140, %v4195
  %v4219 = vsub.f32 %v4145, %v4197
  %v4220 = vsub.f32 %v4150, %v4199
  %v4221 = vsub.f32 %v4155, %v4201
  %v4222 = vsub.f32 %v4160, %v4203
  %v4223 = vsub.f32 %v4165, %v4205
  %v4224 = vsub.f32 %v4170, %v4207
  %v4225 = vsub.f32 %v4175, %v4209
  %v4226 = vmul.f32 %v4210, 1.442695
  %v4227 = vpow.pop %v4226
  %v4228 = vmul.f32 %v4211, 1.442695
  %v4229 = vpow.pop %v4228
  %v4230 = vmul.f32 %v4212, 1.442695
  %v4231 = vpow.pop %v4230
  %v4232 = vmul.f32 %v4213, 1.442695
  %v4233 = vpow.pop %v4232
  %v4234 = vmul.f32 %v4214, 1.442695
  %v4235 = vpow.pop %v4234
  %v4236 = vmul.f32 %v4215, 1.442695
  %v4237 = vpow.pop %v4236
  %v4238 = vmul.f32 %v4216, 1.442695
  %v4239 = vpow.pop %v4238
  %v4240 = vmul.f32 %v4217, 1.442695
  %v4241 = vpow.pop %v4240
  %v4242 = vmul.f32 %v4218, 1.442695
  %v4243 = vpow.pop %v4242
  %v4244 = vmul.f32 %v4219, 1.442695
  %v4245 = vpow.pop %v4244
  %v4246 = vmul.f32 %v4220, 1.442695
  %v4247 = vpow.pop %v4246
  %v4248 = vmul.f32 %v4221, 1.442695
  %v4249 = vpow.pop %v4248
  %v4250 = vmul.f32 %v4222, 1.442695
  %v4251 = vpow.pop %v4250
  %v4252 = vmul.f32 %v4223, 1.442695
  %v4253 = vpow.pop %v4252
  %v4254 = vmul.f32 %v4224, 1.442695
  %v4255 = vpow.pop %v4254
  %v4256 = vmul.f32 %v4225, 1.442695
  %v4257 = vpow.pop %v4256
  %4258 = vadd.xlane.f32.xlu0 %v4227
  %v4259 = vpop.xlane.xlu0 %4258
  %4260 = vadd.xlane.f32.xlu0 %v4229
  %v4261 = vpop.xlane.xlu0 %4260
  %4262 = vadd.xlane.f32.xlu0 %v4231
  %v4263 = vpop.xlane.xlu0 %4262
  %4264 = vadd.xlane.f32.xlu0 %v4233
  %v4265 = vpop.xlane.xlu0 %4264
  %4266 = vadd.xlane.f32.xlu0 %v4235
  %v4267 = vpop.xlane.xlu0 %4266
  %4268 = vadd.xlane.f32.xlu0 %v4237
  %v4269 = vpop.xlane.xlu0 %4268
  %4270 = vadd.xlane.f32.xlu0 %v4239
  %v4271 = vpop.xlane.xlu0 %4270
  %4272 = vadd.xlane.f32.xlu0 %v4241
  %v4273 = vpop.xlane.xlu0 %4272
  %4274 = vadd.xlane.f32.xlu0 %v4243
  %v4275 = vpop.xlane.xlu0 %4274
  %4276 = vadd.xlane.f32.xlu0 %v4245
  %v4277 = vpop.xlane.xlu0 %4276
  %4278 = vadd.xlane.f32.xlu0 %v4247
  %v4279 = vpop.xlane.xlu0 %4278
  %4280 = vadd.xlane.f32.xlu0 %v4249
  %v4281 = vpop.xlane.xlu0 %4280
  %4282 = vadd.xlane.f32.xlu0 %v4251
  %v4283 = vpop.xlane.xlu0 %4282
  %4284 = vadd.xlane.f32.xlu0 %v4253
  %v4285 = vpop.xlane.xlu0 %4284
  %4286 = vadd.xlane.f32.xlu0 %v4255
  %v4287 = vpop.xlane.xlu0 %4286
  %4288 = vadd.xlane.f32.xlu0 %v4257
  %v4289 = vpop.xlane.xlu0 %4288
  %v4290 = vrcp.pop %v4259
  %v4291 = vmul.f32 1.0, %v4290
  %v4292 = vrcp.pop %v4261
  %v4293 = vmul.f32 1.0, %v4292
  %v4294 = vrcp.pop %v4263
  %v4295 = vmul.f32 1.0, %v4294
  %v4296 = vrcp.pop %v4265
  %v4297 = vmul.f32 1.0, %v4296
  %v4298 = vrcp.pop %v4267
  %v4299 = vmul.f32 1.0, %v4298
  %v4300 = vrcp.pop %v4269
  %v4301 = vmul.f32 1.0, %v4300
  %v4302 = vrcp.pop %v4271
  %v4303 = vmul.f32 1.0, %v4302
  %v4304 = vrcp.pop %v4273
  %v4305 = vmul.f32 1.0, %v4304
  %v4306 = vrcp.pop %v4275
  %v4307 = vmul.f32 1.0, %v4306
  %v4308 = vrcp.pop %v4277
  %v4309 = vmul.f32 1.0, %v4308
  %v4310 = vrcp.pop %v4279
  %v4311 = vmul.f32 1.0, %v4310
  %v4312 = vrcp.pop %v4281
  %v4313 = vmul.f32 1.0, %v4312
  %v4314 = vrcp.pop %v4283
  %v4315 = vmul.f32 1.0, %v4314
  %v4316 = vrcp.pop %v4285
  %v4317 = vmul.f32 1.0, %v4316
  %v4318 = vrcp.pop %v4287
  %v4319 = vmul.f32 1.0, %v4318
  %v4320 = vrcp.pop %v4289
  %v4321 = vmul.f32 1.0, %v4320
  %v4322 = vmul.f32 %v4227, %v4291
  %v4323 = vmul.f32 %v4229, %v4293
  %v4324 = vmul.f32 %v4231, %v4295
  %v4325 = vmul.f32 %v4233, %v4297
  %v4326 = vmul.f32 %v4235, %v4299
  %v4327 = vmul.f32 %v4237, %v4301
  %v4328 = vmul.f32 %v4239, %v4303
  %v4329 = vmul.f32 %v4241, %v4305
  %v4330 = vmul.f32 %v4243, %v4307
  %v4331 = vmul.f32 %v4245, %v4309
  %v4332 = vmul.f32 %v4247, %v4311
  %v4333 = vmul.f32 %v4249, %v4313
  %v4334 = vmul.f32 %v4251, %v4315
  %v4335 = vmul.f32 %v4253, %v4317
  %v4336 = vmul.f32 %v4255, %v4319
  %v4337 = vmul.f32 %v4257, %v4321
  %4354 = vrot.lane.b32.xlu0 %v3456, 64
  %v4355 = vpop.permute.xlu0 %4354
  %4356 = vrot.lane.b32.xlu0 %v3457, 64
  %v4357 = vpop.permute.xlu0 %4356
  %4358 = vrot.lane.b32.xlu0 %v3458, 64
  %v4359 = vpop.permute.xlu0 %4358
  %4360 = vrot.lane.b32.xlu0 %v3459, 64
  %v4361 = vpop.permute.xlu0 %4360
  %4362 = vrot.lane.b32.xlu0 %v3460, 64
  %v4363 = vpop.permute.xlu0 %4362
  %4364 = vrot.lane.b32.xlu0 %v3461, 64
  %v4365 = vpop.permute.xlu0 %4364
  %4366 = vrot.lane.b32.xlu0 %v3462, 64
  %v4367 = vpop.permute.xlu0 %4366
  %4368 = vrot.lane.b32.xlu0 %v3463, 64
  %v4369 = vpop.permute.xlu0 %4368
  %4370 = vrot.lane.b32.xlu0 %v3464, 64
  %v4371 = vpop.permute.xlu0 %4370
  %4372 = vrot.lane.b32.xlu0 %v3465, 64
  %v4373 = vpop.permute.xlu0 %4372
  %4374 = vrot.lane.b32.xlu0 %v3466, 64
  %v4375 = vpop.permute.xlu0 %4374
  %4376 = vrot.lane.b32.xlu0 %v3467, 64
  %v4377 = vpop.permute.xlu0 %4376
  %4378 = vrot.lane.b32.xlu0 %v3468, 64
  %v4379 = vpop.permute.xlu0 %4378
  %4380 = vrot.lane.b32.xlu0 %v3469, 64
  %v4381 = vpop.permute.xlu0 %4380
  %4382 = vrot.lane.b32.xlu0 %v3470, 64
  %v4383 = vpop.permute.xlu0 %4382
  %4384 = vrot.lane.b32.xlu0 %v3471, 64
  %v4385 = vpop.permute.xlu0 %4384
  %4402 = vmatprep.subr.mxu0 0.0
  %4403 = vmatpush1.msra.mxu0 %v4355
  %4404 = vmatprep.subr.mxu0 0.0
  %4405 = vmatpush1.msra.mxu0 %v4357
  %4406 = vmatprep.subr.mxu0 0.0
  %4407 = vmatpush1.msra.mxu0 %v4359
  %4408 = vmatprep.subr.mxu0 0.0
  %4409 = vmatpush1.msra.mxu0 %v4361
  %4410 = vmatprep.subr.mxu0 0.0
  %4411 = vmatpush1.msra.mxu0 %v4363
  %4412 = vmatprep.subr.mxu0 0.0
  %4413 = vmatpush1.msra.mxu0 %v4365
  %4414 = vmatprep.subr.mxu0 0.0
  %4415 = vmatpush1.msra.mxu0 %v4367
  %4416 = vmatprep.subr.mxu0 0.0
  %4417 = vmatpush1.msra.mxu0 %v4369
  %4418 = vmatprep.subr.mxu0 0.0
  %4419 = vmatpush1.msra.mxu0 %v4371
  %4420 = vmatprep.subr.mxu0 0.0
  %4421 = vmatpush1.msra.mxu0 %v4373
  %4422 = vmatprep.subr.mxu0 0.0
  %4423 = vmatpush1.msra.mxu0 %v4375
  %4424 = vmatprep.subr.mxu0 0.0
  %4425 = vmatpush1.msra.mxu0 %v4377
  %4426 = vmatprep.subr.mxu0 0.0
  %4427 = vmatpush1.msra.mxu0 %v4379
  %4428 = vmatprep.subr.mxu0 0.0
  %4429 = vmatpush1.msra.mxu0 %v4381
  %4430 = vmatprep.subr.mxu0 0.0
  %4431 = vmatpush1.msra.mxu0 %v4383
  %4432 = vmatprep.subr.mxu0 0.0
  %4433 = vmatpush1.msra.mxu0 %v4385
  %4434 = vmatprep.subr.mxu0 0.0
  %4435 = vmatpush1.msra.mxu0 0.0
  %4436 = vmatprep.subr.mxu0 0.0
  %4437 = vmatpush1.msra.mxu0 0.0
  %4438 = vmatprep.subr.mxu0 0.0
  %4439 = vmatpush1.msra.mxu0 0.0
  %4440 = vmatprep.subr.mxu0 0.0
  %4441 = vmatpush1.msra.mxu0 0.0
  %4442 = vmatprep.subr.mxu0 0.0
  %4443 = vmatpush1.msra.mxu0 0.0
  %4444 = vmatprep.subr.mxu0 0.0
  %4445 = vmatpush1.msra.mxu0 0.0
  %4446 = vmatprep.subr.mxu0 0.0
  %4447 = vmatpush1.msra.mxu0 0.0
  %4448 = vmatprep.subr.mxu0 0.0
  %4449 = vmatpush1.msra.mxu0 0.0
  %4450 = vmatprep.subr.mxu0 0.0
  %4451 = vmatpush1.msra.mxu0 0.0
  %4452 = vmatprep.subr.mxu0 0.0
  %4453 = vmatpush1.msra.mxu0 0.0
  %4454 = vmatprep.subr.mxu0 0.0
  %4455 = vmatpush1.msra.mxu0 0.0
  %4456 = vmatprep.subr.mxu0 0.0
  %4457 = vmatpush1.msra.mxu0 0.0
  %4458 = vmatprep.subr.mxu0 0.0
  %4459 = vmatpush1.msra.mxu0 0.0
  %4460 = vmatprep.subr.mxu0 0.0
  %4461 = vmatpush1.msra.mxu0 0.0
  %4462 = vmatprep.subr.mxu0 0.0
  %4463 = vmatpush1.msra.mxu0 0.0
  %4464 = vmatprep.subr.mxu0 0.0
  %4465 = vmatpush1.msra.mxu0 0.0
  %4466 = vmatprep.mubr.f32.mxu0 0.0
  %4467 = vmatmul.mubr.f32.gmra.mrb[0].mxu0 %v4322
  %v4468 = vpop.f32.mrb[0].mxu0
  %v4469 = vadd.f32 0.0, %v4468
  %v4470 = vpop.f32.mrb[0].mxu0
  %4471 = vmatprep.mubr.f32.mxu0 0.0
  %4472 = vmatmul.mubr.f32.gmra.mrb[0].mxu0 %v4323
  %v4473 = vpop.f32.mrb[0].mxu0
  %v4474 = vadd.f32 0.0, %v4473
  %v4475 = vpop.f32.mrb[0].mxu0
  %4476 = vmatprep.mubr.f32.mxu0 0.0
  %4477 = vmatmul.mubr.f32.gmra.mrb[0].mxu0 %v4324
  %v4478 = vpop.f32.mrb[0].mxu0
  %v4479 = vadd.f32 0.0, %v4478
  %v4480 = vpop.f32.mrb[0].mxu0
  %4481 = vmatprep.mubr.f32.mxu0 0.0
  %4482 = vmatmul.mubr.f32.gmra.mrb[0].mxu0 %v4325
  %v4483 = vpop.f32.mrb[0].mxu0
  %v4484 = vadd.f32 0.0, %v4483
  %v4485 = vpop.f32.mrb[0].mxu0
  %4486 = vmatprep.mubr.f32.mxu0 0.0
  %4487 = vmatmul.mubr.f32.gmra.mrb[0].mxu0 %v4326
  %v4488 = vpop.f32.mrb[0].mxu0
  %v4489 = vadd.f32 0.0, %v4488
  %v4490 = vpop.f32.mrb[0].mxu0
  %4491 = vmatprep.mubr.f32.mxu0 0.0
  %4492 = vmatmul.mubr.f32.gmra.mrb[0].mxu0 %v4327
  %v4493 = vpop.f32.mrb[0].mxu0
  %v4494 = vadd.f32 0.0, %v4493
  %v4495 = vpop.f32.mrb[0].mxu0
  %4496 = vmatprep.mubr.f32.mxu0 0.0
  %4497 = vmatmul.mubr.f32.gmra.mrb[0].mxu0 %v4328
  %v4498 = vpop.f32.mrb[0].mxu0
  %v4499 = vadd.f32 0.0, %v4498
  %v4500 = vpop.f32.mrb[0].mxu0
  %4501 = vmatprep.mubr.f32.mxu0 0.0
  %4502 = vmatmul.mubr.f32.gmra.mrb[0].mxu0 %v4329
  %v4503 = vpop.f32.mrb[0].mxu0
  %v4504 = vadd.f32 0.0, %v4503
  %v4505 = vpop.f32.mrb[0].mxu0
  %4506 = vmatprep.mubr.f32.mxu0 0.0
  %4507 = vmatmul.mubr.f32.gmra.mrb[0].mxu0 %v4330
  %v4508 = vpop.f32.mrb[0].mxu0
  %v4509 = vadd.f32 0.0, %v4508
  %v4510 = vpop.f32.mrb[0].mxu0
  %4511 = vmatprep.mubr.f32.mxu0 0.0
  %4512 = vmatmul.mubr.f32.gmra.mrb[0].mxu0 %v4331
  %v4513 = vpop.f32.mrb[0].mxu0
  %v4514 = vadd.f32 0.0, %v4513
  %v4515 = vpop.f32.mrb[0].mxu0
  %4516 = vmatprep.mubr.f32.mxu0 0.0
  %4517 = vmatmul.mubr.f32.gmra.mrb[0].mxu0 %v4332
  %v4518 = vpop.f32.mrb[0].mxu0
  %v4519 = vadd.f32 0.0, %v4518
  %v4520 = vpop.f32.mrb[0].mxu0
  %4521 = vmatprep.mubr.f32.mxu0 0.0
  %4522 = vmatmul.mubr.f32.gmra.mrb[0].mxu0 %v4333
  %v4523 = vpop.f32.mrb[0].mxu0
  %v4524 = vadd.f32 0.0, %v4523
  %v4525 = vpop.f32.mrb[0].mxu0
  %4526 = vmatprep.mubr.f32.mxu0 0.0
  %4527 = vmatmul.mubr.f32.gmra.mrb[0].mxu0 %v4334
  %v4528 = vpop.f32.mrb[0].mxu0
  %v4529 = vadd.f32 0.0, %v4528
  %v4530 = vpop.f32.mrb[0].mxu0
  %4531 = vmatprep.mubr.f32.mxu0 0.0
  %4532 = vmatmul.mubr.f32.gmra.mrb[0].mxu0 %v4335
  %v4533 = vpop.f32.mrb[0].mxu0
  %v4534 = vadd.f32 0.0, %v4533
  %v4535 = vpop.f32.mrb[0].mxu0
  %4536 = vmatprep.mubr.f32.mxu0 0.0
  %4537 = vmatmul.mubr.f32.gmra.mrb[0].mxu0 %v4336
  %v4538 = vpop.f32.mrb[0].mxu0
  %v4539 = vadd.f32 0.0, %v4538
  %v4540 = vpop.f32.mrb[0].mxu0
  %4541 = vmatprep.mubr.f32.mxu0 0.0
  %4542 = vmatmul.mubr.f32.gmra.mrb[0].mxu0 %v4337
  %v4543 = vpop.f32.mrb[0].mxu0
  %v4544 = vadd.f32 0.0, %v4543
  %v4545 = vpop.f32.mrb[0].mxu0
  %4546 = vdwg.mxu0
  %4547 = vmatprep.subr.mxu0 0.0
  %4548 = vmatpush1.msra.mxu0 %v3456
  %4549 = vmatprep.subr.mxu0 0.0
  %4550 = vmatpush1.msra.mxu0 %v3457
  %4551 = vmatprep.subr.mxu0 0.0
  %4552 = vmatpush1.msra.mxu0 %v3458
  %4553 = vmatprep.subr.mxu0 0.0
  %4554 = vmatpush1.msra.mxu0 %v3459
  %4555 = vmatprep.subr.mxu0 0.0
  %4556 = vmatpush1.msra.mxu0 %v3460
  %4557 = vmatprep.subr.mxu0 0.0
  %4558 = vmatpush1.msra.mxu0 %v3461
  %4559 = vmatprep.subr.mxu0 0.0
  %4560 = vmatpush1.msra.mxu0 %v3462
  %4561 = vmatprep.subr.mxu0 0.0
  %4562 = vmatpush1.msra.mxu0 %v3463
  %4563 = vmatprep.subr.mxu0 0.0
  %4564 = vmatpush1.msra.mxu0 %v3464
  %4565 = vmatprep.subr.mxu0 0.0
  %4566 = vmatpush1.msra.mxu0 %v3465
  %4567 = vmatprep.subr.mxu0 0.0
  %4568 = vmatpush1.msra.mxu0 %v3466
  %4569 = vmatprep.subr.mxu0 0.0
  %4570 = vmatpush1.msra.mxu0 %v3467
  %4571 = vmatprep.subr.mxu0 0.0
  %4572 = vmatpush1.msra.mxu0 %v3468
  %4573 = vmatprep.subr.mxu0 0.0
  %4574 = vmatpush1.msra.mxu0 %v3469
  %4575 = vmatprep.subr.mxu0 0.0
  %4576 = vmatpush1.msra.mxu0 %v3470
  %4577 = vmatprep.subr.mxu0 0.0
  %4578 = vmatpush1.msra.mxu0 %v3471
  %4579 = vmatprep.subr.mxu0 0.0
  %4580 = vmatpush1.msra.mxu0 0.0
  %4581 = vmatprep.subr.mxu0 0.0
  %4582 = vmatpush1.msra.mxu0 0.0
  %4583 = vmatprep.subr.mxu0 0.0
  %4584 = vmatpush1.msra.mxu0 0.0
  %4585 = vmatprep.subr.mxu0 0.0
  %4586 = vmatpush1.msra.mxu0 0.0
  %4587 = vmatprep.subr.mxu0 0.0
  %4588 = vmatpush1.msra.mxu0 0.0
  %4589 = vmatprep.subr.mxu0 0.0
  %4590 = vmatpush1.msra.mxu0 0.0
  %4591 = vmatprep.subr.mxu0 0.0
  %4592 = vmatpush1.msra.mxu0 0.0
  %4593 = vmatprep.subr.mxu0 0.0
  %4594 = vmatpush1.msra.mxu0 0.0
  %4595 = vmatprep.subr.mxu0 0.0
  %4596 = vmatpush1.msra.mxu0 0.0
  %4597 = vmatprep.subr.mxu0 0.0
  %4598 = vmatpush1.msra.mxu0 0.0
  %4599 = vmatprep.subr.mxu0 0.0
  %4600 = vmatpush1.msra.mxu0 0.0
  %4601 = vmatprep.subr.mxu0 0.0
  %4602 = vmatpush1.msra.mxu0 0.0
  %4603 = vmatprep.subr.mxu0 0.0
  %4604 = vmatpush1.msra.mxu0 0.0
  %4605 = vmatprep.subr.mxu0 0.0
  %4606 = vmatpush1.msra.mxu0 0.0
  %4607 = vmatprep.subr.mxu0 0.0
  %4608 = vmatpush1.msra.mxu0 0.0
  %4609 = vmatprep.subr.mxu0 0.0
  %4610 = vmatpush1.msra.mxu0 0.0
  %4611 = vmatprep.mubr.f32.mxu0 0.0
  %4612 = vmatmul.mubr.f32.gmra.mrb[0].mxu0 %v3889
  %v4613 = vpop.f32.mrb[0].mxu0
  %v4614 = vadd.f32 %v4469, %v4613
  %v4615 = vpop.f32.mrb[0].mxu0
  %4616 = vmatprep.mubr.f32.mxu0 0.0
  %4617 = vmatmul.mubr.f32.gmra.mrb[0].mxu0 %v3890
  %v4618 = vpop.f32.mrb[0].mxu0
  %v4619 = vadd.f32 %v4474, %v4618
  %v4620 = vpop.f32.mrb[0].mxu0
  %4621 = vmatprep.mubr.f32.mxu0 0.0
  %4622 = vmatmul.mubr.f32.gmra.mrb[0].mxu0 %v3891
  %v4623 = vpop.f32.mrb[0].mxu0
  %v4624 = vadd.f32 %v4479, %v4623
  %v4625 = vpop.f32.mrb[0].mxu0
  %4626 = vmatprep.mubr.f32.mxu0 0.0
  %4627 = vmatmul.mubr.f32.gmra.mrb[0].mxu0 %v3892
  %v4628 = vpop.f32.mrb[0].mxu0
  %v4629 = vadd.f32 %v4484, %v4628
  %v4630 = vpop.f32.mrb[0].mxu0
  %4631 = vmatprep.mubr.f32.mxu0 0.0
  %4632 = vmatmul.mubr.f32.gmra.mrb[0].mxu0 %v3893
  %v4633 = vpop.f32.mrb[0].mxu0
  %v4634 = vadd.f32 %v4489, %v4633
  %v4635 = vpop.f32.mrb[0].mxu0
  %4636 = vmatprep.mubr.f32.mxu0 0.0
  %4637 = vmatmul.mubr.f32.gmra.mrb[0].mxu0 %v3894
  %v4638 = vpop.f32.mrb[0].mxu0
  %v4639 = vadd.f32 %v4494, %v4638
  %v4640 = vpop.f32.mrb[0].mxu0
  %4641 = vmatprep.mubr.f32.mxu0 0.0
  %4642 = vmatmul.mubr.f32.gmra.mrb[0].mxu0 %v3895
  %v4643 = vpop.f32.mrb[0].mxu0
  %v4644 = vadd.f32 %v4499, %v4643
  %v4645 = vpop.f32.mrb[0].mxu0
  %4646 = vmatprep.mubr.f32.mxu0 0.0
  %4647 = vmatmul.mubr.f32.gmra.mrb[0].mxu0 %v3896
  %v4648 = vpop.f32.mrb[0].mxu0
  %v4649 = vadd.f32 %v4504, %v4648
  %v4650 = vpop.f32.mrb[0].mxu0
  %4651 = vmatprep.mubr.f32.mxu0 0.0
  %4652 = vmatmul.mubr.f32.gmra.mrb[0].mxu0 %v3897
  %v4653 = vpop.f32.mrb[0].mxu0
  %v4654 = vadd.f32 %v4509, %v4653
  %v4655 = vpop.f32.mrb[0].mxu0
  %4656 = vmatprep.mubr.f32.mxu0 0.0
  %4657 = vmatmul.mubr.f32.gmra.mrb[0].mxu0 %v3898
  %v4658 = vpop.f32.mrb[0].mxu0
  %v4659 = vadd.f32 %v4514, %v4658
  %v4660 = vpop.f32.mrb[0].mxu0
  %4661 = vmatprep.mubr.f32.mxu0 0.0
  %4662 = vmatmul.mubr.f32.gmra.mrb[0].mxu0 %v3899
  %v4663 = vpop.f32.mrb[0].mxu0
  %v4664 = vadd.f32 %v4519, %v4663
  %v4665 = vpop.f32.mrb[0].mxu0
  %4666 = vmatprep.mubr.f32.mxu0 0.0
  %4667 = vmatmul.mubr.f32.gmra.mrb[0].mxu0 %v3900
  %v4668 = vpop.f32.mrb[0].mxu0
  %v4669 = vadd.f32 %v4524, %v4668
  %v4670 = vpop.f32.mrb[0].mxu0
  %4671 = vmatprep.mubr.f32.mxu0 0.0
  %4672 = vmatmul.mubr.f32.gmra.mrb[0].mxu0 %v3901
  %v4673 = vpop.f32.mrb[0].mxu0
  %v4674 = vadd.f32 %v4529, %v4673
  %v4675 = vpop.f32.mrb[0].mxu0
  %4676 = vmatprep.mubr.f32.mxu0 0.0
  %4677 = vmatmul.mubr.f32.gmra.mrb[0].mxu0 %v3902
  %v4678 = vpop.f32.mrb[0].mxu0
  %v4679 = vadd.f32 %v4534, %v4678
  %v4680 = vpop.f32.mrb[0].mxu0
  %4681 = vmatprep.mubr.f32.mxu0 0.0
  %4682 = vmatmul.mubr.f32.gmra.mrb[0].mxu0 %v3903
  %v4683 = vpop.f32.mrb[0].mxu0
  %v4684 = vadd.f32 %v4539, %v4683
  %v4685 = vpop.f32.mrb[0].mxu0
  %4686 = vmatprep.mubr.f32.mxu0 0.0
  %4687 = vmatmul.mubr.f32.gmra.mrb[0].mxu0 %v3904
  %v4688 = vpop.f32.mrb[0].mxu0
  %v4689 = vadd.f32 %v4544, %v4688
  %v4690 = vpop.f32.mrb[0].mxu0
  %4691 = vdwg.mxu0
  %v4692 = vld [vmem:[#allocation2 + $0x190] sm:$0xff]
  %v4693 = vld [vmem:[#allocation2 + $0x1a8] sm:$0xff]
  %v4694 = vld [vmem:[#allocation2 + $0x1c0] sm:$0xff]
  %v4695 = vld [vmem:[#allocation2 + $0x1d8] sm:$0xff]
  %v4696 = vld [vmem:[#allocation2 + $0x1f0] sm:$0xff]
  %v4697 = vld [vmem:[#allocation2 + $0x208] sm:$0xff]
  %v4698 = vld [vmem:[#allocation2 + $0x220] sm:$0xff]
  %v4699 = vld [vmem:[#allocation2 + $0x238] sm:$0xff]
  %v4700 = vld [vmem:[#allocation2 + $0x250] sm:$0xff]
  %v4701 = vld [vmem:[#allocation2 + $0x268] sm:$0xff]
  %v4702 = vld [vmem:[#allocation2 + $0x280] sm:$0xff]
  %v4703 = vld [vmem:[#allocation2 + $0x298] sm:$0xff]
  %v4704 = vld [vmem:[#allocation2 + $0x2b0] sm:$0xff]
  %v4705 = vld [vmem:[#allocation2 + $0x2c8] sm:$0xff]
  %v4706 = vld [vmem:[#allocation2 + $0x2e0] sm:$0xff]
  %v4707 = vld [vmem:[#allocation2 + $0x2f8] sm:$0xff]
  %4708 = vrot.lane.b32.xlu0 %v3440, 96
  %v4709 = vpop.permute.xlu0 %4708
  %4710 = vrot.lane.b32.xlu0 %v3441, 96
  %v4711 = vpop.permute.xlu0 %4710
  %4712 = vrot.lane.b32.xlu0 %v3442, 96
  %v4713 = vpop.permute.xlu0 %4712
  %4714 = vrot.lane.b32.xlu0 %v3443, 96
  %v4715 = vpop.permute.xlu0 %4714
  %4716 = vrot.lane.b32.xlu0 %v3444, 96
  %v4717 = vpop.permute.xlu0 %4716
  %4718 = vrot.lane.b32.xlu0 %v3445, 96
  %v4719 = vpop.permute.xlu0 %4718
  %4720 = vrot.lane.b32.xlu0 %v3446, 96
  %v4721 = vpop.permute.xlu0 %4720
  %4722 = vrot.lane.b32.xlu0 %v3447, 96
  %v4723 = vpop.permute.xlu0 %4722
  %4724 = vrot.lane.b32.xlu0 %v3448, 96
  %v4725 = vpop.permute.xlu0 %4724
  %4726 = vrot.lane.b32.xlu0 %v3449, 96
  %v4727 = vpop.permute.xlu0 %4726
  %4728 = vrot.lane.b32.xlu0 %v3450, 96
  %v4729 = vpop.permute.xlu0 %4728
  %4730 = vrot.lane.b32.xlu0 %v3451, 96
  %v4731 = vpop.permute.xlu0 %4730
  %4732 = vrot.lane.b32.xlu0 %v3452, 96
  %v4733 = vpop.permute.xlu0 %4732
  %4734 = vrot.lane.b32.xlu0 %v3453, 96
  %v4735 = vpop.permute.xlu0 %4734
  %4736 = vrot.lane.b32.xlu0 %v3454, 96
  %v4737 = vpop.permute.xlu0 %4736
  %4738 = vrot.lane.b32.xlu0 %v3455, 96
  %v4739 = vpop.permute.xlu0 %4738
  %4740 = vrot.lane.b32.xlu0 %v3440, 32
  %v4741 = vpop.permute.xlu0 %4740
  %4742 = vrot.lane.b32.xlu0 %v3441, 32
  %v4743 = vpop.permute.xlu0 %4742
  %4744 = vrot.lane.b32.xlu0 %v3442, 32
  %v4745 = vpop.permute.xlu0 %4744
  %4746 = vrot.lane.b32.xlu0 %v3443, 32
  %v4747 = vpop.permute.xlu0 %4746
  %4748 = vrot.lane.b32.xlu0 %v3444, 32
  %v4749 = vpop.permute.xlu0 %4748
  %4750 = vrot.lane.b32.xlu0 %v3445, 32
  %v4751 = vpop.permute.xlu0 %4750
  %4752 = vrot.lane.b32.xlu0 %v3446, 32
  %v4753 = vpop.permute.xlu0 %4752
  %4754 = vrot.lane.b32.xlu0 %v3447, 32
  %v4755 = vpop.permute.xlu0 %4754
  %4756 = vrot.lane.b32.xlu0 %v3448, 32
  %v4757 = vpop.permute.xlu0 %4756
  %4758 = vrot.lane.b32.xlu0 %v3449, 32
  %v4759 = vpop.permute.xlu0 %4758
  %4760 = vrot.lane.b32.xlu0 %v3450, 32
  %v4761 = vpop.permute.xlu0 %4760
  %4762 = vrot.lane.b32.xlu0 %v3451, 32
  %v4763 = vpop.permute.xlu0 %4762
  %4764 = vrot.lane.b32.xlu0 %v3452, 32
  %v4765 = vpop.permute.xlu0 %4764
  %4766 = vrot.lane.b32.xlu0 %v3453, 32
  %v4767 = vpop.permute.xlu0 %4766
  %4768 = vrot.lane.b32.xlu0 %v3454, 32
  %v4769 = vpop.permute.xlu0 %4768
  %4770 = vrot.lane.b32.xlu0 %v3455, 32
  %v4771 = vpop.permute.xlu0 %4770
  %v4772 = vsel %vm977, %v4709, 0
  %v4774 = vsel %vm977, %v4711, 0
  %v4776 = vsel %vm977, %v4713, 0
  %v4778 = vsel %vm977, %v4715, 0
  %v4780 = vsel %vm977, %v4717, 0
  %v4782 = vsel %vm977, %v4719, 0
  %v4784 = vsel %vm977, %v4721, 0
  %v4786 = vsel %vm977, %v4723, 0
  %v4788 = vsel %vm977, %v4725, 0
  %v4790 = vsel %vm977, %v4727, 0
  %v4792 = vsel %vm977, %v4729, 0
  %v4794 = vsel %vm977, %v4731, 0
  %v4796 = vsel %vm977, %v4733, 0
  %v4798 = vsel %vm977, %v4735, 0
  %v4800 = vsel %vm977, %v4737, 0
  %v4802 = vsel %vm977, %v4739, 0
  %v4804 = vsel %vm977, %v4741, 0
  %v4806 = vsel %vm977, %v4743, 0
  %v4808 = vsel %vm977, %v4745, 0
  %v4810 = vsel %vm977, %v4747, 0
  %v4812 = vsel %vm977, %v4749, 0
  %v4814 = vsel %vm977, %v4751, 0
  %v4816 = vsel %vm977, %v4753, 0
  %v4818 = vsel %vm977, %v4755, 0
  %v4820 = vsel %vm977, %v4757, 0
  %v4822 = vsel %vm977, %v4759, 0
  %v4824 = vsel %vm977, %v4761, 0
  %v4826 = vsel %vm977, %v4763, 0
  %v4828 = vsel %vm977, %v4765, 0
  %v4830 = vsel %vm977, %v4767, 0
  %v4832 = vsel %vm977, %v4769, 0
  %v4834 = vsel %vm977, %v4771, 0
  %4836 = vmatprep.subr.mxu0 0.0
  %4837 = vmatpush1.xpose.msra.mxu0 %v4804
  %4838 = vmatprep.subr.mxu0 0.0
  %4839 = vmatpush1.xpose.msra.mxu0 %v4806
  %4840 = vmatprep.subr.mxu0 0.0
  %4841 = vmatpush1.xpose.msra.mxu0 %v4808
  %4842 = vmatprep.subr.mxu0 0.0
  %4843 = vmatpush1.xpose.msra.mxu0 %v4810
  %4844 = vmatprep.subr.mxu0 0.0
  %4845 = vmatpush1.xpose.msra.mxu0 %v4812
  %4846 = vmatprep.subr.mxu0 0.0
  %4847 = vmatpush1.xpose.msra.mxu0 %v4814
  %4848 = vmatprep.subr.mxu0 0.0
  %4849 = vmatpush1.xpose.msra.mxu0 %v4816
  %4850 = vmatprep.subr.mxu0 0.0
  %4851 = vmatpush1.xpose.msra.mxu0 %v4818
  %4852 = vmatprep.subr.mxu0 0.0
  %4853 = vmatpush1.xpose.msra.mxu0 %v4820
  %4854 = vmatprep.subr.mxu0 0.0
  %4855 = vmatpush1.xpose.msra.mxu0 %v4822
  %4856 = vmatprep.subr.mxu0 0.0
  %4857 = vmatpush1.xpose.msra.mxu0 %v4824
  %4858 = vmatprep.subr.mxu0 0.0
  %4859 = vmatpush1.xpose.msra.mxu0 %v4826
  %4860 = vmatprep.subr.mxu0 0.0
  %4861 = vmatpush1.xpose.msra.mxu0 %v4828
  %4862 = vmatprep.subr.mxu0 0.0
  %4863 = vmatpush1.xpose.msra.mxu0 %v4830
  %4864 = vmatprep.subr.mxu0 0.0
  %4865 = vmatpush1.xpose.msra.mxu0 %v4832
  %4866 = vmatprep.subr.mxu0 0.0
  %4867 = vmatpush1.xpose.msra.mxu0 %v4834
  %4868 = vmatprep.subr.mxu0 0.0
  %4869 = vmatpush1.xpose.msra.mxu0 0.0
  %4870 = vmatprep.subr.mxu0 0.0
  %4871 = vmatpush1.xpose.msra.mxu0 0.0
  %4872 = vmatprep.subr.mxu0 0.0
  %4873 = vmatpush1.xpose.msra.mxu0 0.0
  %4874 = vmatprep.subr.mxu0 0.0
  %4875 = vmatpush1.xpose.msra.mxu0 0.0
  %4876 = vmatprep.subr.mxu0 0.0
  %4877 = vmatpush1.xpose.msra.mxu0 0.0
  %4878 = vmatprep.subr.mxu0 0.0
  %4879 = vmatpush1.xpose.msra.mxu0 0.0
  %4880 = vmatprep.subr.mxu0 0.0
  %4881 = vmatpush1.xpose.msra.mxu0 0.0
  %4882 = vmatprep.subr.mxu0 0.0
  %4883 = vmatpush1.xpose.msra.mxu0 0.0
  %4884 = vmatprep.subr.mxu0 0.0
  %4885 = vmatpush1.xpose.msra.mxu0 0.0
  %4886 = vmatprep.subr.mxu0 0.0
  %4887 = vmatpush1.xpose.msra.mxu0 0.0
  %4888 = vmatprep.subr.mxu0 0.0
  %4889 = vmatpush1.xpose.msra.mxu0 0.0
  %4890 = vmatprep.subr.mxu0 0.0
  %4891 = vmatpush1.xpose.msra.mxu0 0.0
  %4892 = vmatprep.subr.mxu0 0.0
  %4893 = vmatpush1.xpose.msra.mxu0 0.0
  %4894 = vmatprep.subr.mxu0 0.0
  %4895 = vmatpush1.xpose.msra.mxu0 0.0
  %4896 = vmatprep.subr.mxu0 0.0
  %4897 = vmatpush1.xpose.msra.mxu0 0.0
  %4898 = vmatprep.subr.mxu0 0.0
  %4899 = vmatpush1.xpose.msra.mxu0 0.0
  %4900 = vmatprep.mubr.f32.mxu0 0.0
  %4901 = vmatmul.mubr.f32.gmra.mrb[0].mxu0 %v4772
  %v4902 = vpop.f32.mrb[0].mxu0
  %v4903 = vadd.f32 %v3472, %v4902
  %v4904 = vpop.f32.mrb[0].mxu0
  %4905 = vmatprep.mubr.f32.mxu0 0.0
  %4906 = vmatmul.mubr.f32.gmra.mrb[0].mxu0 %v4774
  %v4907 = vpop.f32.mrb[0].mxu0
  %v4908 = vadd.f32 %v3473, %v4907
  %v4909 = vpop.f32.mrb[0].mxu0
  %4910 = vmatprep.mubr.f32.mxu0 0.0
  %4911 = vmatmul.mubr.f32.gmra.mrb[0].mxu0 %v4776
  %v4912 = vpop.f32.mrb[0].mxu0
  %v4913 = vadd.f32 %v3474, %v4912
  %v4914 = vpop.f32.mrb[0].mxu0
  %4915 = vmatprep.mubr.f32.mxu0 0.0
  %4916 = vmatmul.mubr.f32.gmra.mrb[0].mxu0 %v4778
  %v4917 = vpop.f32.mrb[0].mxu0
  %v4918 = vadd.f32 %v3475, %v4917
  %v4919 = vpop.f32.mrb[0].mxu0
  %4920 = vmatprep.mubr.f32.mxu0 0.0
  %4921 = vmatmul.mubr.f32.gmra.mrb[0].mxu0 %v4780
  %v4922 = vpop.f32.mrb[0].mxu0
  %v4923 = vadd.f32 %v3476, %v4922
  %v4924 = vpop.f32.mrb[0].mxu0
  %4925 = vmatprep.mubr.f32.mxu0 0.0
  %4926 = vmatmul.mubr.f32.gmra.mrb[0].mxu0 %v4782
  %v4927 = vpop.f32.mrb[0].mxu0
  %v4928 = vadd.f32 %v3477, %v4927
  %v4929 = vpop.f32.mrb[0].mxu0
  %4930 = vmatprep.mubr.f32.mxu0 0.0
  %4931 = vmatmul.mubr.f32.gmra.mrb[0].mxu0 %v4784
  %v4932 = vpop.f32.mrb[0].mxu0
  %v4933 = vadd.f32 %v3478, %v4932
  %v4934 = vpop.f32.mrb[0].mxu0
  %4935 = vmatprep.mubr.f32.mxu0 0.0
  %4936 = vmatmul.mubr.f32.gmra.mrb[0].mxu0 %v4786
  %v4937 = vpop.f32.mrb[0].mxu0
  %v4938 = vadd.f32 %v3479, %v4937
  %v4939 = vpop.f32.mrb[0].mxu0
  %4940 = vmatprep.mubr.f32.mxu0 0.0
  %4941 = vmatmul.mubr.f32.gmra.mrb[0].mxu0 %v4788
  %v4942 = vpop.f32.mrb[0].mxu0
  %v4943 = vadd.f32 %v3480, %v4942
  %v4944 = vpop.f32.mrb[0].mxu0
  %4945 = vmatprep.mubr.f32.mxu0 0.0
  %4946 = vmatmul.mubr.f32.gmra.mrb[0].mxu0 %v4790
  %v4947 = vpop.f32.mrb[0].mxu0
  %v4948 = vadd.f32 %v3481, %v4947
  %v4949 = vpop.f32.mrb[0].mxu0
  %4950 = vmatprep.mubr.f32.mxu0 0.0
  %4951 = vmatmul.mubr.f32.gmra.mrb[0].mxu0 %v4792
  %v4952 = vpop.f32.mrb[0].mxu0
  %v4953 = vadd.f32 %v3482, %v4952
  %v4954 = vpop.f32.mrb[0].mxu0
  %4955 = vmatprep.mubr.f32.mxu0 0.0
  %4956 = vmatmul.mubr.f32.gmra.mrb[0].mxu0 %v4794
  %v4957 = vpop.f32.mrb[0].mxu0
  %v4958 = vadd.f32 %v3483, %v4957
  %v4959 = vpop.f32.mrb[0].mxu0
  %4960 = vmatprep.mubr.f32.mxu0 0.0
  %4961 = vmatmul.mubr.f32.gmra.mrb[0].mxu0 %v4796
  %v4962 = vpop.f32.mrb[0].mxu0
  %v4963 = vadd.f32 %v3484, %v4962
  %v4964 = vpop.f32.mrb[0].mxu0
  %4965 = vmatprep.mubr.f32.mxu0 0.0
  %4966 = vmatmul.mubr.f32.gmra.mrb[0].mxu0 %v4798
  %v4967 = vpop.f32.mrb[0].mxu0
  %v4968 = vadd.f32 %v3485, %v4967
  %v4969 = vpop.f32.mrb[0].mxu0
  %4970 = vmatprep.mubr.f32.mxu0 0.0
  %4971 = vmatmul.mubr.f32.gmra.mrb[0].mxu0 %v4800
  %v4972 = vpop.f32.mrb[0].mxu0
  %v4973 = vadd.f32 %v3486, %v4972
  %v4974 = vpop.f32.mrb[0].mxu0
  %4975 = vmatprep.mubr.f32.mxu0 0.0
  %4976 = vmatmul.mubr.f32.gmra.mrb[0].mxu0 %v4802
  %v4977 = vpop.f32.mrb[0].mxu0
  %v4978 = vadd.f32 %v3487, %v4977
  %v4979 = vpop.f32.mrb[0].mxu0
  %4980 = vdwg.mxu0
  %4981 = vmax.xlane.f32.xlu0 %v4903
  %v4982 = vpop.xlane.xlu0 %4981
  %4983 = vmax.xlane.f32.xlu0 %v4908
  %v4984 = vpop.xlane.xlu0 %4983
  %4985 = vmax.xlane.f32.xlu0 %v4913
  %v4986 = vpop.xlane.xlu0 %4985
  %4987 = vmax.xlane.f32.xlu0 %v4918
  %v4988 = vpop.xlane.xlu0 %4987
  %4989 = vmax.xlane.f32.xlu0 %v4923
  %v4990 = vpop.xlane.xlu0 %4989
  %4991 = vmax.xlane.f32.xlu0 %v4928
  %v4992 = vpop.xlane.xlu0 %4991
  %4993 = vmax.xlane.f32.xlu0 %v4933
  %v4994 = vpop.xlane.xlu0 %4993
  %4995 = vmax.xlane.f32.xlu0 %v4938
  %v4996 = vpop.xlane.xlu0 %4995
  %4997 = vmax.xlane.f32.xlu0 %v4943
  %v4998 = vpop.xlane.xlu0 %4997
  %4999 = vmax.xlane.f32.xlu0 %v4948
  %v5000 = vpop.xlane.xlu0 %4999
  %5001 = vmax.xlane.f32.xlu0 %v4953
  %v5002 = vpop.xlane.xlu0 %5001
  %5003 = vmax.xlane.f32.xlu0 %v4958
  %v5004 = vpop.xlane.xlu0 %5003
  %5005 = vmax.xlane.f32.xlu0 %v4963
  %v5006 = vpop.xlane.xlu0 %5005
  %5007 = vmax.xlane.f32.xlu0 %v4968
  %v5008 = vpop.xlane.xlu0 %5007
  %5009 = vmax.xlane.f32.xlu0 %v4973
  %v5010 = vpop.xlane.xlu0 %5009
  %5011 = vmax.xlane.f32.xlu0 %v4978
  %v5012 = vpop.xlane.xlu0 %5011
  %v5013 = vsub.f32 %v4903, %v4982
  %v5014 = vsub.f32 %v4908, %v4984
  %v5015 = vsub.f32 %v4913, %v4986
  %v5016 = vsub.f32 %v4918, %v4988
  %v5017 = vsub.f32 %v4923, %v4990
  %v5018 = vsub.f32 %v4928, %v4992
  %v5019 = vsub.f32 %v4933, %v4994
  %v5020 = vsub.f32 %v4938, %v4996
  %v5021 = vsub.f32 %v4943, %v4998
  %v5022 = vsub.f32 %v4948, %v5000
  %v5023 = vsub.f32 %v4953, %v5002
  %v5024 = vsub.f32 %v4958, %v5004
  %v5025 = vsub.f32 %v4963, %v5006
  %v5026 = vsub.f32 %v4968, %v5008
  %v5027 = vsub.f32 %v4973, %v5010
  %v5028 = vsub.f32 %v4978, %v5012
  %v5029 = vmul.f32 %v5013, 1.442695
  %v5030 = vpow.pop %v5029
  %v5031 = vmul.f32 %v5014, 1.442695
  %v5032 = vpow.pop %v5031
  %v5033 = vmul.f32 %v5015, 1.442695
  %v5034 = vpow.pop %v5033
  %v5035 = vmul.f32 %v5016, 1.442695
  %v5036 = vpow.pop %v5035
  %v5037 = vmul.f32 %v5017, 1.442695
  %v5038 = vpow.pop %v5037
  %v5039 = vmul.f32 %v5018, 1.442695
  %v5040 = vpow.pop %v5039
  %v5041 = vmul.f32 %v5019, 1.442695
  %v5042 = vpow.pop %v5041
  %v5043 = vmul.f32 %v5020, 1.442695
  %v5044 = vpow.pop %v5043
  %v5045 = vmul.f32 %v5021, 1.442695
  %v5046 = vpow.pop %v5045
  %v5047 = vmul.f32 %v5022, 1.442695
  %v5048 = vpow.pop %v5047
  %v5049 = vmul.f32 %v5023, 1.442695
  %v5050 = vpow.pop %v5049
  %v5051 = vmul.f32 %v5024, 1.442695
  %v5052 = vpow.pop %v5051
  %v5053 = vmul.f32 %v5025, 1.442695
  %v5054 = vpow.pop %v5053
  %v5055 = vmul.f32 %v5026, 1.442695
  %v5056 = vpow.pop %v5055
  %v5057 = vmul.f32 %v5027, 1.442695
  %v5058 = vpow.pop %v5057
  %v5059 = vmul.f32 %v5028, 1.442695
  %v5060 = vpow.pop %v5059
  %5061 = vadd.xlane.f32.xlu0 %v5030
  %v5062 = vpop.xlane.xlu0 %5061
  %5063 = vadd.xlane.f32.xlu0 %v5032
  %v5064 = vpop.xlane.xlu0 %5063
  %5065 = vadd.xlane.f32.xlu0 %v5034
  %v5066 = vpop.xlane.xlu0 %5065
  %5067 = vadd.xlane.f32.xlu0 %v5036
  %v5068 = vpop.xlane.xlu0 %5067
  %5069 = vadd.xlane.f32.xlu0 %v5038
  %v5070 = vpop.xlane.xlu0 %5069
  %5071 = vadd.xlane.f32.xlu0 %v5040
  %v5072 = vpop.xlane.xlu0 %5071
  %5073 = vadd.xlane.f32.xlu0 %v5042
  %v5074 = vpop.xlane.xlu0 %5073
  %5075 = vadd.xlane.f32.xlu0 %v5044
  %v5076 = vpop.xlane.xlu0 %5075
  %5077 = vadd.xlane.f32.xlu0 %v5046
  %v5078 = vpop.xlane.xlu0 %5077
  %5079 = vadd.xlane.f32.xlu0 %v5048
  %v5080 = vpop.xlane.xlu0 %5079
  %5081 = vadd.xlane.f32.xlu0 %v5050
  %v5082 = vpop.xlane.xlu0 %5081
  %5083 = vadd.xlane.f32.xlu0 %v5052
  %v5084 = vpop.xlane.xlu0 %5083
  %5085 = vadd.xlane.f32.xlu0 %v5054
  %v5086 = vpop.xlane.xlu0 %5085
  %5087 = vadd.xlane.f32.xlu0 %v5056
  %v5088 = vpop.xlane.xlu0 %5087
  %5089 = vadd.xlane.f32.xlu0 %v5058
  %v5090 = vpop.xlane.xlu0 %5089
  %5091 = vadd.xlane.f32.xlu0 %v5060
  %v5092 = vpop.xlane.xlu0 %5091
  %v5093 = vrcp.pop %v5062
  %v5094 = vmul.f32 1.0, %v5093
  %v5095 = vrcp.pop %v5064
  %v5096 = vmul.f32 1.0, %v5095
  %v5097 = vrcp.pop %v5066
  %v5098 = vmul.f32 1.0, %v5097
  %v5099 = vrcp.pop %v5068
  %v5100 = vmul.f32 1.0, %v5099
  %v5101 = vrcp.pop %v5070
  %v5102 = vmul.f32 1.0, %v5101
  %v5103 = vrcp.pop %v5072
  %v5104 = vmul.f32 1.0, %v5103
  %v5105 = vrcp.pop %v5074
  %v5106 = vmul.f32 1.0, %v5105
  %v5107 = vrcp.pop %v5076
  %v5108 = vmul.f32 1.0, %v5107
  %v5109 = vrcp.pop %v5078
  %v5110 = vmul.f32 1.0, %v5109
  %v5111 = vrcp.pop %v5080
  %v5112 = vmul.f32 1.0, %v5111
  %v5113 = vrcp.pop %v5082
  %v5114 = vmul.f32 1.0, %v5113
  %v5115 = vrcp.pop %v5084
  %v5116 = vmul.f32 1.0, %v5115
  %v5117 = vrcp.pop %v5086
  %v5118 = vmul.f32 1.0, %v5117
  %v5119 = vrcp.pop %v5088
  %v5120 = vmul.f32 1.0, %v5119
  %v5121 = vrcp.pop %v5090
  %v5122 = vmul.f32 1.0, %v5121
  %v5123 = vrcp.pop %v5092
  %v5124 = vmul.f32 1.0, %v5123
  %v5125 = vmul.f32 %v5030, %v5094
  %v5126 = vmul.f32 %v5032, %v5096
  %v5127 = vmul.f32 %v5034, %v5098
  %v5128 = vmul.f32 %v5036, %v5100
  %v5129 = vmul.f32 %v5038, %v5102
  %v5130 = vmul.f32 %v5040, %v5104
  %v5131 = vmul.f32 %v5042, %v5106
  %v5132 = vmul.f32 %v5044, %v5108
  %v5133 = vmul.f32 %v5046, %v5110
  %v5134 = vmul.f32 %v5048, %v5112
  %v5135 = vmul.f32 %v5050, %v5114
  %v5136 = vmul.f32 %v5052, %v5116
  %v5137 = vmul.f32 %v5054, %v5118
  %v5138 = vmul.f32 %v5056, %v5120
  %v5139 = vmul.f32 %v5058, %v5122
  %v5140 = vmul.f32 %v5060, %v5124
  %5141 = vmatprep.subr.mxu0 0.0
  %5142 = vmatpush1.msra.mxu0 %v4692
  %5143 = vmatprep.subr.mxu0 0.0
  %5144 = vmatpush1.msra.mxu0 %v4693
  %5145 = vmatprep.subr.mxu0 0.0
  %5146 = vmatpush1.msra.mxu0 %v4694
  %5147 = vmatprep.subr.mxu0 0.0
  %5148 = vmatpush1.msra.mxu0 %v4695
  %5149 = vmatprep.subr.mxu0 0.0
  %5150 = vmatpush1.msra.mxu0 %v4696
  %5151 = vmatprep.subr.mxu0 0.0
  %5152 = vmatpush1.msra.mxu0 %v4697
  %5153 = vmatprep.subr.mxu0 0.0
  %5154 = vmatpush1.msra.mxu0 %v4698
  %5155 = vmatprep.subr.mxu0 0.0
  %5156 = vmatpush1.msra.mxu0 %v4699
  %5157 = vmatprep.subr.mxu0 0.0
  %5158 = vmatpush1.msra.mxu0 %v4700
  %5159 = vmatprep.subr.mxu0 0.0
  %5160 = vmatpush1.msra.mxu0 %v4701
  %5161 = vmatprep.subr.mxu0 0.0
  %5162 = vmatpush1.msra.mxu0 %v4702
  %5163 = vmatprep.subr.mxu0 0.0
  %5164 = vmatpush1.msra.mxu0 %v4703
  %5165 = vmatprep.subr.mxu0 0.0
  %5166 = vmatpush1.msra.mxu0 %v4704
  %5167 = vmatprep.subr.mxu0 0.0
  %5168 = vmatpush1.msra.mxu0 %v4705
  %5169 = vmatprep.subr.mxu0 0.0
  %5170 = vmatpush1.msra.mxu0 %v4706
  %5171 = vmatprep.subr.mxu0 0.0
  %5172 = vmatpush1.msra.mxu0 %v4707
  %5173 = vmatprep.subr.mxu0 0.0
  %5174 = vmatpush1.msra.mxu0 0.0
  %5175 = vmatprep.subr.mxu0 0.0
  %5176 = vmatpush1.msra.mxu0 0.0
  %5177 = vmatprep.subr.mxu0 0.0
  %5178 = vmatpush1.msra.mxu0 0.0
  %5179 = vmatprep.subr.mxu0 0.0
  %5180 = vmatpush1.msra.mxu0 0.0
  %5181 = vmatprep.subr.mxu0 0.0
  %5182 = vmatpush1.msra.mxu0 0.0
  %5183 = vmatprep.subr.mxu0 0.0
  %5184 = vmatpush1.msra.mxu0 0.0
  %5185 = vmatprep.subr.mxu0 0.0
  %5186 = vmatpush1.msra.mxu0 0.0
  %5187 = vmatprep.subr.mxu0 0.0
  %5188 = vmatpush1.msra.mxu0 0.0
  %5189 = vmatprep.subr.mxu0 0.0
  %5190 = vmatpush1.msra.mxu0 0.0
  %5191 = vmatprep.subr.mxu0 0.0
  %5192 = vmatpush1.msra.mxu0 0.0
  %5193 = vmatprep.subr.mxu0 0.0
  %5194 = vmatpush1.msra.mxu0 0.0
  %5195 = vmatprep.subr.mxu0 0.0
  %5196 = vmatpush1.msra.mxu0 0.0
  %5197 = vmatprep.subr.mxu0 0.0
  %5198 = vmatpush1.msra.mxu0 0.0
  %5199 = vmatprep.subr.mxu0 0.0
  %5200 = vmatpush1.msra.mxu0 0.0
  %5201 = vmatprep.subr.mxu0 0.0
  %5202 = vmatpush1.msra.mxu0 0.0
  %5203 = vmatprep.subr.mxu0 0.0
  %5204 = vmatpush1.msra.mxu0 0.0
  %5205 = vmatprep.mubr.f32.mxu0 0.0
  %5206 = vmatmul.mubr.f32.gmra.mrb[0].mxu0 %v5125
  %v5207 = vpop.f32.mrb[0].mxu0
  %v5208 = vadd.f32 0.0, %v5207
  %v5209 = vpop.f32.mrb[0].mxu0
  %5210 = vmatprep.mubr.f32.mxu0 0.0
  %5211 = vmatmul.mubr.f32.gmra.mrb[0].mxu0 %v5126
  %v5212 = vpop.f32.mrb[0].mxu0
  %v5213 = vadd.f32 0.0, %v5212
  %v5214 = vpop.f32.mrb[0].mxu0
  %5215 = vmatprep.mubr.f32.mxu0 0.0
  %5216 = vmatmul.mubr.f32.gmra.mrb[0].mxu0 %v5127
  %v5217 = vpop.f32.mrb[0].mxu0
  %v5218 = vadd.f32 0.0, %v5217
  %v5219 = vpop.f32.mrb[0].mxu0
  %5220 = vmatprep.mubr.f32.mxu0 0.0
  %5221 = vmatmul.mubr.f32.gmra.mrb[0].mxu0 %v5128
  %v5222 = vpop.f32.mrb[0].mxu0
  %v5223 = vadd.f32 0.0, %v5222
  %v5224 = vpop.f32.mrb[0].mxu0
  %5225 = vmatprep.mubr.f32.mxu0 0.0
  %5226 = vmatmul.mubr.f32.gmra.mrb[0].mxu0 %v5129
  %v5227 = vpop.f32.mrb[0].mxu0
  %v5228 = vadd.f32 0.0, %v5227
  %v5229 = vpop.f32.mrb[0].mxu0
  %5230 = vmatprep.mubr.f32.mxu0 0.0
  %5231 = vmatmul.mubr.f32.gmra.mrb[0].mxu0 %v5130
  %v5232 = vpop.f32.mrb[0].mxu0
  %v5233 = vadd.f32 0.0, %v5232
  %v5234 = vpop.f32.mrb[0].mxu0
  %5235 = vmatprep.mubr.f32.mxu0 0.0
  %5236 = vmatmul.mubr.f32.gmra.mrb[0].mxu0 %v5131
  %v5237 = vpop.f32.mrb[0].mxu0
  %v5238 = vadd.f32 0.0, %v5237
  %v5239 = vpop.f32.mrb[0].mxu0
  %5240 = vmatprep.mubr.f32.mxu0 0.0
  %5241 = vmatmul.mubr.f32.gmra.mrb[0].mxu0 %v5132
  %v5242 = vpop.f32.mrb[0].mxu0
  %v5243 = vadd.f32 0.0, %v5242
  %v5244 = vpop.f32.mrb[0].mxu0
  %5245 = vmatprep.mubr.f32.mxu0 0.0
  %5246 = vmatmul.mubr.f32.gmra.mrb[0].mxu0 %v5133
  %v5247 = vpop.f32.mrb[0].mxu0
  %v5248 = vadd.f32 0.0, %v5247
  %v5249 = vpop.f32.mrb[0].mxu0
  %5250 = vmatprep.mubr.f32.mxu0 0.0
  %5251 = vmatmul.mubr.f32.gmra.mrb[0].mxu0 %v5134
  %v5252 = vpop.f32.mrb[0].mxu0
  %v5253 = vadd.f32 0.0, %v5252
  %v5254 = vpop.f32.mrb[0].mxu0
  %5255 = vmatprep.mubr.f32.mxu0 0.0
  %5256 = vmatmul.mubr.f32.gmra.mrb[0].mxu0 %v5135
  %v5257 = vpop.f32.mrb[0].mxu0
  %v5258 = vadd.f32 0.0, %v5257
  %v5259 = vpop.f32.mrb[0].mxu0
  %5260 = vmatprep.mubr.f32.mxu0 0.0
  %5261 = vmatmul.mubr.f32.gmra.mrb[0].mxu0 %v5136
  %v5262 = vpop.f32.mrb[0].mxu0
  %v5263 = vadd.f32 0.0, %v5262
  %v5264 = vpop.f32.mrb[0].mxu0
  %5265 = vmatprep.mubr.f32.mxu0 0.0
  %5266 = vmatmul.mubr.f32.gmra.mrb[0].mxu0 %v5137
  %v5267 = vpop.f32.mrb[0].mxu0
  %v5268 = vadd.f32 0.0, %v5267
  %v5269 = vpop.f32.mrb[0].mxu0
  %5270 = vmatprep.mubr.f32.mxu0 0.0
  %5271 = vmatmul.mubr.f32.gmra.mrb[0].mxu0 %v5138
  %v5272 = vpop.f32.mrb[0].mxu0
  %v5273 = vadd.f32 0.0, %v5272
  %v5274 = vpop.f32.mrb[0].mxu0
  %5275 = vmatprep.mubr.f32.mxu0 0.0
  %5276 = vmatmul.mubr.f32.gmra.mrb[0].mxu0 %v5139
  %v5277 = vpop.f32.mrb[0].mxu0
  %v5278 = vadd.f32 0.0, %v5277
  %v5279 = vpop.f32.mrb[0].mxu0
  %5280 = vmatprep.mubr.f32.mxu0 0.0
  %5281 = vmatmul.mubr.f32.gmra.mrb[0].mxu0 %v5140
  %v5282 = vpop.f32.mrb[0].mxu0
  %v5283 = vadd.f32 0.0, %v5282
  %v5284 = vpop.f32.mrb[0].mxu0
  %5285 = vdwg.mxu0
  %v5286 = vadd.f32 %v4614, %v5208
  %v5287 = vadd.f32 %v4619, %v5213
  %v5288 = vadd.f32 %v4624, %v5218
  %v5289 = vadd.f32 %v4629, %v5223
  %v5290 = vadd.f32 %v4634, %v5228
  %v5291 = vadd.f32 %v4639, %v5233
  %v5292 = vadd.f32 %v4644, %v5238
  %v5293 = vadd.f32 %v4649, %v5243
  %v5294 = vadd.f32 %v4654, %v5248
  %v5295 = vadd.f32 %v4659, %v5253
  %v5296 = vadd.f32 %v4664, %v5258
  %v5297 = vadd.f32 %v4669, %v5263
  %v5298 = vadd.f32 %v4674, %v5268
  %v5299 = vadd.f32 %v4679, %v5273
  %v5300 = vadd.f32 %v4684, %v5278
  %v5301 = vadd.f32 %v4689, %v5283
  %5302 = vrot.lane.b32.xlu0 %v3440, 80
  %v5303 = vpop.permute.xlu0 %5302
  %5304 = vrot.lane.b32.xlu0 %v3441, 80
  %v5305 = vpop.permute.xlu0 %5304
  %5306 = vrot.lane.b32.xlu0 %v3442, 80
  %v5307 = vpop.permute.xlu0 %5306
  %5308 = vrot.lane.b32.xlu0 %v3443, 80
  %v5309 = vpop.permute.xlu0 %5308
  %5310 = vrot.lane.b32.xlu0 %v3444, 80
  %v5311 = vpop.permute.xlu0 %5310
  %5312 = vrot.lane.b32.xlu0 %v3445, 80
  %v5313 = vpop.permute.xlu0 %5312
  %5314 = vrot.lane.b32.xlu0 %v3446, 80
  %v5315 = vpop.permute.xlu0 %5314
  %5316 = vrot.lane.b32.xlu0 %v3447, 80
  %v5317 = vpop.permute.xlu0 %5316
  %5318 = vrot.lane.b32.xlu0 %v3448, 80
  %v5319 = vpop.permute.xlu0 %5318
  %5320 = vrot.lane.b32.xlu0 %v3449, 80
  %v5321 = vpop.permute.xlu0 %5320
  %5322 = vrot.lane.b32.xlu0 %v3450, 80
  %v5323 = vpop.permute.xlu0 %5322
  %5324 = vrot.lane.b32.xlu0 %v3451, 80
  %v5325 = vpop.permute.xlu0 %5324
  %5326 = vrot.lane.b32.xlu0 %v3452, 80
  %v5327 = vpop.permute.xlu0 %5326
  %5328 = vrot.lane.b32.xlu0 %v3453, 80
  %v5329 = vpop.permute.xlu0 %5328
  %5330 = vrot.lane.b32.xlu0 %v3454, 80
  %v5331 = vpop.permute.xlu0 %5330
  %5332 = vrot.lane.b32.xlu0 %v3455, 80
  %v5333 = vpop.permute.xlu0 %5332
  %5334 = vrot.lane.b32.xlu0 %v3440, 16
  %v5335 = vpop.permute.xlu0 %5334
  %5336 = vrot.lane.b32.xlu0 %v3441, 16
  %v5337 = vpop.permute.xlu0 %5336
  %5338 = vrot.lane.b32.xlu0 %v3442, 16
  %v5339 = vpop.permute.xlu0 %5338
  %5340 = vrot.lane.b32.xlu0 %v3443, 16
  %v5341 = vpop.permute.xlu0 %5340
  %5342 = vrot.lane.b32.xlu0 %v3444, 16
  %v5343 = vpop.permute.xlu0 %5342
  %5344 = vrot.lane.b32.xlu0 %v3445, 16
  %v5345 = vpop.permute.xlu0 %5344
  %5346 = vrot.lane.b32.xlu0 %v3446, 16
  %v5347 = vpop.permute.xlu0 %5346
  %5348 = vrot.lane.b32.xlu0 %v3447, 16
  %v5349 = vpop.permute.xlu0 %5348
  %5350 = vrot.lane.b32.xlu0 %v3448, 16
  %v5351 = vpop.permute.xlu0 %5350
  %5352 = vrot.lane.b32.xlu0 %v3449, 16
  %v5353 = vpop.permute.xlu0 %5352
  %5354 = vrot.lane.b32.xlu0 %v3450, 16
  %v5355 = vpop.permute.xlu0 %5354
  %5356 = vrot.lane.b32.xlu0 %v3451, 16
  %v5357 = vpop.permute.xlu0 %5356
  %5358 = vrot.lane.b32.xlu0 %v3452, 16
  %v5359 = vpop.permute.xlu0 %5358
  %5360 = vrot.lane.b32.xlu0 %v3453, 16
  %v5361 = vpop.permute.xlu0 %5360
  %5362 = vrot.lane.b32.xlu0 %v3454, 16
  %v5363 = vpop.permute.xlu0 %5362
  %5364 = vrot.lane.b32.xlu0 %v3455, 16
  %v5365 = vpop.permute.xlu0 %5364
  %v5366 = vsel %vm977, %v5303, 0
  %v5368 = vsel %vm977, %v5305, 0
  %v5370 = vsel %vm977, %v5307, 0
  %v5372 = vsel %vm977, %v5309, 0
  %v5374 = vsel %vm977, %v5311, 0
  %v5376 = vsel %vm977, %v5313, 0
  %v5378 = vsel %vm977, %v5315, 0
  %v5380 = vsel %vm977, %v5317, 0
  %v5382 = vsel %vm977, %v5319, 0
  %v5384 = vsel %vm977, %v5321, 0
  %v5386 = vsel %vm977, %v5323, 0
  %v5388 = vsel %vm977, %v5325, 0
  %v5390 = vsel %vm977, %v5327, 0
  %v5392 = vsel %vm977, %v5329, 0
  %v5394 = vsel %vm977, %v5331, 0
  %v5396 = vsel %vm977, %v5333, 0
  %v5398 = vsel %vm977, %v5335, 0
  %v5400 = vsel %vm977, %v5337, 0
  %v5402 = vsel %vm977, %v5339, 0
  %v5404 = vsel %vm977, %v5341, 0
  %v5406 = vsel %vm977, %v5343, 0
  %v5408 = vsel %vm977, %v5345, 0
  %v5410 = vsel %vm977, %v5347, 0
  %v5412 = vsel %vm977, %v5349, 0
  %v5414 = vsel %vm977, %v5351, 0
  %v5416 = vsel %vm977, %v5353, 0
  %v5418 = vsel %vm977, %v5355, 0
  %v5420 = vsel %vm977, %v5357, 0
  %v5422 = vsel %vm977, %v5359, 0
  %v5424 = vsel %vm977, %v5361, 0
  %v5426 = vsel %vm977, %v5363, 0
  %v5428 = vsel %vm977, %v5365, 0
  %5430 = vmatprep.subr.mxu0 0.0
  %5431 = vmatpush1.xpose.msra.mxu0 %v5398
  %5432 = vmatprep.subr.mxu0 0.0
  %5433 = vmatpush1.xpose.msra.mxu0 %v5400
  %5434 = vmatprep.subr.mxu0 0.0
  %5435 = vmatpush1.xpose.msra.mxu0 %v5402
  %5436 = vmatprep.subr.mxu0 0.0
  %5437 = vmatpush1.xpose.msra.mxu0 %v5404
  %5438 = vmatprep.subr.mxu0 0.0
  %5439 = vmatpush1.xpose.msra.mxu0 %v5406
  %5440 = vmatprep.subr.mxu0 0.0
  %5441 = vmatpush1.xpose.msra.mxu0 %v5408
  %5442 = vmatprep.subr.mxu0 0.0
  %5443 = vmatpush1.xpose.msra.mxu0 %v5410
  %5444 = vmatprep.subr.mxu0 0.0
  %5445 = vmatpush1.xpose.msra.mxu0 %v5412
  %5446 = vmatprep.subr.mxu0 0.0
  %5447 = vmatpush1.xpose.msra.mxu0 %v5414
  %5448 = vmatprep.subr.mxu0 0.0
  %5449 = vmatpush1.xpose.msra.mxu0 %v5416
  %5450 = vmatprep.subr.mxu0 0.0
  %5451 = vmatpush1.xpose.msra.mxu0 %v5418
  %5452 = vmatprep.subr.mxu0 0.0
  %5453 = vmatpush1.xpose.msra.mxu0 %v5420
  %5454 = vmatprep.subr.mxu0 0.0
  %5455 = vmatpush1.xpose.msra.mxu0 %v5422
  %5456 = vmatprep.subr.mxu0 0.0
  %5457 = vmatpush1.xpose.msra.mxu0 %v5424
  %5458 = vmatprep.subr.mxu0 0.0
  %5459 = vmatpush1.xpose.msra.mxu0 %v5426
  %5460 = vmatprep.subr.mxu0 0.0
  %5461 = vmatpush1.xpose.msra.mxu0 %v5428
  %5462 = vmatprep.subr.mxu0 0.0
  %5463 = vmatpush1.xpose.msra.mxu0 0.0
  %5464 = vmatprep.subr.mxu0 0.0
  %5465 = vmatpush1.xpose.msra.mxu0 0.0
  %5466 = vmatprep.subr.mxu0 0.0
  %5467 = vmatpush1.xpose.msra.mxu0 0.0
  %5468 = vmatprep.subr.mxu0 0.0
  %5469 = vmatpush1.xpose.msra.mxu0 0.0
  %5470 = vmatprep.subr.mxu0 0.0
  %5471 = vmatpush1.xpose.msra.mxu0 0.0
  %5472 = vmatprep.subr.mxu0 0.0
  %5473 = vmatpush1.xpose.msra.mxu0 0.0
  %5474 = vmatprep.subr.mxu0 0.0
  %5475 = vmatpush1.xpose.msra.mxu0 0.0
  %5476 = vmatprep.subr.mxu0 0.0
  %5477 = vmatpush1.xpose.msra.mxu0 0.0
  %5478 = vmatprep.subr.mxu0 0.0
  %5479 = vmatpush1.xpose.msra.mxu0 0.0
  %5480 = vmatprep.subr.mxu0 0.0
  %5481 = vmatpush1.xpose.msra.mxu0 0.0
  %5482 = vmatprep.subr.mxu0 0.0
  %5483 = vmatpush1.xpose.msra.mxu0 0.0
  %5484 = vmatprep.subr.mxu0 0.0
  %5485 = vmatpush1.xpose.msra.mxu0 0.0
  %5486 = vmatprep.subr.mxu0 0.0
  %5487 = vmatpush1.xpose.msra.mxu0 0.0
  %5488 = vmatprep.subr.mxu0 0.0
  %5489 = vmatpush1.xpose.msra.mxu0 0.0
  %5490 = vmatprep.subr.mxu0 0.0
  %5491 = vmatpush1.xpose.msra.mxu0 0.0
  %5492 = vmatprep.subr.mxu0 0.0
  %5493 = vmatpush1.xpose.msra.mxu0 0.0
  %5494 = vmatprep.mubr.f32.mxu0 0.0
  %5495 = vmatmul.mubr.f32.gmra.mrb[0].mxu0 %v5366
  %v5496 = vpop.f32.mrb[0].mxu0
  %v5497 = vadd.f32 %v3472, %v5496
  %v5498 = vpop.f32.mrb[0].mxu0
  %5499 = vmatprep.mubr.f32.mxu0 0.0
  %5500 = vmatmul.mubr.f32.gmra.mrb[0].mxu0 %v5368
  %v5501 = vpop.f32.mrb[0].mxu0
  %v5502 = vadd.f32 %v3473, %v5501
  %v5503 = vpop.f32.mrb[0].mxu0
  %5504 = vmatprep.mubr.f32.mxu0 0.0
  %5505 = vmatmul.mubr.f32.gmra.mrb[0].mxu0 %v5370
  %v5506 = vpop.f32.mrb[0].mxu0
  %v5507 = vadd.f32 %v3474, %v5506
  %v5508 = vpop.f32.mrb[0].mxu0
  %5509 = vmatprep.mubr.f32.mxu0 0.0
  %5510 = vmatmul.mubr.f32.gmra.mrb[0].mxu0 %v5372
  %v5511 = vpop.f32.mrb[0].mxu0
  %v5512 = vadd.f32 %v3475, %v5511
  %v5513 = vpop.f32.mrb[0].mxu0
  %5514 = vmatprep.mubr.f32.mxu0 0.0
  %5515 = vmatmul.mubr.f32.gmra.mrb[0].mxu0 %v5374
  %v5516 = vpop.f32.mrb[0].mxu0
  %v5517 = vadd.f32 %v3476, %v5516
  %v5518 = vpop.f32.mrb[0].mxu0
  %5519 = vmatprep.mubr.f32.mxu0 0.0
  %5520 = vmatmul.mubr.f32.gmra.mrb[0].mxu0 %v5376
  %v5521 = vpop.f32.mrb[0].mxu0
  %v5522 = vadd.f32 %v3477, %v5521
  %v5523 = vpop.f32.mrb[0].mxu0
  %5524 = vmatprep.mubr.f32.mxu0 0.0
  %5525 = vmatmul.mubr.f32.gmra.mrb[0].mxu0 %v5378
  %v5526 = vpop.f32.mrb[0].mxu0
  %v5527 = vadd.f32 %v3478, %v5526
  %v5528 = vpop.f32.mrb[0].mxu0
  %5529 = vmatprep.mubr.f32.mxu0 0.0
  %5530 = vmatmul.mubr.f32.gmra.mrb[0].mxu0 %v5380
  %v5531 = vpop.f32.mrb[0].mxu0
  %v5532 = vadd.f32 %v3479, %v5531
  %v5533 = vpop.f32.mrb[0].mxu0
  %5534 = vmatprep.mubr.f32.mxu0 0.0
  %5535 = vmatmul.mubr.f32.gmra.mrb[0].mxu0 %v5382
  %v5536 = vpop.f32.mrb[0].mxu0
  %v5537 = vadd.f32 %v3480, %v5536
  %v5538 = vpop.f32.mrb[0].mxu0
  %5539 = vmatprep.mubr.f32.mxu0 0.0
  %5540 = vmatmul.mubr.f32.gmra.mrb[0].mxu0 %v5384
  %v5541 = vpop.f32.mrb[0].mxu0
  %v5542 = vadd.f32 %v3481, %v5541
  %v5543 = vpop.f32.mrb[0].mxu0
  %5544 = vmatprep.mubr.f32.mxu0 0.0
  %5545 = vmatmul.mubr.f32.gmra.mrb[0].mxu0 %v5386
  %v5546 = vpop.f32.mrb[0].mxu0
  %v5547 = vadd.f32 %v3482, %v5546
  %v5548 = vpop.f32.mrb[0].mxu0
  %5549 = vmatprep.mubr.f32.mxu0 0.0
  %5550 = vmatmul.mubr.f32.gmra.mrb[0].mxu0 %v5388
  %v5551 = vpop.f32.mrb[0].mxu0
  %v5552 = vadd.f32 %v3483, %v5551
  %v5553 = vpop.f32.mrb[0].mxu0
  %5554 = vmatprep.mubr.f32.mxu0 0.0
  %5555 = vmatmul.mubr.f32.gmra.mrb[0].mxu0 %v5390
  %v5556 = vpop.f32.mrb[0].mxu0
  %v5557 = vadd.f32 %v3484, %v5556
  %v5558 = vpop.f32.mrb[0].mxu0
  %5559 = vmatprep.mubr.f32.mxu0 0.0
  %5560 = vmatmul.mubr.f32.gmra.mrb[0].mxu0 %v5392
  %v5561 = vpop.f32.mrb[0].mxu0
  %v5562 = vadd.f32 %v3485, %v5561
  %v5563 = vpop.f32.mrb[0].mxu0
  %5564 = vmatprep.mubr.f32.mxu0 0.0
  %5565 = vmatmul.mubr.f32.gmra.mrb[0].mxu0 %v5394
  %v5566 = vpop.f32.mrb[0].mxu0
  %v5567 = vadd.f32 %v3486, %v5566
  %v5568 = vpop.f32.mrb[0].mxu0
  %5569 = vmatprep.mubr.f32.mxu0 0.0
  %5570 = vmatmul.mubr.f32.gmra.mrb[0].mxu0 %v5396
  %v5571 = vpop.f32.mrb[0].mxu0
  %v5572 = vadd.f32 %v3487, %v5571
  %v5573 = vpop.f32.mrb[0].mxu0
  %5574 = vdwg.mxu0
  %5575 = vmax.xlane.f32.xlu0 %v5497
  %v5576 = vpop.xlane.xlu0 %5575
  %5577 = vmax.xlane.f32.xlu0 %v5502
  %v5578 = vpop.xlane.xlu0 %5577
  %5579 = vmax.xlane.f32.xlu0 %v5507
  %v5580 = vpop.xlane.xlu0 %5579
  %5581 = vmax.xlane.f32.xlu0 %v5512
  %v5582 = vpop.xlane.xlu0 %5581
  %5583 = vmax.xlane.f32.xlu0 %v5517
  %v5584 = vpop.xlane.xlu0 %5583
  %5585 = vmax.xlane.f32.xlu0 %v5522
  %v5586 = vpop.xlane.xlu0 %5585
  %5587 = vmax.xlane.f32.xlu0 %v5527
  %v5588 = vpop.xlane.xlu0 %5587
  %5589 = vmax.xlane.f32.xlu0 %v5532
  %v5590 = vpop.xlane.xlu0 %5589
  %5591 = vmax.xlane.f32.xlu0 %v5537
  %v5592 = vpop.xlane.xlu0 %5591
  %5593 = vmax.xlane.f32.xlu0 %v5542
  %v5594 = vpop.xlane.xlu0 %5593
  %5595 = vmax.xlane.f32.xlu0 %v5547
  %v5596 = vpop.xlane.xlu0 %5595
  %5597 = vmax.xlane.f32.xlu0 %v5552
  %v5598 = vpop.xlane.xlu0 %5597
  %5599 = vmax.xlane.f32.xlu0 %v5557
  %v5600 = vpop.xlane.xlu0 %5599
  %5601 = vmax.xlane.f32.xlu0 %v5562
  %v5602 = vpop.xlane.xlu0 %5601
  %5603 = vmax.xlane.f32.xlu0 %v5567
  %v5604 = vpop.xlane.xlu0 %5603
  %5605 = vmax.xlane.f32.xlu0 %v5572
  %v5606 = vpop.xlane.xlu0 %5605
  %v5607 = vsub.f32 %v5497, %v5576
  %v5608 = vsub.f32 %v5502, %v5578
  %v5609 = vsub.f32 %v5507, %v5580
  %v5610 = vsub.f32 %v5512, %v5582
  %v5611 = vsub.f32 %v5517, %v5584
  %v5612 = vsub.f32 %v5522, %v5586
  %v5613 = vsub.f32 %v5527, %v5588
  %v5614 = vsub.f32 %v5532, %v5590
  %v5615 = vsub.f32 %v5537, %v5592
  %v5616 = vsub.f32 %v5542, %v5594
  %v5617 = vsub.f32 %v5547, %v5596
  %v5618 = vsub.f32 %v5552, %v5598
  %v5619 = vsub.f32 %v5557, %v5600
  %v5620 = vsub.f32 %v5562, %v5602
  %v5621 = vsub.f32 %v5567, %v5604
  %v5622 = vsub.f32 %v5572, %v5606
  %v5623 = vmul.f32 %v5607, 1.442695
  %v5624 = vpow.pop %v5623
  %v5625 = vmul.f32 %v5608, 1.442695
  %v5626 = vpow.pop %v5625
  %v5627 = vmul.f32 %v5609, 1.442695
  %v5628 = vpow.pop %v5627
  %v5629 = vmul.f32 %v5610, 1.442695
  %v5630 = vpow.pop %v5629
  %v5631 = vmul.f32 %v5611, 1.442695
  %v5632 = vpow.pop %v5631
  %v5633 = vmul.f32 %v5612, 1.442695
  %v5634 = vpow.pop %v5633
  %v5635 = vmul.f32 %v5613, 1.442695
  %v5636 = vpow.pop %v5635
  %v5637 = vmul.f32 %v5614, 1.442695
  %v5638 = vpow.pop %v5637
  %v5639 = vmul.f32 %v5615, 1.442695
  %v5640 = vpow.pop %v5639
  %v5641 = vmul.f32 %v5616, 1.442695
  %v5642 = vpow.pop %v5641
  %v5643 = vmul.f32 %v5617, 1.442695
  %v5644 = vpow.pop %v5643
  %v5645 = vmul.f32 %v5618, 1.442695
  %v5646 = vpow.pop %v5645
  %v5647 = vmul.f32 %v5619, 1.442695
  %v5648 = vpow.pop %v5647
  %v5649 = vmul.f32 %v5620, 1.442695
  %v5650 = vpow.pop %v5649
  %v5651 = vmul.f32 %v5621, 1.442695
  %v5652 = vpow.pop %v5651
  %v5653 = vmul.f32 %v5622, 1.442695
  %v5654 = vpow.pop %v5653
  %5655 = vadd.xlane.f32.xlu0 %v5624
  %v5656 = vpop.xlane.xlu0 %5655
  %5657 = vadd.xlane.f32.xlu0 %v5626
  %v5658 = vpop.xlane.xlu0 %5657
  %5659 = vadd.xlane.f32.xlu0 %v5628
  %v5660 = vpop.xlane.xlu0 %5659
  %5661 = vadd.xlane.f32.xlu0 %v5630
  %v5662 = vpop.xlane.xlu0 %5661
  %5663 = vadd.xlane.f32.xlu0 %v5632
  %v5664 = vpop.xlane.xlu0 %5663
  %5665 = vadd.xlane.f32.xlu0 %v5634
  %v5666 = vpop.xlane.xlu0 %5665
  %5667 = vadd.xlane.f32.xlu0 %v5636
  %v5668 = vpop.xlane.xlu0 %5667
  %5669 = vadd.xlane.f32.xlu0 %v5638
  %v5670 = vpop.xlane.xlu0 %5669
  %5671 = vadd.xlane.f32.xlu0 %v5640
  %v5672 = vpop.xlane.xlu0 %5671
  %5673 = vadd.xlane.f32.xlu0 %v5642
  %v5674 = vpop.xlane.xlu0 %5673
  %5675 = vadd.xlane.f32.xlu0 %v5644
  %v5676 = vpop.xlane.xlu0 %5675
  %5677 = vadd.xlane.f32.xlu0 %v5646
  %v5678 = vpop.xlane.xlu0 %5677
  %5679 = vadd.xlane.f32.xlu0 %v5648
  %v5680 = vpop.xlane.xlu0 %5679
  %5681 = vadd.xlane.f32.xlu0 %v5650
  %v5682 = vpop.xlane.xlu0 %5681
  %5683 = vadd.xlane.f32.xlu0 %v5652
  %v5684 = vpop.xlane.xlu0 %5683
  %5685 = vadd.xlane.f32.xlu0 %v5654
  %v5686 = vpop.xlane.xlu0 %5685
  %v5687 = vrcp.pop %v5656
  %v5688 = vmul.f32 1.0, %v5687
  %v5689 = vrcp.pop %v5658
  %v5690 = vmul.f32 1.0, %v5689
  %v5691 = vrcp.pop %v5660
  %v5692 = vmul.f32 1.0, %v5691
  %v5693 = vrcp.pop %v5662
  %v5694 = vmul.f32 1.0, %v5693
  %v5695 = vrcp.pop %v5664
  %v5696 = vmul.f32 1.0, %v5695
  %v5697 = vrcp.pop %v5666
  %v5698 = vmul.f32 1.0, %v5697
  %v5699 = vrcp.pop %v5668
  %v5700 = vmul.f32 1.0, %v5699
  %v5701 = vrcp.pop %v5670
  %v5702 = vmul.f32 1.0, %v5701
  %v5703 = vrcp.pop %v5672
  %v5704 = vmul.f32 1.0, %v5703
  %v5705 = vrcp.pop %v5674
  %v5706 = vmul.f32 1.0, %v5705
  %v5707 = vrcp.pop %v5676
  %v5708 = vmul.f32 1.0, %v5707
  %v5709 = vrcp.pop %v5678
  %v5710 = vmul.f32 1.0, %v5709
  %v5711 = vrcp.pop %v5680
  %v5712 = vmul.f32 1.0, %v5711
  %v5713 = vrcp.pop %v5682
  %v5714 = vmul.f32 1.0, %v5713
  %v5715 = vrcp.pop %v5684
  %v5716 = vmul.f32 1.0, %v5715
  %v5717 = vrcp.pop %v5686
  %v5718 = vmul.f32 1.0, %v5717
  %v5719 = vmul.f32 %v5624, %v5688
  %v5720 = vmul.f32 %v5626, %v5690
  %v5721 = vmul.f32 %v5628, %v5692
  %v5722 = vmul.f32 %v5630, %v5694
  %v5723 = vmul.f32 %v5632, %v5696
  %v5724 = vmul.f32 %v5634, %v5698
  %v5725 = vmul.f32 %v5636, %v5700
  %v5726 = vmul.f32 %v5638, %v5702
  %v5727 = vmul.f32 %v5640, %v5704
  %v5728 = vmul.f32 %v5642, %v5706
  %v5729 = vmul.f32 %v5644, %v5708
  %v5730 = vmul.f32 %v5646, %v5710
  %v5731 = vmul.f32 %v5648, %v5712
  %v5732 = vmul.f32 %v5650, %v5714
  %v5733 = vmul.f32 %v5652, %v5716
  %v5734 = vmul.f32 %v5654, %v5718
  %5751 = vrot.lane.b32.xlu0 %v4692, 64
  %v5752 = vpop.permute.xlu0 %5751
  %5753 = vrot.lane.b32.xlu0 %v4693, 64
  %v5754 = vpop.permute.xlu0 %5753
  %5755 = vrot.lane.b32.xlu0 %v4694, 64
  %v5756 = vpop.permute.xlu0 %5755
  %5757 = vrot.lane.b32.xlu0 %v4695, 64
  %v5758 = vpop.permute.xlu0 %5757
  %5759 = vrot.lane.b32.xlu0 %v4696, 64
  %v5760 = vpop.permute.xlu0 %5759
  %5761 = vrot.lane.b32.xlu0 %v4697, 64
  %v5762 = vpop.permute.xlu0 %5761
  %5763 = vrot.lane.b32.xlu0 %v4698, 64
  %v5764 = vpop.permute.xlu0 %5763
  %5765 = vrot.lane.b32.xlu0 %v4699, 64
  %v5766 = vpop.permute.xlu0 %5765
  %5767 = vrot.lane.b32.xlu0 %v4700, 64
  %v5768 = vpop.permute.xlu0 %5767
  %5769 = vrot.lane.b32.xlu0 %v4701, 64
  %v5770 = vpop.permute.xlu0 %5769
  %5771 = vrot.lane.b32.xlu0 %v4702, 64
  %v5772 = vpop.permute.xlu0 %5771
  %5773 = vrot.lane.b32.xlu0 %v4703, 64
  %v5774 = vpop.permute.xlu0 %5773
  %5775 = vrot.lane.b32.xlu0 %v4704, 64
  %v5776 = vpop.permute.xlu0 %5775
  %5777 = vrot.lane.b32.xlu0 %v4705, 64
  %v5778 = vpop.permute.xlu0 %5777
  %5779 = vrot.lane.b32.xlu0 %v4706, 64
  %v5780 = vpop.permute.xlu0 %5779
  %5781 = vrot.lane.b32.xlu0 %v4707, 64
  %v5782 = vpop.permute.xlu0 %5781
  %5799 = vmatprep.subr.mxu0 0.0
  %5800 = vmatpush1.msra.mxu0 %v5752
  %5801 = vmatprep.subr.mxu0 0.0
  %5802 = vmatpush1.msra.mxu0 %v5754
  %5803 = vmatprep.subr.mxu0 0.0
  %5804 = vmatpush1.msra.mxu0 %v5756
  %5805 = vmatprep.subr.mxu0 0.0
  %5806 = vmatpush1.msra.mxu0 %v5758
  %5807 = vmatprep.subr.mxu0 0.0
  %5808 = vmatpush1.msra.mxu0 %v5760
  %5809 = vmatprep.subr.mxu0 0.0
  %5810 = vmatpush1.msra.mxu0 %v5762
  %5811 = vmatprep.subr.mxu0 0.0
  %5812 = vmatpush1.msra.mxu0 %v5764
  %5813 = vmatprep.subr.mxu0 0.0
  %5814 = vmatpush1.msra.mxu0 %v5766
  %5815 = vmatprep.subr.mxu0 0.0
  %5816 = vmatpush1.msra.mxu0 %v5768
  %5817 = vmatprep.subr.mxu0 0.0
  %5818 = vmatpush1.msra.mxu0 %v5770
  %5819 = vmatprep.subr.mxu0 0.0
  %5820 = vmatpush1.msra.mxu0 %v5772
  %5821 = vmatprep.subr.mxu0 0.0
  %5822 = vmatpush1.msra.mxu0 %v5774
  %5823 = vmatprep.subr.mxu0 0.0
  %5824 = vmatpush1.msra.mxu0 %v5776
  %5825 = vmatprep.subr.mxu0 0.0
  %5826 = vmatpush1.msra.mxu0 %v5778
  %5827 = vmatprep.subr.mxu0 0.0
  %5828 = vmatpush1.msra.mxu0 %v5780
  %5829 = vmatprep.subr.mxu0 0.0
  %5830 = vmatpush1.msra.mxu0 %v5782
  %5831 = vmatprep.subr.mxu0 0.0
  %5832 = vmatpush1.msra.mxu0 0.0
  %5833 = vmatprep.subr.mxu0 0.0
  %5834 = vmatpush1.msra.mxu0 0.0
  %5835 = vmatprep.subr.mxu0 0.0
  %5836 = vmatpush1.msra.mxu0 0.0
  %5837 = vmatprep.subr.mxu0 0.0
  %5838 = vmatpush1.msra.mxu0 0.0
  %5839 = vmatprep.subr.mxu0 0.0
  %5840 = vmatpush1.msra.mxu0 0.0
  %5841 = vmatprep.subr.mxu0 0.0
  %5842 = vmatpush1.msra.mxu0 0.0
  %5843 = vmatprep.subr.mxu0 0.0
  %5844 = vmatpush1.msra.mxu0 0.0
  %5845 = vmatprep.subr.mxu0 0.0
  %5846 = vmatpush1.msra.mxu0 0.0
  %5847 = vmatprep.subr.mxu0 0.0
  %5848 = vmatpush1.msra.mxu0 0.0
  %5849 = vmatprep.subr.mxu0 0.0
  %5850 = vmatpush1.msra.mxu0 0.0
  %5851 = vmatprep.subr.mxu0 0.0
  %5852 = vmatpush1.msra.mxu0 0.0
  %5853 = vmatprep.subr.mxu0 0.0
  %5854 = vmatpush1.msra.mxu0 0.0
  %5855 = vmatprep.subr.mxu0 0.0
  %5856 = vmatpush1.msra.mxu0 0.0
  %5857 = vmatprep.subr.mxu0 0.0
  %5858 = vmatpush1.msra.mxu0 0.0
  %5859 = vmatprep.subr.mxu0 0.0
  %5860 = vmatpush1.msra.mxu0 0.0
  %5861 = vmatprep.subr.mxu0 0.0
  %5862 = vmatpush1.msra.mxu0 0.0
  %5863 = vmatprep.mubr.f32.mxu0 0.0
  %5864 = vmatmul.mubr.f32.gmra.mrb[0].mxu0 %v5719
  %v5865 = vpop.f32.mrb[0].mxu0
  %v5866 = vadd.f32 0.0, %v5865
  %v5867 = vpop.f32.mrb[0].mxu0
  %5868 = vmatprep.mubr.f32.mxu0 0.0
  %5869 = vmatmul.mubr.f32.gmra.mrb[0].mxu0 %v5720
  %v5870 = vpop.f32.mrb[0].mxu0
  %v5871 = vadd.f32 0.0, %v5870
  %v5872 = vpop.f32.mrb[0].mxu0
  %5873 = vmatprep.mubr.f32.mxu0 0.0
  %5874 = vmatmul.mubr.f32.gmra.mrb[0].mxu0 %v5721
  %v5875 = vpop.f32.mrb[0].mxu0
  %v5876 = vadd.f32 0.0, %v5875
  %v5877 = vpop.f32.mrb[0].mxu0
  %5878 = vmatprep.mubr.f32.mxu0 0.0
  %5879 = vmatmul.mubr.f32.gmra.mrb[0].mxu0 %v5722
  %v5880 = vpop.f32.mrb[0].mxu0
  %v5881 = vadd.f32 0.0, %v5880
  %v5882 = vpop.f32.mrb[0].mxu0
  %5883 = vmatprep.mubr.f32.mxu0 0.0
  %5884 = vmatmul.mubr.f32.gmra.mrb[0].mxu0 %v5723
  %v5885 = vpop.f32.mrb[0].mxu0
  %v5886 = vadd.f32 0.0, %v5885
  %v5887 = vpop.f32.mrb[0].mxu0
  %5888 = vmatprep.mubr.f32.mxu0 0.0
  %5889 = vmatmul.mubr.f32.gmra.mrb[0].mxu0 %v5724
  %v5890 = vpop.f32.mrb[0].mxu0
  %v5891 = vadd.f32 0.0, %v5890
  %v5892 = vpop.f32.mrb[0].mxu0
  %5893 = vmatprep.mubr.f32.mxu0 0.0
  %5894 = vmatmul.mubr.f32.gmra.mrb[0].mxu0 %v5725
  %v5895 = vpop.f32.mrb[0].mxu0
  %v5896 = vadd.f32 0.0, %v5895
  %v5897 = vpop.f32.mrb[0].mxu0
  %5898 = vmatprep.mubr.f32.mxu0 0.0
  %5899 = vmatmul.mubr.f32.gmra.mrb[0].mxu0 %v5726
  %v5900 = vpop.f32.mrb[0].mxu0
  %v5901 = vadd.f32 0.0, %v5900
  %v5902 = vpop.f32.mrb[0].mxu0
  %5903 = vmatprep.mubr.f32.mxu0 0.0
  %5904 = vmatmul.mubr.f32.gmra.mrb[0].mxu0 %v5727
  %v5905 = vpop.f32.mrb[0].mxu0
  %v5906 = vadd.f32 0.0, %v5905
  %v5907 = vpop.f32.mrb[0].mxu0
  %5908 = vmatprep.mubr.f32.mxu0 0.0
  %5909 = vmatmul.mubr.f32.gmra.mrb[0].mxu0 %v5728
  %v5910 = vpop.f32.mrb[0].mxu0
  %v5911 = vadd.f32 0.0, %v5910
  %v5912 = vpop.f32.mrb[0].mxu0
  %5913 = vmatprep.mubr.f32.mxu0 0.0
  %5914 = vmatmul.mubr.f32.gmra.mrb[0].mxu0 %v5729
  %v5915 = vpop.f32.mrb[0].mxu0
  %v5916 = vadd.f32 0.0, %v5915
  %v5917 = vpop.f32.mrb[0].mxu0
  %5918 = vmatprep.mubr.f32.mxu0 0.0
  %5919 = vmatmul.mubr.f32.gmra.mrb[0].mxu0 %v5730
  %v5920 = vpop.f32.mrb[0].mxu0
  %v5921 = vadd.f32 0.0, %v5920
  %v5922 = vpop.f32.mrb[0].mxu0
  %5923 = vmatprep.mubr.f32.mxu0 0.0
  %5924 = vmatmul.mubr.f32.gmra.mrb[0].mxu0 %v5731
  %v5925 = vpop.f32.mrb[0].mxu0
  %v5926 = vadd.f32 0.0, %v5925
  %v5927 = vpop.f32.mrb[0].mxu0
  %5928 = vmatprep.mubr.f32.mxu0 0.0
  %5929 = vmatmul.mubr.f32.gmra.mrb[0].mxu0 %v5732
  %v5930 = vpop.f32.mrb[0].mxu0
  %v5931 = vadd.f32 0.0, %v5930
  %v5932 = vpop.f32.mrb[0].mxu0
  %5933 = vmatprep.mubr.f32.mxu0 0.0
  %5934 = vmatmul.mubr.f32.gmra.mrb[0].mxu0 %v5733
  %v5935 = vpop.f32.mrb[0].mxu0
  %v5936 = vadd.f32 0.0, %v5935
  %v5937 = vpop.f32.mrb[0].mxu0
  %5938 = vmatprep.mubr.f32.mxu0 0.0
  %5939 = vmatmul.mubr.f32.gmra.mrb[0].mxu0 %v5734
  %v5940 = vpop.f32.mrb[0].mxu0
  %v5941 = vadd.f32 0.0, %v5940
  %v5942 = vpop.f32.mrb[0].mxu0
  %5943 = vdwg.mxu0
  %v5944 = vadd.f32 %v5286, %v5866
  %v5945 = vadd.f32 %v5287, %v5871
  %v5946 = vadd.f32 %v5288, %v5876
  %v5947 = vadd.f32 %v5289, %v5881
  %v5948 = vadd.f32 %v5290, %v5886
  %v5949 = vadd.f32 %v5291, %v5891
  %v5950 = vadd.f32 %v5292, %v5896
  %v5951 = vadd.f32 %v5293, %v5901
  %v5952 = vadd.f32 %v5294, %v5906
  %v5953 = vadd.f32 %v5295, %v5911
  %v5954 = vadd.f32 %v5296, %v5916
  %v5955 = vadd.f32 %v5297, %v5921
  %v5956 = vadd.f32 %v5298, %v5926
  %v5957 = vadd.f32 %v5299, %v5931
  %v5958 = vadd.f32 %v5300, %v5936
  %v5959 = vadd.f32 %v5301, %v5941
  %v5960 = vadd.f32 %v5944, %v3406
  %v5961 = vadd.f32 %v5945, %v3406
  %v5962 = vadd.f32 %v5946, %v3406
  %v5963 = vadd.f32 %v5947, %v3406
  %v5964 = vadd.f32 %v5948, %v3406
  %v5965 = vadd.f32 %v5949, %v3406
  %v5966 = vadd.f32 %v5950, %v3406
  %v5967 = vadd.f32 %v5951, %v3406
  %v5968 = vadd.f32 %v5952, %v3406
  %v5969 = vadd.f32 %v5953, %v3406
  %v5970 = vadd.f32 %v5954, %v3406
  %v5971 = vadd.f32 %v5955, %v3406
  %v5972 = vadd.f32 %v5956, %v3406
  %v5973 = vadd.f32 %v5957, %v3406
  %v5974 = vadd.f32 %v5958, %v3406
  %v5975 = vadd.f32 %v5959, %v3406
  %5976 = vst.msk [vmem:[%s4 + $0x80] sm:$0xff] %vm90, %v5960
  %5977 = vst.msk [vmem:[%s4 + $0x88] sm:$0xff] %vm90, %v5961
  %5978 = vst.msk [vmem:[%s4 + $0x90] sm:$0xff] %vm90, %v5962
  %5979 = vst.msk [vmem:[%s4 + $0x98] sm:$0xff] %vm90, %v5963
  %5980 = vst.msk [vmem:[%s4 + $0xa0] sm:$0xff] %vm90, %v5964
  %5981 = vst.msk [vmem:[%s4 + $0xa8] sm:$0xff] %vm90, %v5965
  %5982 = vst.msk [vmem:[%s4 + $0xb0] sm:$0xff] %vm90, %v5966
  %5983 = vst.msk [vmem:[%s4 + $0xb8] sm:$0xff] %vm90, %v5967
  %5984 = vst.msk [vmem:[%s4 + $0xc0] sm:$0xff] %vm90, %v5968
  %5985 = vst.msk [vmem:[%s4 + $0xc8] sm:$0xff] %vm90, %v5969
  %5986 = vst.msk [vmem:[%s4 + $0xd0] sm:$0xff] %vm90, %v5970
  %5987 = vst.msk [vmem:[%s4 + $0xd8] sm:$0xff] %vm90, %v5971
  %5988 = vst.msk [vmem:[%s4 + $0xe0] sm:$0xff] %vm90, %v5972
  %5989 = vst.msk [vmem:[%s4 + $0xe8] sm:$0xff] %vm90, %v5973
  %5990 = vst.msk [vmem:[%s4 + $0xf0] sm:$0xff] %vm90, %v5974
  %5991 = vst.msk [vmem:[%s4 + $0xf8] sm:$0xff] %vm90, %v5975
  // Predicated region
  $region18: #{tpu_custom_call.1} parent=0 // pred_check
    _
  $region19: #{tpu_custom_call.1} parent=0 // pred_check_branch
    %5993 = sbr.rel (0) target = $region21
  $region20: #{tpu_custom_call.1} parent=0 // pred_region
    _
  $region21: #{tpu_custom_call.1} parent=0 // pred_fallthru
    _
  // Predicated region
  $region22: #{tpu_custom_call.1} parent=0 // pred_check
    _
  $region23: #{tpu_custom_call.1} parent=0 // pred_check_branch
    %5995 = sbr.rel (0) target = $region25
  $region24: #{tpu_custom_call.1} parent=0 // pred_region
    _
  $region25: #{tpu_custom_call.1} parent=0 // pred_fallthru
    _

// kernel: tpu_custom_call.1
$region0: #{tpu_custom_call.1}
  #allocation0 [shape = 'u32[]', space=smem, size = 0x4, offset = 0x4, fixed_abs, tag = 'smem constant byte address 0x4 - core index']
  #allocation1 [shape = 'u32[144,128]{1,0:T(1,128)}', space=vmem, size = 0x12000, scoped, tag = 'internal scratch']
  #allocation2 [shape = 'f32[256,384]{1,0:T(8,128)}', space=vmem, size = 0x60000, scoped, tag = 'scratch operand']
  #allocation3 [shape = 'f32[128,128]{1,0:T(8,128)}', space=vmem, size = 0x10000, scoped, tag = 'scratch operand']
  %s0 = inlined_call_operand.vmem [shape: f32[256,64], index: 0, kind: input, shape index: {}]
  %s1 = inlined_call_operand.vmem [shape: f32[64,384], index: 1, kind: input, shape index: {}]
  %s2 = inlined_call_operand.vmem [shape: f32[1,384], index: 2, kind: input, shape index: {}]
  %s3 = inlined_call_operand.vmem [shape: f32[1,64], index: 3, kind: input, shape index: {}]
  %s4 = inlined_call_operand.vmem [shape: f32[256,64], index: 4, kind: output, shape index: {}]
  %s5 = sld [smem:[#allocation0]]
  $region26: #{tpu_custom_call.1} parent=0
    _
  %s7 = ssub.s32 1, %s5
  %s8 = scalar_select 0, %s7, %s5
  // Predicated region
  $region2: #{tpu_custom_call.1} parent=0 // pred_check
    _
  $region3: #{tpu_custom_call.1} parent=0 // pred_check_branch
    %10 = sbr.rel (0) target = $region5
  $region4: #{tpu_custom_call.1} parent=0 // pred_region
    _
  $region5: #{tpu_custom_call.1} parent=0 // pred_fallthru
    _
  // Predicated region
  $region6: #{tpu_custom_call.1} parent=0 // pred_check
    _
  $region7: #{tpu_custom_call.1} parent=0 // pred_check_branch
    %12 = sbr.rel (0) target = $region9
  $region8: #{tpu_custom_call.1} parent=0 // pred_region
    _
  $region9: #{tpu_custom_call.1} parent=0 // pred_fallthru
    _
  // Predicated region
  $region10: #{tpu_custom_call.1} parent=0 // pred_check
    _
  $region11: #{tpu_custom_call.1} parent=0 // pred_check_branch
    %14 = sbr.rel (0) target = $region13
  $region12: #{tpu_custom_call.1} parent=0 // pred_region
    _
  $region13: #{tpu_custom_call.1} parent=0 // pred_fallthru
    _
  // Predicated region
  $region14: #{tpu_custom_call.1} parent=0 // pred_check
    _
  $region15: #{tpu_custom_call.1} parent=0 // pred_check_branch
    %16 = sbr.rel (0) target = $region17
  $region16: #{tpu_custom_call.1} parent=0 // pred_region
    _
  $region17: #{tpu_custom_call.1} parent=0 // pred_fallthru
    _
  %v17 = vld [vmem:[%s0] sm:$0xff]
  %v18 = vld [vmem:[%s0 + $0x8] sm:$0xff]
  %v19 = vld [vmem:[%s0 + $0x10] sm:$0xff]
  %v20 = vld [vmem:[%s0 + $0x18] sm:$0xff]
  %v21 = vld [vmem:[%s0 + $0x20] sm:$0xff]
  %v22 = vld [vmem:[%s0 + $0x28] sm:$0xff]
  %v23 = vld [vmem:[%s0 + $0x30] sm:$0xff]
  %v24 = vld [vmem:[%s0 + $0x38] sm:$0xff]
  %v25 = vld [vmem:[%s0 + $0x40] sm:$0xff]
  %v26 = vld [vmem:[%s0 + $0x48] sm:$0xff]
  %v27 = vld [vmem:[%s0 + $0x50] sm:$0xff]
  %v28 = vld [vmem:[%s0 + $0x58] sm:$0xff]
  %v29 = vld [vmem:[%s0 + $0x60] sm:$0xff]
  %v30 = vld [vmem:[%s0 + $0x68] sm:$0xff]
  %v31 = vld [vmem:[%s0 + $0x70] sm:$0xff]
  %v32 = vld [vmem:[%s0 + $0x78] sm:$0xff]
  %v33 = vld [vmem:[%s0 + $0x80] sm:$0xff]
  %v34 = vld [vmem:[%s0 + $0x88] sm:$0xff]
  %v35 = vld [vmem:[%s0 + $0x90] sm:$0xff]
  %v36 = vld [vmem:[%s0 + $0x98] sm:$0xff]
  %v37 = vld [vmem:[%s0 + $0xa0] sm:$0xff]
  %v38 = vld [vmem:[%s0 + $0xa8] sm:$0xff]
  %v39 = vld [vmem:[%s0 + $0xb0] sm:$0xff]
  %v40 = vld [vmem:[%s0 + $0xb8] sm:$0xff]
  %v41 = vld [vmem:[%s0 + $0xc0] sm:$0xff]
  %v42 = vld [vmem:[%s0 + $0xc8] sm:$0xff]
  %v43 = vld [vmem:[%s0 + $0xd0] sm:$0xff]
  %v44 = vld [vmem:[%s0 + $0xd8] sm:$0xff]
  %v45 = vld [vmem:[%s0 + $0xe0] sm:$0xff]
  %v46 = vld [vmem:[%s0 + $0xe8] sm:$0xff]
  %v47 = vld [vmem:[%s0 + $0xf0] sm:$0xff]
  %v48 = vld [vmem:[%s0 + $0xf8] sm:$0xff]
  %v49 = vld [vmem:[%s1] sm:$0xff]
  %v50 = vld [vmem:[%s1 + $0x8] sm:$0xff]
  %v51 = vld [vmem:[%s1 + $0x10] sm:$0xff]
  %v52 = vld [vmem:[%s1 + $0x18] sm:$0xff]
  %v53 = vld [vmem:[%s1 + $0x20] sm:$0xff]
  %v54 = vld [vmem:[%s1 + $0x28] sm:$0xff]
  %v55 = vld [vmem:[%s1 + $0x30] sm:$0xff]
  %v56 = vld [vmem:[%s1 + $0x38] sm:$0xff]
  %v57 = vld [vmem:[%s1 + $0x40] sm:$0xff]
  %v58 = vld [vmem:[%s1 + $0x48] sm:$0xff]
  %v59 = vld [vmem:[%s1 + $0x50] sm:$0xff]
  %v60 = vld [vmem:[%s1 + $0x58] sm:$0xff]
  %v61 = vld [vmem:[%s1 + $0x60] sm:$0xff]
  %v62 = vld [vmem:[%s1 + $0x68] sm:$0xff]
  %v63 = vld [vmem:[%s1 + $0x70] sm:$0xff]
  %v64 = vld [vmem:[%s1 + $0x78] sm:$0xff]
  %v65 = vld [vmem:[%s1 + $0x80] sm:$0xff]
  %v66 = vld [vmem:[%s1 + $0x88] sm:$0xff]
  %v67 = vld [vmem:[%s1 + $0x90] sm:$0xff]
  %v68 = vld [vmem:[%s1 + $0x98] sm:$0xff]
  %v69 = vld [vmem:[%s1 + $0xa0] sm:$0xff]
  %v70 = vld [vmem:[%s1 + $0xa8] sm:$0xff]
  %v71 = vld [vmem:[%s1 + $0xb0] sm:$0xff]
  %v72 = vld [vmem:[%s1 + $0xb8] sm:$0xff]
  %v73 = vld [vmem:[%s2] sm:$0x7]
  %v75 = vlaneseq
  %v76 = vshrl.u32 %v75, 7
  %v77 = vsub.s32 0, %v76
  %v78 = vrot.slane %v73, %v77
  %v79 = vlaneseq
  %v80 = vshrl.u32 %v79, 7
  %v81 = vsub.s32 1, %v80
  %v82 = vrot.slane %v73, %v81
  %v83 = vlaneseq
  %v84 = vshrl.u32 %v83, 7
  %v85 = vsub.s32 2, %v84
  %v86 = vrot.slane %v73, %v85
  %vm90 = vcmask 523264
  %v92 = vsel %vm90, %v17, 0
  %v95 = vsel %vm90, %v18, 0
  %v98 = vsel %vm90, %v19, 0
  %v101 = vsel %vm90, %v20, 0
  %v104 = vsel %vm90, %v21, 0
  %v107 = vsel %vm90, %v22, 0
  %v110 = vsel %vm90, %v23, 0
  %v113 = vsel %vm90, %v24, 0
  %v116 = vsel %vm90, %v25, 0
  %v119 = vsel %vm90, %v26, 0
  %v122 = vsel %vm90, %v27, 0
  %v125 = vsel %vm90, %v28, 0
  %v128 = vsel %vm90, %v29, 0
  %v131 = vsel %vm90, %v30, 0
  %v134 = vsel %vm90, %v31, 0
  %v137 = vsel %vm90, %v32, 0
  %v140 = vsel %vm90, %v33, 0
  %v143 = vsel %vm90, %v34, 0
  %v146 = vsel %vm90, %v35, 0
  %v149 = vsel %vm90, %v36, 0
  %v152 = vsel %vm90, %v37, 0
  %v155 = vsel %vm90, %v38, 0
  %v158 = vsel %vm90, %v39, 0
  %v161 = vsel %vm90, %v40, 0
  %v164 = vsel %vm90, %v41, 0
  %v167 = vsel %vm90, %v42, 0
  %v170 = vsel %vm90, %v43, 0
  %v173 = vsel %vm90, %v44, 0
  %v176 = vsel %vm90, %v45, 0
  %v179 = vsel %vm90, %v46, 0
  %v182 = vsel %vm90, %v47, 0
  %v185 = vsel %vm90, %v48, 0
  %187 = vmatprep.subr.mxu0 %v50
  %188 = vmatpush1.msra.mxu0 %v49
  %189 = vmatprep.subr.mxu0 %v53
  %190 = vmatpush1.msra.mxu0 %v52
  %191 = vmatprep.subr.mxu0 %v56
  %192 = vmatpush1.msra.mxu0 %v55
  %193 = vmatprep.subr.mxu0 %v59
  %194 = vmatpush1.msra.mxu0 %v58
  %195 = vmatprep.subr.mxu0 %v62
  %196 = vmatpush1.msra.mxu0 %v61
  %197 = vmatprep.subr.mxu0 %v65
  %198 = vmatpush1.msra.mxu0 %v64
  %199 = vmatprep.subr.mxu0 %v68
  %200 = vmatpush1.msra.mxu0 %v67
  %201 = vmatprep.subr.mxu0 %v71
  %202 = vmatpush1.msra.mxu0 %v70
  %203 = vmatprep.subr.mxu0 0.0
  %204 = vmatpush1.msra.mxu0 0.0
  %205 = vmatprep.subr.mxu0 0.0
  %206 = vmatpush1.msra.mxu0 0.0
  %207 = vmatprep.subr.mxu0 0.0
  %208 = vmatpush1.msra.mxu0 0.0
  %209 = vmatprep.subr.mxu0 0.0
  %210 = vmatpush1.msra.mxu0 0.0
  %211 = vmatprep.subr.mxu0 0.0
  %212 = vmatpush1.msra.mxu0 0.0
  %213 = vmatprep.subr.mxu0 0.0
  %214 = vmatpush1.msra.mxu0 0.0
  %215 = vmatprep.subr.mxu0 0.0
  %216 = vmatpush1.msra.mxu0 0.0
  %217 = vmatprep.subr.mxu0 0.0
  %218 = vmatpush1.msra.mxu0 0.0
  %219 = vmatprep.subr.mxu0 0.0
  %220 = vmatpush1.msra.mxu0 0.0
  %221 = vmatprep.subr.mxu0 0.0
  %222 = vmatpush1.msra.mxu0 0.0
  %223 = vmatprep.subr.mxu0 0.0
  %224 = vmatpush1.msra.mxu0 0.0
  %225 = vmatprep.subr.mxu0 0.0
  %226 = vmatpush1.msra.mxu0 0.0
  %227 = vmatprep.subr.mxu0 0.0
  %228 = vmatpush1.msra.mxu0 0.0
  %229 = vmatprep.subr.mxu0 0.0
  %230 = vmatpush1.msra.mxu0 0.0
  %231 = vmatprep.subr.mxu0 0.0
  %232 = vmatpush1.msra.mxu0 0.0
  %233 = vmatprep.subr.mxu0 0.0
  %234 = vmatpush1.msra.mxu0 0.0
  %235 = vmatprep.subr.mxu0 0.0
  %236 = vmatpush1.msra.mxu0 0.0
  %237 = vmatprep.subr.mxu0 0.0
  %238 = vmatpush1.msra.mxu0 0.0
  %239 = vmatprep.subr.mxu0 0.0
  %240 = vmatpush1.msra.mxu0 0.0
  %241 = vmatprep.subr.mxu0 0.0
  %242 = vmatpush1.msra.mxu0 0.0
  %243 = vmatprep.subr.mxu0 0.0
  %244 = vmatpush1.msra.mxu0 0.0
  %245 = vmatprep.subr.mxu0 0.0
  %246 = vmatpush1.msra.mxu0 0.0
  %247 = vmatprep.subr.mxu0 0.0
  %248 = vmatpush1.msra.mxu0 0.0
  %249 = vmatprep.subr.mxu0 0.0
  %250 = vmatpush1.msra.mxu0 0.0
  %251 = vmatprep.mubr.f32.mxu0 0.0
  %252 = vmatmul.mubr.f32.gmra.mrb[0].mxu0 %v92
  %v253 = vpop.f32.mrb[0].mxu0
  %v254 = vadd.f32 %v78, %v253
  %v255 = vpop.f32.mrb[0].mxu0
  %v256 = vadd.f32 %v82, %v255
  %257 = vmatprep.mubr.f32.mxu0 0.0
  %258 = vmatmul.mubr.f32.gmra.mrb[0].mxu0 %v95
  %v259 = vpop.f32.mrb[0].mxu0
  %v260 = vadd.f32 %v78, %v259
  %v261 = vpop.f32.mrb[0].mxu0
  %v262 = vadd.f32 %v82, %v261
  %263 = vmatprep.mubr.f32.mxu0 0.0
  %264 = vmatmul.mubr.f32.gmra.mrb[0].mxu0 %v98
  %v265 = vpop.f32.mrb[0].mxu0
  %v266 = vadd.f32 %v78, %v265
  %v267 = vpop.f32.mrb[0].mxu0
  %v268 = vadd.f32 %v82, %v267
  %269 = vmatprep.mubr.f32.mxu0 0.0
  %270 = vmatmul.mubr.f32.gmra.mrb[0].mxu0 %v101
  %v271 = vpop.f32.mrb[0].mxu0
  %v272 = vadd.f32 %v78, %v271
  %v273 = vpop.f32.mrb[0].mxu0
  %v274 = vadd.f32 %v82, %v273
  %275 = vmatprep.mubr.f32.mxu0 0.0
  %276 = vmatmul.mubr.f32.gmra.mrb[0].mxu0 %v104
  %v277 = vpop.f32.mrb[0].mxu0
  %v278 = vadd.f32 %v78, %v277
  %v279 = vpop.f32.mrb[0].mxu0
  %v280 = vadd.f32 %v82, %v279
  %281 = vmatprep.mubr.f32.mxu0 0.0
  %282 = vmatmul.mubr.f32.gmra.mrb[0].mxu0 %v107
  %v283 = vpop.f32.mrb[0].mxu0
  %v284 = vadd.f32 %v78, %v283
  %v285 = vpop.f32.mrb[0].mxu0
  %v286 = vadd.f32 %v82, %v285
  %287 = vmatprep.mubr.f32.mxu0 0.0
  %288 = vmatmul.mubr.f32.gmra.mrb[0].mxu0 %v110
  %v289 = vpop.f32.mrb[0].mxu0
  %v290 = vadd.f32 %v78, %v289
  %v291 = vpop.f32.mrb[0].mxu0
  %v292 = vadd.f32 %v82, %v291
  %293 = vmatprep.mubr.f32.mxu0 0.0
  %294 = vmatmul.mubr.f32.gmra.mrb[0].mxu0 %v113
  %v295 = vpop.f32.mrb[0].mxu0
  %v296 = vadd.f32 %v78, %v295
  %v297 = vpop.f32.mrb[0].mxu0
  %v298 = vadd.f32 %v82, %v297
  %299 = vmatprep.mubr.f32.mxu0 0.0
  %300 = vmatmul.mubr.f32.gmra.mrb[0].mxu0 %v116
  %v301 = vpop.f32.mrb[0].mxu0
  %v302 = vadd.f32 %v78, %v301
  %v303 = vpop.f32.mrb[0].mxu0
  %v304 = vadd.f32 %v82, %v303
  %305 = vmatprep.mubr.f32.mxu0 0.0
  %306 = vmatmul.mubr.f32.gmra.mrb[0].mxu0 %v119
  %v307 = vpop.f32.mrb[0].mxu0
  %v308 = vadd.f32 %v78, %v307
  %v309 = vpop.f32.mrb[0].mxu0
  %v310 = vadd.f32 %v82, %v309
  %311 = vmatprep.mubr.f32.mxu0 0.0
  %312 = vmatmul.mubr.f32.gmra.mrb[0].mxu0 %v122
  %v313 = vpop.f32.mrb[0].mxu0
  %v314 = vadd.f32 %v78, %v313
  %v315 = vpop.f32.mrb[0].mxu0
  %v316 = vadd.f32 %v82, %v315
  %317 = vmatprep.mubr.f32.mxu0 0.0
  %318 = vmatmul.mubr.f32.gmra.mrb[0].mxu0 %v125
  %v319 = vpop.f32.mrb[0].mxu0
  %v320 = vadd.f32 %v78, %v319
  %v321 = vpop.f32.mrb[0].mxu0
  %v322 = vadd.f32 %v82, %v321
  %323 = vmatprep.mubr.f32.mxu0 0.0
  %324 = vmatmul.mubr.f32.gmra.mrb[0].mxu0 %v128
  %v325 = vpop.f32.mrb[0].mxu0
  %v326 = vadd.f32 %v78, %v325
  %v327 = vpop.f32.mrb[0].mxu0
  %v328 = vadd.f32 %v82, %v327
  %329 = vmatprep.mubr.f32.mxu0 0.0
  %330 = vmatmul.mubr.f32.gmra.mrb[0].mxu0 %v131
  %v331 = vpop.f32.mrb[0].mxu0
  %v332 = vadd.f32 %v78, %v331
  %v333 = vpop.f32.mrb[0].mxu0
  %v334 = vadd.f32 %v82, %v333
  %335 = vmatprep.mubr.f32.mxu0 0.0
  %336 = vmatmul.mubr.f32.gmra.mrb[0].mxu0 %v134
  %v337 = vpop.f32.mrb[0].mxu0
  %v338 = vadd.f32 %v78, %v337
  %v339 = vpop.f32.mrb[0].mxu0
  %v340 = vadd.f32 %v82, %v339
  %341 = vmatprep.mubr.f32.mxu0 0.0
  %342 = vmatmul.mubr.f32.gmra.mrb[0].mxu0 %v137
  %v343 = vpop.f32.mrb[0].mxu0
  %v344 = vadd.f32 %v78, %v343
  %v345 = vpop.f32.mrb[0].mxu0
  %v346 = vadd.f32 %v82, %v345
  %347 = vmatprep.mubr.f32.mxu0 0.0
  %348 = vmatmul.mubr.f32.gmra.mrb[0].mxu0 %v140
  %v349 = vpop.f32.mrb[0].mxu0
  %v350 = vadd.f32 %v78, %v349
  %v351 = vpop.f32.mrb[0].mxu0
  %v352 = vadd.f32 %v82, %v351
  %353 = vmatprep.mubr.f32.mxu0 0.0
  %354 = vmatmul.mubr.f32.gmra.mrb[0].mxu0 %v143
  %v355 = vpop.f32.mrb[0].mxu0
  %v356 = vadd.f32 %v78, %v355
  %v357 = vpop.f32.mrb[0].mxu0
  %v358 = vadd.f32 %v82, %v357
  %359 = vmatprep.mubr.f32.mxu0 0.0
  %360 = vmatmul.mubr.f32.gmra.mrb[0].mxu0 %v146
  %v361 = vpop.f32.mrb[0].mxu0
  %v362 = vadd.f32 %v78, %v361
  %v363 = vpop.f32.mrb[0].mxu0
  %v364 = vadd.f32 %v82, %v363
  %365 = vmatprep.mubr.f32.mxu0 0.0
  %366 = vmatmul.mubr.f32.gmra.mrb[0].mxu0 %v149
  %v367 = vpop.f32.mrb[0].mxu0
  %v368 = vadd.f32 %v78, %v367
  %v369 = vpop.f32.mrb[0].mxu0
  %v370 = vadd.f32 %v82, %v369
  %371 = vmatprep.mubr.f32.mxu0 0.0
  %372 = vmatmul.mubr.f32.gmra.mrb[0].mxu0 %v152
  %v373 = vpop.f32.mrb[0].mxu0
  %v374 = vadd.f32 %v78, %v373
  %v375 = vpop.f32.mrb[0].mxu0
  %v376 = vadd.f32 %v82, %v375
  %377 = vmatprep.mubr.f32.mxu0 0.0
  %378 = vmatmul.mubr.f32.gmra.mrb[0].mxu0 %v155
  %v379 = vpop.f32.mrb[0].mxu0
  %v380 = vadd.f32 %v78, %v379
  %v381 = vpop.f32.mrb[0].mxu0
  %v382 = vadd.f32 %v82, %v381
  %383 = vmatprep.mubr.f32.mxu0 0.0
  %384 = vmatmul.mubr.f32.gmra.mrb[0].mxu0 %v158
  %v385 = vpop.f32.mrb[0].mxu0
  %v386 = vadd.f32 %v78, %v385
  %v387 = vpop.f32.mrb[0].mxu0
  %v388 = vadd.f32 %v82, %v387
  %389 = vmatprep.mubr.f32.mxu0 0.0
  %390 = vmatmul.mubr.f32.gmra.mrb[0].mxu0 %v161
  %v391 = vpop.f32.mrb[0].mxu0
  %v392 = vadd.f32 %v78, %v391
  %v393 = vpop.f32.mrb[0].mxu0
  %v394 = vadd.f32 %v82, %v393
  %395 = vmatprep.mubr.f32.mxu0 0.0
  %396 = vmatmul.mubr.f32.gmra.mrb[0].mxu0 %v164
  %v397 = vpop.f32.mrb[0].mxu0
  %v398 = vadd.f32 %v78, %v397
  %v399 = vpop.f32.mrb[0].mxu0
  %v400 = vadd.f32 %v82, %v399
  %401 = vmatprep.mubr.f32.mxu0 0.0
  %402 = vmatmul.mubr.f32.gmra.mrb[0].mxu0 %v167
  %v403 = vpop.f32.mrb[0].mxu0
  %v404 = vadd.f32 %v78, %v403
  %v405 = vpop.f32.mrb[0].mxu0
  %v406 = vadd.f32 %v82, %v405
  %407 = vmatprep.mubr.f32.mxu0 0.0
  %408 = vmatmul.mubr.f32.gmra.mrb[0].mxu0 %v170
  %v409 = vpop.f32.mrb[0].mxu0
  %v410 = vadd.f32 %v78, %v409
  %v411 = vpop.f32.mrb[0].mxu0
  %v412 = vadd.f32 %v82, %v411
  %413 = vmatprep.mubr.f32.mxu0 0.0
  %414 = vmatmul.mubr.f32.gmra.mrb[0].mxu0 %v173
  %v415 = vpop.f32.mrb[0].mxu0
  %v416 = vadd.f32 %v78, %v415
  %v417 = vpop.f32.mrb[0].mxu0
  %v418 = vadd.f32 %v82, %v417
  %419 = vmatprep.mubr.f32.mxu0 0.0
  %420 = vmatmul.mubr.f32.gmra.mrb[0].mxu0 %v176
  %v421 = vpop.f32.mrb[0].mxu0
  %v422 = vadd.f32 %v78, %v421
  %v423 = vpop.f32.mrb[0].mxu0
  %v424 = vadd.f32 %v82, %v423
  %425 = vmatprep.mubr.f32.mxu0 0.0
  %426 = vmatmul.mubr.f32.gmra.mrb[0].mxu0 %v179
  %v427 = vpop.f32.mrb[0].mxu0
  %v428 = vadd.f32 %v78, %v427
  %v429 = vpop.f32.mrb[0].mxu0
  %v430 = vadd.f32 %v82, %v429
  %431 = vmatprep.mubr.f32.mxu0 0.0
  %432 = vmatmul.mubr.f32.gmra.mrb[0].mxu0 %v182
  %v433 = vpop.f32.mrb[0].mxu0
  %v434 = vadd.f32 %v78, %v433
  %v435 = vpop.f32.mrb[0].mxu0
  %v436 = vadd.f32 %v82, %v435
  %437 = vmatprep.mubr.f32.mxu0 0.0
  %438 = vmatmul.mubr.f32.gmra.mrb[0].mxu0 %v185
  %v439 = vpop.f32.mrb[0].mxu0
  %v440 = vadd.f32 %v78, %v439
  %v441 = vpop.f32.mrb[0].mxu0
  %v442 = vadd.f32 %v82, %v441
  %443 = vdwg.mxu0
  %444 = vmatprep.subr.mxu0 0.0
  %445 = vmatpush1.msra.mxu0 %v51
  %446 = vmatprep.subr.mxu0 0.0
  %447 = vmatpush1.msra.mxu0 %v54
  %448 = vmatprep.subr.mxu0 0.0
  %449 = vmatpush1.msra.mxu0 %v57
  %450 = vmatprep.subr.mxu0 0.0
  %451 = vmatpush1.msra.mxu0 %v60
  %452 = vmatprep.subr.mxu0 0.0
  %453 = vmatpush1.msra.mxu0 %v63
  %454 = vmatprep.subr.mxu0 0.0
  %455 = vmatpush1.msra.mxu0 %v66
  %456 = vmatprep.subr.mxu0 0.0
  %457 = vmatpush1.msra.mxu0 %v69
  %458 = vmatprep.subr.mxu0 0.0
  %459 = vmatpush1.msra.mxu0 %v72
  %460 = vmatprep.subr.mxu0 0.0
  %461 = vmatpush1.msra.mxu0 0.0
  %462 = vmatprep.subr.mxu0 0.0
  %463 = vmatpush1.msra.mxu0 0.0
  %464 = vmatprep.subr.mxu0 0.0
  %465 = vmatpush1.msra.mxu0 0.0
  %466 = vmatprep.subr.mxu0 0.0
  %467 = vmatpush1.msra.mxu0 0.0
  %468 = vmatprep.subr.mxu0 0.0
  %469 = vmatpush1.msra.mxu0 0.0
  %470 = vmatprep.subr.mxu0 0.0
  %471 = vmatpush1.msra.mxu0 0.0
  %472 = vmatprep.subr.mxu0 0.0
  %473 = vmatpush1.msra.mxu0 0.0
  %474 = vmatprep.subr.mxu0 0.0
  %475 = vmatpush1.msra.mxu0 0.0
  %476 = vmatprep.subr.mxu0 0.0
  %477 = vmatpush1.msra.mxu0 0.0
  %478 = vmatprep.subr.mxu0 0.0
  %479 = vmatpush1.msra.mxu0 0.0
  %480 = vmatprep.subr.mxu0 0.0
  %481 = vmatpush1.msra.mxu0 0.0
  %482 = vmatprep.subr.mxu0 0.0
  %483 = vmatpush1.msra.mxu0 0.0
  %484 = vmatprep.subr.mxu0 0.0
  %485 = vmatpush1.msra.mxu0 0.0
  %486 = vmatprep.subr.mxu0 0.0
  %487 = vmatpush1.msra.mxu0 0.0
  %488 = vmatprep.subr.mxu0 0.0
  %489 = vmatpush1.msra.mxu0 0.0
  %490 = vmatprep.subr.mxu0 0.0
  %491 = vmatpush1.msra.mxu0 0.0
  %492 = vmatprep.subr.mxu0 0.0
  %493 = vmatpush1.msra.mxu0 0.0
  %494 = vmatprep.subr.mxu0 0.0
  %495 = vmatpush1.msra.mxu0 0.0
  %496 = vmatprep.subr.mxu0 0.0
  %497 = vmatpush1.msra.mxu0 0.0
  %498 = vmatprep.subr.mxu0 0.0
  %499 = vmatpush1.msra.mxu0 0.0
  %500 = vmatprep.subr.mxu0 0.0
  %501 = vmatpush1.msra.mxu0 0.0
  %502 = vmatprep.subr.mxu0 0.0
  %503 = vmatpush1.msra.mxu0 0.0
  %504 = vmatprep.subr.mxu0 0.0
  %505 = vmatpush1.msra.mxu0 0.0
  %506 = vmatprep.subr.mxu0 0.0
  %507 = vmatpush1.msra.mxu0 0.0
  %508 = vmatprep.mubr.f32.mxu0 0.0
  %509 = vmatmul.mubr.f32.gmra.mrb[0].mxu0 %v92
  %v510 = vpop.f32.mrb[0].mxu0
  %v511 = vadd.f32 %v86, %v510
  %v512 = vpop.f32.mrb[0].mxu0
  %513 = vmatprep.mubr.f32.mxu0 0.0
  %514 = vmatmul.mubr.f32.gmra.mrb[0].mxu0 %v95
  %v515 = vpop.f32.mrb[0].mxu0
  %v516 = vadd.f32 %v86, %v515
  %v517 = vpop.f32.mrb[0].mxu0
  %518 = vmatprep.mubr.f32.mxu0 0.0
  %519 = vmatmul.mubr.f32.gmra.mrb[0].mxu0 %v98
  %v520 = vpop.f32.mrb[0].mxu0
  %v521 = vadd.f32 %v86, %v520
  %v522 = vpop.f32.mrb[0].mxu0
  %523 = vmatprep.mubr.f32.mxu0 0.0
  %524 = vmatmul.mubr.f32.gmra.mrb[0].mxu0 %v101
  %v525 = vpop.f32.mrb[0].mxu0
  %v526 = vadd.f32 %v86, %v525
  %v527 = vpop.f32.mrb[0].mxu0
  %528 = vmatprep.mubr.f32.mxu0 0.0
  %529 = vmatmul.mubr.f32.gmra.mrb[0].mxu0 %v104
  %v530 = vpop.f32.mrb[0].mxu0
  %v531 = vadd.f32 %v86, %v530
  %v532 = vpop.f32.mrb[0].mxu0
  %533 = vmatprep.mubr.f32.mxu0 0.0
  %534 = vmatmul.mubr.f32.gmra.mrb[0].mxu0 %v107
  %v535 = vpop.f32.mrb[0].mxu0
  %v536 = vadd.f32 %v86, %v535
  %v537 = vpop.f32.mrb[0].mxu0
  %538 = vmatprep.mubr.f32.mxu0 0.0
  %539 = vmatmul.mubr.f32.gmra.mrb[0].mxu0 %v110
  %v540 = vpop.f32.mrb[0].mxu0
  %v541 = vadd.f32 %v86, %v540
  %v542 = vpop.f32.mrb[0].mxu0
  %543 = vmatprep.mubr.f32.mxu0 0.0
  %544 = vmatmul.mubr.f32.gmra.mrb[0].mxu0 %v113
  %v545 = vpop.f32.mrb[0].mxu0
  %v546 = vadd.f32 %v86, %v545
  %v547 = vpop.f32.mrb[0].mxu0
  %548 = vmatprep.mubr.f32.mxu0 0.0
  %549 = vmatmul.mubr.f32.gmra.mrb[0].mxu0 %v116
  %v550 = vpop.f32.mrb[0].mxu0
  %v551 = vadd.f32 %v86, %v550
  %v552 = vpop.f32.mrb[0].mxu0
  %553 = vmatprep.mubr.f32.mxu0 0.0
  %554 = vmatmul.mubr.f32.gmra.mrb[0].mxu0 %v119
  %v555 = vpop.f32.mrb[0].mxu0
  %v556 = vadd.f32 %v86, %v555
  %v557 = vpop.f32.mrb[0].mxu0
  %558 = vmatprep.mubr.f32.mxu0 0.0
  %559 = vmatmul.mubr.f32.gmra.mrb[0].mxu0 %v122
  %v560 = vpop.f32.mrb[0].mxu0
  %v561 = vadd.f32 %v86, %v560
  %v562 = vpop.f32.mrb[0].mxu0
  %563 = vmatprep.mubr.f32.mxu0 0.0
  %564 = vmatmul.mubr.f32.gmra.mrb[0].mxu0 %v125
  %v565 = vpop.f32.mrb[0].mxu0
  %v566 = vadd.f32 %v86, %v565
  %v567 = vpop.f32.mrb[0].mxu0
  %568 = vmatprep.mubr.f32.mxu0 0.0
  %569 = vmatmul.mubr.f32.gmra.mrb[0].mxu0 %v128
  %v570 = vpop.f32.mrb[0].mxu0
  %v571 = vadd.f32 %v86, %v570
  %v572 = vpop.f32.mrb[0].mxu0
  %573 = vmatprep.mubr.f32.mxu0 0.0
  %574 = vmatmul.mubr.f32.gmra.mrb[0].mxu0 %v131
  %v575 = vpop.f32.mrb[0].mxu0
  %v576 = vadd.f32 %v86, %v575
  %v577 = vpop.f32.mrb[0].mxu0
  %578 = vmatprep.mubr.f32.mxu0 0.0
  %579 = vmatmul.mubr.f32.gmra.mrb[0].mxu0 %v134
  %v580 = vpop.f32.mrb[0].mxu0
  %v581 = vadd.f32 %v86, %v580
  %v582 = vpop.f32.mrb[0].mxu0
  %583 = vmatprep.mubr.f32.mxu0 0.0
  %584 = vmatmul.mubr.f32.gmra.mrb[0].mxu0 %v137
  %v585 = vpop.f32.mrb[0].mxu0
  %v586 = vadd.f32 %v86, %v585
  %v587 = vpop.f32.mrb[0].mxu0
  %588 = vmatprep.mubr.f32.mxu0 0.0
  %589 = vmatmul.mubr.f32.gmra.mrb[0].mxu0 %v140
  %v590 = vpop.f32.mrb[0].mxu0
  %v591 = vadd.f32 %v86, %v590
  %v592 = vpop.f32.mrb[0].mxu0
  %593 = vmatprep.mubr.f32.mxu0 0.0
  %594 = vmatmul.mubr.f32.gmra.mrb[0].mxu0 %v143
  %v595 = vpop.f32.mrb[0].mxu0
  %v596 = vadd.f32 %v86, %v595
  %v597 = vpop.f32.mrb[0].mxu0
  %598 = vmatprep.mubr.f32.mxu0 0.0
  %599 = vmatmul.mubr.f32.gmra.mrb[0].mxu0 %v146
  %v600 = vpop.f32.mrb[0].mxu0
  %v601 = vadd.f32 %v86, %v600
  %v602 = vpop.f32.mrb[0].mxu0
  %603 = vmatprep.mubr.f32.mxu0 0.0
  %604 = vmatmul.mubr.f32.gmra.mrb[0].mxu0 %v149
  %v605 = vpop.f32.mrb[0].mxu0
  %v606 = vadd.f32 %v86, %v605
  %v607 = vpop.f32.mrb[0].mxu0
  %608 = vmatprep.mubr.f32.mxu0 0.0
  %609 = vmatmul.mubr.f32.gmra.mrb[0].mxu0 %v152
  %v610 = vpop.f32.mrb[0].mxu0
  %v611 = vadd.f32 %v86, %v610
  %v612 = vpop.f32.mrb[0].mxu0
  %613 = vmatprep.mubr.f32.mxu0 0.0
  %614 = vmatmul.mubr.f32.gmra.mrb[0].mxu0 %v155
  %v615 = vpop.f32.mrb[0].mxu0
  %v616 = vadd.f32 %v86, %v615
  %v617 = vpop.f32.mrb[0].mxu0
  %618 = vmatprep.mubr.f32.mxu0 0.0
  %619 = vmatmul.mubr.f32.gmra.mrb[0].mxu0 %v158
  %v620 = vpop.f32.mrb[0].mxu0
  %v621 = vadd.f32 %v86, %v620
  %v622 = vpop.f32.mrb[0].mxu0
  %623 = vmatprep.mubr.f32.mxu0 0.0
  %624 = vmatmul.mubr.f32.gmra.mrb[0].mxu0 %v161
  %v625 = vpop.f32.mrb[0].mxu0
  %v626 = vadd.f32 %v86, %v625
  %v627 = vpop.f32.mrb[0].mxu0
  %628 = vmatprep.mubr.f32.mxu0 0.0
  %629 = vmatmul.mubr.f32.gmra.mrb[0].mxu0 %v164
  %v630 = vpop.f32.mrb[0].mxu0
  %v631 = vadd.f32 %v86, %v630
  %v632 = vpop.f32.mrb[0].mxu0
  %633 = vmatprep.mubr.f32.mxu0 0.0
  %634 = vmatmul.mubr.f32.gmra.mrb[0].mxu0 %v167
  %v635 = vpop.f32.mrb[0].mxu0
  %v636 = vadd.f32 %v86, %v635
  %v637 = vpop.f32.mrb[0].mxu0
  %638 = vmatprep.mubr.f32.mxu0 0.0
  %639 = vmatmul.mubr.f32.gmra.mrb[0].mxu0 %v170
  %v640 = vpop.f32.mrb[0].mxu0
  %v641 = vadd.f32 %v86, %v640
  %v642 = vpop.f32.mrb[0].mxu0
  %643 = vmatprep.mubr.f32.mxu0 0.0
  %644 = vmatmul.mubr.f32.gmra.mrb[0].mxu0 %v173
  %v645 = vpop.f32.mrb[0].mxu0
  %v646 = vadd.f32 %v86, %v645
  %v647 = vpop.f32.mrb[0].mxu0
  %648 = vmatprep.mubr.f32.mxu0 0.0
  %649 = vmatmul.mubr.f32.gmra.mrb[0].mxu0 %v176
  %v650 = vpop.f32.mrb[0].mxu0
  %v651 = vadd.f32 %v86, %v650
  %v652 = vpop.f32.mrb[0].mxu0
  %653 = vmatprep.mubr.f32.mxu0 0.0
  %654 = vmatmul.mubr.f32.gmra.mrb[0].mxu0 %v179
  %v655 = vpop.f32.mrb[0].mxu0
  %v656 = vadd.f32 %v86, %v655
  %v657 = vpop.f32.mrb[0].mxu0
  %658 = vmatprep.mubr.f32.mxu0 0.0
  %659 = vmatmul.mubr.f32.gmra.mrb[0].mxu0 %v182
  %v660 = vpop.f32.mrb[0].mxu0
  %v661 = vadd.f32 %v86, %v660
  %v662 = vpop.f32.mrb[0].mxu0
  %663 = vmatprep.mubr.f32.mxu0 0.0
  %664 = vmatmul.mubr.f32.gmra.mrb[0].mxu0 %v185
  %v665 = vpop.f32.mrb[0].mxu0
  %v666 = vadd.f32 %v86, %v665
  %v667 = vpop.f32.mrb[0].mxu0
  %668 = vdwg.mxu0
  %669 = vst [vmem:[#allocation2] sm:$0xff] %v254
  %670 = vst [vmem:[#allocation2 + $0x8] sm:$0xff] %v256
  %671 = vst [vmem:[#allocation2 + $0x10] sm:$0xff] %v511
  %672 = vst [vmem:[#allocation2 + $0x18] sm:$0xff] %v260
  %673 = vst [vmem:[#allocation2 + $0x20] sm:$0xff] %v262
  %674 = vst [vmem:[#allocation2 + $0x28] sm:$0xff] %v516
  %675 = vst [vmem:[#allocation2 + $0x30] sm:$0xff] %v266
  %676 = vst [vmem:[#allocation2 + $0x38] sm:$0xff] %v268
  %677 = vst [vmem:[#allocation2 + $0x40] sm:$0xff] %v521
  %678 = vst [vmem:[#allocation2 + $0x48] sm:$0xff] %v272
  %679 = vst [vmem:[#allocation2 + $0x50] sm:$0xff] %v274
  %680 = vst [vmem:[#allocation2 + $0x58] sm:$0xff] %v526
  %681 = vst [vmem:[#allocation2 + $0x60] sm:$0xff] %v278
  %682 = vst [vmem:[#allocation2 + $0x68] sm:$0xff] %v280
  %683 = vst [vmem:[#allocation2 + $0x70] sm:$0xff] %v531
  %684 = vst [vmem:[#allocation2 + $0x78] sm:$0xff] %v284
  %685 = vst [vmem:[#allocation2 + $0x80] sm:$0xff] %v286
  %686 = vst [vmem:[#allocation2 + $0x88] sm:$0xff] %v536
  %687 = vst [vmem:[#allocation2 + $0x90] sm:$0xff] %v290
  %688 = vst [vmem:[#allocation2 + $0x98] sm:$0xff] %v292
  %689 = vst [vmem:[#allocation2 + $0xa0] sm:$0xff] %v541
  %690 = vst [vmem:[#allocation2 + $0xa8] sm:$0xff] %v296
  %691 = vst [vmem:[#allocation2 + $0xb0] sm:$0xff] %v298
  %692 = vst [vmem:[#allocation2 + $0xb8] sm:$0xff] %v546
  %693 = vst [vmem:[#allocation2 + $0xc0] sm:$0xff] %v302
  %694 = vst [vmem:[#allocation2 + $0xc8] sm:$0xff] %v304
  %695 = vst [vmem:[#allocation2 + $0xd0] sm:$0xff] %v551
  %696 = vst [vmem:[#allocation2 + $0xd8] sm:$0xff] %v308
  %697 = vst [vmem:[#allocation2 + $0xe0] sm:$0xff] %v310
  %698 = vst [vmem:[#allocation2 + $0xe8] sm:$0xff] %v556
  %699 = vst [vmem:[#allocation2 + $0xf0] sm:$0xff] %v314
  %700 = vst [vmem:[#allocation2 + $0xf8] sm:$0xff] %v316
  %701 = vst [vmem:[#allocation2 + $0x100] sm:$0xff] %v561
  %702 = vst [vmem:[#allocation2 + $0x108] sm:$0xff] %v320
  %703 = vst [vmem:[#allocation2 + $0x110] sm:$0xff] %v322
  %704 = vst [vmem:[#allocation2 + $0x118] sm:$0xff] %v566
  %705 = vst [vmem:[#allocation2 + $0x120] sm:$0xff] %v326
  %706 = vst [vmem:[#allocation2 + $0x128] sm:$0xff] %v328
  %707 = vst [vmem:[#allocation2 + $0x130] sm:$0xff] %v571
  %708 = vst [vmem:[#allocation2 + $0x138] sm:$0xff] %v332
  %709 = vst [vmem:[#allocation2 + $0x140] sm:$0xff] %v334
  %710 = vst [vmem:[#allocation2 + $0x148] sm:$0xff] %v576
  %711 = vst [vmem:[#allocation2 + $0x150] sm:$0xff] %v338
  %712 = vst [vmem:[#allocation2 + $0x158] sm:$0xff] %v340
  %713 = vst [vmem:[#allocation2 + $0x160] sm:$0xff] %v581
  %714 = vst [vmem:[#allocation2 + $0x168] sm:$0xff] %v344
  %715 = vst [vmem:[#allocation2 + $0x170] sm:$0xff] %v346
  %716 = vst [vmem:[#allocation2 + $0x178] sm:$0xff] %v586
  %717 = vst [vmem:[#allocation2 + $0x180] sm:$0xff] %v350
  %718 = vst [vmem:[#allocation2 + $0x188] sm:$0xff] %v352
  %719 = vst [vmem:[#allocation2 + $0x190] sm:$0xff] %v591
  %720 = vst [vmem:[#allocation2 + $0x198] sm:$0xff] %v356
  %721 = vst [vmem:[#allocation2 + $0x1a0] sm:$0xff] %v358
  %722 = vst [vmem:[#allocation2 + $0x1a8] sm:$0xff] %v596
  %723 = vst [vmem:[#allocation2 + $0x1b0] sm:$0xff] %v362
  %724 = vst [vmem:[#allocation2 + $0x1b8] sm:$0xff] %v364
  %725 = vst [vmem:[#allocation2 + $0x1c0] sm:$0xff] %v601
  %726 = vst [vmem:[#allocation2 + $0x1c8] sm:$0xff] %v368
  %727 = vst [vmem:[#allocation2 + $0x1d0] sm:$0xff] %v370
  %728 = vst [vmem:[#allocation2 + $0x1d8] sm:$0xff] %v606
  %729 = vst [vmem:[#allocation2 + $0x1e0] sm:$0xff] %v374
  %730 = vst [vmem:[#allocation2 + $0x1e8] sm:$0xff] %v376
  %731 = vst [vmem:[#allocation2 + $0x1f0] sm:$0xff] %v611
  %732 = vst [vmem:[#allocation2 + $0x1f8] sm:$0xff] %v380
  %733 = vst [vmem:[#allocation2 + $0x200] sm:$0xff] %v382
  %734 = vst [vmem:[#allocation2 + $0x208] sm:$0xff] %v616
  %735 = vst [vmem:[#allocation2 + $0x210] sm:$0xff] %v386
  %736 = vst [vmem:[#allocation2 + $0x218] sm:$0xff] %v388
  %737 = vst [vmem:[#allocation2 + $0x220] sm:$0xff] %v621
  %738 = vst [vmem:[#allocation2 + $0x228] sm:$0xff] %v392
  %739 = vst [vmem:[#allocation2 + $0x230] sm:$0xff] %v394
  %740 = vst [vmem:[#allocation2 + $0x238] sm:$0xff] %v626
  %741 = vst [vmem:[#allocation2 + $0x240] sm:$0xff] %v398
  %742 = vst [vmem:[#allocation2 + $0x248] sm:$0xff] %v400
  %743 = vst [vmem:[#allocation2 + $0x250] sm:$0xff] %v631
  %744 = vst [vmem:[#allocation2 + $0x258] sm:$0xff] %v404
  %745 = vst [vmem:[#allocation2 + $0x260] sm:$0xff] %v406
  %746 = vst [vmem:[#allocation2 + $0x268] sm:$0xff] %v636
  %747 = vst [vmem:[#allocation2 + $0x270] sm:$0xff] %v410
  %748 = vst [vmem:[#allocation2 + $0x278] sm:$0xff] %v412
  %749 = vst [vmem:[#allocation2 + $0x280] sm:$0xff] %v641
  %750 = vst [vmem:[#allocation2 + $0x288] sm:$0xff] %v416
  %751 = vst [vmem:[#allocation2 + $0x290] sm:$0xff] %v418
  %752 = vst [vmem:[#allocation2 + $0x298] sm:$0xff] %v646
  %753 = vst [vmem:[#allocation2 + $0x2a0] sm:$0xff] %v422
  %754 = vst [vmem:[#allocation2 + $0x2a8] sm:$0xff] %v424
  %755 = vst [vmem:[#allocation2 + $0x2b0] sm:$0xff] %v651
  %756 = vst [vmem:[#allocation2 + $0x2b8] sm:$0xff] %v428
  %757 = vst [vmem:[#allocation2 + $0x2c0] sm:$0xff] %v430
  %758 = vst [vmem:[#allocation2 + $0x2c8] sm:$0xff] %v656
  %759 = vst [vmem:[#allocation2 + $0x2d0] sm:$0xff] %v434
  %760 = vst [vmem:[#allocation2 + $0x2d8] sm:$0xff] %v436
  %761 = vst [vmem:[#allocation2 + $0x2e0] sm:$0xff] %v661
  %762 = vst [vmem:[#allocation2 + $0x2e8] sm:$0xff] %v440
  %763 = vst [vmem:[#allocation2 + $0x2f0] sm:$0xff] %v442
  %764 = vst [vmem:[#allocation2 + $0x2f8] sm:$0xff] %v666
  %v765 = vlaneseq
  %v766 = vshrl.u32 %v765, 7
  %v767 = vadd.s32 %v766, 8
  %v768 = vadd.s32 %v766, 16
  %v769 = vadd.s32 %v766, 24
  %v770 = vadd.s32 %v766, 32
  %v771 = vadd.s32 %v766, 40
  %v772 = vadd.s32 %v766, 48
  %v773 = vadd.s32 %v766, 56
  %v774 = vadd.s32 %v766, 64
  %v775 = vadd.s32 %v766, 72
  %v776 = vadd.s32 %v766, 80
  %v777 = vadd.s32 %v766, 88
  %v778 = vadd.s32 %v766, 96
  %v779 = vadd.s32 %v766, 104
  %v780 = vadd.s32 %v766, 112
  %v781 = vadd.s32 %v766, 120
  %v782 = vlaneseq
  %v783 = vand.u32 %v782, 127
  %v784 = vsub.s32 %v783, %v766
  %v785 = vsub.s32 %v783, %v767
  %v786 = vsub.s32 %v783, %v768
  %v787 = vsub.s32 %v783, %v769
  %v788 = vsub.s32 %v783, %v770
  %v789 = vsub.s32 %v783, %v771
  %v790 = vsub.s32 %v783, %v772
  %v791 = vsub.s32 %v783, %v773
  %v792 = vsub.s32 %v783, %v774
  %v793 = vsub.s32 %v783, %v775
  %v794 = vsub.s32 %v783, %v776
  %v795 = vsub.s32 %v783, %v777
  %v796 = vsub.s32 %v783, %v778
  %v797 = vsub.s32 %v783, %v779
  %v798 = vsub.s32 %v783, %v780
  %v799 = vsub.s32 %v783, %v781
  %vm800 = vcmp.ge.s32.totalorder %v784, 4294967293
  %vm801 = vcmp.ge.s32.totalorder %v785, 4294967293
  %vm802 = vcmp.ge.s32.totalorder %v786, 4294967293
  %vm803 = vcmp.ge.s32.totalorder %v787, 4294967293
  %vm804 = vcmp.ge.s32.totalorder %v788, 4294967293
  %vm805 = vcmp.ge.s32.totalorder %v789, 4294967293
  %vm806 = vcmp.ge.s32.totalorder %v790, 4294967293
  %vm807 = vcmp.ge.s32.totalorder %v791, 4294967293
  %vm808 = vcmp.ge.s32.totalorder %v792, 4294967293
  %vm809 = vcmp.ge.s32.totalorder %v793, 4294967293
  %vm810 = vcmp.ge.s32.totalorder %v794, 4294967293
  %vm811 = vcmp.ge.s32.totalorder %v795, 4294967293
  %vm812 = vcmp.ge.s32.totalorder %v796, 4294967293
  %vm813 = vcmp.ge.s32.totalorder %v797, 4294967293
  %vm814 = vcmp.ge.s32.totalorder %v798, 4294967293
  %vm815 = vcmp.ge.s32.totalorder %v799, 4294967293
  %vm816 = vcmp.le.s32.totalorder %v784, 3
  %vm817 = vcmp.le.s32.totalorder %v785, 3
  %vm818 = vcmp.le.s32.totalorder %v786, 3
  %vm819 = vcmp.le.s32.totalorder %v787, 3
  %vm820 = vcmp.le.s32.totalorder %v788, 3
  %vm821 = vcmp.le.s32.totalorder %v789, 3
  %vm822 = vcmp.le.s32.totalorder %v790, 3
  %vm823 = vcmp.le.s32.totalorder %v791, 3
  %vm824 = vcmp.le.s32.totalorder %v792, 3
  %vm825 = vcmp.le.s32.totalorder %v793, 3
  %vm826 = vcmp.le.s32.totalorder %v794, 3
  %vm827 = vcmp.le.s32.totalorder %v795, 3
  %vm828 = vcmp.le.s32.totalorder %v796, 3
  %vm829 = vcmp.le.s32.totalorder %v797, 3
  %vm830 = vcmp.le.s32.totalorder %v798, 3
  %vm831 = vcmp.le.s32.totalorder %v799, 3
  %vm832 = vmand %vm800, %vm816
  %vm833 = vmand %vm801, %vm817
  %vm834 = vmand %vm802, %vm818
  %vm835 = vmand %vm803, %vm819
  %vm836 = vmand %vm804, %vm820
  %vm837 = vmand %vm805, %vm821
  %vm838 = vmand %vm806, %vm822
  %vm839 = vmand %vm807, %vm823
  %vm840 = vmand %vm808, %vm824
  %vm841 = vmand %vm809, %vm825
  %vm842 = vmand %vm810, %vm826
  %vm843 = vmand %vm811, %vm827
  %vm844 = vmand %vm812, %vm828
  %vm845 = vmand %vm813, %vm829
  %vm846 = vmand %vm814, %vm830
  %vm847 = vmand %vm815, %vm831
  %v848 = vsel %vm832, 0.0, -1e+30
  %v849 = vsel %vm833, 0.0, -1e+30
  %v850 = vsel %vm834, 0.0, -1e+30
  %v851 = vsel %vm835, 0.0, -1e+30
  %v852 = vsel %vm836, 0.0, -1e+30
  %v853 = vsel %vm837, 0.0, -1e+30
  %v854 = vsel %vm838, 0.0, -1e+30
  %v855 = vsel %vm839, 0.0, -1e+30
  %v856 = vsel %vm840, 0.0, -1e+30
  %v857 = vsel %vm841, 0.0, -1e+30
  %v858 = vsel %vm842, 0.0, -1e+30
  %v859 = vsel %vm843, 0.0, -1e+30
  %v860 = vsel %vm844, 0.0, -1e+30
  %v861 = vsel %vm845, 0.0, -1e+30
  %v862 = vsel %vm846, 0.0, -1e+30
  %v863 = vsel %vm847, 0.0, -1e+30
  %864 = vst [vmem:[#allocation3] sm:$0xff] %v848
  %865 = vst [vmem:[#allocation3 + $0x8] sm:$0xff] %v849
  %866 = vst [vmem:[#allocation3 + $0x10] sm:$0xff] %v850
  %867 = vst [vmem:[#allocation3 + $0x18] sm:$0xff] %v851
  %868 = vst [vmem:[#allocation3 + $0x20] sm:$0xff] %v852
  %869 = vst [vmem:[#allocation3 + $0x28] sm:$0xff] %v853
  %870 = vst [vmem:[#allocation3 + $0x30] sm:$0xff] %v854
  %871 = vst [vmem:[#allocation3 + $0x38] sm:$0xff] %v855
  %872 = vst [vmem:[#allocation3 + $0x40] sm:$0xff] %v856
  %873 = vst [vmem:[#allocation3 + $0x48] sm:$0xff] %v857
  %874 = vst [vmem:[#allocation3 + $0x50] sm:$0xff] %v858
  %875 = vst [vmem:[#allocation3 + $0x58] sm:$0xff] %v859
  %876 = vst [vmem:[#allocation3 + $0x60] sm:$0xff] %v860
  %877 = vst [vmem:[#allocation3 + $0x68] sm:$0xff] %v861
  %878 = vst [vmem:[#allocation3 + $0x70] sm:$0xff] %v862
  %879 = vst [vmem:[#allocation3 + $0x78] sm:$0xff] %v863
  %v880 = vld [vmem:[%s3] sm:$0x1]
  %v881 = vld [vmem:[#allocation2] sm:$0xff]
  %v882 = vld [vmem:[#allocation2 + $0x18] sm:$0xff]
  %v883 = vld [vmem:[#allocation2 + $0x30] sm:$0xff]
  %v884 = vld [vmem:[#allocation2 + $0x48] sm:$0xff]
  %v885 = vld [vmem:[#allocation2 + $0x60] sm:$0xff]
  %v886 = vld [vmem:[#allocation2 + $0x78] sm:$0xff]
  %v887 = vld [vmem:[#allocation2 + $0x90] sm:$0xff]
  %v888 = vld [vmem:[#allocation2 + $0xa8] sm:$0xff]
  %v889 = vld [vmem:[#allocation2 + $0xc0] sm:$0xff]
  %v890 = vld [vmem:[#allocation2 + $0xd8] sm:$0xff]
  %v891 = vld [vmem:[#allocation2 + $0xf0] sm:$0xff]
  %v892 = vld [vmem:[#allocation2 + $0x108] sm:$0xff]
  %v893 = vld [vmem:[#allocation2 + $0x120] sm:$0xff]
  %v894 = vld [vmem:[#allocation2 + $0x138] sm:$0xff]
  %v895 = vld [vmem:[#allocation2 + $0x150] sm:$0xff]
  %v896 = vld [vmem:[#allocation2 + $0x168] sm:$0xff]
  %v897 = vld [vmem:[#allocation2 + $0x8] sm:$0xff]
  %v898 = vld [vmem:[#allocation2 + $0x20] sm:$0xff]
  %v899 = vld [vmem:[#allocation2 + $0x38] sm:$0xff]
  %v900 = vld [vmem:[#allocation2 + $0x50] sm:$0xff]
  %v901 = vld [vmem:[#allocation2 + $0x68] sm:$0xff]
  %v902 = vld [vmem:[#allocation2 + $0x80] sm:$0xff]
  %v903 = vld [vmem:[#allocation2 + $0x98] sm:$0xff]
  %v904 = vld [vmem:[#allocation2 + $0xb0] sm:$0xff]
  %v905 = vld [vmem:[#allocation2 + $0xc8] sm:$0xff]
  %v906 = vld [vmem:[#allocation2 + $0xe0] sm:$0xff]
  %v907 = vld [vmem:[#allocation2 + $0xf8] sm:$0xff]
  %v908 = vld [vmem:[#allocation2 + $0x110] sm:$0xff]
  %v909 = vld [vmem:[#allocation2 + $0x128] sm:$0xff]
  %v910 = vld [vmem:[#allocation2 + $0x140] sm:$0xff]
  %v911 = vld [vmem:[#allocation2 + $0x158] sm:$0xff]
  %v912 = vld [vmem:[#allocation2 + $0x170] sm:$0xff]
  %v913 = vld [vmem:[#allocation3] sm:$0xff]
  %v914 = vld [vmem:[#allocation3 + $0x8] sm:$0xff]
  %v915 = vld [vmem:[#allocation3 + $0x10] sm:$0xff]
  %v916 = vld [vmem:[#allocation3 + $0x18] sm:$0xff]
  %v917 = vld [vmem:[#allocation3 + $0x20] sm:$0xff]
  %v918 = vld [vmem:[#allocation3 + $0x28] sm:$0xff]
  %v919 = vld [vmem:[#allocation3 + $0x30] sm:$0xff]
  %v920 = vld [vmem:[#allocation3 + $0x38] sm:$0xff]
  %v921 = vld [vmem:[#allocation3 + $0x40] sm:$0xff]
  %v922 = vld [vmem:[#allocation3 + $0x48] sm:$0xff]
  %v923 = vld [vmem:[#allocation3 + $0x50] sm:$0xff]
  %v924 = vld [vmem:[#allocation3 + $0x58] sm:$0xff]
  %v925 = vld [vmem:[#allocation3 + $0x60] sm:$0xff]
  %v926 = vld [vmem:[#allocation3 + $0x68] sm:$0xff]
  %v927 = vld [vmem:[#allocation3 + $0x70] sm:$0xff]
  %v928 = vld [vmem:[#allocation3 + $0x78] sm:$0xff]
  %945 = vrot.lane.b32.xlu0 %v881, 64
  %v946 = vpop.permute.xlu0 %945
  %947 = vrot.lane.b32.xlu0 %v882, 64
  %v948 = vpop.permute.xlu0 %947
  %949 = vrot.lane.b32.xlu0 %v883, 64
  %v950 = vpop.permute.xlu0 %949
  %951 = vrot.lane.b32.xlu0 %v884, 64
  %v952 = vpop.permute.xlu0 %951
  %953 = vrot.lane.b32.xlu0 %v885, 64
  %v954 = vpop.permute.xlu0 %953
  %955 = vrot.lane.b32.xlu0 %v886, 64
  %v956 = vpop.permute.xlu0 %955
  %957 = vrot.lane.b32.xlu0 %v887, 64
  %v958 = vpop.permute.xlu0 %957
  %959 = vrot.lane.b32.xlu0 %v888, 64
  %v960 = vpop.permute.xlu0 %959
  %961 = vrot.lane.b32.xlu0 %v889, 64
  %v962 = vpop.permute.xlu0 %961
  %963 = vrot.lane.b32.xlu0 %v890, 64
  %v964 = vpop.permute.xlu0 %963
  %965 = vrot.lane.b32.xlu0 %v891, 64
  %v966 = vpop.permute.xlu0 %965
  %967 = vrot.lane.b32.xlu0 %v892, 64
  %v968 = vpop.permute.xlu0 %967
  %969 = vrot.lane.b32.xlu0 %v893, 64
  %v970 = vpop.permute.xlu0 %969
  %971 = vrot.lane.b32.xlu0 %v894, 64
  %v972 = vpop.permute.xlu0 %971
  %973 = vrot.lane.b32.xlu0 %v895, 64
  %v974 = vpop.permute.xlu0 %973
  %975 = vrot.lane.b32.xlu0 %v896, 64
  %v976 = vpop.permute.xlu0 %975
  %vm977 = vcmask 130048
  %v978 = vsel %vm977, %v881, 0
  %v980 = vsel %vm977, %v882, 0
  %v982 = vsel %vm977, %v883, 0
  %v984 = vsel %vm977, %v884, 0
  %v986 = vsel %vm977, %v885, 0
  %v988 = vsel %vm977, %v886, 0
  %v990 = vsel %vm977, %v887, 0
  %v992 = vsel %vm977, %v888, 0
  %v994 = vsel %vm977, %v889, 0
  %v996 = vsel %vm977, %v890, 0
  %v998 = vsel %vm977, %v891, 0
  %v1000 = vsel %vm977, %v892, 0
  %v1002 = vsel %vm977, %v893, 0
  %v1004 = vsel %vm977, %v894, 0
  %v1006 = vsel %vm977, %v895, 0
  %v1008 = vsel %vm977, %v896, 0
  %v1010 = vsel %vm977, %v946, 0
  %v1012 = vsel %vm977, %v948, 0
  %v1014 = vsel %vm977, %v950, 0
  %v1016 = vsel %vm977, %v952, 0
  %v1018 = vsel %vm977, %v954, 0
  %v1020 = vsel %vm977, %v956, 0
  %v1022 = vsel %vm977, %v958, 0
  %v1024 = vsel %vm977, %v960, 0
  %v1026 = vsel %vm977, %v962, 0
  %v1028 = vsel %vm977, %v964, 0
  %v1030 = vsel %vm977, %v966, 0
  %v1032 = vsel %vm977, %v968, 0
  %v1034 = vsel %vm977, %v970, 0
  %v1036 = vsel %vm977, %v972, 0
  %v1038 = vsel %vm977, %v974, 0
  %v1040 = vsel %vm977, %v976, 0
  %1042 = vmatprep.subr.mxu0 0.0
  %1043 = vmatpush1.xpose.msra.mxu0 %v1010
  %1044 = vmatprep.subr.mxu0 0.0
  %1045 = vmatpush1.xpose.msra.mxu0 %v1012
  %1046 = vmatprep.subr.mxu0 0.0
  %1047 = vmatpush1.xpose.msra.mxu0 %v1014
  %1048 = vmatprep.subr.mxu0 0.0
  %1049 = vmatpush1.xpose.msra.mxu0 %v1016
  %1050 = vmatprep.subr.mxu0 0.0
  %1051 = vmatpush1.xpose.msra.mxu0 %v1018
  %1052 = vmatprep.subr.mxu0 0.0
  %1053 = vmatpush1.xpose.msra.mxu0 %v1020
  %1054 = vmatprep.subr.mxu0 0.0
  %1055 = vmatpush1.xpose.msra.mxu0 %v1022
  %1056 = vmatprep.subr.mxu0 0.0
  %1057 = vmatpush1.xpose.msra.mxu0 %v1024
  %1058 = vmatprep.subr.mxu0 0.0
  %1059 = vmatpush1.xpose.msra.mxu0 %v1026
  %1060 = vmatprep.subr.mxu0 0.0
  %1061 = vmatpush1.xpose.msra.mxu0 %v1028
  %1062 = vmatprep.subr.mxu0 0.0
  %1063 = vmatpush1.xpose.msra.mxu0 %v1030
  %1064 = vmatprep.subr.mxu0 0.0
  %1065 = vmatpush1.xpose.msra.mxu0 %v1032
  %1066 = vmatprep.subr.mxu0 0.0
  %1067 = vmatpush1.xpose.msra.mxu0 %v1034
  %1068 = vmatprep.subr.mxu0 0.0
  %1069 = vmatpush1.xpose.msra.mxu0 %v1036
  %1070 = vmatprep.subr.mxu0 0.0
  %1071 = vmatpush1.xpose.msra.mxu0 %v1038
  %1072 = vmatprep.subr.mxu0 0.0
  %1073 = vmatpush1.xpose.msra.mxu0 %v1040
  %1074 = vmatprep.subr.mxu0 0.0
  %1075 = vmatpush1.xpose.msra.mxu0 0.0
  %1076 = vmatprep.subr.mxu0 0.0
  %1077 = vmatpush1.xpose.msra.mxu0 0.0
  %1078 = vmatprep.subr.mxu0 0.0
  %1079 = vmatpush1.xpose.msra.mxu0 0.0
  %1080 = vmatprep.subr.mxu0 0.0
  %1081 = vmatpush1.xpose.msra.mxu0 0.0
  %1082 = vmatprep.subr.mxu0 0.0
  %1083 = vmatpush1.xpose.msra.mxu0 0.0
  %1084 = vmatprep.subr.mxu0 0.0
  %1085 = vmatpush1.xpose.msra.mxu0 0.0
  %1086 = vmatprep.subr.mxu0 0.0
  %1087 = vmatpush1.xpose.msra.mxu0 0.0
  %1088 = vmatprep.subr.mxu0 0.0
  %1089 = vmatpush1.xpose.msra.mxu0 0.0
  %1090 = vmatprep.subr.mxu0 0.0
  %1091 = vmatpush1.xpose.msra.mxu0 0.0
  %1092 = vmatprep.subr.mxu0 0.0
  %1093 = vmatpush1.xpose.msra.mxu0 0.0
  %1094 = vmatprep.subr.mxu0 0.0
  %1095 = vmatpush1.xpose.msra.mxu0 0.0
  %1096 = vmatprep.subr.mxu0 0.0
  %1097 = vmatpush1.xpose.msra.mxu0 0.0
  %1098 = vmatprep.subr.mxu0 0.0
  %1099 = vmatpush1.xpose.msra.mxu0 0.0
  %1100 = vmatprep.subr.mxu0 0.0
  %1101 = vmatpush1.xpose.msra.mxu0 0.0
  %1102 = vmatprep.subr.mxu0 0.0
  %1103 = vmatpush1.xpose.msra.mxu0 0.0
  %1104 = vmatprep.subr.mxu0 0.0
  %1105 = vmatpush1.xpose.msra.mxu0 0.0
  %1106 = vmatprep.mubr.f32.mxu0 0.0
  %1107 = vmatmul.mubr.f32.gmra.mrb[0].mxu0 %v978
  %v1108 = vpop.f32.mrb[0].mxu0
  %v1109 = vadd.f32 %v913, %v1108
  %v1110 = vpop.f32.mrb[0].mxu0
  %1111 = vmatprep.mubr.f32.mxu0 0.0
  %1112 = vmatmul.mubr.f32.gmra.mrb[0].mxu0 %v980
  %v1113 = vpop.f32.mrb[0].mxu0
  %v1114 = vadd.f32 %v914, %v1113
  %v1115 = vpop.f32.mrb[0].mxu0
  %1116 = vmatprep.mubr.f32.mxu0 0.0
  %1117 = vmatmul.mubr.f32.gmra.mrb[0].mxu0 %v982
  %v1118 = vpop.f32.mrb[0].mxu0
  %v1119 = vadd.f32 %v915, %v1118
  %v1120 = vpop.f32.mrb[0].mxu0
  %1121 = vmatprep.mubr.f32.mxu0 0.0
  %1122 = vmatmul.mubr.f32.gmra.mrb[0].mxu0 %v984
  %v1123 = vpop.f32.mrb[0].mxu0
  %v1124 = vadd.f32 %v916, %v1123
  %v1125 = vpop.f32.mrb[0].mxu0
  %1126 = vmatprep.mubr.f32.mxu0 0.0
  %1127 = vmatmul.mubr.f32.gmra.mrb[0].mxu0 %v986
  %v1128 = vpop.f32.mrb[0].mxu0
  %v1129 = vadd.f32 %v917, %v1128
  %v1130 = vpop.f32.mrb[0].mxu0
  %1131 = vmatprep.mubr.f32.mxu0 0.0
  %1132 = vmatmul.mubr.f32.gmra.mrb[0].mxu0 %v988
  %v1133 = vpop.f32.mrb[0].mxu0
  %v1134 = vadd.f32 %v918, %v1133
  %v1135 = vpop.f32.mrb[0].mxu0
  %1136 = vmatprep.mubr.f32.mxu0 0.0
  %1137 = vmatmul.mubr.f32.gmra.mrb[0].mxu0 %v990
  %v1138 = vpop.f32.mrb[0].mxu0
  %v1139 = vadd.f32 %v919, %v1138
  %v1140 = vpop.f32.mrb[0].mxu0
  %1141 = vmatprep.mubr.f32.mxu0 0.0
  %1142 = vmatmul.mubr.f32.gmra.mrb[0].mxu0 %v992
  %v1143 = vpop.f32.mrb[0].mxu0
  %v1144 = vadd.f32 %v920, %v1143
  %v1145 = vpop.f32.mrb[0].mxu0
  %1146 = vmatprep.mubr.f32.mxu0 0.0
  %1147 = vmatmul.mubr.f32.gmra.mrb[0].mxu0 %v994
  %v1148 = vpop.f32.mrb[0].mxu0
  %v1149 = vadd.f32 %v921, %v1148
  %v1150 = vpop.f32.mrb[0].mxu0
  %1151 = vmatprep.mubr.f32.mxu0 0.0
  %1152 = vmatmul.mubr.f32.gmra.mrb[0].mxu0 %v996
  %v1153 = vpop.f32.mrb[0].mxu0
  %v1154 = vadd.f32 %v922, %v1153
  %v1155 = vpop.f32.mrb[0].mxu0
  %1156 = vmatprep.mubr.f32.mxu0 0.0
  %1157 = vmatmul.mubr.f32.gmra.mrb[0].mxu0 %v998
  %v1158 = vpop.f32.mrb[0].mxu0
  %v1159 = vadd.f32 %v923, %v1158
  %v1160 = vpop.f32.mrb[0].mxu0
  %1161 = vmatprep.mubr.f32.mxu0 0.0
  %1162 = vmatmul.mubr.f32.gmra.mrb[0].mxu0 %v1000
  %v1163 = vpop.f32.mrb[0].mxu0
  %v1164 = vadd.f32 %v924, %v1163
  %v1165 = vpop.f32.mrb[0].mxu0
  %1166 = vmatprep.mubr.f32.mxu0 0.0
  %1167 = vmatmul.mubr.f32.gmra.mrb[0].mxu0 %v1002
  %v1168 = vpop.f32.mrb[0].mxu0
  %v1169 = vadd.f32 %v925, %v1168
  %v1170 = vpop.f32.mrb[0].mxu0
  %1171 = vmatprep.mubr.f32.mxu0 0.0
  %1172 = vmatmul.mubr.f32.gmra.mrb[0].mxu0 %v1004
  %v1173 = vpop.f32.mrb[0].mxu0
  %v1174 = vadd.f32 %v926, %v1173
  %v1175 = vpop.f32.mrb[0].mxu0
  %1176 = vmatprep.mubr.f32.mxu0 0.0
  %1177 = vmatmul.mubr.f32.gmra.mrb[0].mxu0 %v1006
  %v1178 = vpop.f32.mrb[0].mxu0
  %v1179 = vadd.f32 %v927, %v1178
  %v1180 = vpop.f32.mrb[0].mxu0
  %1181 = vmatprep.mubr.f32.mxu0 0.0
  %1182 = vmatmul.mubr.f32.gmra.mrb[0].mxu0 %v1008
  %v1183 = vpop.f32.mrb[0].mxu0
  %v1184 = vadd.f32 %v928, %v1183
  %v1185 = vpop.f32.mrb[0].mxu0
  %1186 = vdwg.mxu0
  %1187 = vmax.xlane.f32.xlu0 %v1109
  %v1188 = vpop.xlane.xlu0 %1187
  %1189 = vmax.xlane.f32.xlu0 %v1114
  %v1190 = vpop.xlane.xlu0 %1189
  %1191 = vmax.xlane.f32.xlu0 %v1119
  %v1192 = vpop.xlane.xlu0 %1191
  %1193 = vmax.xlane.f32.xlu0 %v1124
  %v1194 = vpop.xlane.xlu0 %1193
  %1195 = vmax.xlane.f32.xlu0 %v1129
  %v1196 = vpop.xlane.xlu0 %1195
  %1197 = vmax.xlane.f32.xlu0 %v1134
  %v1198 = vpop.xlane.xlu0 %1197
  %1199 = vmax.xlane.f32.xlu0 %v1139
  %v1200 = vpop.xlane.xlu0 %1199
  %1201 = vmax.xlane.f32.xlu0 %v1144
  %v1202 = vpop.xlane.xlu0 %1201
  %1203 = vmax.xlane.f32.xlu0 %v1149
  %v1204 = vpop.xlane.xlu0 %1203
  %1205 = vmax.xlane.f32.xlu0 %v1154
  %v1206 = vpop.xlane.xlu0 %1205
  %1207 = vmax.xlane.f32.xlu0 %v1159
  %v1208 = vpop.xlane.xlu0 %1207
  %1209 = vmax.xlane.f32.xlu0 %v1164
  %v1210 = vpop.xlane.xlu0 %1209
  %1211 = vmax.xlane.f32.xlu0 %v1169
  %v1212 = vpop.xlane.xlu0 %1211
  %1213 = vmax.xlane.f32.xlu0 %v1174
  %v1214 = vpop.xlane.xlu0 %1213
  %1215 = vmax.xlane.f32.xlu0 %v1179
  %v1216 = vpop.xlane.xlu0 %1215
  %1217 = vmax.xlane.f32.xlu0 %v1184
  %v1218 = vpop.xlane.xlu0 %1217
  %v1219 = vsub.f32 %v1109, %v1188
  %v1220 = vsub.f32 %v1114, %v1190
  %v1221 = vsub.f32 %v1119, %v1192
  %v1222 = vsub.f32 %v1124, %v1194
  %v1223 = vsub.f32 %v1129, %v1196
  %v1224 = vsub.f32 %v1134, %v1198
  %v1225 = vsub.f32 %v1139, %v1200
  %v1226 = vsub.f32 %v1144, %v1202
  %v1227 = vsub.f32 %v1149, %v1204
  %v1228 = vsub.f32 %v1154, %v1206
  %v1229 = vsub.f32 %v1159, %v1208
  %v1230 = vsub.f32 %v1164, %v1210
  %v1231 = vsub.f32 %v1169, %v1212
  %v1232 = vsub.f32 %v1174, %v1214
  %v1233 = vsub.f32 %v1179, %v1216
  %v1234 = vsub.f32 %v1184, %v1218
  %v1235 = vmul.f32 %v1219, 1.442695
  %v1236 = vpow.pop %v1235
  %v1237 = vmul.f32 %v1220, 1.442695
  %v1238 = vpow.pop %v1237
  %v1239 = vmul.f32 %v1221, 1.442695
  %v1240 = vpow.pop %v1239
  %v1241 = vmul.f32 %v1222, 1.442695
  %v1242 = vpow.pop %v1241
  %v1243 = vmul.f32 %v1223, 1.442695
  %v1244 = vpow.pop %v1243
  %v1245 = vmul.f32 %v1224, 1.442695
  %v1246 = vpow.pop %v1245
  %v1247 = vmul.f32 %v1225, 1.442695
  %v1248 = vpow.pop %v1247
  %v1249 = vmul.f32 %v1226, 1.442695
  %v1250 = vpow.pop %v1249
  %v1251 = vmul.f32 %v1227, 1.442695
  %v1252 = vpow.pop %v1251
  %v1253 = vmul.f32 %v1228, 1.442695
  %v1254 = vpow.pop %v1253
  %v1255 = vmul.f32 %v1229, 1.442695
  %v1256 = vpow.pop %v1255
  %v1257 = vmul.f32 %v1230, 1.442695
  %v1258 = vpow.pop %v1257
  %v1259 = vmul.f32 %v1231, 1.442695
  %v1260 = vpow.pop %v1259
  %v1261 = vmul.f32 %v1232, 1.442695
  %v1262 = vpow.pop %v1261
  %v1263 = vmul.f32 %v1233, 1.442695
  %v1264 = vpow.pop %v1263
  %v1265 = vmul.f32 %v1234, 1.442695
  %v1266 = vpow.pop %v1265
  %1267 = vadd.xlane.f32.xlu0 %v1236
  %v1268 = vpop.xlane.xlu0 %1267
  %1269 = vadd.xlane.f32.xlu0 %v1238
  %v1270 = vpop.xlane.xlu0 %1269
  %1271 = vadd.xlane.f32.xlu0 %v1240
  %v1272 = vpop.xlane.xlu0 %1271
  %1273 = vadd.xlane.f32.xlu0 %v1242
  %v1274 = vpop.xlane.xlu0 %1273
  %1275 = vadd.xlane.f32.xlu0 %v1244
  %v1276 = vpop.xlane.xlu0 %1275
  %1277 = vadd.xlane.f32.xlu0 %v1246
  %v1278 = vpop.xlane.xlu0 %1277
  %1279 = vadd.xlane.f32.xlu0 %v1248
  %v1280 = vpop.xlane.xlu0 %1279
  %1281 = vadd.xlane.f32.xlu0 %v1250
  %v1282 = vpop.xlane.xlu0 %1281
  %1283 = vadd.xlane.f32.xlu0 %v1252
  %v1284 = vpop.xlane.xlu0 %1283
  %1285 = vadd.xlane.f32.xlu0 %v1254
  %v1286 = vpop.xlane.xlu0 %1285
  %1287 = vadd.xlane.f32.xlu0 %v1256
  %v1288 = vpop.xlane.xlu0 %1287
  %1289 = vadd.xlane.f32.xlu0 %v1258
  %v1290 = vpop.xlane.xlu0 %1289
  %1291 = vadd.xlane.f32.xlu0 %v1260
  %v1292 = vpop.xlane.xlu0 %1291
  %1293 = vadd.xlane.f32.xlu0 %v1262
  %v1294 = vpop.xlane.xlu0 %1293
  %1295 = vadd.xlane.f32.xlu0 %v1264
  %v1296 = vpop.xlane.xlu0 %1295
  %1297 = vadd.xlane.f32.xlu0 %v1266
  %v1298 = vpop.xlane.xlu0 %1297
  %v1299 = vrcp.pop %v1268
  %v1300 = vmul.f32 1.0, %v1299
  %v1301 = vrcp.pop %v1270
  %v1302 = vmul.f32 1.0, %v1301
  %v1303 = vrcp.pop %v1272
  %v1304 = vmul.f32 1.0, %v1303
  %v1305 = vrcp.pop %v1274
  %v1306 = vmul.f32 1.0, %v1305
  %v1307 = vrcp.pop %v1276
  %v1308 = vmul.f32 1.0, %v1307
  %v1309 = vrcp.pop %v1278
  %v1310 = vmul.f32 1.0, %v1309
  %v1311 = vrcp.pop %v1280
  %v1312 = vmul.f32 1.0, %v1311
  %v1313 = vrcp.pop %v1282
  %v1314 = vmul.f32 1.0, %v1313
  %v1315 = vrcp.pop %v1284
  %v1316 = vmul.f32 1.0, %v1315
  %v1317 = vrcp.pop %v1286
  %v1318 = vmul.f32 1.0, %v1317
  %v1319 = vrcp.pop %v1288
  %v1320 = vmul.f32 1.0, %v1319
  %v1321 = vrcp.pop %v1290
  %v1322 = vmul.f32 1.0, %v1321
  %v1323 = vrcp.pop %v1292
  %v1324 = vmul.f32 1.0, %v1323
  %v1325 = vrcp.pop %v1294
  %v1326 = vmul.f32 1.0, %v1325
  %v1327 = vrcp.pop %v1296
  %v1328 = vmul.f32 1.0, %v1327
  %v1329 = vrcp.pop %v1298
  %v1330 = vmul.f32 1.0, %v1329
  %v1331 = vmul.f32 %v1236, %v1300
  %v1332 = vmul.f32 %v1238, %v1302
  %v1333 = vmul.f32 %v1240, %v1304
  %v1334 = vmul.f32 %v1242, %v1306
  %v1335 = vmul.f32 %v1244, %v1308
  %v1336 = vmul.f32 %v1246, %v1310
  %v1337 = vmul.f32 %v1248, %v1312
  %v1338 = vmul.f32 %v1250, %v1314
  %v1339 = vmul.f32 %v1252, %v1316
  %v1340 = vmul.f32 %v1254, %v1318
  %v1341 = vmul.f32 %v1256, %v1320
  %v1342 = vmul.f32 %v1258, %v1322
  %v1343 = vmul.f32 %v1260, %v1324
  %v1344 = vmul.f32 %v1262, %v1326
  %v1345 = vmul.f32 %v1264, %v1328
  %v1346 = vmul.f32 %v1266, %v1330
  %1347 = vrot.lane.b32.xlu0 %v881, 112
  %v1348 = vpop.permute.xlu0 %1347
  %1349 = vrot.lane.b32.xlu0 %v882, 112
  %v1350 = vpop.permute.xlu0 %1349
  %1351 = vrot.lane.b32.xlu0 %v883, 112
  %v1352 = vpop.permute.xlu0 %1351
  %1353 = vrot.lane.b32.xlu0 %v884, 112
  %v1354 = vpop.permute.xlu0 %1353
  %1355 = vrot.lane.b32.xlu0 %v885, 112
  %v1356 = vpop.permute.xlu0 %1355
  %1357 = vrot.lane.b32.xlu0 %v886, 112
  %v1358 = vpop.permute.xlu0 %1357
  %1359 = vrot.lane.b32.xlu0 %v887, 112
  %v1360 = vpop.permute.xlu0 %1359
  %1361 = vrot.lane.b32.xlu0 %v888, 112
  %v1362 = vpop.permute.xlu0 %1361
  %1363 = vrot.lane.b32.xlu0 %v889, 112
  %v1364 = vpop.permute.xlu0 %1363
  %1365 = vrot.lane.b32.xlu0 %v890, 112
  %v1366 = vpop.permute.xlu0 %1365
  %1367 = vrot.lane.b32.xlu0 %v891, 112
  %v1368 = vpop.permute.xlu0 %1367
  %1369 = vrot.lane.b32.xlu0 %v892, 112
  %v1370 = vpop.permute.xlu0 %1369
  %1371 = vrot.lane.b32.xlu0 %v893, 112
  %v1372 = vpop.permute.xlu0 %1371
  %1373 = vrot.lane.b32.xlu0 %v894, 112
  %v1374 = vpop.permute.xlu0 %1373
  %1375 = vrot.lane.b32.xlu0 %v895, 112
  %v1376 = vpop.permute.xlu0 %1375
  %1377 = vrot.lane.b32.xlu0 %v896, 112
  %v1378 = vpop.permute.xlu0 %1377
  %1379 = vrot.lane.b32.xlu0 %v881, 48
  %v1380 = vpop.permute.xlu0 %1379
  %1381 = vrot.lane.b32.xlu0 %v882, 48
  %v1382 = vpop.permute.xlu0 %1381
  %1383 = vrot.lane.b32.xlu0 %v883, 48
  %v1384 = vpop.permute.xlu0 %1383
  %1385 = vrot.lane.b32.xlu0 %v884, 48
  %v1386 = vpop.permute.xlu0 %1385
  %1387 = vrot.lane.b32.xlu0 %v885, 48
  %v1388 = vpop.permute.xlu0 %1387
  %1389 = vrot.lane.b32.xlu0 %v886, 48
  %v1390 = vpop.permute.xlu0 %1389
  %1391 = vrot.lane.b32.xlu0 %v887, 48
  %v1392 = vpop.permute.xlu0 %1391
  %1393 = vrot.lane.b32.xlu0 %v888, 48
  %v1394 = vpop.permute.xlu0 %1393
  %1395 = vrot.lane.b32.xlu0 %v889, 48
  %v1396 = vpop.permute.xlu0 %1395
  %1397 = vrot.lane.b32.xlu0 %v890, 48
  %v1398 = vpop.permute.xlu0 %1397
  %1399 = vrot.lane.b32.xlu0 %v891, 48
  %v1400 = vpop.permute.xlu0 %1399
  %1401 = vrot.lane.b32.xlu0 %v892, 48
  %v1402 = vpop.permute.xlu0 %1401
  %1403 = vrot.lane.b32.xlu0 %v893, 48
  %v1404 = vpop.permute.xlu0 %1403
  %1405 = vrot.lane.b32.xlu0 %v894, 48
  %v1406 = vpop.permute.xlu0 %1405
  %1407 = vrot.lane.b32.xlu0 %v895, 48
  %v1408 = vpop.permute.xlu0 %1407
  %1409 = vrot.lane.b32.xlu0 %v896, 48
  %v1410 = vpop.permute.xlu0 %1409
  %v1411 = vsel %vm977, %v1348, 0
  %v1413 = vsel %vm977, %v1350, 0
  %v1415 = vsel %vm977, %v1352, 0
  %v1417 = vsel %vm977, %v1354, 0
  %v1419 = vsel %vm977, %v1356, 0
  %v1421 = vsel %vm977, %v1358, 0
  %v1423 = vsel %vm977, %v1360, 0
  %v1425 = vsel %vm977, %v1362, 0
  %v1427 = vsel %vm977, %v1364, 0
  %v1429 = vsel %vm977, %v1366, 0
  %v1431 = vsel %vm977, %v1368, 0
  %v1433 = vsel %vm977, %v1370, 0
  %v1435 = vsel %vm977, %v1372, 0
  %v1437 = vsel %vm977, %v1374, 0
  %v1439 = vsel %vm977, %v1376, 0
  %v1441 = vsel %vm977, %v1378, 0
  %v1443 = vsel %vm977, %v1380, 0
  %v1445 = vsel %vm977, %v1382, 0
  %v1447 = vsel %vm977, %v1384, 0
  %v1449 = vsel %vm977, %v1386, 0
  %v1451 = vsel %vm977, %v1388, 0
  %v1453 = vsel %vm977, %v1390, 0
  %v1455 = vsel %vm977, %v1392, 0
  %v1457 = vsel %vm977, %v1394, 0
  %v1459 = vsel %vm977, %v1396, 0
  %v1461 = vsel %vm977, %v1398, 0
  %v1463 = vsel %vm977, %v1400, 0
  %v1465 = vsel %vm977, %v1402, 0
  %v1467 = vsel %vm977, %v1404, 0
  %v1469 = vsel %vm977, %v1406, 0
  %v1471 = vsel %vm977, %v1408, 0
  %v1473 = vsel %vm977, %v1410, 0
  %1475 = vmatprep.subr.mxu0 0.0
  %1476 = vmatpush1.xpose.msra.mxu0 %v1443
  %1477 = vmatprep.subr.mxu0 0.0
  %1478 = vmatpush1.xpose.msra.mxu0 %v1445
  %1479 = vmatprep.subr.mxu0 0.0
  %1480 = vmatpush1.xpose.msra.mxu0 %v1447
  %1481 = vmatprep.subr.mxu0 0.0
  %1482 = vmatpush1.xpose.msra.mxu0 %v1449
  %1483 = vmatprep.subr.mxu0 0.0
  %1484 = vmatpush1.xpose.msra.mxu0 %v1451
  %1485 = vmatprep.subr.mxu0 0.0
  %1486 = vmatpush1.xpose.msra.mxu0 %v1453
  %1487 = vmatprep.subr.mxu0 0.0
  %1488 = vmatpush1.xpose.msra.mxu0 %v1455
  %1489 = vmatprep.subr.mxu0 0.0
  %1490 = vmatpush1.xpose.msra.mxu0 %v1457
  %1491 = vmatprep.subr.mxu0 0.0
  %1492 = vmatpush1.xpose.msra.mxu0 %v1459
  %1493 = vmatprep.subr.mxu0 0.0
  %1494 = vmatpush1.xpose.msra.mxu0 %v1461
  %1495 = vmatprep.subr.mxu0 0.0
  %1496 = vmatpush1.xpose.msra.mxu0 %v1463
  %1497 = vmatprep.subr.mxu0 0.0
  %1498 = vmatpush1.xpose.msra.mxu0 %v1465
  %1499 = vmatprep.subr.mxu0 0.0
  %1500 = vmatpush1.xpose.msra.mxu0 %v1467
  %1501 = vmatprep.subr.mxu0 0.0
  %1502 = vmatpush1.xpose.msra.mxu0 %v1469
  %1503 = vmatprep.subr.mxu0 0.0
  %1504 = vmatpush1.xpose.msra.mxu0 %v1471
  %1505 = vmatprep.subr.mxu0 0.0
  %1506 = vmatpush1.xpose.msra.mxu0 %v1473
  %1507 = vmatprep.subr.mxu0 0.0
  %1508 = vmatpush1.xpose.msra.mxu0 0.0
  %1509 = vmatprep.subr.mxu0 0.0
  %1510 = vmatpush1.xpose.msra.mxu0 0.0
  %1511 = vmatprep.subr.mxu0 0.0
  %1512 = vmatpush1.xpose.msra.mxu0 0.0
  %1513 = vmatprep.subr.mxu0 0.0
  %1514 = vmatpush1.xpose.msra.mxu0 0.0
  %1515 = vmatprep.subr.mxu0 0.0
  %1516 = vmatpush1.xpose.msra.mxu0 0.0
  %1517 = vmatprep.subr.mxu0 0.0
  %1518 = vmatpush1.xpose.msra.mxu0 0.0
  %1519 = vmatprep.subr.mxu0 0.0
  %1520 = vmatpush1.xpose.msra.mxu0 0.0
  %1521 = vmatprep.subr.mxu0 0.0
  %1522 = vmatpush1.xpose.msra.mxu0 0.0
  %1523 = vmatprep.subr.mxu0 0.0
  %1524 = vmatpush1.xpose.msra.mxu0 0.0
  %1525 = vmatprep.subr.mxu0 0.0
  %1526 = vmatpush1.xpose.msra.mxu0 0.0
  %1527 = vmatprep.subr.mxu0 0.0
  %1528 = vmatpush1.xpose.msra.mxu0 0.0
  %1529 = vmatprep.subr.mxu0 0.0
  %1530 = vmatpush1.xpose.msra.mxu0 0.0
  %1531 = vmatprep.subr.mxu0 0.0
  %1532 = vmatpush1.xpose.msra.mxu0 0.0
  %1533 = vmatprep.subr.mxu0 0.0
  %1534 = vmatpush1.xpose.msra.mxu0 0.0
  %1535 = vmatprep.subr.mxu0 0.0
  %1536 = vmatpush1.xpose.msra.mxu0 0.0
  %1537 = vmatprep.subr.mxu0 0.0
  %1538 = vmatpush1.xpose.msra.mxu0 0.0
  %1539 = vmatprep.mubr.f32.mxu0 0.0
  %1540 = vmatmul.mubr.f32.gmra.mrb[0].mxu0 %v1411
  %v1541 = vpop.f32.mrb[0].mxu0
  %v1542 = vadd.f32 %v913, %v1541
  %v1543 = vpop.f32.mrb[0].mxu0
  %1544 = vmatprep.mubr.f32.mxu0 0.0
  %1545 = vmatmul.mubr.f32.gmra.mrb[0].mxu0 %v1413
  %v1546 = vpop.f32.mrb[0].mxu0
  %v1547 = vadd.f32 %v914, %v1546
  %v1548 = vpop.f32.mrb[0].mxu0
  %1549 = vmatprep.mubr.f32.mxu0 0.0
  %1550 = vmatmul.mubr.f32.gmra.mrb[0].mxu0 %v1415
  %v1551 = vpop.f32.mrb[0].mxu0
  %v1552 = vadd.f32 %v915, %v1551
  %v1553 = vpop.f32.mrb[0].mxu0
  %1554 = vmatprep.mubr.f32.mxu0 0.0
  %1555 = vmatmul.mubr.f32.gmra.mrb[0].mxu0 %v1417
  %v1556 = vpop.f32.mrb[0].mxu0
  %v1557 = vadd.f32 %v916, %v1556
  %v1558 = vpop.f32.mrb[0].mxu0
  %1559 = vmatprep.mubr.f32.mxu0 0.0
  %1560 = vmatmul.mubr.f32.gmra.mrb[0].mxu0 %v1419
  %v1561 = vpop.f32.mrb[0].mxu0
  %v1562 = vadd.f32 %v917, %v1561
  %v1563 = vpop.f32.mrb[0].mxu0
  %1564 = vmatprep.mubr.f32.mxu0 0.0
  %1565 = vmatmul.mubr.f32.gmra.mrb[0].mxu0 %v1421
  %v1566 = vpop.f32.mrb[0].mxu0
  %v1567 = vadd.f32 %v918, %v1566
  %v1568 = vpop.f32.mrb[0].mxu0
  %1569 = vmatprep.mubr.f32.mxu0 0.0
  %1570 = vmatmul.mubr.f32.gmra.mrb[0].mxu0 %v1423
  %v1571 = vpop.f32.mrb[0].mxu0
  %v1572 = vadd.f32 %v919, %v1571
  %v1573 = vpop.f32.mrb[0].mxu0
  %1574 = vmatprep.mubr.f32.mxu0 0.0
  %1575 = vmatmul.mubr.f32.gmra.mrb[0].mxu0 %v1425
  %v1576 = vpop.f32.mrb[0].mxu0
  %v1577 = vadd.f32 %v920, %v1576
  %v1578 = vpop.f32.mrb[0].mxu0
  %1579 = vmatprep.mubr.f32.mxu0 0.0
  %1580 = vmatmul.mubr.f32.gmra.mrb[0].mxu0 %v1427
  %v1581 = vpop.f32.mrb[0].mxu0
  %v1582 = vadd.f32 %v921, %v1581
  %v1583 = vpop.f32.mrb[0].mxu0
  %1584 = vmatprep.mubr.f32.mxu0 0.0
  %1585 = vmatmul.mubr.f32.gmra.mrb[0].mxu0 %v1429
  %v1586 = vpop.f32.mrb[0].mxu0
  %v1587 = vadd.f32 %v922, %v1586
  %v1588 = vpop.f32.mrb[0].mxu0
  %1589 = vmatprep.mubr.f32.mxu0 0.0
  %1590 = vmatmul.mubr.f32.gmra.mrb[0].mxu0 %v1431
  %v1591 = vpop.f32.mrb[0].mxu0
  %v1592 = vadd.f32 %v923, %v1591
  %v1593 = vpop.f32.mrb[0].mxu0
  %1594 = vmatprep.mubr.f32.mxu0 0.0
  %1595 = vmatmul.mubr.f32.gmra.mrb[0].mxu0 %v1433
  %v1596 = vpop.f32.mrb[0].mxu0
  %v1597 = vadd.f32 %v924, %v1596
  %v1598 = vpop.f32.mrb[0].mxu0
  %1599 = vmatprep.mubr.f32.mxu0 0.0
  %1600 = vmatmul.mubr.f32.gmra.mrb[0].mxu0 %v1435
  %v1601 = vpop.f32.mrb[0].mxu0
  %v1602 = vadd.f32 %v925, %v1601
  %v1603 = vpop.f32.mrb[0].mxu0
  %1604 = vmatprep.mubr.f32.mxu0 0.0
  %1605 = vmatmul.mubr.f32.gmra.mrb[0].mxu0 %v1437
  %v1606 = vpop.f32.mrb[0].mxu0
  %v1607 = vadd.f32 %v926, %v1606
  %v1608 = vpop.f32.mrb[0].mxu0
  %1609 = vmatprep.mubr.f32.mxu0 0.0
  %1610 = vmatmul.mubr.f32.gmra.mrb[0].mxu0 %v1439
  %v1611 = vpop.f32.mrb[0].mxu0
  %v1612 = vadd.f32 %v927, %v1611
  %v1613 = vpop.f32.mrb[0].mxu0
  %1614 = vmatprep.mubr.f32.mxu0 0.0
  %1615 = vmatmul.mubr.f32.gmra.mrb[0].mxu0 %v1441
  %v1616 = vpop.f32.mrb[0].mxu0
  %v1617 = vadd.f32 %v928, %v1616
  %v1618 = vpop.f32.mrb[0].mxu0
  %1619 = vdwg.mxu0
  %1620 = vmax.xlane.f32.xlu0 %v1542
  %v1621 = vpop.xlane.xlu0 %1620
  %1622 = vmax.xlane.f32.xlu0 %v1547
  %v1623 = vpop.xlane.xlu0 %1622
  %1624 = vmax.xlane.f32.xlu0 %v1552
  %v1625 = vpop.xlane.xlu0 %1624
  %1626 = vmax.xlane.f32.xlu0 %v1557
  %v1627 = vpop.xlane.xlu0 %1626
  %1628 = vmax.xlane.f32.xlu0 %v1562
  %v1629 = vpop.xlane.xlu0 %1628
  %1630 = vmax.xlane.f32.xlu0 %v1567
  %v1631 = vpop.xlane.xlu0 %1630
  %1632 = vmax.xlane.f32.xlu0 %v1572
  %v1633 = vpop.xlane.xlu0 %1632
  %1634 = vmax.xlane.f32.xlu0 %v1577
  %v1635 = vpop.xlane.xlu0 %1634
  %1636 = vmax.xlane.f32.xlu0 %v1582
  %v1637 = vpop.xlane.xlu0 %1636
  %1638 = vmax.xlane.f32.xlu0 %v1587
  %v1639 = vpop.xlane.xlu0 %1638
  %1640 = vmax.xlane.f32.xlu0 %v1592
  %v1641 = vpop.xlane.xlu0 %1640
  %1642 = vmax.xlane.f32.xlu0 %v1597
  %v1643 = vpop.xlane.xlu0 %1642
  %1644 = vmax.xlane.f32.xlu0 %v1602
  %v1645 = vpop.xlane.xlu0 %1644
  %1646 = vmax.xlane.f32.xlu0 %v1607
  %v1647 = vpop.xlane.xlu0 %1646
  %1648 = vmax.xlane.f32.xlu0 %v1612
  %v1649 = vpop.xlane.xlu0 %1648
  %1650 = vmax.xlane.f32.xlu0 %v1617
  %v1651 = vpop.xlane.xlu0 %1650
  %v1652 = vsub.f32 %v1542, %v1621
  %v1653 = vsub.f32 %v1547, %v1623
  %v1654 = vsub.f32 %v1552, %v1625
  %v1655 = vsub.f32 %v1557, %v1627
  %v1656 = vsub.f32 %v1562, %v1629
  %v1657 = vsub.f32 %v1567, %v1631
  %v1658 = vsub.f32 %v1572, %v1633
  %v1659 = vsub.f32 %v1577, %v1635
  %v1660 = vsub.f32 %v1582, %v1637
  %v1661 = vsub.f32 %v1587, %v1639
  %v1662 = vsub.f32 %v1592, %v1641
  %v1663 = vsub.f32 %v1597, %v1643
  %v1664 = vsub.f32 %v1602, %v1645
  %v1665 = vsub.f32 %v1607, %v1647
  %v1666 = vsub.f32 %v1612, %v1649
  %v1667 = vsub.f32 %v1617, %v1651
  %v1668 = vmul.f32 %v1652, 1.442695
  %v1669 = vpow.pop %v1668
  %v1670 = vmul.f32 %v1653, 1.442695
  %v1671 = vpow.pop %v1670
  %v1672 = vmul.f32 %v1654, 1.442695
  %v1673 = vpow.pop %v1672
  %v1674 = vmul.f32 %v1655, 1.442695
  %v1675 = vpow.pop %v1674
  %v1676 = vmul.f32 %v1656, 1.442695
  %v1677 = vpow.pop %v1676
  %v1678 = vmul.f32 %v1657, 1.442695
  %v1679 = vpow.pop %v1678
  %v1680 = vmul.f32 %v1658, 1.442695
  %v1681 = vpow.pop %v1680
  %v1682 = vmul.f32 %v1659, 1.442695
  %v1683 = vpow.pop %v1682
  %v1684 = vmul.f32 %v1660, 1.442695
  %v1685 = vpow.pop %v1684
  %v1686 = vmul.f32 %v1661, 1.442695
  %v1687 = vpow.pop %v1686
  %v1688 = vmul.f32 %v1662, 1.442695
  %v1689 = vpow.pop %v1688
  %v1690 = vmul.f32 %v1663, 1.442695
  %v1691 = vpow.pop %v1690
  %v1692 = vmul.f32 %v1664, 1.442695
  %v1693 = vpow.pop %v1692
  %v1694 = vmul.f32 %v1665, 1.442695
  %v1695 = vpow.pop %v1694
  %v1696 = vmul.f32 %v1666, 1.442695
  %v1697 = vpow.pop %v1696
  %v1698 = vmul.f32 %v1667, 1.442695
  %v1699 = vpow.pop %v1698
  %1700 = vadd.xlane.f32.xlu0 %v1669
  %v1701 = vpop.xlane.xlu0 %1700
  %1702 = vadd.xlane.f32.xlu0 %v1671
  %v1703 = vpop.xlane.xlu0 %1702
  %1704 = vadd.xlane.f32.xlu0 %v1673
  %v1705 = vpop.xlane.xlu0 %1704
  %1706 = vadd.xlane.f32.xlu0 %v1675
  %v1707 = vpop.xlane.xlu0 %1706
  %1708 = vadd.xlane.f32.xlu0 %v1677
  %v1709 = vpop.xlane.xlu0 %1708
  %1710 = vadd.xlane.f32.xlu0 %v1679
  %v1711 = vpop.xlane.xlu0 %1710
  %1712 = vadd.xlane.f32.xlu0 %v1681
  %v1713 = vpop.xlane.xlu0 %1712
  %1714 = vadd.xlane.f32.xlu0 %v1683
  %v1715 = vpop.xlane.xlu0 %1714
  %1716 = vadd.xlane.f32.xlu0 %v1685
  %v1717 = vpop.xlane.xlu0 %1716
  %1718 = vadd.xlane.f32.xlu0 %v1687
  %v1719 = vpop.xlane.xlu0 %1718
  %1720 = vadd.xlane.f32.xlu0 %v1689
  %v1721 = vpop.xlane.xlu0 %1720
  %1722 = vadd.xlane.f32.xlu0 %v1691
  %v1723 = vpop.xlane.xlu0 %1722
  %1724 = vadd.xlane.f32.xlu0 %v1693
  %v1725 = vpop.xlane.xlu0 %1724
  %1726 = vadd.xlane.f32.xlu0 %v1695
  %v1727 = vpop.xlane.xlu0 %1726
  %1728 = vadd.xlane.f32.xlu0 %v1697
  %v1729 = vpop.xlane.xlu0 %1728
  %1730 = vadd.xlane.f32.xlu0 %v1699
  %v1731 = vpop.xlane.xlu0 %1730
  %v1732 = vrcp.pop %v1701
  %v1733 = vmul.f32 1.0, %v1732
  %v1734 = vrcp.pop %v1703
  %v1735 = vmul.f32 1.0, %v1734
  %v1736 = vrcp.pop %v1705
  %v1737 = vmul.f32 1.0, %v1736
  %v1738 = vrcp.pop %v1707
  %v1739 = vmul.f32 1.0, %v1738
  %v1740 = vrcp.pop %v1709
  %v1741 = vmul.f32 1.0, %v1740
  %v1742 = vrcp.pop %v1711
  %v1743 = vmul.f32 1.0, %v1742
  %v1744 = vrcp.pop %v1713
  %v1745 = vmul.f32 1.0, %v1744
  %v1746 = vrcp.pop %v1715
  %v1747 = vmul.f32 1.0, %v1746
  %v1748 = vrcp.pop %v1717
  %v1749 = vmul.f32 1.0, %v1748
  %v1750 = vrcp.pop %v1719
  %v1751 = vmul.f32 1.0, %v1750
  %v1752 = vrcp.pop %v1721
  %v1753 = vmul.f32 1.0, %v1752
  %v1754 = vrcp.pop %v1723
  %v1755 = vmul.f32 1.0, %v1754
  %v1756 = vrcp.pop %v1725
  %v1757 = vmul.f32 1.0, %v1756
  %v1758 = vrcp.pop %v1727
  %v1759 = vmul.f32 1.0, %v1758
  %v1760 = vrcp.pop %v1729
  %v1761 = vmul.f32 1.0, %v1760
  %v1762 = vrcp.pop %v1731
  %v1763 = vmul.f32 1.0, %v1762
  %v1764 = vmul.f32 %v1669, %v1733
  %v1765 = vmul.f32 %v1671, %v1735
  %v1766 = vmul.f32 %v1673, %v1737
  %v1767 = vmul.f32 %v1675, %v1739
  %v1768 = vmul.f32 %v1677, %v1741
  %v1769 = vmul.f32 %v1679, %v1743
  %v1770 = vmul.f32 %v1681, %v1745
  %v1771 = vmul.f32 %v1683, %v1747
  %v1772 = vmul.f32 %v1685, %v1749
  %v1773 = vmul.f32 %v1687, %v1751
  %v1774 = vmul.f32 %v1689, %v1753
  %v1775 = vmul.f32 %v1691, %v1755
  %v1776 = vmul.f32 %v1693, %v1757
  %v1777 = vmul.f32 %v1695, %v1759
  %v1778 = vmul.f32 %v1697, %v1761
  %v1779 = vmul.f32 %v1699, %v1763
  %1796 = vrot.lane.b32.xlu0 %v897, 64
  %v1797 = vpop.permute.xlu0 %1796
  %1798 = vrot.lane.b32.xlu0 %v898, 64
  %v1799 = vpop.permute.xlu0 %1798
  %1800 = vrot.lane.b32.xlu0 %v899, 64
  %v1801 = vpop.permute.xlu0 %1800
  %1802 = vrot.lane.b32.xlu0 %v900, 64
  %v1803 = vpop.permute.xlu0 %1802
  %1804 = vrot.lane.b32.xlu0 %v901, 64
  %v1805 = vpop.permute.xlu0 %1804
  %1806 = vrot.lane.b32.xlu0 %v902, 64
  %v1807 = vpop.permute.xlu0 %1806
  %1808 = vrot.lane.b32.xlu0 %v903, 64
  %v1809 = vpop.permute.xlu0 %1808
  %1810 = vrot.lane.b32.xlu0 %v904, 64
  %v1811 = vpop.permute.xlu0 %1810
  %1812 = vrot.lane.b32.xlu0 %v905, 64
  %v1813 = vpop.permute.xlu0 %1812
  %1814 = vrot.lane.b32.xlu0 %v906, 64
  %v1815 = vpop.permute.xlu0 %1814
  %1816 = vrot.lane.b32.xlu0 %v907, 64
  %v1817 = vpop.permute.xlu0 %1816
  %1818 = vrot.lane.b32.xlu0 %v908, 64
  %v1819 = vpop.permute.xlu0 %1818
  %1820 = vrot.lane.b32.xlu0 %v909, 64
  %v1821 = vpop.permute.xlu0 %1820
  %1822 = vrot.lane.b32.xlu0 %v910, 64
  %v1823 = vpop.permute.xlu0 %1822
  %1824 = vrot.lane.b32.xlu0 %v911, 64
  %v1825 = vpop.permute.xlu0 %1824
  %1826 = vrot.lane.b32.xlu0 %v912, 64
  %v1827 = vpop.permute.xlu0 %1826
  %1844 = vmatprep.subr.mxu0 0.0
  %1845 = vmatpush1.msra.mxu0 %v1797
  %1846 = vmatprep.subr.mxu0 0.0
  %1847 = vmatpush1.msra.mxu0 %v1799
  %1848 = vmatprep.subr.mxu0 0.0
  %1849 = vmatpush1.msra.mxu0 %v1801
  %1850 = vmatprep.subr.mxu0 0.0
  %1851 = vmatpush1.msra.mxu0 %v1803
  %1852 = vmatprep.subr.mxu0 0.0
  %1853 = vmatpush1.msra.mxu0 %v1805
  %1854 = vmatprep.subr.mxu0 0.0
  %1855 = vmatpush1.msra.mxu0 %v1807
  %1856 = vmatprep.subr.mxu0 0.0
  %1857 = vmatpush1.msra.mxu0 %v1809
  %1858 = vmatprep.subr.mxu0 0.0
  %1859 = vmatpush1.msra.mxu0 %v1811
  %1860 = vmatprep.subr.mxu0 0.0
  %1861 = vmatpush1.msra.mxu0 %v1813
  %1862 = vmatprep.subr.mxu0 0.0
  %1863 = vmatpush1.msra.mxu0 %v1815
  %1864 = vmatprep.subr.mxu0 0.0
  %1865 = vmatpush1.msra.mxu0 %v1817
  %1866 = vmatprep.subr.mxu0 0.0
  %1867 = vmatpush1.msra.mxu0 %v1819
  %1868 = vmatprep.subr.mxu0 0.0
  %1869 = vmatpush1.msra.mxu0 %v1821
  %1870 = vmatprep.subr.mxu0 0.0
  %1871 = vmatpush1.msra.mxu0 %v1823
  %1872 = vmatprep.subr.mxu0 0.0
  %1873 = vmatpush1.msra.mxu0 %v1825
  %1874 = vmatprep.subr.mxu0 0.0
  %1875 = vmatpush1.msra.mxu0 %v1827
  %1876 = vmatprep.subr.mxu0 0.0
  %1877 = vmatpush1.msra.mxu0 0.0
  %1878 = vmatprep.subr.mxu0 0.0
  %1879 = vmatpush1.msra.mxu0 0.0
  %1880 = vmatprep.subr.mxu0 0.0
  %1881 = vmatpush1.msra.mxu0 0.0
  %1882 = vmatprep.subr.mxu0 0.0
  %1883 = vmatpush1.msra.mxu0 0.0
  %1884 = vmatprep.subr.mxu0 0.0
  %1885 = vmatpush1.msra.mxu0 0.0
  %1886 = vmatprep.subr.mxu0 0.0
  %1887 = vmatpush1.msra.mxu0 0.0
  %1888 = vmatprep.subr.mxu0 0.0
  %1889 = vmatpush1.msra.mxu0 0.0
  %1890 = vmatprep.subr.mxu0 0.0
  %1891 = vmatpush1.msra.mxu0 0.0
  %1892 = vmatprep.subr.mxu0 0.0
  %1893 = vmatpush1.msra.mxu0 0.0
  %1894 = vmatprep.subr.mxu0 0.0
  %1895 = vmatpush1.msra.mxu0 0.0
  %1896 = vmatprep.subr.mxu0 0.0
  %1897 = vmatpush1.msra.mxu0 0.0
  %1898 = vmatprep.subr.mxu0 0.0
  %1899 = vmatpush1.msra.mxu0 0.0
  %1900 = vmatprep.subr.mxu0 0.0
  %1901 = vmatpush1.msra.mxu0 0.0
  %1902 = vmatprep.subr.mxu0 0.0
  %1903 = vmatpush1.msra.mxu0 0.0
  %1904 = vmatprep.subr.mxu0 0.0
  %1905 = vmatpush1.msra.mxu0 0.0
  %1906 = vmatprep.subr.mxu0 0.0
  %1907 = vmatpush1.msra.mxu0 0.0
  %1908 = vmatprep.mubr.f32.mxu0 0.0
  %1909 = vmatmul.mubr.f32.gmra.mrb[0].mxu0 %v1764
  %v1910 = vpop.f32.mrb[0].mxu0
  %v1911 = vadd.f32 0.0, %v1910
  %v1912 = vpop.f32.mrb[0].mxu0
  %1913 = vmatprep.mubr.f32.mxu0 0.0
  %1914 = vmatmul.mubr.f32.gmra.mrb[0].mxu0 %v1765
  %v1915 = vpop.f32.mrb[0].mxu0
  %v1916 = vadd.f32 0.0, %v1915
  %v1917 = vpop.f32.mrb[0].mxu0
  %1918 = vmatprep.mubr.f32.mxu0 0.0
  %1919 = vmatmul.mubr.f32.gmra.mrb[0].mxu0 %v1766
  %v1920 = vpop.f32.mrb[0].mxu0
  %v1921 = vadd.f32 0.0, %v1920
  %v1922 = vpop.f32.mrb[0].mxu0
  %1923 = vmatprep.mubr.f32.mxu0 0.0
  %1924 = vmatmul.mubr.f32.gmra.mrb[0].mxu0 %v1767
  %v1925 = vpop.f32.mrb[0].mxu0
  %v1926 = vadd.f32 0.0, %v1925
  %v1927 = vpop.f32.mrb[0].mxu0
  %1928 = vmatprep.mubr.f32.mxu0 0.0
  %1929 = vmatmul.mubr.f32.gmra.mrb[0].mxu0 %v1768
  %v1930 = vpop.f32.mrb[0].mxu0
  %v1931 = vadd.f32 0.0, %v1930
  %v1932 = vpop.f32.mrb[0].mxu0
  %1933 = vmatprep.mubr.f32.mxu0 0.0
  %1934 = vmatmul.mubr.f32.gmra.mrb[0].mxu0 %v1769
  %v1935 = vpop.f32.mrb[0].mxu0
  %v1936 = vadd.f32 0.0, %v1935
  %v1937 = vpop.f32.mrb[0].mxu0
  %1938 = vmatprep.mubr.f32.mxu0 0.0
  %1939 = vmatmul.mubr.f32.gmra.mrb[0].mxu0 %v1770
  %v1940 = vpop.f32.mrb[0].mxu0
  %v1941 = vadd.f32 0.0, %v1940
  %v1942 = vpop.f32.mrb[0].mxu0
  %1943 = vmatprep.mubr.f32.mxu0 0.0
  %1944 = vmatmul.mubr.f32.gmra.mrb[0].mxu0 %v1771
  %v1945 = vpop.f32.mrb[0].mxu0
  %v1946 = vadd.f32 0.0, %v1945
  %v1947 = vpop.f32.mrb[0].mxu0
  %1948 = vmatprep.mubr.f32.mxu0 0.0
  %1949 = vmatmul.mubr.f32.gmra.mrb[0].mxu0 %v1772
  %v1950 = vpop.f32.mrb[0].mxu0
  %v1951 = vadd.f32 0.0, %v1950
  %v1952 = vpop.f32.mrb[0].mxu0
  %1953 = vmatprep.mubr.f32.mxu0 0.0
  %1954 = vmatmul.mubr.f32.gmra.mrb[0].mxu0 %v1773
  %v1955 = vpop.f32.mrb[0].mxu0
  %v1956 = vadd.f32 0.0, %v1955
  %v1957 = vpop.f32.mrb[0].mxu0
  %1958 = vmatprep.mubr.f32.mxu0 0.0
  %1959 = vmatmul.mubr.f32.gmra.mrb[0].mxu0 %v1774
  %v1960 = vpop.f32.mrb[0].mxu0
  %v1961 = vadd.f32 0.0, %v1960
  %v1962 = vpop.f32.mrb[0].mxu0
  %1963 = vmatprep.mubr.f32.mxu0 0.0
  %1964 = vmatmul.mubr.f32.gmra.mrb[0].mxu0 %v1775
  %v1965 = vpop.f32.mrb[0].mxu0
  %v1966 = vadd.f32 0.0, %v1965
  %v1967 = vpop.f32.mrb[0].mxu0
  %1968 = vmatprep.mubr.f32.mxu0 0.0
  %1969 = vmatmul.mubr.f32.gmra.mrb[0].mxu0 %v1776
  %v1970 = vpop.f32.mrb[0].mxu0
  %v1971 = vadd.f32 0.0, %v1970
  %v1972 = vpop.f32.mrb[0].mxu0
  %1973 = vmatprep.mubr.f32.mxu0 0.0
  %1974 = vmatmul.mubr.f32.gmra.mrb[0].mxu0 %v1777
  %v1975 = vpop.f32.mrb[0].mxu0
  %v1976 = vadd.f32 0.0, %v1975
  %v1977 = vpop.f32.mrb[0].mxu0
  %1978 = vmatprep.mubr.f32.mxu0 0.0
  %1979 = vmatmul.mubr.f32.gmra.mrb[0].mxu0 %v1778
  %v1980 = vpop.f32.mrb[0].mxu0
  %v1981 = vadd.f32 0.0, %v1980
  %v1982 = vpop.f32.mrb[0].mxu0
  %1983 = vmatprep.mubr.f32.mxu0 0.0
  %1984 = vmatmul.mubr.f32.gmra.mrb[0].mxu0 %v1779
  %v1985 = vpop.f32.mrb[0].mxu0
  %v1986 = vadd.f32 0.0, %v1985
  %v1987 = vpop.f32.mrb[0].mxu0
  %1988 = vdwg.mxu0
  %1989 = vmatprep.subr.mxu0 0.0
  %1990 = vmatpush1.msra.mxu0 %v897
  %1991 = vmatprep.subr.mxu0 0.0
  %1992 = vmatpush1.msra.mxu0 %v898
  %1993 = vmatprep.subr.mxu0 0.0
  %1994 = vmatpush1.msra.mxu0 %v899
  %1995 = vmatprep.subr.mxu0 0.0
  %1996 = vmatpush1.msra.mxu0 %v900
  %1997 = vmatprep.subr.mxu0 0.0
  %1998 = vmatpush1.msra.mxu0 %v901
  %1999 = vmatprep.subr.mxu0 0.0
  %2000 = vmatpush1.msra.mxu0 %v902
  %2001 = vmatprep.subr.mxu0 0.0
  %2002 = vmatpush1.msra.mxu0 %v903
  %2003 = vmatprep.subr.mxu0 0.0
  %2004 = vmatpush1.msra.mxu0 %v904
  %2005 = vmatprep.subr.mxu0 0.0
  %2006 = vmatpush1.msra.mxu0 %v905
  %2007 = vmatprep.subr.mxu0 0.0
  %2008 = vmatpush1.msra.mxu0 %v906
  %2009 = vmatprep.subr.mxu0 0.0
  %2010 = vmatpush1.msra.mxu0 %v907
  %2011 = vmatprep.subr.mxu0 0.0
  %2012 = vmatpush1.msra.mxu0 %v908
  %2013 = vmatprep.subr.mxu0 0.0
  %2014 = vmatpush1.msra.mxu0 %v909
  %2015 = vmatprep.subr.mxu0 0.0
  %2016 = vmatpush1.msra.mxu0 %v910
  %2017 = vmatprep.subr.mxu0 0.0
  %2018 = vmatpush1.msra.mxu0 %v911
  %2019 = vmatprep.subr.mxu0 0.0
  %2020 = vmatpush1.msra.mxu0 %v912
  %2021 = vmatprep.subr.mxu0 0.0
  %2022 = vmatpush1.msra.mxu0 0.0
  %2023 = vmatprep.subr.mxu0 0.0
  %2024 = vmatpush1.msra.mxu0 0.0
  %2025 = vmatprep.subr.mxu0 0.0
  %2026 = vmatpush1.msra.mxu0 0.0
  %2027 = vmatprep.subr.mxu0 0.0
  %2028 = vmatpush1.msra.mxu0 0.0
  %2029 = vmatprep.subr.mxu0 0.0
  %2030 = vmatpush1.msra.mxu0 0.0
  %2031 = vmatprep.subr.mxu0 0.0
  %2032 = vmatpush1.msra.mxu0 0.0
  %2033 = vmatprep.subr.mxu0 0.0
  %2034 = vmatpush1.msra.mxu0 0.0
  %2035 = vmatprep.subr.mxu0 0.0
  %2036 = vmatpush1.msra.mxu0 0.0
  %2037 = vmatprep.subr.mxu0 0.0
  %2038 = vmatpush1.msra.mxu0 0.0
  %2039 = vmatprep.subr.mxu0 0.0
  %2040 = vmatpush1.msra.mxu0 0.0
  %2041 = vmatprep.subr.mxu0 0.0
  %2042 = vmatpush1.msra.mxu0 0.0
  %2043 = vmatprep.subr.mxu0 0.0
  %2044 = vmatpush1.msra.mxu0 0.0
  %2045 = vmatprep.subr.mxu0 0.0
  %2046 = vmatpush1.msra.mxu0 0.0
  %2047 = vmatprep.subr.mxu0 0.0
  %2048 = vmatpush1.msra.mxu0 0.0
  %2049 = vmatprep.subr.mxu0 0.0
  %2050 = vmatpush1.msra.mxu0 0.0
  %2051 = vmatprep.subr.mxu0 0.0
  %2052 = vmatpush1.msra.mxu0 0.0
  %2053 = vmatprep.mubr.f32.mxu0 0.0
  %2054 = vmatmul.mubr.f32.gmra.mrb[0].mxu0 %v1331
  %v2055 = vpop.f32.mrb[0].mxu0
  %v2056 = vadd.f32 %v1911, %v2055
  %v2057 = vpop.f32.mrb[0].mxu0
  %2058 = vmatprep.mubr.f32.mxu0 0.0
  %2059 = vmatmul.mubr.f32.gmra.mrb[0].mxu0 %v1332
  %v2060 = vpop.f32.mrb[0].mxu0
  %v2061 = vadd.f32 %v1916, %v2060
  %v2062 = vpop.f32.mrb[0].mxu0
  %2063 = vmatprep.mubr.f32.mxu0 0.0
  %2064 = vmatmul.mubr.f32.gmra.mrb[0].mxu0 %v1333
  %v2065 = vpop.f32.mrb[0].mxu0
  %v2066 = vadd.f32 %v1921, %v2065
  %v2067 = vpop.f32.mrb[0].mxu0
  %2068 = vmatprep.mubr.f32.mxu0 0.0
  %2069 = vmatmul.mubr.f32.gmra.mrb[0].mxu0 %v1334
  %v2070 = vpop.f32.mrb[0].mxu0
  %v2071 = vadd.f32 %v1926, %v2070
  %v2072 = vpop.f32.mrb[0].mxu0
  %2073 = vmatprep.mubr.f32.mxu0 0.0
  %2074 = vmatmul.mubr.f32.gmra.mrb[0].mxu0 %v1335
  %v2075 = vpop.f32.mrb[0].mxu0
  %v2076 = vadd.f32 %v1931, %v2075
  %v2077 = vpop.f32.mrb[0].mxu0
  %2078 = vmatprep.mubr.f32.mxu0 0.0
  %2079 = vmatmul.mubr.f32.gmra.mrb[0].mxu0 %v1336
  %v2080 = vpop.f32.mrb[0].mxu0
  %v2081 = vadd.f32 %v1936, %v2080
  %v2082 = vpop.f32.mrb[0].mxu0
  %2083 = vmatprep.mubr.f32.mxu0 0.0
  %2084 = vmatmul.mubr.f32.gmra.mrb[0].mxu0 %v1337
  %v2085 = vpop.f32.mrb[0].mxu0
  %v2086 = vadd.f32 %v1941, %v2085
  %v2087 = vpop.f32.mrb[0].mxu0
  %2088 = vmatprep.mubr.f32.mxu0 0.0
  %2089 = vmatmul.mubr.f32.gmra.mrb[0].mxu0 %v1338
  %v2090 = vpop.f32.mrb[0].mxu0
  %v2091 = vadd.f32 %v1946, %v2090
  %v2092 = vpop.f32.mrb[0].mxu0
  %2093 = vmatprep.mubr.f32.mxu0 0.0
  %2094 = vmatmul.mubr.f32.gmra.mrb[0].mxu0 %v1339
  %v2095 = vpop.f32.mrb[0].mxu0
  %v2096 = vadd.f32 %v1951, %v2095
  %v2097 = vpop.f32.mrb[0].mxu0
  %2098 = vmatprep.mubr.f32.mxu0 0.0
  %2099 = vmatmul.mubr.f32.gmra.mrb[0].mxu0 %v1340
  %v2100 = vpop.f32.mrb[0].mxu0
  %v2101 = vadd.f32 %v1956, %v2100
  %v2102 = vpop.f32.mrb[0].mxu0
  %2103 = vmatprep.mubr.f32.mxu0 0.0
  %2104 = vmatmul.mubr.f32.gmra.mrb[0].mxu0 %v1341
  %v2105 = vpop.f32.mrb[0].mxu0
  %v2106 = vadd.f32 %v1961, %v2105
  %v2107 = vpop.f32.mrb[0].mxu0
  %2108 = vmatprep.mubr.f32.mxu0 0.0
  %2109 = vmatmul.mubr.f32.gmra.mrb[0].mxu0 %v1342
  %v2110 = vpop.f32.mrb[0].mxu0
  %v2111 = vadd.f32 %v1966, %v2110
  %v2112 = vpop.f32.mrb[0].mxu0
  %2113 = vmatprep.mubr.f32.mxu0 0.0
  %2114 = vmatmul.mubr.f32.gmra.mrb[0].mxu0 %v1343
  %v2115 = vpop.f32.mrb[0].mxu0
  %v2116 = vadd.f32 %v1971, %v2115
  %v2117 = vpop.f32.mrb[0].mxu0
  %2118 = vmatprep.mubr.f32.mxu0 0.0
  %2119 = vmatmul.mubr.f32.gmra.mrb[0].mxu0 %v1344
  %v2120 = vpop.f32.mrb[0].mxu0
  %v2121 = vadd.f32 %v1976, %v2120
  %v2122 = vpop.f32.mrb[0].mxu0
  %2123 = vmatprep.mubr.f32.mxu0 0.0
  %2124 = vmatmul.mubr.f32.gmra.mrb[0].mxu0 %v1345
  %v2125 = vpop.f32.mrb[0].mxu0
  %v2126 = vadd.f32 %v1981, %v2125
  %v2127 = vpop.f32.mrb[0].mxu0
  %2128 = vmatprep.mubr.f32.mxu0 0.0
  %2129 = vmatmul.mubr.f32.gmra.mrb[0].mxu0 %v1346
  %v2130 = vpop.f32.mrb[0].mxu0
  %v2131 = vadd.f32 %v1986, %v2130
  %v2132 = vpop.f32.mrb[0].mxu0
  %2133 = vdwg.mxu0
  %v2134 = vld [vmem:[#allocation2 + $0x10] sm:$0xff]
  %v2135 = vld [vmem:[#allocation2 + $0x28] sm:$0xff]
  %v2136 = vld [vmem:[#allocation2 + $0x40] sm:$0xff]
  %v2137 = vld [vmem:[#allocation2 + $0x58] sm:$0xff]
  %v2138 = vld [vmem:[#allocation2 + $0x70] sm:$0xff]
  %v2139 = vld [vmem:[#allocation2 + $0x88] sm:$0xff]
  %v2140 = vld [vmem:[#allocation2 + $0xa0] sm:$0xff]
  %v2141 = vld [vmem:[#allocation2 + $0xb8] sm:$0xff]
  %v2142 = vld [vmem:[#allocation2 + $0xd0] sm:$0xff]
  %v2143 = vld [vmem:[#allocation2 + $0xe8] sm:$0xff]
  %v2144 = vld [vmem:[#allocation2 + $0x100] sm:$0xff]
  %v2145 = vld [vmem:[#allocation2 + $0x118] sm:$0xff]
  %v2146 = vld [vmem:[#allocation2 + $0x130] sm:$0xff]
  %v2147 = vld [vmem:[#allocation2 + $0x148] sm:$0xff]
  %v2148 = vld [vmem:[#allocation2 + $0x160] sm:$0xff]
  %v2149 = vld [vmem:[#allocation2 + $0x178] sm:$0xff]
  %2150 = vrot.lane.b32.xlu0 %v881, 96
  %v2151 = vpop.permute.xlu0 %2150
  %2152 = vrot.lane.b32.xlu0 %v882, 96
  %v2153 = vpop.permute.xlu0 %2152
  %2154 = vrot.lane.b32.xlu0 %v883, 96
  %v2155 = vpop.permute.xlu0 %2154
  %2156 = vrot.lane.b32.xlu0 %v884, 96
  %v2157 = vpop.permute.xlu0 %2156
  %2158 = vrot.lane.b32.xlu0 %v885, 96
  %v2159 = vpop.permute.xlu0 %2158
  %2160 = vrot.lane.b32.xlu0 %v886, 96
  %v2161 = vpop.permute.xlu0 %2160
  %2162 = vrot.lane.b32.xlu0 %v887, 96
  %v2163 = vpop.permute.xlu0 %2162
  %2164 = vrot.lane.b32.xlu0 %v888, 96
  %v2165 = vpop.permute.xlu0 %2164
  %2166 = vrot.lane.b32.xlu0 %v889, 96
  %v2167 = vpop.permute.xlu0 %2166
  %2168 = vrot.lane.b32.xlu0 %v890, 96
  %v2169 = vpop.permute.xlu0 %2168
  %2170 = vrot.lane.b32.xlu0 %v891, 96
  %v2171 = vpop.permute.xlu0 %2170
  %2172 = vrot.lane.b32.xlu0 %v892, 96
  %v2173 = vpop.permute.xlu0 %2172
  %2174 = vrot.lane.b32.xlu0 %v893, 96
  %v2175 = vpop.permute.xlu0 %2174
  %2176 = vrot.lane.b32.xlu0 %v894, 96
  %v2177 = vpop.permute.xlu0 %2176
  %2178 = vrot.lane.b32.xlu0 %v895, 96
  %v2179 = vpop.permute.xlu0 %2178
  %2180 = vrot.lane.b32.xlu0 %v896, 96
  %v2181 = vpop.permute.xlu0 %2180
  %2182 = vrot.lane.b32.xlu0 %v881, 32
  %v2183 = vpop.permute.xlu0 %2182
  %2184 = vrot.lane.b32.xlu0 %v882, 32
  %v2185 = vpop.permute.xlu0 %2184
  %2186 = vrot.lane.b32.xlu0 %v883, 32
  %v2187 = vpop.permute.xlu0 %2186
  %2188 = vrot.lane.b32.xlu0 %v884, 32
  %v2189 = vpop.permute.xlu0 %2188
  %2190 = vrot.lane.b32.xlu0 %v885, 32
  %v2191 = vpop.permute.xlu0 %2190
  %2192 = vrot.lane.b32.xlu0 %v886, 32
  %v2193 = vpop.permute.xlu0 %2192
  %2194 = vrot.lane.b32.xlu0 %v887, 32
  %v2195 = vpop.permute.xlu0 %2194
  %2196 = vrot.lane.b32.xlu0 %v888, 32
  %v2197 = vpop.permute.xlu0 %2196
  %2198 = vrot.lane.b32.xlu0 %v889, 32
  %v2199 = vpop.permute.xlu0 %2198
  %2200 = vrot.lane.b32.xlu0 %v890, 32
  %v2201 = vpop.permute.xlu0 %2200
  %2202 = vrot.lane.b32.xlu0 %v891, 32
  %v2203 = vpop.permute.xlu0 %2202
  %2204 = vrot.lane.b32.xlu0 %v892, 32
  %v2205 = vpop.permute.xlu0 %2204
  %2206 = vrot.lane.b32.xlu0 %v893, 32
  %v2207 = vpop.permute.xlu0 %2206
  %2208 = vrot.lane.b32.xlu0 %v894, 32
  %v2209 = vpop.permute.xlu0 %2208
  %2210 = vrot.lane.b32.xlu0 %v895, 32
  %v2211 = vpop.permute.xlu0 %2210
  %2212 = vrot.lane.b32.xlu0 %v896, 32
  %v2213 = vpop.permute.xlu0 %2212
  %v2214 = vsel %vm977, %v2151, 0
  %v2216 = vsel %vm977, %v2153, 0
  %v2218 = vsel %vm977, %v2155, 0
  %v2220 = vsel %vm977, %v2157, 0
  %v2222 = vsel %vm977, %v2159, 0
  %v2224 = vsel %vm977, %v2161, 0
  %v2226 = vsel %vm977, %v2163, 0
  %v2228 = vsel %vm977, %v2165, 0
  %v2230 = vsel %vm977, %v2167, 0
  %v2232 = vsel %vm977, %v2169, 0
  %v2234 = vsel %vm977, %v2171, 0
  %v2236 = vsel %vm977, %v2173, 0
  %v2238 = vsel %vm977, %v2175, 0
  %v2240 = vsel %vm977, %v2177, 0
  %v2242 = vsel %vm977, %v2179, 0
  %v2244 = vsel %vm977, %v2181, 0
  %v2246 = vsel %vm977, %v2183, 0
  %v2248 = vsel %vm977, %v2185, 0
  %v2250 = vsel %vm977, %v2187, 0
  %v2252 = vsel %vm977, %v2189, 0
  %v2254 = vsel %vm977, %v2191, 0
  %v2256 = vsel %vm977, %v2193, 0
  %v2258 = vsel %vm977, %v2195, 0
  %v2260 = vsel %vm977, %v2197, 0
  %v2262 = vsel %vm977, %v2199, 0
  %v2264 = vsel %vm977, %v2201, 0
  %v2266 = vsel %vm977, %v2203, 0
  %v2268 = vsel %vm977, %v2205, 0
  %v2270 = vsel %vm977, %v2207, 0
  %v2272 = vsel %vm977, %v2209, 0
  %v2274 = vsel %vm977, %v2211, 0
  %v2276 = vsel %vm977, %v2213, 0
  %2278 = vmatprep.subr.mxu0 0.0
  %2279 = vmatpush1.xpose.msra.mxu0 %v2246
  %2280 = vmatprep.subr.mxu0 0.0
  %2281 = vmatpush1.xpose.msra.mxu0 %v2248
  %2282 = vmatprep.subr.mxu0 0.0
  %2283 = vmatpush1.xpose.msra.mxu0 %v2250
  %2284 = vmatprep.subr.mxu0 0.0
  %2285 = vmatpush1.xpose.msra.mxu0 %v2252
  %2286 = vmatprep.subr.mxu0 0.0
  %2287 = vmatpush1.xpose.msra.mxu0 %v2254
  %2288 = vmatprep.subr.mxu0 0.0
  %2289 = vmatpush1.xpose.msra.mxu0 %v2256
  %2290 = vmatprep.subr.mxu0 0.0
  %2291 = vmatpush1.xpose.msra.mxu0 %v2258
  %2292 = vmatprep.subr.mxu0 0.0
  %2293 = vmatpush1.xpose.msra.mxu0 %v2260
  %2294 = vmatprep.subr.mxu0 0.0
  %2295 = vmatpush1.xpose.msra.mxu0 %v2262
  %2296 = vmatprep.subr.mxu0 0.0
  %2297 = vmatpush1.xpose.msra.mxu0 %v2264
  %2298 = vmatprep.subr.mxu0 0.0
  %2299 = vmatpush1.xpose.msra.mxu0 %v2266
  %2300 = vmatprep.subr.mxu0 0.0
  %2301 = vmatpush1.xpose.msra.mxu0 %v2268
  %2302 = vmatprep.subr.mxu0 0.0
  %2303 = vmatpush1.xpose.msra.mxu0 %v2270
  %2304 = vmatprep.subr.mxu0 0.0
  %2305 = vmatpush1.xpose.msra.mxu0 %v2272
  %2306 = vmatprep.subr.mxu0 0.0
  %2307 = vmatpush1.xpose.msra.mxu0 %v2274
  %2308 = vmatprep.subr.mxu0 0.0
  %2309 = vmatpush1.xpose.msra.mxu0 %v2276
  %2310 = vmatprep.subr.mxu0 0.0
  %2311 = vmatpush1.xpose.msra.mxu0 0.0
  %2312 = vmatprep.subr.mxu0 0.0
  %2313 = vmatpush1.xpose.msra.mxu0 0.0
  %2314 = vmatprep.subr.mxu0 0.0
  %2315 = vmatpush1.xpose.msra.mxu0 0.0
  %2316 = vmatprep.subr.mxu0 0.0
  %2317 = vmatpush1.xpose.msra.mxu0 0.0
  %2318 = vmatprep.subr.mxu0 0.0
  %2319 = vmatpush1.xpose.msra.mxu0 0.0
  %2320 = vmatprep.subr.mxu0 0.0
  %2321 = vmatpush1.xpose.msra.mxu0 0.0
  %2322 = vmatprep.subr.mxu0 0.0
  %2323 = vmatpush1.xpose.msra.mxu0 0.0
  %2324 = vmatprep.subr.mxu0 0.0
  %2325 = vmatpush1.xpose.msra.mxu0 0.0
  %2326 = vmatprep.subr.mxu0 0.0
  %2327 = vmatpush1.xpose.msra.mxu0 0.0
  %2328 = vmatprep.subr.mxu0 0.0
  %2329 = vmatpush1.xpose.msra.mxu0 0.0
  %2330 = vmatprep.subr.mxu0 0.0
  %2331 = vmatpush1.xpose.msra.mxu0 0.0
  %2332 = vmatprep.subr.mxu0 0.0
  %2333 = vmatpush1.xpose.msra.mxu0 0.0
  %2334 = vmatprep.subr.mxu0 0.0
  %2335 = vmatpush1.xpose.msra.mxu0 0.0
  %2336 = vmatprep.subr.mxu0 0.0
  %2337 = vmatpush1.xpose.msra.mxu0 0.0
  %2338 = vmatprep.subr.mxu0 0.0
  %2339 = vmatpush1.xpose.msra.mxu0 0.0
  %2340 = vmatprep.subr.mxu0 0.0
  %2341 = vmatpush1.xpose.msra.mxu0 0.0
  %2342 = vmatprep.mubr.f32.mxu0 0.0
  %2343 = vmatmul.mubr.f32.gmra.mrb[0].mxu0 %v2214
  %v2344 = vpop.f32.mrb[0].mxu0
  %v2345 = vadd.f32 %v913, %v2344
  %v2346 = vpop.f32.mrb[0].mxu0
  %2347 = vmatprep.mubr.f32.mxu0 0.0
  %2348 = vmatmul.mubr.f32.gmra.mrb[0].mxu0 %v2216
  %v2349 = vpop.f32.mrb[0].mxu0
  %v2350 = vadd.f32 %v914, %v2349
  %v2351 = vpop.f32.mrb[0].mxu0
  %2352 = vmatprep.mubr.f32.mxu0 0.0
  %2353 = vmatmul.mubr.f32.gmra.mrb[0].mxu0 %v2218
  %v2354 = vpop.f32.mrb[0].mxu0
  %v2355 = vadd.f32 %v915, %v2354
  %v2356 = vpop.f32.mrb[0].mxu0
  %2357 = vmatprep.mubr.f32.mxu0 0.0
  %2358 = vmatmul.mubr.f32.gmra.mrb[0].mxu0 %v2220
  %v2359 = vpop.f32.mrb[0].mxu0
  %v2360 = vadd.f32 %v916, %v2359
  %v2361 = vpop.f32.mrb[0].mxu0
  %2362 = vmatprep.mubr.f32.mxu0 0.0
  %2363 = vmatmul.mubr.f32.gmra.mrb[0].mxu0 %v2222
  %v2364 = vpop.f32.mrb[0].mxu0
  %v2365 = vadd.f32 %v917, %v2364
  %v2366 = vpop.f32.mrb[0].mxu0
  %2367 = vmatprep.mubr.f32.mxu0 0.0
  %2368 = vmatmul.mubr.f32.gmra.mrb[0].mxu0 %v2224
  %v2369 = vpop.f32.mrb[0].mxu0
  %v2370 = vadd.f32 %v918, %v2369
  %v2371 = vpop.f32.mrb[0].mxu0
  %2372 = vmatprep.mubr.f32.mxu0 0.0
  %2373 = vmatmul.mubr.f32.gmra.mrb[0].mxu0 %v2226
  %v2374 = vpop.f32.mrb[0].mxu0
  %v2375 = vadd.f32 %v919, %v2374
  %v2376 = vpop.f32.mrb[0].mxu0
  %2377 = vmatprep.mubr.f32.mxu0 0.0
  %2378 = vmatmul.mubr.f32.gmra.mrb[0].mxu0 %v2228
  %v2379 = vpop.f32.mrb[0].mxu0
  %v2380 = vadd.f32 %v920, %v2379
  %v2381 = vpop.f32.mrb[0].mxu0
  %2382 = vmatprep.mubr.f32.mxu0 0.0
  %2383 = vmatmul.mubr.f32.gmra.mrb[0].mxu0 %v2230
  %v2384 = vpop.f32.mrb[0].mxu0
  %v2385 = vadd.f32 %v921, %v2384
  %v2386 = vpop.f32.mrb[0].mxu0
  %2387 = vmatprep.mubr.f32.mxu0 0.0
  %2388 = vmatmul.mubr.f32.gmra.mrb[0].mxu0 %v2232
  %v2389 = vpop.f32.mrb[0].mxu0
  %v2390 = vadd.f32 %v922, %v2389
  %v2391 = vpop.f32.mrb[0].mxu0
  %2392 = vmatprep.mubr.f32.mxu0 0.0
  %2393 = vmatmul.mubr.f32.gmra.mrb[0].mxu0 %v2234
  %v2394 = vpop.f32.mrb[0].mxu0
  %v2395 = vadd.f32 %v923, %v2394
  %v2396 = vpop.f32.mrb[0].mxu0
  %2397 = vmatprep.mubr.f32.mxu0 0.0
  %2398 = vmatmul.mubr.f32.gmra.mrb[0].mxu0 %v2236
  %v2399 = vpop.f32.mrb[0].mxu0
  %v2400 = vadd.f32 %v924, %v2399
  %v2401 = vpop.f32.mrb[0].mxu0
  %2402 = vmatprep.mubr.f32.mxu0 0.0
  %2403 = vmatmul.mubr.f32.gmra.mrb[0].mxu0 %v2238
  %v2404 = vpop.f32.mrb[0].mxu0
  %v2405 = vadd.f32 %v925, %v2404
  %v2406 = vpop.f32.mrb[0].mxu0
  %2407 = vmatprep.mubr.f32.mxu0 0.0
  %2408 = vmatmul.mubr.f32.gmra.mrb[0].mxu0 %v2240
  %v2409 = vpop.f32.mrb[0].mxu0
  %v2410 = vadd.f32 %v926, %v2409
  %v2411 = vpop.f32.mrb[0].mxu0
  %2412 = vmatprep.mubr.f32.mxu0 0.0
  %2413 = vmatmul.mubr.f32.gmra.mrb[0].mxu0 %v2242
  %v2414 = vpop.f32.mrb[0].mxu0
  %v2415 = vadd.f32 %v927, %v2414
  %v2416 = vpop.f32.mrb[0].mxu0
  %2417 = vmatprep.mubr.f32.mxu0 0.0
  %2418 = vmatmul.mubr.f32.gmra.mrb[0].mxu0 %v2244
  %v2419 = vpop.f32.mrb[0].mxu0
  %v2420 = vadd.f32 %v928, %v2419
  %v2421 = vpop.f32.mrb[0].mxu0
  %2422 = vdwg.mxu0
  %2423 = vmax.xlane.f32.xlu0 %v2345
  %v2424 = vpop.xlane.xlu0 %2423
  %2425 = vmax.xlane.f32.xlu0 %v2350
  %v2426 = vpop.xlane.xlu0 %2425
  %2427 = vmax.xlane.f32.xlu0 %v2355
  %v2428 = vpop.xlane.xlu0 %2427
  %2429 = vmax.xlane.f32.xlu0 %v2360
  %v2430 = vpop.xlane.xlu0 %2429
  %2431 = vmax.xlane.f32.xlu0 %v2365
  %v2432 = vpop.xlane.xlu0 %2431
  %2433 = vmax.xlane.f32.xlu0 %v2370
  %v2434 = vpop.xlane.xlu0 %2433
  %2435 = vmax.xlane.f32.xlu0 %v2375
  %v2436 = vpop.xlane.xlu0 %2435
  %2437 = vmax.xlane.f32.xlu0 %v2380
  %v2438 = vpop.xlane.xlu0 %2437
  %2439 = vmax.xlane.f32.xlu0 %v2385
  %v2440 = vpop.xlane.xlu0 %2439
  %2441 = vmax.xlane.f32.xlu0 %v2390
  %v2442 = vpop.xlane.xlu0 %2441
  %2443 = vmax.xlane.f32.xlu0 %v2395
  %v2444 = vpop.xlane.xlu0 %2443
  %2445 = vmax.xlane.f32.xlu0 %v2400
  %v2446 = vpop.xlane.xlu0 %2445
  %2447 = vmax.xlane.f32.xlu0 %v2405
  %v2448 = vpop.xlane.xlu0 %2447
  %2449 = vmax.xlane.f32.xlu0 %v2410
  %v2450 = vpop.xlane.xlu0 %2449
  %2451 = vmax.xlane.f32.xlu0 %v2415
  %v2452 = vpop.xlane.xlu0 %2451
  %2453 = vmax.xlane.f32.xlu0 %v2420
  %v2454 = vpop.xlane.xlu0 %2453
  %v2455 = vsub.f32 %v2345, %v2424
  %v2456 = vsub.f32 %v2350, %v2426
  %v2457 = vsub.f32 %v2355, %v2428
  %v2458 = vsub.f32 %v2360, %v2430
  %v2459 = vsub.f32 %v2365, %v2432
  %v2460 = vsub.f32 %v2370, %v2434
  %v2461 = vsub.f32 %v2375, %v2436
  %v2462 = vsub.f32 %v2380, %v2438
  %v2463 = vsub.f32 %v2385, %v2440
  %v2464 = vsub.f32 %v2390, %v2442
  %v2465 = vsub.f32 %v2395, %v2444
  %v2466 = vsub.f32 %v2400, %v2446
  %v2467 = vsub.f32 %v2405, %v2448
  %v2468 = vsub.f32 %v2410, %v2450
  %v2469 = vsub.f32 %v2415, %v2452
  %v2470 = vsub.f32 %v2420, %v2454
  %v2471 = vmul.f32 %v2455, 1.442695
  %v2472 = vpow.pop %v2471
  %v2473 = vmul.f32 %v2456, 1.442695
  %v2474 = vpow.pop %v2473
  %v2475 = vmul.f32 %v2457, 1.442695
  %v2476 = vpow.pop %v2475
  %v2477 = vmul.f32 %v2458, 1.442695
  %v2478 = vpow.pop %v2477
  %v2479 = vmul.f32 %v2459, 1.442695
  %v2480 = vpow.pop %v2479
  %v2481 = vmul.f32 %v2460, 1.442695
  %v2482 = vpow.pop %v2481
  %v2483 = vmul.f32 %v2461, 1.442695
  %v2484 = vpow.pop %v2483
  %v2485 = vmul.f32 %v2462, 1.442695
  %v2486 = vpow.pop %v2485
  %v2487 = vmul.f32 %v2463, 1.442695
  %v2488 = vpow.pop %v2487
  %v2489 = vmul.f32 %v2464, 1.442695
  %v2490 = vpow.pop %v2489
  %v2491 = vmul.f32 %v2465, 1.442695
  %v2492 = vpow.pop %v2491
  %v2493 = vmul.f32 %v2466, 1.442695
  %v2494 = vpow.pop %v2493
  %v2495 = vmul.f32 %v2467, 1.442695
  %v2496 = vpow.pop %v2495
  %v2497 = vmul.f32 %v2468, 1.442695
  %v2498 = vpow.pop %v2497
  %v2499 = vmul.f32 %v2469, 1.442695
  %v2500 = vpow.pop %v2499
  %v2501 = vmul.f32 %v2470, 1.442695
  %v2502 = vpow.pop %v2501
  %2503 = vadd.xlane.f32.xlu0 %v2472
  %v2504 = vpop.xlane.xlu0 %2503
  %2505 = vadd.xlane.f32.xlu0 %v2474
  %v2506 = vpop.xlane.xlu0 %2505
  %2507 = vadd.xlane.f32.xlu0 %v2476
  %v2508 = vpop.xlane.xlu0 %2507
  %2509 = vadd.xlane.f32.xlu0 %v2478
  %v2510 = vpop.xlane.xlu0 %2509
  %2511 = vadd.xlane.f32.xlu0 %v2480
  %v2512 = vpop.xlane.xlu0 %2511
  %2513 = vadd.xlane.f32.xlu0 %v2482
  %v2514 = vpop.xlane.xlu0 %2513
  %2515 = vadd.xlane.f32.xlu0 %v2484
  %v2516 = vpop.xlane.xlu0 %2515
  %2517 = vadd.xlane.f32.xlu0 %v2486
  %v2518 = vpop.xlane.xlu0 %2517
  %2519 = vadd.xlane.f32.xlu0 %v2488
  %v2520 = vpop.xlane.xlu0 %2519
  %2521 = vadd.xlane.f32.xlu0 %v2490
  %v2522 = vpop.xlane.xlu0 %2521
  %2523 = vadd.xlane.f32.xlu0 %v2492
  %v2524 = vpop.xlane.xlu0 %2523
  %2525 = vadd.xlane.f32.xlu0 %v2494
  %v2526 = vpop.xlane.xlu0 %2525
  %2527 = vadd.xlane.f32.xlu0 %v2496
  %v2528 = vpop.xlane.xlu0 %2527
  %2529 = vadd.xlane.f32.xlu0 %v2498
  %v2530 = vpop.xlane.xlu0 %2529
  %2531 = vadd.xlane.f32.xlu0 %v2500
  %v2532 = vpop.xlane.xlu0 %2531
  %2533 = vadd.xlane.f32.xlu0 %v2502
  %v2534 = vpop.xlane.xlu0 %2533
  %v2535 = vrcp.pop %v2504
  %v2536 = vmul.f32 1.0, %v2535
  %v2537 = vrcp.pop %v2506
  %v2538 = vmul.f32 1.0, %v2537
  %v2539 = vrcp.pop %v2508
  %v2540 = vmul.f32 1.0, %v2539
  %v2541 = vrcp.pop %v2510
  %v2542 = vmul.f32 1.0, %v2541
  %v2543 = vrcp.pop %v2512
  %v2544 = vmul.f32 1.0, %v2543
  %v2545 = vrcp.pop %v2514
  %v2546 = vmul.f32 1.0, %v2545
  %v2547 = vrcp.pop %v2516
  %v2548 = vmul.f32 1.0, %v2547
  %v2549 = vrcp.pop %v2518
  %v2550 = vmul.f32 1.0, %v2549
  %v2551 = vrcp.pop %v2520
  %v2552 = vmul.f32 1.0, %v2551
  %v2553 = vrcp.pop %v2522
  %v2554 = vmul.f32 1.0, %v2553
  %v2555 = vrcp.pop %v2524
  %v2556 = vmul.f32 1.0, %v2555
  %v2557 = vrcp.pop %v2526
  %v2558 = vmul.f32 1.0, %v2557
  %v2559 = vrcp.pop %v2528
  %v2560 = vmul.f32 1.0, %v2559
  %v2561 = vrcp.pop %v2530
  %v2562 = vmul.f32 1.0, %v2561
  %v2563 = vrcp.pop %v2532
  %v2564 = vmul.f32 1.0, %v2563
  %v2565 = vrcp.pop %v2534
  %v2566 = vmul.f32 1.0, %v2565
  %v2567 = vmul.f32 %v2472, %v2536
  %v2568 = vmul.f32 %v2474, %v2538
  %v2569 = vmul.f32 %v2476, %v2540
  %v2570 = vmul.f32 %v2478, %v2542
  %v2571 = vmul.f32 %v2480, %v2544
  %v2572 = vmul.f32 %v2482, %v2546
  %v2573 = vmul.f32 %v2484, %v2548
  %v2574 = vmul.f32 %v2486, %v2550
  %v2575 = vmul.f32 %v2488, %v2552
  %v2576 = vmul.f32 %v2490, %v2554
  %v2577 = vmul.f32 %v2492, %v2556
  %v2578 = vmul.f32 %v2494, %v2558
  %v2579 = vmul.f32 %v2496, %v2560
  %v2580 = vmul.f32 %v2498, %v2562
  %v2581 = vmul.f32 %v2500, %v2564
  %v2582 = vmul.f32 %v2502, %v2566
  %2583 = vmatprep.subr.mxu0 0.0
  %2584 = vmatpush1.msra.mxu0 %v2134
  %2585 = vmatprep.subr.mxu0 0.0
  %2586 = vmatpush1.msra.mxu0 %v2135
  %2587 = vmatprep.subr.mxu0 0.0
  %2588 = vmatpush1.msra.mxu0 %v2136
  %2589 = vmatprep.subr.mxu0 0.0
  %2590 = vmatpush1.msra.mxu0 %v2137
  %2591 = vmatprep.subr.mxu0 0.0
  %2592 = vmatpush1.msra.mxu0 %v2138
  %2593 = vmatprep.subr.mxu0 0.0
  %2594 = vmatpush1.msra.mxu0 %v2139
  %2595 = vmatprep.subr.mxu0 0.0
  %2596 = vmatpush1.msra.mxu0 %v2140
  %2597 = vmatprep.subr.mxu0 0.0
  %2598 = vmatpush1.msra.mxu0 %v2141
  %2599 = vmatprep.subr.mxu0 0.0
  %2600 = vmatpush1.msra.mxu0 %v2142
  %2601 = vmatprep.subr.mxu0 0.0
  %2602 = vmatpush1.msra.mxu0 %v2143
  %2603 = vmatprep.subr.mxu0 0.0
  %2604 = vmatpush1.msra.mxu0 %v2144
  %2605 = vmatprep.subr.mxu0 0.0
  %2606 = vmatpush1.msra.mxu0 %v2145
  %2607 = vmatprep.subr.mxu0 0.0
  %2608 = vmatpush1.msra.mxu0 %v2146
  %2609 = vmatprep.subr.mxu0 0.0
  %2610 = vmatpush1.msra.mxu0 %v2147
  %2611 = vmatprep.subr.mxu0 0.0
  %2612 = vmatpush1.msra.mxu0 %v2148
  %2613 = vmatprep.subr.mxu0 0.0
  %2614 = vmatpush1.msra.mxu0 %v2149
  %2615 = vmatprep.subr.mxu0 0.0
  %2616 = vmatpush1.msra.mxu0 0.0
  %2617 = vmatprep.subr.mxu0 0.0
  %2618 = vmatpush1.msra.mxu0 0.0
  %2619 = vmatprep.subr.mxu0 0.0
  %2620 = vmatpush1.msra.mxu0 0.0
  %2621 = vmatprep.subr.mxu0 0.0
  %2622 = vmatpush1.msra.mxu0 0.0
  %2623 = vmatprep.subr.mxu0 0.0
  %2624 = vmatpush1.msra.mxu0 0.0
  %2625 = vmatprep.subr.mxu0 0.0
  %2626 = vmatpush1.msra.mxu0 0.0
  %2627 = vmatprep.subr.mxu0 0.0
  %2628 = vmatpush1.msra.mxu0 0.0
  %2629 = vmatprep.subr.mxu0 0.0
  %2630 = vmatpush1.msra.mxu0 0.0
  %2631 = vmatprep.subr.mxu0 0.0
  %2632 = vmatpush1.msra.mxu0 0.0
  %2633 = vmatprep.subr.mxu0 0.0
  %2634 = vmatpush1.msra.mxu0 0.0
  %2635 = vmatprep.subr.mxu0 0.0
  %2636 = vmatpush1.msra.mxu0 0.0
  %2637 = vmatprep.subr.mxu0 0.0
  %2638 = vmatpush1.msra.mxu0 0.0
  %2639 = vmatprep.subr.mxu0 0.0
  %2640 = vmatpush1.msra.mxu0 0.0
  %2641 = vmatprep.subr.mxu0 0.0
  %2642 = vmatpush1.msra.mxu0 0.0
  %2643 = vmatprep.subr.mxu0 0.0
  %2644 = vmatpush1.msra.mxu0 0.0
  %2645 = vmatprep.subr.mxu0 0.0
  %2646 = vmatpush1.msra.mxu0 0.0
  %2647 = vmatprep.mubr.f32.mxu0 0.0
  %2648 = vmatmul.mubr.f32.gmra.mrb[0].mxu0 %v2567
  %v2649 = vpop.f32.mrb[0].mxu0
  %v2650 = vadd.f32 0.0, %v2649
  %v2651 = vpop.f32.mrb[0].mxu0
  %2652 = vmatprep.mubr.f32.mxu0 0.0
  %2653 = vmatmul.mubr.f32.gmra.mrb[0].mxu0 %v2568
  %v2654 = vpop.f32.mrb[0].mxu0
  %v2655 = vadd.f32 0.0, %v2654
  %v2656 = vpop.f32.mrb[0].mxu0
  %2657 = vmatprep.mubr.f32.mxu0 0.0
  %2658 = vmatmul.mubr.f32.gmra.mrb[0].mxu0 %v2569
  %v2659 = vpop.f32.mrb[0].mxu0
  %v2660 = vadd.f32 0.0, %v2659
  %v2661 = vpop.f32.mrb[0].mxu0
  %2662 = vmatprep.mubr.f32.mxu0 0.0
  %2663 = vmatmul.mubr.f32.gmra.mrb[0].mxu0 %v2570
  %v2664 = vpop.f32.mrb[0].mxu0
  %v2665 = vadd.f32 0.0, %v2664
  %v2666 = vpop.f32.mrb[0].mxu0
  %2667 = vmatprep.mubr.f32.mxu0 0.0
  %2668 = vmatmul.mubr.f32.gmra.mrb[0].mxu0 %v2571
  %v2669 = vpop.f32.mrb[0].mxu0
  %v2670 = vadd.f32 0.0, %v2669
  %v2671 = vpop.f32.mrb[0].mxu0
  %2672 = vmatprep.mubr.f32.mxu0 0.0
  %2673 = vmatmul.mubr.f32.gmra.mrb[0].mxu0 %v2572
  %v2674 = vpop.f32.mrb[0].mxu0
  %v2675 = vadd.f32 0.0, %v2674
  %v2676 = vpop.f32.mrb[0].mxu0
  %2677 = vmatprep.mubr.f32.mxu0 0.0
  %2678 = vmatmul.mubr.f32.gmra.mrb[0].mxu0 %v2573
  %v2679 = vpop.f32.mrb[0].mxu0
  %v2680 = vadd.f32 0.0, %v2679
  %v2681 = vpop.f32.mrb[0].mxu0
  %2682 = vmatprep.mubr.f32.mxu0 0.0
  %2683 = vmatmul.mubr.f32.gmra.mrb[0].mxu0 %v2574
  %v2684 = vpop.f32.mrb[0].mxu0
  %v2685 = vadd.f32 0.0, %v2684
  %v2686 = vpop.f32.mrb[0].mxu0
  %2687 = vmatprep.mubr.f32.mxu0 0.0
  %2688 = vmatmul.mubr.f32.gmra.mrb[0].mxu0 %v2575
  %v2689 = vpop.f32.mrb[0].mxu0
  %v2690 = vadd.f32 0.0, %v2689
  %v2691 = vpop.f32.mrb[0].mxu0
  %2692 = vmatprep.mubr.f32.mxu0 0.0
  %2693 = vmatmul.mubr.f32.gmra.mrb[0].mxu0 %v2576
  %v2694 = vpop.f32.mrb[0].mxu0
  %v2695 = vadd.f32 0.0, %v2694
  %v2696 = vpop.f32.mrb[0].mxu0
  %2697 = vmatprep.mubr.f32.mxu0 0.0
  %2698 = vmatmul.mubr.f32.gmra.mrb[0].mxu0 %v2577
  %v2699 = vpop.f32.mrb[0].mxu0
  %v2700 = vadd.f32 0.0, %v2699
  %v2701 = vpop.f32.mrb[0].mxu0
  %2702 = vmatprep.mubr.f32.mxu0 0.0
  %2703 = vmatmul.mubr.f32.gmra.mrb[0].mxu0 %v2578
  %v2704 = vpop.f32.mrb[0].mxu0
  %v2705 = vadd.f32 0.0, %v2704
  %v2706 = vpop.f32.mrb[0].mxu0
  %2707 = vmatprep.mubr.f32.mxu0 0.0
  %2708 = vmatmul.mubr.f32.gmra.mrb[0].mxu0 %v2579
  %v2709 = vpop.f32.mrb[0].mxu0
  %v2710 = vadd.f32 0.0, %v2709
  %v2711 = vpop.f32.mrb[0].mxu0
  %2712 = vmatprep.mubr.f32.mxu0 0.0
  %2713 = vmatmul.mubr.f32.gmra.mrb[0].mxu0 %v2580
  %v2714 = vpop.f32.mrb[0].mxu0
  %v2715 = vadd.f32 0.0, %v2714
  %v2716 = vpop.f32.mrb[0].mxu0
  %2717 = vmatprep.mubr.f32.mxu0 0.0
  %2718 = vmatmul.mubr.f32.gmra.mrb[0].mxu0 %v2581
  %v2719 = vpop.f32.mrb[0].mxu0
  %v2720 = vadd.f32 0.0, %v2719
  %v2721 = vpop.f32.mrb[0].mxu0
  %2722 = vmatprep.mubr.f32.mxu0 0.0
  %2723 = vmatmul.mubr.f32.gmra.mrb[0].mxu0 %v2582
  %v2724 = vpop.f32.mrb[0].mxu0
  %v2725 = vadd.f32 0.0, %v2724
  %v2726 = vpop.f32.mrb[0].mxu0
  %2727 = vdwg.mxu0
  %v2728 = vadd.f32 %v2056, %v2650
  %v2729 = vadd.f32 %v2061, %v2655
  %v2730 = vadd.f32 %v2066, %v2660
  %v2731 = vadd.f32 %v2071, %v2665
  %v2732 = vadd.f32 %v2076, %v2670
  %v2733 = vadd.f32 %v2081, %v2675
  %v2734 = vadd.f32 %v2086, %v2680
  %v2735 = vadd.f32 %v2091, %v2685
  %v2736 = vadd.f32 %v2096, %v2690
  %v2737 = vadd.f32 %v2101, %v2695
  %v2738 = vadd.f32 %v2106, %v2700
  %v2739 = vadd.f32 %v2111, %v2705
  %v2740 = vadd.f32 %v2116, %v2710
  %v2741 = vadd.f32 %v2121, %v2715
  %v2742 = vadd.f32 %v2126, %v2720
  %v2743 = vadd.f32 %v2131, %v2725
  %2744 = vrot.lane.b32.xlu0 %v881, 80
  %v2745 = vpop.permute.xlu0 %2744
  %2746 = vrot.lane.b32.xlu0 %v882, 80
  %v2747 = vpop.permute.xlu0 %2746
  %2748 = vrot.lane.b32.xlu0 %v883, 80
  %v2749 = vpop.permute.xlu0 %2748
  %2750 = vrot.lane.b32.xlu0 %v884, 80
  %v2751 = vpop.permute.xlu0 %2750
  %2752 = vrot.lane.b32.xlu0 %v885, 80
  %v2753 = vpop.permute.xlu0 %2752
  %2754 = vrot.lane.b32.xlu0 %v886, 80
  %v2755 = vpop.permute.xlu0 %2754
  %2756 = vrot.lane.b32.xlu0 %v887, 80
  %v2757 = vpop.permute.xlu0 %2756
  %2758 = vrot.lane.b32.xlu0 %v888, 80
  %v2759 = vpop.permute.xlu0 %2758
  %2760 = vrot.lane.b32.xlu0 %v889, 80
  %v2761 = vpop.permute.xlu0 %2760
  %2762 = vrot.lane.b32.xlu0 %v890, 80
  %v2763 = vpop.permute.xlu0 %2762
  %2764 = vrot.lane.b32.xlu0 %v891, 80
  %v2765 = vpop.permute.xlu0 %2764
  %2766 = vrot.lane.b32.xlu0 %v892, 80
  %v2767 = vpop.permute.xlu0 %2766
  %2768 = vrot.lane.b32.xlu0 %v893, 80
  %v2769 = vpop.permute.xlu0 %2768
  %2770 = vrot.lane.b32.xlu0 %v894, 80
  %v2771 = vpop.permute.xlu0 %2770
  %2772 = vrot.lane.b32.xlu0 %v895, 80
  %v2773 = vpop.permute.xlu0 %2772
  %2774 = vrot.lane.b32.xlu0 %v896, 80
  %v2775 = vpop.permute.xlu0 %2774
  %2776 = vrot.lane.b32.xlu0 %v881, 16
  %v2777 = vpop.permute.xlu0 %2776
  %2778 = vrot.lane.b32.xlu0 %v882, 16
  %v2779 = vpop.permute.xlu0 %2778
  %2780 = vrot.lane.b32.xlu0 %v883, 16
  %v2781 = vpop.permute.xlu0 %2780
  %2782 = vrot.lane.b32.xlu0 %v884, 16
  %v2783 = vpop.permute.xlu0 %2782
  %2784 = vrot.lane.b32.xlu0 %v885, 16
  %v2785 = vpop.permute.xlu0 %2784
  %2786 = vrot.lane.b32.xlu0 %v886, 16
  %v2787 = vpop.permute.xlu0 %2786
  %2788 = vrot.lane.b32.xlu0 %v887, 16
  %v2789 = vpop.permute.xlu0 %2788
  %2790 = vrot.lane.b32.xlu0 %v888, 16
  %v2791 = vpop.permute.xlu0 %2790
  %2792 = vrot.lane.b32.xlu0 %v889, 16
  %v2793 = vpop.permute.xlu0 %2792
  %2794 = vrot.lane.b32.xlu0 %v890, 16
  %v2795 = vpop.permute.xlu0 %2794
  %2796 = vrot.lane.b32.xlu0 %v891, 16
  %v2797 = vpop.permute.xlu0 %2796
  %2798 = vrot.lane.b32.xlu0 %v892, 16
  %v2799 = vpop.permute.xlu0 %2798
  %2800 = vrot.lane.b32.xlu0 %v893, 16
  %v2801 = vpop.permute.xlu0 %2800
  %2802 = vrot.lane.b32.xlu0 %v894, 16
  %v2803 = vpop.permute.xlu0 %2802
  %2804 = vrot.lane.b32.xlu0 %v895, 16
  %v2805 = vpop.permute.xlu0 %2804
  %2806 = vrot.lane.b32.xlu0 %v896, 16
  %v2807 = vpop.permute.xlu0 %2806
  %v2808 = vsel %vm977, %v2745, 0
  %v2810 = vsel %vm977, %v2747, 0
  %v2812 = vsel %vm977, %v2749, 0
  %v2814 = vsel %vm977, %v2751, 0
  %v2816 = vsel %vm977, %v2753, 0
  %v2818 = vsel %vm977, %v2755, 0
  %v2820 = vsel %vm977, %v2757, 0
  %v2822 = vsel %vm977, %v2759, 0
  %v2824 = vsel %vm977, %v2761, 0
  %v2826 = vsel %vm977, %v2763, 0
  %v2828 = vsel %vm977, %v2765, 0
  %v2830 = vsel %vm977, %v2767, 0
  %v2832 = vsel %vm977, %v2769, 0
  %v2834 = vsel %vm977, %v2771, 0
  %v2836 = vsel %vm977, %v2773, 0
  %v2838 = vsel %vm977, %v2775, 0
  %v2840 = vsel %vm977, %v2777, 0
  %v2842 = vsel %vm977, %v2779, 0
  %v2844 = vsel %vm977, %v2781, 0
  %v2846 = vsel %vm977, %v2783, 0
  %v2848 = vsel %vm977, %v2785, 0
  %v2850 = vsel %vm977, %v2787, 0
  %v2852 = vsel %vm977, %v2789, 0
  %v2854 = vsel %vm977, %v2791, 0
  %v2856 = vsel %vm977, %v2793, 0
  %v2858 = vsel %vm977, %v2795, 0
  %v2860 = vsel %vm977, %v2797, 0
  %v2862 = vsel %vm977, %v2799, 0
  %v2864 = vsel %vm977, %v2801, 0
  %v2866 = vsel %vm977, %v2803, 0
  %v2868 = vsel %vm977, %v2805, 0
  %v2870 = vsel %vm977, %v2807, 0
  %2872 = vmatprep.subr.mxu0 0.0
  %2873 = vmatpush1.xpose.msra.mxu0 %v2840
  %2874 = vmatprep.subr.mxu0 0.0
  %2875 = vmatpush1.xpose.msra.mxu0 %v2842
  %2876 = vmatprep.subr.mxu0 0.0
  %2877 = vmatpush1.xpose.msra.mxu0 %v2844
  %2878 = vmatprep.subr.mxu0 0.0
  %2879 = vmatpush1.xpose.msra.mxu0 %v2846
  %2880 = vmatprep.subr.mxu0 0.0
  %2881 = vmatpush1.xpose.msra.mxu0 %v2848
  %2882 = vmatprep.subr.mxu0 0.0
  %2883 = vmatpush1.xpose.msra.mxu0 %v2850
  %2884 = vmatprep.subr.mxu0 0.0
  %2885 = vmatpush1.xpose.msra.mxu0 %v2852
  %2886 = vmatprep.subr.mxu0 0.0
  %2887 = vmatpush1.xpose.msra.mxu0 %v2854
  %2888 = vmatprep.subr.mxu0 0.0
  %2889 = vmatpush1.xpose.msra.mxu0 %v2856
  %2890 = vmatprep.subr.mxu0 0.0
  %2891 = vmatpush1.xpose.msra.mxu0 %v2858
  %2892 = vmatprep.subr.mxu0 0.0
  %2893 = vmatpush1.xpose.msra.mxu0 %v2860
  %2894 = vmatprep.subr.mxu0 0.0
  %2895 = vmatpush1.xpose.msra.mxu0 %v2862
  %2896 = vmatprep.subr.mxu0 0.0
  %2897 = vmatpush1.xpose.msra.mxu0 %v2864
  %2898 = vmatprep.subr.mxu0 0.0
  %2899 = vmatpush1.xpose.msra.mxu0 %v2866
  %2900 = vmatprep.subr.mxu0 0.0
  %2901 = vmatpush1.xpose.msra.mxu0 %v2868
  %2902 = vmatprep.subr.mxu0 0.0
  %2903 = vmatpush1.xpose.msra.mxu0 %v2870
  %2904 = vmatprep.subr.mxu0 0.0
  %2905 = vmatpush1.xpose.msra.mxu0 0.0
  %2906 = vmatprep.subr.mxu0 0.0
  %2907 = vmatpush1.xpose.msra.mxu0 0.0
  %2908 = vmatprep.subr.mxu0 0.0
  %2909 = vmatpush1.xpose.msra.mxu0 0.0
  %2910 = vmatprep.subr.mxu0 0.0
  %2911 = vmatpush1.xpose.msra.mxu0 0.0
  %2912 = vmatprep.subr.mxu0 0.0
  %2913 = vmatpush1.xpose.msra.mxu0 0.0
  %2914 = vmatprep.subr.mxu0 0.0
  %2915 = vmatpush1.xpose.msra.mxu0 0.0
  %2916 = vmatprep.subr.mxu0 0.0
  %2917 = vmatpush1.xpose.msra.mxu0 0.0
  %2918 = vmatprep.subr.mxu0 0.0
  %2919 = vmatpush1.xpose.msra.mxu0 0.0
  %2920 = vmatprep.subr.mxu0 0.0
  %2921 = vmatpush1.xpose.msra.mxu0 0.0
  %2922 = vmatprep.subr.mxu0 0.0
  %2923 = vmatpush1.xpose.msra.mxu0 0.0
  %2924 = vmatprep.subr.mxu0 0.0
  %2925 = vmatpush1.xpose.msra.mxu0 0.0
  %2926 = vmatprep.subr.mxu0 0.0
  %2927 = vmatpush1.xpose.msra.mxu0 0.0
  %2928 = vmatprep.subr.mxu0 0.0
  %2929 = vmatpush1.xpose.msra.mxu0 0.0
  %2930 = vmatprep.subr.mxu0 0.0
  %2931 = vmatpush1.xpose.msra.mxu0 0.0
  %2932 = vmatprep.subr.mxu0 0.0
  %2933 = vmatpush1.xpose.msra.mxu0 0.0
  %2934 = vmatprep.subr.mxu0 0.0
  %2935 = vmatpush1.xpose.msra.mxu0 0.0
  %2936 = vmatprep.mubr.f32.mxu0 0.0
  %2937 = vmatmul.mubr.f32.gmra.mrb[0].mxu0 %v2808
  %v2938 = vpop.f32.mrb[0].mxu0
  %v2939 = vadd.f32 %v913, %v2938
  %v2940 = vpop.f32.mrb[0].mxu0
  %2941 = vmatprep.mubr.f32.mxu0 0.0
  %2942 = vmatmul.mubr.f32.gmra.mrb[0].mxu0 %v2810
  %v2943 = vpop.f32.mrb[0].mxu0
  %v2944 = vadd.f32 %v914, %v2943
  %v2945 = vpop.f32.mrb[0].mxu0
  %2946 = vmatprep.mubr.f32.mxu0 0.0
  %2947 = vmatmul.mubr.f32.gmra.mrb[0].mxu0 %v2812
  %v2948 = vpop.f32.mrb[0].mxu0
  %v2949 = vadd.f32 %v915, %v2948
  %v2950 = vpop.f32.mrb[0].mxu0
  %2951 = vmatprep.mubr.f32.mxu0 0.0
  %2952 = vmatmul.mubr.f32.gmra.mrb[0].mxu0 %v2814
  %v2953 = vpop.f32.mrb[0].mxu0
  %v2954 = vadd.f32 %v916, %v2953
  %v2955 = vpop.f32.mrb[0].mxu0
  %2956 = vmatprep.mubr.f32.mxu0 0.0
  %2957 = vmatmul.mubr.f32.gmra.mrb[0].mxu0 %v2816
  %v2958 = vpop.f32.mrb[0].mxu0
  %v2959 = vadd.f32 %v917, %v2958
  %v2960 = vpop.f32.mrb[0].mxu0
  %2961 = vmatprep.mubr.f32.mxu0 0.0
  %2962 = vmatmul.mubr.f32.gmra.mrb[0].mxu0 %v2818
  %v2963 = vpop.f32.mrb[0].mxu0
  %v2964 = vadd.f32 %v918, %v2963
  %v2965 = vpop.f32.mrb[0].mxu0
  %2966 = vmatprep.mubr.f32.mxu0 0.0
  %2967 = vmatmul.mubr.f32.gmra.mrb[0].mxu0 %v2820
  %v2968 = vpop.f32.mrb[0].mxu0
  %v2969 = vadd.f32 %v919, %v2968
  %v2970 = vpop.f32.mrb[0].mxu0
  %2971 = vmatprep.mubr.f32.mxu0 0.0
  %2972 = vmatmul.mubr.f32.gmra.mrb[0].mxu0 %v2822
  %v2973 = vpop.f32.mrb[0].mxu0
  %v2974 = vadd.f32 %v920, %v2973
  %v2975 = vpop.f32.mrb[0].mxu0
  %2976 = vmatprep.mubr.f32.mxu0 0.0
  %2977 = vmatmul.mubr.f32.gmra.mrb[0].mxu0 %v2824
  %v2978 = vpop.f32.mrb[0].mxu0
  %v2979 = vadd.f32 %v921, %v2978
  %v2980 = vpop.f32.mrb[0].mxu0
  %2981 = vmatprep.mubr.f32.mxu0 0.0
  %2982 = vmatmul.mubr.f32.gmra.mrb[0].mxu0 %v2826
  %v2983 = vpop.f32.mrb[0].mxu0
  %v2984 = vadd.f32 %v922, %v2983
  %v2985 = vpop.f32.mrb[0].mxu0
  %2986 = vmatprep.mubr.f32.mxu0 0.0
  %2987 = vmatmul.mubr.f32.gmra.mrb[0].mxu0 %v2828
  %v2988 = vpop.f32.mrb[0].mxu0
  %v2989 = vadd.f32 %v923, %v2988
  %v2990 = vpop.f32.mrb[0].mxu0
  %2991 = vmatprep.mubr.f32.mxu0 0.0
  %2992 = vmatmul.mubr.f32.gmra.mrb[0].mxu0 %v2830
  %v2993 = vpop.f32.mrb[0].mxu0
  %v2994 = vadd.f32 %v924, %v2993
  %v2995 = vpop.f32.mrb[0].mxu0
  %2996 = vmatprep.mubr.f32.mxu0 0.0
  %2997 = vmatmul.mubr.f32.gmra.mrb[0].mxu0 %v2832
  %v2998 = vpop.f32.mrb[0].mxu0
  %v2999 = vadd.f32 %v925, %v2998
  %v3000 = vpop.f32.mrb[0].mxu0
  %3001 = vmatprep.mubr.f32.mxu0 0.0
  %3002 = vmatmul.mubr.f32.gmra.mrb[0].mxu0 %v2834
  %v3003 = vpop.f32.mrb[0].mxu0
  %v3004 = vadd.f32 %v926, %v3003
  %v3005 = vpop.f32.mrb[0].mxu0
  %3006 = vmatprep.mubr.f32.mxu0 0.0
  %3007 = vmatmul.mubr.f32.gmra.mrb[0].mxu0 %v2836
  %v3008 = vpop.f32.mrb[0].mxu0
  %v3009 = vadd.f32 %v927, %v3008
  %v3010 = vpop.f32.mrb[0].mxu0
  %3011 = vmatprep.mubr.f32.mxu0 0.0
  %3012 = vmatmul.mubr.f32.gmra.mrb[0].mxu0 %v2838
  %v3013 = vpop.f32.mrb[0].mxu0
  %v3014 = vadd.f32 %v928, %v3013
  %v3015 = vpop.f32.mrb[0].mxu0
  %3016 = vdwg.mxu0
  %3017 = vmax.xlane.f32.xlu0 %v2939
  %v3018 = vpop.xlane.xlu0 %3017
  %3019 = vmax.xlane.f32.xlu0 %v2944
  %v3020 = vpop.xlane.xlu0 %3019
  %3021 = vmax.xlane.f32.xlu0 %v2949
  %v3022 = vpop.xlane.xlu0 %3021
  %3023 = vmax.xlane.f32.xlu0 %v2954
  %v3024 = vpop.xlane.xlu0 %3023
  %3025 = vmax.xlane.f32.xlu0 %v2959
  %v3026 = vpop.xlane.xlu0 %3025
  %3027 = vmax.xlane.f32.xlu0 %v2964
  %v3028 = vpop.xlane.xlu0 %3027
  %3029 = vmax.xlane.f32.xlu0 %v2969
  %v3030 = vpop.xlane.xlu0 %3029
  %3031 = vmax.xlane.f32.xlu0 %v2974
  %v3032 = vpop.xlane.xlu0 %3031
  %3033 = vmax.xlane.f32.xlu0 %v2979
  %v3034 = vpop.xlane.xlu0 %3033
  %3035 = vmax.xlane.f32.xlu0 %v2984
  %v3036 = vpop.xlane.xlu0 %3035
  %3037 = vmax.xlane.f32.xlu0 %v2989
  %v3038 = vpop.xlane.xlu0 %3037
  %3039 = vmax.xlane.f32.xlu0 %v2994
  %v3040 = vpop.xlane.xlu0 %3039
  %3041 = vmax.xlane.f32.xlu0 %v2999
  %v3042 = vpop.xlane.xlu0 %3041
  %3043 = vmax.xlane.f32.xlu0 %v3004
  %v3044 = vpop.xlane.xlu0 %3043
  %3045 = vmax.xlane.f32.xlu0 %v3009
  %v3046 = vpop.xlane.xlu0 %3045
  %3047 = vmax.xlane.f32.xlu0 %v3014
  %v3048 = vpop.xlane.xlu0 %3047
  %v3049 = vsub.f32 %v2939, %v3018
  %v3050 = vsub.f32 %v2944, %v3020
  %v3051 = vsub.f32 %v2949, %v3022
  %v3052 = vsub.f32 %v2954, %v3024
  %v3053 = vsub.f32 %v2959, %v3026
  %v3054 = vsub.f32 %v2964, %v3028
  %v3055 = vsub.f32 %v2969, %v3030
  %v3056 = vsub.f32 %v2974, %v3032
  %v3057 = vsub.f32 %v2979, %v3034
  %v3058 = vsub.f32 %v2984, %v3036
  %v3059 = vsub.f32 %v2989, %v3038
  %v3060 = vsub.f32 %v2994, %v3040
  %v3061 = vsub.f32 %v2999, %v3042
  %v3062 = vsub.f32 %v3004, %v3044
  %v3063 = vsub.f32 %v3009, %v3046
  %v3064 = vsub.f32 %v3014, %v3048
  %v3065 = vmul.f32 %v3049, 1.442695
  %v3066 = vpow.pop %v3065
  %v3067 = vmul.f32 %v3050, 1.442695
  %v3068 = vpow.pop %v3067
  %v3069 = vmul.f32 %v3051, 1.442695
  %v3070 = vpow.pop %v3069
  %v3071 = vmul.f32 %v3052, 1.442695
  %v3072 = vpow.pop %v3071
  %v3073 = vmul.f32 %v3053, 1.442695
  %v3074 = vpow.pop %v3073
  %v3075 = vmul.f32 %v3054, 1.442695
  %v3076 = vpow.pop %v3075
  %v3077 = vmul.f32 %v3055, 1.442695
  %v3078 = vpow.pop %v3077
  %v3079 = vmul.f32 %v3056, 1.442695
  %v3080 = vpow.pop %v3079
  %v3081 = vmul.f32 %v3057, 1.442695
  %v3082 = vpow.pop %v3081
  %v3083 = vmul.f32 %v3058, 1.442695
  %v3084 = vpow.pop %v3083
  %v3085 = vmul.f32 %v3059, 1.442695
  %v3086 = vpow.pop %v3085
  %v3087 = vmul.f32 %v3060, 1.442695
  %v3088 = vpow.pop %v3087
  %v3089 = vmul.f32 %v3061, 1.442695
  %v3090 = vpow.pop %v3089
  %v3091 = vmul.f32 %v3062, 1.442695
  %v3092 = vpow.pop %v3091
  %v3093 = vmul.f32 %v3063, 1.442695
  %v3094 = vpow.pop %v3093
  %v3095 = vmul.f32 %v3064, 1.442695
  %v3096 = vpow.pop %v3095
  %3097 = vadd.xlane.f32.xlu0 %v3066
  %v3098 = vpop.xlane.xlu0 %3097
  %3099 = vadd.xlane.f32.xlu0 %v3068
  %v3100 = vpop.xlane.xlu0 %3099
  %3101 = vadd.xlane.f32.xlu0 %v3070
  %v3102 = vpop.xlane.xlu0 %3101
  %3103 = vadd.xlane.f32.xlu0 %v3072
  %v3104 = vpop.xlane.xlu0 %3103
  %3105 = vadd.xlane.f32.xlu0 %v3074
  %v3106 = vpop.xlane.xlu0 %3105
  %3107 = vadd.xlane.f32.xlu0 %v3076
  %v3108 = vpop.xlane.xlu0 %3107
  %3109 = vadd.xlane.f32.xlu0 %v3078
  %v3110 = vpop.xlane.xlu0 %3109
  %3111 = vadd.xlane.f32.xlu0 %v3080
  %v3112 = vpop.xlane.xlu0 %3111
  %3113 = vadd.xlane.f32.xlu0 %v3082
  %v3114 = vpop.xlane.xlu0 %3113
  %3115 = vadd.xlane.f32.xlu0 %v3084
  %v3116 = vpop.xlane.xlu0 %3115
  %3117 = vadd.xlane.f32.xlu0 %v3086
  %v3118 = vpop.xlane.xlu0 %3117
  %3119 = vadd.xlane.f32.xlu0 %v3088
  %v3120 = vpop.xlane.xlu0 %3119
  %3121 = vadd.xlane.f32.xlu0 %v3090
  %v3122 = vpop.xlane.xlu0 %3121
  %3123 = vadd.xlane.f32.xlu0 %v3092
  %v3124 = vpop.xlane.xlu0 %3123
  %3125 = vadd.xlane.f32.xlu0 %v3094
  %v3126 = vpop.xlane.xlu0 %3125
  %3127 = vadd.xlane.f32.xlu0 %v3096
  %v3128 = vpop.xlane.xlu0 %3127
  %v3129 = vrcp.pop %v3098
  %v3130 = vmul.f32 1.0, %v3129
  %v3131 = vrcp.pop %v3100
  %v3132 = vmul.f32 1.0, %v3131
  %v3133 = vrcp.pop %v3102
  %v3134 = vmul.f32 1.0, %v3133
  %v3135 = vrcp.pop %v3104
  %v3136 = vmul.f32 1.0, %v3135
  %v3137 = vrcp.pop %v3106
  %v3138 = vmul.f32 1.0, %v3137
  %v3139 = vrcp.pop %v3108
  %v3140 = vmul.f32 1.0, %v3139
  %v3141 = vrcp.pop %v3110
  %v3142 = vmul.f32 1.0, %v3141
  %v3143 = vrcp.pop %v3112
  %v3144 = vmul.f32 1.0, %v3143
  %v3145 = vrcp.pop %v3114
  %v3146 = vmul.f32 1.0, %v3145
  %v3147 = vrcp.pop %v3116
  %v3148 = vmul.f32 1.0, %v3147
  %v3149 = vrcp.pop %v3118
  %v3150 = vmul.f32 1.0, %v3149
  %v3151 = vrcp.pop %v3120
  %v3152 = vmul.f32 1.0, %v3151
  %v3153 = vrcp.pop %v3122
  %v3154 = vmul.f32 1.0, %v3153
  %v3155 = vrcp.pop %v3124
  %v3156 = vmul.f32 1.0, %v3155
  %v3157 = vrcp.pop %v3126
  %v3158 = vmul.f32 1.0, %v3157
  %v3159 = vrcp.pop %v3128
  %v3160 = vmul.f32 1.0, %v3159
  %v3161 = vmul.f32 %v3066, %v3130
  %v3162 = vmul.f32 %v3068, %v3132
  %v3163 = vmul.f32 %v3070, %v3134
  %v3164 = vmul.f32 %v3072, %v3136
  %v3165 = vmul.f32 %v3074, %v3138
  %v3166 = vmul.f32 %v3076, %v3140
  %v3167 = vmul.f32 %v3078, %v3142
  %v3168 = vmul.f32 %v3080, %v3144
  %v3169 = vmul.f32 %v3082, %v3146
  %v3170 = vmul.f32 %v3084, %v3148
  %v3171 = vmul.f32 %v3086, %v3150
  %v3172 = vmul.f32 %v3088, %v3152
  %v3173 = vmul.f32 %v3090, %v3154
  %v3174 = vmul.f32 %v3092, %v3156
  %v3175 = vmul.f32 %v3094, %v3158
  %v3176 = vmul.f32 %v3096, %v3160
  %3193 = vrot.lane.b32.xlu0 %v2134, 64
  %v3194 = vpop.permute.xlu0 %3193
  %3195 = vrot.lane.b32.xlu0 %v2135, 64
  %v3196 = vpop.permute.xlu0 %3195
  %3197 = vrot.lane.b32.xlu0 %v2136, 64
  %v3198 = vpop.permute.xlu0 %3197
  %3199 = vrot.lane.b32.xlu0 %v2137, 64
  %v3200 = vpop.permute.xlu0 %3199
  %3201 = vrot.lane.b32.xlu0 %v2138, 64
  %v3202 = vpop.permute.xlu0 %3201
  %3203 = vrot.lane.b32.xlu0 %v2139, 64
  %v3204 = vpop.permute.xlu0 %3203
  %3205 = vrot.lane.b32.xlu0 %v2140, 64
  %v3206 = vpop.permute.xlu0 %3205
  %3207 = vrot.lane.b32.xlu0 %v2141, 64
  %v3208 = vpop.permute.xlu0 %3207
  %3209 = vrot.lane.b32.xlu0 %v2142, 64
  %v3210 = vpop.permute.xlu0 %3209
  %3211 = vrot.lane.b32.xlu0 %v2143, 64
  %v3212 = vpop.permute.xlu0 %3211
  %3213 = vrot.lane.b32.xlu0 %v2144, 64
  %v3214 = vpop.permute.xlu0 %3213
  %3215 = vrot.lane.b32.xlu0 %v2145, 64
  %v3216 = vpop.permute.xlu0 %3215
  %3217 = vrot.lane.b32.xlu0 %v2146, 64
  %v3218 = vpop.permute.xlu0 %3217
  %3219 = vrot.lane.b32.xlu0 %v2147, 64
  %v3220 = vpop.permute.xlu0 %3219
  %3221 = vrot.lane.b32.xlu0 %v2148, 64
  %v3222 = vpop.permute.xlu0 %3221
  %3223 = vrot.lane.b32.xlu0 %v2149, 64
  %v3224 = vpop.permute.xlu0 %3223
  %3241 = vmatprep.subr.mxu0 0.0
  %3242 = vmatpush1.msra.mxu0 %v3194
  %3243 = vmatprep.subr.mxu0 0.0
  %3244 = vmatpush1.msra.mxu0 %v3196
  %3245 = vmatprep.subr.mxu0 0.0
  %3246 = vmatpush1.msra.mxu0 %v3198
  %3247 = vmatprep.subr.mxu0 0.0
  %3248 = vmatpush1.msra.mxu0 %v3200
  %3249 = vmatprep.subr.mxu0 0.0
  %3250 = vmatpush1.msra.mxu0 %v3202
  %3251 = vmatprep.subr.mxu0 0.0
  %3252 = vmatpush1.msra.mxu0 %v3204
  %3253 = vmatprep.subr.mxu0 0.0
  %3254 = vmatpush1.msra.mxu0 %v3206
  %3255 = vmatprep.subr.mxu0 0.0
  %3256 = vmatpush1.msra.mxu0 %v3208
  %3257 = vmatprep.subr.mxu0 0.0
  %3258 = vmatpush1.msra.mxu0 %v3210
  %3259 = vmatprep.subr.mxu0 0.0
  %3260 = vmatpush1.msra.mxu0 %v3212
  %3261 = vmatprep.subr.mxu0 0.0
  %3262 = vmatpush1.msra.mxu0 %v3214
  %3263 = vmatprep.subr.mxu0 0.0
  %3264 = vmatpush1.msra.mxu0 %v3216
  %3265 = vmatprep.subr.mxu0 0.0
  %3266 = vmatpush1.msra.mxu0 %v3218
  %3267 = vmatprep.subr.mxu0 0.0
  %3268 = vmatpush1.msra.mxu0 %v3220
  %3269 = vmatprep.subr.mxu0 0.0
  %3270 = vmatpush1.msra.mxu0 %v3222
  %3271 = vmatprep.subr.mxu0 0.0
  %3272 = vmatpush1.msra.mxu0 %v3224
  %3273 = vmatprep.subr.mxu0 0.0
  %3274 = vmatpush1.msra.mxu0 0.0
  %3275 = vmatprep.subr.mxu0 0.0
  %3276 = vmatpush1.msra.mxu0 0.0
  %3277 = vmatprep.subr.mxu0 0.0
  %3278 = vmatpush1.msra.mxu0 0.0
  %3279 = vmatprep.subr.mxu0 0.0
  %3280 = vmatpush1.msra.mxu0 0.0
  %3281 = vmatprep.subr.mxu0 0.0
  %3282 = vmatpush1.msra.mxu0 0.0
  %3283 = vmatprep.subr.mxu0 0.0
  %3284 = vmatpush1.msra.mxu0 0.0
  %3285 = vmatprep.subr.mxu0 0.0
  %3286 = vmatpush1.msra.mxu0 0.0
  %3287 = vmatprep.subr.mxu0 0.0
  %3288 = vmatpush1.msra.mxu0 0.0
  %3289 = vmatprep.subr.mxu0 0.0
  %3290 = vmatpush1.msra.mxu0 0.0
  %3291 = vmatprep.subr.mxu0 0.0
  %3292 = vmatpush1.msra.mxu0 0.0
  %3293 = vmatprep.subr.mxu0 0.0
  %3294 = vmatpush1.msra.mxu0 0.0
  %3295 = vmatprep.subr.mxu0 0.0
  %3296 = vmatpush1.msra.mxu0 0.0
  %3297 = vmatprep.subr.mxu0 0.0
  %3298 = vmatpush1.msra.mxu0 0.0
  %3299 = vmatprep.subr.mxu0 0.0
  %3300 = vmatpush1.msra.mxu0 0.0
  %3301 = vmatprep.subr.mxu0 0.0
  %3302 = vmatpush1.msra.mxu0 0.0
  %3303 = vmatprep.subr.mxu0 0.0
  %3304 = vmatpush1.msra.mxu0 0.0
  %3305 = vmatprep.mubr.f32.mxu0 0.0
  %3306 = vmatmul.mubr.f32.gmra.mrb[0].mxu0 %v3161
  %v3307 = vpop.f32.mrb[0].mxu0
  %v3308 = vadd.f32 0.0, %v3307
  %v3309 = vpop.f32.mrb[0].mxu0
  %3310 = vmatprep.mubr.f32.mxu0 0.0
  %3311 = vmatmul.mubr.f32.gmra.mrb[0].mxu0 %v3162
  %v3312 = vpop.f32.mrb[0].mxu0
  %v3313 = vadd.f32 0.0, %v3312
  %v3314 = vpop.f32.mrb[0].mxu0
  %3315 = vmatprep.mubr.f32.mxu0 0.0
  %3316 = vmatmul.mubr.f32.gmra.mrb[0].mxu0 %v3163
  %v3317 = vpop.f32.mrb[0].mxu0
  %v3318 = vadd.f32 0.0, %v3317
  %v3319 = vpop.f32.mrb[0].mxu0
  %3320 = vmatprep.mubr.f32.mxu0 0.0
  %3321 = vmatmul.mubr.f32.gmra.mrb[0].mxu0 %v3164
  %v3322 = vpop.f32.mrb[0].mxu0
  %v3323 = vadd.f32 0.0, %v3322
  %v3324 = vpop.f32.mrb[0].mxu0
  %3325 = vmatprep.mubr.f32.mxu0 0.0
  %3326 = vmatmul.mubr.f32.gmra.mrb[0].mxu0 %v3165
  %v3327 = vpop.f32.mrb[0].mxu0
  %v3328 = vadd.f32 0.0, %v3327
  %v3329 = vpop.f32.mrb[0].mxu0
  %3330 = vmatprep.mubr.f32.mxu0 0.0
  %3331 = vmatmul.mubr.f32.gmra.mrb[0].mxu0 %v3166
  %v3332 = vpop.f32.mrb[0].mxu0
  %v3333 = vadd.f32 0.0, %v3332
  %v3334 = vpop.f32.mrb[0].mxu0
  %3335 = vmatprep.mubr.f32.mxu0 0.0
  %3336 = vmatmul.mubr.f32.gmra.mrb[0].mxu0 %v3167
  %v3337 = vpop.f32.mrb[0].mxu0
  %v3338 = vadd.f32 0.0, %v3337
  %v3339 = vpop.f32.mrb[0].mxu0
  %3340 = vmatprep.mubr.f32.mxu0 0.0
  %3341 = vmatmul.mubr.f32.gmra.mrb[0].mxu0 %v3168
  %v3342 = vpop.f32.mrb[0].mxu0
  %v3343 = vadd.f32 0.0, %v3342
  %v3344 = vpop.f32.mrb[0].mxu0
  %3345 = vmatprep.mubr.f32.mxu0 0.0
  %3346 = vmatmul.mubr.f32.gmra.mrb[0].mxu0 %v3169
  %v3347 = vpop.f32.mrb[0].mxu0
  %v3348 = vadd.f32 0.0, %v3347
  %v3349 = vpop.f32.mrb[0].mxu0
  %3350 = vmatprep.mubr.f32.mxu0 0.0
  %3351 = vmatmul.mubr.f32.gmra.mrb[0].mxu0 %v3170
  %v3352 = vpop.f32.mrb[0].mxu0
  %v3353 = vadd.f32 0.0, %v3352
  %v3354 = vpop.f32.mrb[0].mxu0
  %3355 = vmatprep.mubr.f32.mxu0 0.0
  %3356 = vmatmul.mubr.f32.gmra.mrb[0].mxu0 %v3171
  %v3357 = vpop.f32.mrb[0].mxu0
  %v3358 = vadd.f32 0.0, %v3357
  %v3359 = vpop.f32.mrb[0].mxu0
  %3360 = vmatprep.mubr.f32.mxu0 0.0
  %3361 = vmatmul.mubr.f32.gmra.mrb[0].mxu0 %v3172
  %v3362 = vpop.f32.mrb[0].mxu0
  %v3363 = vadd.f32 0.0, %v3362
  %v3364 = vpop.f32.mrb[0].mxu0
  %3365 = vmatprep.mubr.f32.mxu0 0.0
  %3366 = vmatmul.mubr.f32.gmra.mrb[0].mxu0 %v3173
  %v3367 = vpop.f32.mrb[0].mxu0
  %v3368 = vadd.f32 0.0, %v3367
  %v3369 = vpop.f32.mrb[0].mxu0
  %3370 = vmatprep.mubr.f32.mxu0 0.0
  %3371 = vmatmul.mubr.f32.gmra.mrb[0].mxu0 %v3174
  %v3372 = vpop.f32.mrb[0].mxu0
  %v3373 = vadd.f32 0.0, %v3372
  %v3374 = vpop.f32.mrb[0].mxu0
  %3375 = vmatprep.mubr.f32.mxu0 0.0
  %3376 = vmatmul.mubr.f32.gmra.mrb[0].mxu0 %v3175
  %v3377 = vpop.f32.mrb[0].mxu0
  %v3378 = vadd.f32 0.0, %v3377
  %v3379 = vpop.f32.mrb[0].mxu0
  %3380 = vmatprep.mubr.f32.mxu0 0.0
  %3381 = vmatmul.mubr.f32.gmra.mrb[0].mxu0 %v3176
  %v3382 = vpop.f32.mrb[0].mxu0
  %v3383 = vadd.f32 0.0, %v3382
  %v3384 = vpop.f32.mrb[0].mxu0
  %3385 = vdwg.mxu0
  %v3386 = vadd.f32 %v2728, %v3308
  %v3387 = vadd.f32 %v2729, %v3313
  %v3388 = vadd.f32 %v2730, %v3318
  %v3389 = vadd.f32 %v2731, %v3323
  %v3390 = vadd.f32 %v2732, %v3328
  %v3391 = vadd.f32 %v2733, %v3333
  %v3392 = vadd.f32 %v2734, %v3338
  %v3393 = vadd.f32 %v2735, %v3343
  %v3394 = vadd.f32 %v2736, %v3348
  %v3395 = vadd.f32 %v2737, %v3353
  %v3396 = vadd.f32 %v2738, %v3358
  %v3397 = vadd.f32 %v2739, %v3363
  %v3398 = vadd.f32 %v2740, %v3368
  %v3399 = vadd.f32 %v2741, %v3373
  %v3400 = vadd.f32 %v2742, %v3378
  %v3401 = vadd.f32 %v2743, %v3383
  %v3403 = vlaneseq
  %v3404 = vshrl.u32 %v3403, 7
  %v3405 = vsub.s32 0, %v3404
  %v3406 = vrot.slane %v880, %v3405
  %v3408 = vadd.f32 %v3386, %v3406
  %v3409 = vadd.f32 %v3387, %v3406
  %v3410 = vadd.f32 %v3388, %v3406
  %v3411 = vadd.f32 %v3389, %v3406
  %v3412 = vadd.f32 %v3390, %v3406
  %v3413 = vadd.f32 %v3391, %v3406
  %v3414 = vadd.f32 %v3392, %v3406
  %v3415 = vadd.f32 %v3393, %v3406
  %v3416 = vadd.f32 %v3394, %v3406
  %v3417 = vadd.f32 %v3395, %v3406
  %v3418 = vadd.f32 %v3396, %v3406
  %v3419 = vadd.f32 %v3397, %v3406
  %v3420 = vadd.f32 %v3398, %v3406
  %v3421 = vadd.f32 %v3399, %v3406
  %v3422 = vadd.f32 %v3400, %v3406
  %v3423 = vadd.f32 %v3401, %v3406
  %3424 = vst.msk [vmem:[%s4] sm:$0xff] %vm90, %v3408
  %3425 = vst.msk [vmem:[%s4 + $0x8] sm:$0xff] %vm90, %v3409
  %3426 = vst.msk [vmem:[%s4 + $0x10] sm:$0xff] %vm90, %v3410
  %3427 = vst.msk [vmem:[%s4 + $0x18] sm:$0xff] %vm90, %v3411
  %3428 = vst.msk [vmem:[%s4 + $0x20] sm:$0xff] %vm90, %v3412
  %3429 = vst.msk [vmem:[%s4 + $0x28] sm:$0xff] %vm90, %v3413
  %3430 = vst.msk [vmem:[%s4 + $0x30] sm:$0xff] %vm90, %v3414
  %3431 = vst.msk [vmem:[%s4 + $0x38] sm:$0xff] %vm90, %v3415
  %3432 = vst.msk [vmem:[%s4 + $0x40] sm:$0xff] %vm90, %v3416
  %3433 = vst.msk [vmem:[%s4 + $0x48] sm:$0xff] %vm90, %v3417
  %3434 = vst.msk [vmem:[%s4 + $0x50] sm:$0xff] %vm90, %v3418
  %3435 = vst.msk [vmem:[%s4 + $0x58] sm:$0xff] %vm90, %v3419
  %3436 = vst.msk [vmem:[%s4 + $0x60] sm:$0xff] %vm90, %v3420
  %3437 = vst.msk [vmem:[%s4 + $0x68] sm:$0xff] %vm90, %v3421
  %3438 = vst.msk [vmem:[%s4 + $0x70] sm:$0xff] %vm90, %v3422
  %3439 = vst.msk [vmem:[%s4 + $0x78] sm:$0xff] %vm90, %v3423
  %v3440 = vld [vmem:[#allocation2 + $0x180] sm:$0xff]
  %v3441 = vld [vmem:[#allocation2 + $0x198] sm:$0xff]
  %v3442 = vld [vmem:[#allocation2 + $0x1b0] sm:$0xff]
  %v3443 = vld [vmem:[#allocation2 + $0x1c8] sm:$0xff]
  %v3444 = vld [vmem:[#allocation2 + $0x1e0] sm:$0xff]
  %v3445 = vld [vmem:[#allocation2 + $0x1f8] sm:$0xff]
  %v3446 = vld [vmem:[#allocation2 + $0x210] sm:$0xff]
  %v3447 = vld [vmem:[#allocation2 + $0x228] sm:$0xff]
  %v3448 = vld [vmem:[#allocation2 + $0x240] sm:$0xff]
  %v3449 = vld [vmem:[#allocation2 + $0x258] sm:$0xff]
  %v3450 = vld [vmem:[#allocation2 + $0x270] sm:$0xff]
  %v3451 = vld [vmem:[#allocation2 + $0x288] sm:$0xff]
  %v3452 = vld [vmem:[#allocation2 + $0x2a0] sm:$0xff]
  %v3453 = vld [vmem:[#allocation2 + $0x2b8] sm:$0xff]
  %v3454 = vld [vmem:[#allocation2 + $0x2d0] sm:$0xff]
  %v3455 = vld [vmem:[#allocation2 + $0x2e8] sm:$0xff]
  %v3456 = vld [vmem:[#allocation2 + $0x188] sm:$0xff]
  %v3457 = vld [vmem:[#allocation2 + $0x1a0] sm:$0xff]
  %v3458 = vld [vmem:[#allocation2 + $0x1b8] sm:$0xff]
  %v3459 = vld [vmem:[#allocation2 + $0x1d0] sm:$0xff]
  %v3460 = vld [vmem:[#allocation2 + $0x1e8] sm:$0xff]
  %v3461 = vld [vmem:[#allocation2 + $0x200] sm:$0xff]
  %v3462 = vld [vmem:[#allocation2 + $0x218] sm:$0xff]
  %v3463 = vld [vmem:[#allocation2 + $0x230] sm:$0xff]
  %v3464 = vld [vmem:[#allocation2 + $0x248] sm:$0xff]
  %v3465 = vld [vmem:[#allocation2 + $0x260] sm:$0xff]
  %v3466 = vld [vmem:[#allocation2 + $0x278] sm:$0xff]
  %v3467 = vld [vmem:[#allocation2 + $0x290] sm:$0xff]
  %v3468 = vld [vmem:[#allocation2 + $0x2a8] sm:$0xff]
  %v3469 = vld [vmem:[#allocation2 + $0x2c0] sm:$0xff]
  %v3470 = vld [vmem:[#allocation2 + $0x2d8] sm:$0xff]
  %v3471 = vld [vmem:[#allocation2 + $0x2f0] sm:$0xff]
  %v3472 = vld [vmem:[#allocation3] sm:$0xff]
  %v3473 = vld [vmem:[#allocation3 + $0x8] sm:$0xff]
  %v3474 = vld [vmem:[#allocation3 + $0x10] sm:$0xff]
  %v3475 = vld [vmem:[#allocation3 + $0x18] sm:$0xff]
  %v3476 = vld [vmem:[#allocation3 + $0x20] sm:$0xff]
  %v3477 = vld [vmem:[#allocation3 + $0x28] sm:$0xff]
  %v3478 = vld [vmem:[#allocation3 + $0x30] sm:$0xff]
  %v3479 = vld [vmem:[#allocation3 + $0x38] sm:$0xff]
  %v3480 = vld [vmem:[#allocation3 + $0x40] sm:$0xff]
  %v3481 = vld [vmem:[#allocation3 + $0x48] sm:$0xff]
  %v3482 = vld [vmem:[#allocation3 + $0x50] sm:$0xff]
  %v3483 = vld [vmem:[#allocation3 + $0x58] sm:$0xff]
  %v3484 = vld [vmem:[#allocation3 + $0x60] sm:$0xff]
  %v3485 = vld [vmem:[#allocation3 + $0x68] sm:$0xff]
  %v3486 = vld [vmem:[#allocation3 + $0x70] sm:$0xff]
  %v3487 = vld [vmem:[#allocation3 + $0x78] sm:$0xff]
  %3504 = vrot.lane.b32.xlu0 %v3440, 64
  %v3505 = vpop.permute.xlu0 %3504
  %3506 = vrot.lane.b32.xlu0 %v3441, 64
  %v3507 = vpop.permute.xlu0 %3506
  %3508 = vrot.lane.b32.xlu0 %v3442, 64
  %v3509 = vpop.permute.xlu0 %3508
  %3510 = vrot.lane.b32.xlu0 %v3443, 64
  %v3511 = vpop.permute.xlu0 %3510
  %3512 = vrot.lane.b32.xlu0 %v3444, 64
  %v3513 = vpop.permute.xlu0 %3512
  %3514 = vrot.lane.b32.xlu0 %v3445, 64
  %v3515 = vpop.permute.xlu0 %3514
  %3516 = vrot.lane.b32.xlu0 %v3446, 64
  %v3517 = vpop.permute.xlu0 %3516
  %3518 = vrot.lane.b32.xlu0 %v3447, 64
  %v3519 = vpop.permute.xlu0 %3518
  %3520 = vrot.lane.b32.xlu0 %v3448, 64
  %v3521 = vpop.permute.xlu0 %3520
  %3522 = vrot.lane.b32.xlu0 %v3449, 64
  %v3523 = vpop.permute.xlu0 %3522
  %3524 = vrot.lane.b32.xlu0 %v3450, 64
  %v3525 = vpop.permute.xlu0 %3524
  %3526 = vrot.lane.b32.xlu0 %v3451, 64
  %v3527 = vpop.permute.xlu0 %3526
  %3528 = vrot.lane.b32.xlu0 %v3452, 64
  %v3529 = vpop.permute.xlu0 %3528
  %3530 = vrot.lane.b32.xlu0 %v3453, 64
  %v3531 = vpop.permute.xlu0 %3530
  %3532 = vrot.lane.b32.xlu0 %v3454, 64
  %v3533 = vpop.permute.xlu0 %3532
  %3534 = vrot.lane.b32.xlu0 %v3455, 64
  %v3535 = vpop.permute.xlu0 %3534
  %v3536 = vsel %vm977, %v3440, 0
  %v3538 = vsel %vm977, %v3441, 0
  %v3540 = vsel %vm977, %v3442, 0
  %v3542 = vsel %vm977, %v3443, 0
  %v3544 = vsel %vm977, %v3444, 0
  %v3546 = vsel %vm977, %v3445, 0
  %v3548 = vsel %vm977, %v3446, 0
  %v3550 = vsel %vm977, %v3447, 0
  %v3552 = vsel %vm977, %v3448, 0
  %v3554 = vsel %vm977, %v3449, 0
  %v3556 = vsel %vm977, %v3450, 0
  %v3558 = vsel %vm977, %v3451, 0
  %v3560 = vsel %vm977, %v3452, 0
  %v3562 = vsel %vm977, %v3453, 0
  %v3564 = vsel %vm977, %v3454, 0
  %v3566 = vsel %vm977, %v3455, 0
  %v3568 = vsel %vm977, %v3505, 0
  %v3570 = vsel %vm977, %v3507, 0
  %v3572 = vsel %vm977, %v3509, 0
  %v3574 = vsel %vm977, %v3511, 0
  %v3576 = vsel %vm977, %v3513, 0
  %v3578 = vsel %vm977, %v3515, 0
  %v3580 = vsel %vm977, %v3517, 0
  %v3582 = vsel %vm977, %v3519, 0
  %v3584 = vsel %vm977, %v3521, 0
  %v3586 = vsel %vm977, %v3523, 0
  %v3588 = vsel %vm977, %v3525, 0
  %v3590 = vsel %vm977, %v3527, 0
  %v3592 = vsel %vm977, %v3529, 0
  %v3594 = vsel %vm977, %v3531, 0
  %v3596 = vsel %vm977, %v3533, 0
  %v3598 = vsel %vm977, %v3535, 0
  %3600 = vmatprep.subr.mxu0 0.0
  %3601 = vmatpush1.xpose.msra.mxu0 %v3568
  %3602 = vmatprep.subr.mxu0 0.0
  %3603 = vmatpush1.xpose.msra.mxu0 %v3570
  %3604 = vmatprep.subr.mxu0 0.0
  %3605 = vmatpush1.xpose.msra.mxu0 %v3572
  %3606 = vmatprep.subr.mxu0 0.0
  %3607 = vmatpush1.xpose.msra.mxu0 %v3574
  %3608 = vmatprep.subr.mxu0 0.0
  %3609 = vmatpush1.xpose.msra.mxu0 %v3576
  %3610 = vmatprep.subr.mxu0 0.0
  %3611 = vmatpush1.xpose.msra.mxu0 %v3578
  %3612 = vmatprep.subr.mxu0 0.0
  %3613 = vmatpush1.xpose.msra.mxu0 %v3580
  %3614 = vmatprep.subr.mxu0 0.0
  %3615 = vmatpush1.xpose.msra.mxu0 %v3582
  %3616 = vmatprep.subr.mxu0 0.0
  %3617 = vmatpush1.xpose.msra.mxu0 %v3584
  %3618 = vmatprep.subr.mxu0 0.0
  %3619 = vmatpush1.xpose.msra.mxu0 %v3586
  %3620 = vmatprep.subr.mxu0 0.0
  %3621 = vmatpush1.xpose.msra.mxu0 %v3588
  %3622 = vmatprep.subr.mxu0 0.0
  %3623 = vmatpush1.xpose.msra.mxu0 %v3590
  %3624 = vmatprep.subr.mxu0 0.0
  %3625 = vmatpush1.xpose.msra.mxu0 %v3592
  %3626 = vmatprep.subr.mxu0 0.0
  %3627 = vmatpush1.xpose.msra.mxu0 %v3594
  %3628 = vmatprep.subr.mxu0 0.0
  %3629 = vmatpush1.xpose.msra.mxu0 %v3596
  %3630 = vmatprep.subr.mxu0 0.0
  %3631 = vmatpush1.xpose.msra.mxu0 %v3598
  %3632 = vmatprep.subr.mxu0 0.0
  %3633 = vmatpush1.xpose.msra.mxu0 0.0
  %3634 = vmatprep.subr.mxu0 0.0
  %3635 = vmatpush1.xpose.msra.mxu0 0.0
  %3636 = vmatprep.subr.mxu0 0.0
  %3637 = vmatpush1.xpose.msra.mxu0 0.0
  %3638 = vmatprep.subr.mxu0 0.0
  %3639 = vmatpush1.xpose.msra.mxu0 0.0
  %3640 = vmatprep.subr.mxu0 0.0
  %3641 = vmatpush1.xpose.msra.mxu0 0.0
  %3642 = vmatprep.subr.mxu0 0.0
  %3643 = vmatpush1.xpose.msra.mxu0 0.0
  %3644 = vmatprep.subr.mxu0 0.0
  %3645 = vmatpush1.xpose.msra.mxu0 0.0
  %3646 = vmatprep.subr.mxu0 0.0
  %3647 = vmatpush1.xpose.msra.mxu0 0.0
  %3648 = vmatprep.subr.mxu0 0.0
  %3649 = vmatpush1.xpose.msra.mxu0 0.0
  %3650 = vmatprep.subr.mxu0 0.0
  %3651 = vmatpush1.xpose.msra.mxu0 0.0
  %3652 = vmatprep.subr.mxu0 0.0
  %3653 = vmatpush1.xpose.msra.mxu0 0.0
  %3654 = vmatprep.subr.mxu0 0.0
  %3655 = vmatpush1.xpose.msra.mxu0 0.0
  %3656 = vmatprep.subr.mxu0 0.0
  %3657 = vmatpush1.xpose.msra.mxu0 0.0
  %3658 = vmatprep.subr.mxu0 0.0
  %3659 = vmatpush1.xpose.msra.mxu0 0.0
  %3660 = vmatprep.subr.mxu0 0.0
  %3661 = vmatpush1.xpose.msra.mxu0 0.0
  %3662 = vmatprep.subr.mxu0 0.0
  %3663 = vmatpush1.xpose.msra.mxu0 0.0
  %3664 = vmatprep.mubr.f32.mxu0 0.0
  %3665 = vmatmul.mubr.f32.gmra.mrb[0].mxu0 %v3536
  %v3666 = vpop.f32.mrb[0].mxu0
  %v3667 = vadd.f32 %v3472, %v3666
  %v3668 = vpop.f32.mrb[0].mxu0
  %3669 = vmatprep.mubr.f32.mxu0 0.0
  %3670 = vmatmul.mubr.f32.gmra.mrb[0].mxu0 %v3538
  %v3671 = vpop.f32.mrb[0].mxu0
  %v3672 = vadd.f32 %v3473, %v3671
  %v3673 = vpop.f32.mrb[0].mxu0
  %3674 = vmatprep.mubr.f32.mxu0 0.0
  %3675 = vmatmul.mubr.f32.gmra.mrb[0].mxu0 %v3540
  %v3676 = vpop.f32.mrb[0].mxu0
  %v3677 = vadd.f32 %v3474, %v3676
  %v3678 = vpop.f32.mrb[0].mxu0
  %3679 = vmatprep.mubr.f32.mxu0 0.0
  %3680 = vmatmul.mubr.f32.gmra.mrb[0].mxu0 %v3542
  %v3681 = vpop.f32.mrb[0].mxu0
  %v3682 = vadd.f32 %v3475, %v3681
  %v3683 = vpop.f32.mrb[0].mxu0
  %3684 = vmatprep.mubr.f32.mxu0 0.0
  %3685 = vmatmul.mubr.f32.gmra.mrb[0].mxu0 %v3544
  %v3686 = vpop.f32.mrb[0].mxu0
  %v3687 = vadd.f32 %v3476, %v3686
  %v3688 = vpop.f32.mrb[0].mxu0
  %3689 = vmatprep.mubr.f32.mxu0 0.0
  %3690 = vmatmul.mubr.f32.gmra.mrb[0].mxu0 %v3546
  %v3691 = vpop.f32.mrb[0].mxu0
  %v3692 = vadd.f32 %v3477, %v3691
  %v3693 = vpop.f32.mrb[0].mxu0
  %3694 = vmatprep.mubr.f32.mxu0 0.0
  %3695 = vmatmul.mubr.f32.gmra.mrb[0].mxu0 %v3548
  %v3696 = vpop.f32.mrb[0].mxu0
  %v3697 = vadd.f32 %v3478, %v3696
  %v3698 = vpop.f32.mrb[0].mxu0
  %3699 = vmatprep.mubr.f32.mxu0 0.0
  %3700 = vmatmul.mubr.f32.gmra.mrb[0].mxu0 %v3550
  %v3701 = vpop.f32.mrb[0].mxu0
  %v3702 = vadd.f32 %v3479, %v3701
  %v3703 = vpop.f32.mrb[0].mxu0
  %3704 = vmatprep.mubr.f32.mxu0 0.0
  %3705 = vmatmul.mubr.f32.gmra.mrb[0].mxu0 %v3552
  %v3706 = vpop.f32.mrb[0].mxu0
  %v3707 = vadd.f32 %v3480, %v3706
  %v3708 = vpop.f32.mrb[0].mxu0
  %3709 = vmatprep.mubr.f32.mxu0 0.0
  %3710 = vmatmul.mubr.f32.gmra.mrb[0].mxu0 %v3554
  %v3711 = vpop.f32.mrb[0].mxu0
  %v3712 = vadd.f32 %v3481, %v3711
  %v3713 = vpop.f32.mrb[0].mxu0
  %3714 = vmatprep.mubr.f32.mxu0 0.0
  %3715 = vmatmul.mubr.f32.gmra.mrb[0].mxu0 %v3556
  %v3716 = vpop.f32.mrb[0].mxu0
  %v3717 = vadd.f32 %v3482, %v3716
  %v3718 = vpop.f32.mrb[0].mxu0
  %3719 = vmatprep.mubr.f32.mxu0 0.0
  %3720 = vmatmul.mubr.f32.gmra.mrb[0].mxu0 %v3558
  %v3721 = vpop.f32.mrb[0].mxu0
  %v3722 = vadd.f32 %v3483, %v3721
  %v3723 = vpop.f32.mrb[0].mxu0
  %3724 = vmatprep.mubr.f32.mxu0 0.0
  %3725 = vmatmul.mubr.f32.gmra.mrb[0].mxu0 %v3560
  %v3726 = vpop.f32.mrb[0].mxu0
  %v3727 = vadd.f32 %v3484, %v3726
  %v3728 = vpop.f32.mrb[0].mxu0
  %3729 = vmatprep.mubr.f32.mxu0 0.0
  %3730 = vmatmul.mubr.f32.gmra.mrb[0].mxu0 %v3562
  %v3731 = vpop.f32.mrb[0].mxu0
  %v3732 = vadd.f32 %v3485, %v3731
  %v3733 = vpop.f32.mrb[0].mxu0
  %3734 = vmatprep.mubr.f32.mxu0 0.0
  %3735 = vmatmul.mubr.f32.gmra.mrb[0].mxu0 %v3564
  %v3736 = vpop.f32.mrb[0].mxu0
  %v3737 = vadd.f32 %v3486, %v3736
  %v3738 = vpop.f32.mrb[0].mxu0
  %3739 = vmatprep.mubr.f32.mxu0 0.0
  %3740 = vmatmul.mubr.f32.gmra.mrb[0].mxu0 %v3566
  %v3741 = vpop.f32.mrb[0].mxu0
  %v3742 = vadd.f32 %v3487, %v3741
  %v3743 = vpop.f32.mrb[0].mxu0
  %3744 = vdwg.mxu0
  %3745 = vmax.xlane.f32.xlu0 %v3667
  %v3746 = vpop.xlane.xlu0 %3745
  %3747 = vmax.xlane.f32.xlu0 %v3672
  %v3748 = vpop.xlane.xlu0 %3747
  %3749 = vmax.xlane.f32.xlu0 %v3677
  %v3750 = vpop.xlane.xlu0 %3749
  %3751 = vmax.xlane.f32.xlu0 %v3682
  %v3752 = vpop.xlane.xlu0 %3751
  %3753 = vmax.xlane.f32.xlu0 %v3687
  %v3754 = vpop.xlane.xlu0 %3753
  %3755 = vmax.xlane.f32.xlu0 %v3692
  %v3756 = vpop.xlane.xlu0 %3755
  %3757 = vmax.xlane.f32.xlu0 %v3697
  %v3758 = vpop.xlane.xlu0 %3757
  %3759 = vmax.xlane.f32.xlu0 %v3702
  %v3760 = vpop.xlane.xlu0 %3759
  %3761 = vmax.xlane.f32.xlu0 %v3707
  %v3762 = vpop.xlane.xlu0 %3761
  %3763 = vmax.xlane.f32.xlu0 %v3712
  %v3764 = vpop.xlane.xlu0 %3763
  %3765 = vmax.xlane.f32.xlu0 %v3717
  %v3766 = vpop.xlane.xlu0 %3765
  %3767 = vmax.xlane.f32.xlu0 %v3722
  %v3768 = vpop.xlane.xlu0 %3767
  %3769 = vmax.xlane.f32.xlu0 %v3727
  %v3770 = vpop.xlane.xlu0 %3769
  %3771 = vmax.xlane.f32.xlu0 %v3732
  %v3772 = vpop.xlane.xlu0 %3771
  %3773 = vmax.xlane.f32.xlu0 %v3737
  %v3774 = vpop.xlane.xlu0 %3773
  %3775 = vmax.xlane.f32.xlu0 %v3742
  %v3776 = vpop.xlane.xlu0 %3775
  %v3777 = vsub.f32 %v3667, %v3746
  %v3778 = vsub.f32 %v3672, %v3748
  %v3779 = vsub.f32 %v3677, %v3750
  %v3780 = vsub.f32 %v3682, %v3752
  %v3781 = vsub.f32 %v3687, %v3754
  %v3782 = vsub.f32 %v3692, %v3756
  %v3783 = vsub.f32 %v3697, %v3758
  %v3784 = vsub.f32 %v3702, %v3760
  %v3785 = vsub.f32 %v3707, %v3762
  %v3786 = vsub.f32 %v3712, %v3764
  %v3787 = vsub.f32 %v3717, %v3766
  %v3788 = vsub.f32 %v3722, %v3768
  %v3789 = vsub.f32 %v3727, %v3770
  %v3790 = vsub.f32 %v3732, %v3772
  %v3791 = vsub.f32 %v3737, %v3774
  %v3792 = vsub.f32 %v3742, %v3776
  %v3793 = vmul.f32 %v3777, 1.442695
  %v3794 = vpow.pop %v3793
  %v3795 = vmul.f32 %v3778, 1.442695
  %v3796 = vpow.pop %v3795
  %v3797 = vmul.f32 %v3779, 1.442695
  %v3798 = vpow.pop %v3797
  %v3799 = vmul.f32 %v3780, 1.442695
  %v3800 = vpow.pop %v3799
  %v3801 = vmul.f32 %v3781, 1.442695
  %v3802 = vpow.pop %v3801
  %v3803 = vmul.f32 %v3782, 1.442695
  %v3804 = vpow.pop %v3803
  %v3805 = vmul.f32 %v3783, 1.442695
  %v3806 = vpow.pop %v3805
  %v3807 = vmul.f32 %v3784, 1.442695
  %v3808 = vpow.pop %v3807
  %v3809 = vmul.f32 %v3785, 1.442695
  %v3810 = vpow.pop %v3809
  %v3811 = vmul.f32 %v3786, 1.442695
  %v3812 = vpow.pop %v3811
  %v3813 = vmul.f32 %v3787, 1.442695
  %v3814 = vpow.pop %v3813
  %v3815 = vmul.f32 %v3788, 1.442695
  %v3816 = vpow.pop %v3815
  %v3817 = vmul.f32 %v3789, 1.442695
  %v3818 = vpow.pop %v3817
  %v3819 = vmul.f32 %v3790, 1.442695
  %v3820 = vpow.pop %v3819
  %v3821 = vmul.f32 %v3791, 1.442695
  %v3822 = vpow.pop %v3821
  %v3823 = vmul.f32 %v3792, 1.442695
  %v3824 = vpow.pop %v3823
  %3825 = vadd.xlane.f32.xlu0 %v3794
  %v3826 = vpop.xlane.xlu0 %3825
  %3827 = vadd.xlane.f32.xlu0 %v3796
  %v3828 = vpop.xlane.xlu0 %3827
  %3829 = vadd.xlane.f32.xlu0 %v3798
  %v3830 = vpop.xlane.xlu0 %3829
  %3831 = vadd.xlane.f32.xlu0 %v3800
  %v3832 = vpop.xlane.xlu0 %3831
  %3833 = vadd.xlane.f32.xlu0 %v3802
  %v3834 = vpop.xlane.xlu0 %3833
  %3835 = vadd.xlane.f32.xlu0 %v3804
  %v3836 = vpop.xlane.xlu0 %3835
  %3837 = vadd.xlane.f32.xlu0 %v3806
  %v3838 = vpop.xlane.xlu0 %3837
  %3839 = vadd.xlane.f32.xlu0 %v3808
  %v3840 = vpop.xlane.xlu0 %3839
  %3841 = vadd.xlane.f32.xlu0 %v3810
  %v3842 = vpop.xlane.xlu0 %3841
  %3843 = vadd.xlane.f32.xlu0 %v3812
  %v3844 = vpop.xlane.xlu0 %3843
  %3845 = vadd.xlane.f32.xlu0 %v3814
  %v3846 = vpop.xlane.xlu0 %3845
  %3847 = vadd.xlane.f32.xlu0 %v3816
  %v3848 = vpop.xlane.xlu0 %3847
  %3849 = vadd.xlane.f32.xlu0 %v3818
  %v3850 = vpop.xlane.xlu0 %3849
  %3851 = vadd.xlane.f32.xlu0 %v3820
  %v3852 = vpop.xlane.xlu0 %3851
  %3853 = vadd.xlane.f32.xlu0 %v3822
  %v3854 = vpop.xlane.xlu0 %3853
  %3855 = vadd.xlane.f32.xlu0 %v3824
  %v3856 = vpop.xlane.xlu0 %3855
  %v3857 = vrcp.pop %v3826
  %v3858 = vmul.f32 1.0, %v3857
  %v3859 = vrcp.pop %v3828
  %v3860 = vmul.f32 1.0, %v3859
  %v3861 = vrcp.pop %v3830
  %v3862 = vmul.f32 1.0, %v3861
  %v3863 = vrcp.pop %v3832
  %v3864 = vmul.f32 1.0, %v3863
  %v3865 = vrcp.pop %v3834
  %v3866 = vmul.f32 1.0, %v3865
  %v3867 = vrcp.pop %v3836
  %v3868 = vmul.f32 1.0, %v3867
  %v3869 = vrcp.pop %v3838
  %v3870 = vmul.f32 1.0, %v3869
  %v3871 = vrcp.pop %v3840
  %v3872 = vmul.f32 1.0, %v3871
  %v3873 = vrcp.pop %v3842
  %v3874 = vmul.f32 1.0, %v3873
  %v3875 = vrcp.pop %v3844
  %v3876 = vmul.f32 1.0, %v3875
  %v3877 = vrcp.pop %v3846
  %v3878 = vmul.f32 1.0, %v3877
  %v3879 = vrcp.pop %v3848
  %v3880 = vmul.f32 1.0, %v3879
  %v3881 = vrcp.pop %v3850
  %v3882 = vmul.f32 1.0, %v3881
  %v3883 = vrcp.pop %v3852
  %v3884 = vmul.f32 1.0, %v3883
  %v3885 = vrcp.pop %v3854
  %v3886 = vmul.f32 1.0, %v3885
  %v3887 = vrcp.pop %v3856
  %v3888 = vmul.f32 1.0, %v3887
  %v3889 = vmul.f32 %v3794, %v3858
  %v3890 = vmul.f32 %v3796, %v3860
  %v3891 = vmul.f32 %v3798, %v3862
  %v3892 = vmul.f32 %v3800, %v3864
  %v3893 = vmul.f32 %v3802, %v3866
  %v3894 = vmul.f32 %v3804, %v3868
  %v3895 = vmul.f32 %v3806, %v3870
  %v3896 = vmul.f32 %v3808, %v3872
  %v3897 = vmul.f32 %v3810, %v3874
  %v3898 = vmul.f32 %v3812, %v3876
  %v3899 = vmul.f32 %v3814, %v3878
  %v3900 = vmul.f32 %v3816, %v3880
  %v3901 = vmul.f32 %v3818, %v3882
  %v3902 = vmul.f32 %v3820, %v3884
  %v3903 = vmul.f32 %v3822, %v3886
  %v3904 = vmul.f32 %v3824, %v3888
  %3905 = vrot.lane.b32.xlu0 %v3440, 112
  %v3906 = vpop.permute.xlu0 %3905
  %3907 = vrot.lane.b32.xlu0 %v3441, 112
  %v3908 = vpop.permute.xlu0 %3907
  %3909 = vrot.lane.b32.xlu0 %v3442, 112
  %v3910 = vpop.permute.xlu0 %3909
  %3911 = vrot.lane.b32.xlu0 %v3443, 112
  %v3912 = vpop.permute.xlu0 %3911
  %3913 = vrot.lane.b32.xlu0 %v3444, 112
  %v3914 = vpop.permute.xlu0 %3913
  %3915 = vrot.lane.b32.xlu0 %v3445, 112
  %v3916 = vpop.permute.xlu0 %3915
  %3917 = vrot.lane.b32.xlu0 %v3446, 112
  %v3918 = vpop.permute.xlu0 %3917
  %3919 = vrot.lane.b32.xlu0 %v3447, 112
  %v3920 = vpop.permute.xlu0 %3919
  %3921 = vrot.lane.b32.xlu0 %v3448, 112
  %v3922 = vpop.permute.xlu0 %3921
  %3923 = vrot.lane.b32.xlu0 %v3449, 112
  %v3924 = vpop.permute.xlu0 %3923
  %3925 = vrot.lane.b32.xlu0 %v3450, 112
  %v3926 = vpop.permute.xlu0 %3925
  %3927 = vrot.lane.b32.xlu0 %v3451, 112
  %v3928 = vpop.permute.xlu0 %3927
  %3929 = vrot.lane.b32.xlu0 %v3452, 112
  %v3930 = vpop.permute.xlu0 %3929
  %3931 = vrot.lane.b32.xlu0 %v3453, 112
  %v3932 = vpop.permute.xlu0 %3931
  %3933 = vrot.lane.b32.xlu0 %v3454, 112
  %v3934 = vpop.permute.xlu0 %3933
  %3935 = vrot.lane.b32.xlu0 %v3455, 112
  %v3936 = vpop.permute.xlu0 %3935
  %3937 = vrot.lane.b32.xlu0 %v3440, 48
  %v3938 = vpop.permute.xlu0 %3937
  %3939 = vrot.lane.b32.xlu0 %v3441, 48
  %v3940 = vpop.permute.xlu0 %3939
  %3941 = vrot.lane.b32.xlu0 %v3442, 48
  %v3942 = vpop.permute.xlu0 %3941
  %3943 = vrot.lane.b32.xlu0 %v3443, 48
  %v3944 = vpop.permute.xlu0 %3943
  %3945 = vrot.lane.b32.xlu0 %v3444, 48
  %v3946 = vpop.permute.xlu0 %3945
  %3947 = vrot.lane.b32.xlu0 %v3445, 48
  %v3948 = vpop.permute.xlu0 %3947
  %3949 = vrot.lane.b32.xlu0 %v3446, 48
  %v3950 = vpop.permute.xlu0 %3949
  %3951 = vrot.lane.b32.xlu0 %v3447, 48
  %v3952 = vpop.permute.xlu0 %3951
  %3953 = vrot.lane.b32.xlu0 %v3448, 48
  %v3954 = vpop.permute.xlu0 %3953
  %3955 = vrot.lane.b32.xlu0 %v3449, 48
  %v3956 = vpop.permute.xlu0 %3955
  %3957 = vrot.lane.b32.xlu0 %v3450, 48
  %v3958 = vpop.permute.xlu0 %3957
  %3959 = vrot.lane.b32.xlu0 %v3451, 48
  %v3960 = vpop.permute.xlu0 %3959
  %3961 = vrot.lane.b32.xlu0 %v3452, 48
  %v3962 = vpop.permute.xlu0 %3961
  %3963 = vrot.lane.b32.xlu0 %v3453, 48
  %v3964 = vpop.permute.xlu0 %3963
  %3965 = vrot.lane.b32.xlu0 %v3454, 48
  %v3966 = vpop.permute.xlu0 %3965
  %3967 = vrot.lane.b32.xlu0 %v3455, 48
  %v3968 = vpop.permute.xlu0 %3967
  %v3969 = vsel %vm977, %v3906, 0
  %v3971 = vsel %vm977, %v3908, 0
  %v3973 = vsel %vm977, %v3910, 0
  %v3975 = vsel %vm977, %v3912, 0
  %v3977 = vsel %vm977, %v3914, 0
  %v3979 = vsel %vm977, %v3916, 0
  %v3981 = vsel %vm977, %v3918, 0
  %v3983 = vsel %vm977, %v3920, 0
  %v3985 = vsel %vm977, %v3922, 0
  %v3987 = vsel %vm977, %v3924, 0
  %v3989 = vsel %vm977, %v3926, 0
  %v3991 = vsel %vm977, %v3928, 0
  %v3993 = vsel %vm977, %v3930, 0
  %v3995 = vsel %vm977, %v3932, 0
  %v3997 = vsel %vm977, %v3934, 0
  %v3999 = vsel %vm977, %v3936, 0
  %v4001 = vsel %vm977, %v3938, 0
  %v4003 = vsel %vm977, %v3940, 0
  %v4005 = vsel %vm977, %v3942, 0
  %v4007 = vsel %vm977, %v3944, 0
  %v4009 = vsel %vm977, %v3946, 0
  %v4011 = vsel %vm977, %v3948, 0
  %v4013 = vsel %vm977, %v3950, 0
  %v4015 = vsel %vm977, %v3952, 0
  %v4017 = vsel %vm977, %v3954, 0
  %v4019 = vsel %vm977, %v3956, 0
  %v4021 = vsel %vm977, %v3958, 0
  %v4023 = vsel %vm977, %v3960, 0
  %v4025 = vsel %vm977, %v3962, 0
  %v4027 = vsel %vm977, %v3964, 0
  %v4029 = vsel %vm977, %v3966, 0
  %v4031 = vsel %vm977, %v3968, 0
  %4033 = vmatprep.subr.mxu0 0.0
  %4034 = vmatpush1.xpose.msra.mxu0 %v4001
  %4035 = vmatprep.subr.mxu0 0.0
  %4036 = vmatpush1.xpose.msra.mxu0 %v4003
  %4037 = vmatprep.subr.mxu0 0.0
  %4038 = vmatpush1.xpose.msra.mxu0 %v4005
  %4039 = vmatprep.subr.mxu0 0.0
  %4040 = vmatpush1.xpose.msra.mxu0 %v4007
  %4041 = vmatprep.subr.mxu0 0.0
  %4042 = vmatpush1.xpose.msra.mxu0 %v4009
  %4043 = vmatprep.subr.mxu0 0.0
  %4044 = vmatpush1.xpose.msra.mxu0 %v4011
  %4045 = vmatprep.subr.mxu0 0.0
  %4046 = vmatpush1.xpose.msra.mxu0 %v4013
  %4047 = vmatprep.subr.mxu0 0.0
  %4048 = vmatpush1.xpose.msra.mxu0 %v4015
  %4049 = vmatprep.subr.mxu0 0.0
  %4050 = vmatpush1.xpose.msra.mxu0 %v4017
  %4051 = vmatprep.subr.mxu0 0.0
  %4052 = vmatpush1.xpose.msra.mxu0 %v4019
  %4053 = vmatprep.subr.mxu0 0.0
  %4054 = vmatpush1.xpose.msra.mxu0 %v4021
  %4055 = vmatprep.subr.mxu0 0.0
  %4056 = vmatpush1.xpose.msra.mxu0 %v4023
  %4057 = vmatprep.subr.mxu0 0.0
  %4058 = vmatpush1.xpose.msra.mxu0 %v4025
  %4059 = vmatprep.subr.mxu0 0.0
  %4060 = vmatpush1.xpose.msra.mxu0 %v4027
  %4061 = vmatprep.subr.mxu0 0.0
  %4062 = vmatpush1.xpose.msra.mxu0 %v4029
  %4063 = vmatprep.subr.mxu0 0.0
  %4064 = vmatpush1.xpose.msra.mxu0 %v4031
  %4065 = vmatprep.subr.mxu0 0.0
  %4066 = vmatpush1.xpose.msra.mxu0 0.0
  %4067 = vmatprep.subr.mxu0 0.0
  %4068 = vmatpush1.xpose.msra.mxu0 0.0
  %4069 = vmatprep.subr.mxu0 0.0
  %4070 = vmatpush1.xpose.msra.mxu0 0.0
  %4071 = vmatprep.subr.mxu0 0.0
  %4072 = vmatpush1.xpose.msra.mxu0 0.0
  %4073 = vmatprep.subr.mxu0 0.0
  %4074 = vmatpush1.xpose.msra.mxu0 0.0
  %4075 = vmatprep.subr.mxu0 0.0
  %4076 = vmatpush1.xpose.msra.mxu0 0.0
  %4077 = vmatprep.subr.mxu0 0.0
  %4078 = vmatpush1.xpose.msra.mxu0 0.0
  %4079 = vmatprep.subr.mxu0 0.0
  %4080 = vmatpush1.xpose.msra.mxu0 0.0
  %4081 = vmatprep.subr.mxu0 0.0
  %4082 = vmatpush1.xpose.msra.mxu0 0.0
  %4083 = vmatprep.subr.mxu0 0.0
  %4084 = vmatpush1.xpose.msra.mxu0 0.0
  %4085 = vmatprep.subr.mxu0 0.0
  %4086 = vmatpush1.xpose.msra.mxu0 0.0
  %4087 = vmatprep.subr.mxu0 0.0
  %4088 = vmatpush1.xpose.msra.mxu0 0.0
  %4089 = vmatprep.subr.mxu0 0.0
  %4090 = vmatpush1.xpose.msra.mxu0 0.0
  %4091 = vmatprep.subr.mxu0 0.0
  %4092 = vmatpush1.xpose.msra.mxu0 0.0
  %4093 = vmatprep.subr.mxu0 0.0
  %4094 = vmatpush1.xpose.msra.mxu0 0.0
  %4095 = vmatprep.subr.mxu0 0.0
  %4096 = vmatpush1.xpose.msra.mxu0 0.0
  %4097 = vmatprep.mubr.f32.mxu0 0.0
  %4098 = vmatmul.mubr.f32.gmra.mrb[0].mxu0 %v3969
  %v4099 = vpop.f32.mrb[0].mxu0
  %v4100 = vadd.f32 %v3472, %v4099
  %v4101 = vpop.f32.mrb[0].mxu0
  %4102 = vmatprep.mubr.f32.mxu0 0.0
  %4103 = vmatmul.mubr.f32.gmra.mrb[0].mxu0 %v3971
  %v4104 = vpop.f32.mrb[0].mxu0
  %v4105 = vadd.f32 %v3473, %v4104
  %v4106 = vpop.f32.mrb[0].mxu0
  %4107 = vmatprep.mubr.f32.mxu0 0.0
  %4108 = vmatmul.mubr.f32.gmra.mrb[0].mxu0 %v3973
  %v4109 = vpop.f32.mrb[0].mxu0
  %v4110 = vadd.f32 %v3474, %v4109
  %v4111 = vpop.f32.mrb[0].mxu0
  %4112 = vmatprep.mubr.f32.mxu0 0.0
  %4113 = vmatmul.mubr.f32.gmra.mrb[0].mxu0 %v3975
  %v4114 = vpop.f32.mrb[0].mxu0
  %v4115 = vadd.f32 %v3475, %v4114
  %v4116 = vpop.f32.mrb[0].mxu0
  %4117 = vmatprep.mubr.f32.mxu0 0.0
  %4118 = vmatmul.mubr.f32.gmra.mrb[0].mxu0 %v3977
  %v4119 = vpop.f32.mrb[0].mxu0
  %v4120 = vadd.f32 %v3476, %v4119
  %v4121 = vpop.f32.mrb[0].mxu0
  %4122 = vmatprep.mubr.f32.mxu0 0.0
  %4123 = vmatmul.mubr.f32.gmra.mrb[0].mxu0 %v3979
  %v4124 = vpop.f32.mrb[0].mxu0
  %v4125 = vadd.f32 %v3477, %v4124
  %v4126 = vpop.f32.mrb[0].mxu0
  %4127 = vmatprep.mubr.f32.mxu0 0.0
  %4128 = vmatmul.mubr.f32.gmra.mrb[0].mxu0 %v3981
  %v4129 = vpop.f32.mrb[0].mxu0
  %v4130 = vadd.f32 %v3478, %v4129
  %v4131 = vpop.f32.mrb[0].mxu0
  %4132 = vmatprep.mubr.f32.mxu0 0.0
  %4133 = vmatmul.mubr.f32.gmra.mrb[0].mxu0 %v3983
  %v4134 = vpop.f32.mrb[0].mxu0
  %v4135 = vadd.f32 %v3479, %v4134
  %v4136 = vpop.f32.mrb[0].mxu0
  %4137 = vmatprep.mubr.f32.mxu0 0.0
  %4138 = vmatmul.mubr.f32.gmra.mrb[0].mxu0 %v3985
  %v4139 = vpop.f32.mrb[0].mxu0
  %v4140 = vadd.f32 %v3480, %v4139
  %v4141 = vpop.f32.mrb[0].mxu0
  %4142 = vmatprep.mubr.f32.mxu0 0.0
  %4143 = vmatmul.mubr.f32.gmra.mrb[0].mxu0 %v3987
  %v4144 = vpop.f32.mrb[0].mxu0
  %v4145 = vadd.f32 %v3481, %v4144
  %v4146 = vpop.f32.mrb[0].mxu0
  %4147 = vmatprep.mubr.f32.mxu0 0.0
  %4148 = vmatmul.mubr.f32.gmra.mrb[0].mxu0 %v3989
  %v4149 = vpop.f32.mrb[0].mxu0
  %v4150 = vadd.f32 %v3482, %v4149
  %v4151 = vpop.f32.mrb[0].mxu0
  %4152 = vmatprep.mubr.f32.mxu0 0.0
  %4153 = vmatmul.mubr.f32.gmra.mrb[0].mxu0 %v3991
  %v4154 = vpop.f32.mrb[0].mxu0
  %v4155 = vadd.f32 %v3483, %v4154
  %v4156 = vpop.f32.mrb[0].mxu0
  %4157 = vmatprep.mubr.f32.mxu0 0.0
  %4158 = vmatmul.mubr.f32.gmra.mrb[0].mxu0 %v3993
  %v4159 = vpop.f32.mrb[0].mxu0
  %v4160 = vadd.f32 %v3484, %v4159
  %v4161 = vpop.f32.mrb[0].mxu0
  %4162 = vmatprep.mubr.f32.mxu0 0.0
  %4163 = vmatmul.mubr.f32.gmra.mrb[0].mxu0 %v3995
  %v4164 = vpop.f32.mrb[0].mxu0
  %v4165 = vadd.f32 %v3485, %v4164
  %v4166 = vpop.f32.mrb[0].mxu0
  %4167 = vmatprep.mubr.f32.mxu0 0.0
  %4168 = vmatmul.mubr.f32.gmra.mrb[0].mxu0 %v3997
  %v4169 = vpop.f32.mrb[0].mxu0
  %v4170 = vadd.f32 %v3486, %v4169
  %v4171 = vpop.f32.mrb[0].mxu0
  %4172 = vmatprep.mubr.f32.mxu0 0.0
  %4173 = vmatmul.mubr.f32.gmra.mrb[0].mxu0 %v3999
  %v4174 = vpop.f32.mrb[0].mxu0
  %v4175 = vadd.f32 %v3487, %v4174
  %v4176 = vpop.f32.mrb[0].mxu0
  %4177 = vdwg.mxu0
  %4178 = vmax.xlane.f32.xlu0 %v4100
  %v4179 = vpop.xlane.xlu0 %4178
  %4180 = vmax.xlane.f32.xlu0 %v4105
  %v4181 = vpop.xlane.xlu0 %4180
  %4182 = vmax.xlane.f32.xlu0 %v4110
  %v4183 = vpop.xlane.xlu0 %4182
  %4184 = vmax.xlane.f32.xlu0 %v4115
  %v4185 = vpop.xlane.xlu0 %4184
  %4186 = vmax.xlane.f32.xlu0 %v4120
  %v4187 = vpop.xlane.xlu0 %4186
  %4188 = vmax.xlane.f32.xlu0 %v4125
  %v4189 = vpop.xlane.xlu0 %4188
  %4190 = vmax.xlane.f32.xlu0 %v4130
  %v4191 = vpop.xlane.xlu0 %4190
  %4192 = vmax.xlane.f32.xlu0 %v4135
  %v4193 = vpop.xlane.xlu0 %4192
  %4194 = vmax.xlane.f32.xlu0 %v4140
  %v4195 = vpop.xlane.xlu0 %4194
  %4196 = vmax.xlane.f32.xlu0 %v4145
  %v4197 = vpop.xlane.xlu0 %4196
  %4198 = vmax.xlane.f32.xlu0 %v4150
  %v4199 = vpop.xlane.xlu0 %4198
  %4200 = vmax.xlane.f32.xlu0 %v4155
  %v4201 = vpop.xlane.xlu0 %4200
  %4202 = vmax.xlane.f32.xlu0 %v4160
  %v4203 = vpop.xlane.xlu0 %4202
  %4204 = vmax.xlane.f32.xlu0 %v4165
  %v4205 = vpop.xlane.xlu0 %4204
  %4206 = vmax.xlane.f32.xlu0 %v4170
  %v4207 = vpop.xlane.xlu0 %4206
  %4208 = vmax.xlane.f32.xlu0 %v4175
  %v4209 = vpop.xlane.xlu0 %4208
  %v4210 = vsub.f32 %v4100, %v4179
  %v4211 = vsub.f32 %v4105, %v4181
  %v4212 = vsub.f32 %v4110, %v4183
  %v4213 = vsub.f32 %v4115, %v4185
  %v4214 = vsub.f32 %v4120, %v4187
  %v4215 = vsub.f32 %v4125, %v4189
  %v4216 = vsub.f32 %v4130, %v4191
  %v4217 = vsub.f32 %v4135, %v4193
  %v4218 = vsub.f32 %v4140, %v4195
  %v4219 = vsub.f32 %v4145, %v4197
  %v4220 = vsub.f32 %v4150, %v4199
  %v4221 = vsub.f32 %v4155, %v4201
  %v4222 = vsub.f32 %v4160, %v4203
  %v4223 = vsub.f32 %v4165, %v4205
  %v4224 = vsub.f32 %v4170, %v4207
  %v4225 = vsub.f32 %v4175, %v4209
  %v4226 = vmul.f32 %v4210, 1.442695
  %v4227 = vpow.pop %v4226
  %v4228 = vmul.f32 %v4211, 1.442695
  %v4229 = vpow.pop %v4228
  %v4230 = vmul.f32 %v4212, 1.442695
  %v4231 = vpow.pop %v4230
  %v4232 = vmul.f32 %v4213, 1.442695
  %v4233 = vpow.pop %v4232
  %v4234 = vmul.f32 %v4214, 1.442695
  %v4235 = vpow.pop %v4234
  %v4236 = vmul.f32 %v4215, 1.442695
  %v4237 = vpow.pop %v4236
  %v4238 = vmul.f32 %v4216, 1.442695
  %v4239 = vpow.pop %v4238
  %v4240 = vmul.f32 %v4217, 1.442695
  %v4241 = vpow.pop %v4240
  %v4242 = vmul.f32 %v4218, 1.442695
  %v4243 = vpow.pop %v4242
  %v4244 = vmul.f32 %v4219, 1.442695
  %v4245 = vpow.pop %v4244
  %v4246 = vmul.f32 %v4220, 1.442695
  %v4247 = vpow.pop %v4246
  %v4248 = vmul.f32 %v4221, 1.442695
  %v4249 = vpow.pop %v4248
  %v4250 = vmul.f32 %v4222, 1.442695
  %v4251 = vpow.pop %v4250
  %v4252 = vmul.f32 %v4223, 1.442695
  %v4253 = vpow.pop %v4252
  %v4254 = vmul.f32 %v4224, 1.442695
  %v4255 = vpow.pop %v4254
  %v4256 = vmul.f32 %v4225, 1.442695
  %v4257 = vpow.pop %v4256
  %4258 = vadd.xlane.f32.xlu0 %v4227
  %v4259 = vpop.xlane.xlu0 %4258
  %4260 = vadd.xlane.f32.xlu0 %v4229
  %v4261 = vpop.xlane.xlu0 %4260
  %4262 = vadd.xlane.f32.xlu0 %v4231
  %v4263 = vpop.xlane.xlu0 %4262
  %4264 = vadd.xlane.f32.xlu0 %v4233
  %v4265 = vpop.xlane.xlu0 %4264
  %4266 = vadd.xlane.f32.xlu0 %v4235
  %v4267 = vpop.xlane.xlu0 %4266
  %4268 = vadd.xlane.f32.xlu0 %v4237
  %v4269 = vpop.xlane.xlu0 %4268
  %4270 = vadd.xlane.f32.xlu0 %v4239
  %v4271 = vpop.xlane.xlu0 %4270
  %4272 = vadd.xlane.f32.xlu0 %v4241
  %v4273 = vpop.xlane.xlu0 %4272
  %4274 = vadd.xlane.f32.xlu0 %v4243
  %v4275 = vpop.xlane.xlu0 %4274
  %4276 = vadd.xlane.f32.xlu0 %v4245
  %v4277 = vpop.xlane.xlu0 %4276
  %4278 = vadd.xlane.f32.xlu0 %v4247
  %v4279 = vpop.xlane.xlu0 %4278
  %4280 = vadd.xlane.f32.xlu0 %v4249
  %v4281 = vpop.xlane.xlu0 %4280
  %4282 = vadd.xlane.f32.xlu0 %v4251
  %v4283 = vpop.xlane.xlu0 %4282
  %4284 = vadd.xlane.f32.xlu0 %v4253
  %v4285 = vpop.xlane.xlu0 %4284
  %4286 = vadd.xlane.f32.xlu0 %v4255
  %v4287 = vpop.xlane.xlu0 %4286
  %4288 = vadd.xlane.f32.xlu0 %v4257
  %v4289 = vpop.xlane.xlu0 %4288
  %v4290 = vrcp.pop %v4259
  %v4291 = vmul.f32 1.0, %v4290
  %v4292 = vrcp.pop %v4261
  %v4293 = vmul.f32 1.0, %v4292
  %v4294 = vrcp.pop %v4263
  %v4295 = vmul.f32 1.0, %v4294
  %v4296 = vrcp.pop %v4265
  %v4297 = vmul.f32 1.0, %v4296
  %v4298 = vrcp.pop %v4267
  %v4299 = vmul.f32 1.0, %v4298
  %v4300 = vrcp.pop %v4269
  %v4301 = vmul.f32 1.0, %v4300
  %v4302 = vrcp.pop %v4271
  %v4303 = vmul.f32 1.0, %v4302
  %v4304 = vrcp.pop %v4273
  %v4305 = vmul.f32 1.0, %v4304
  %v4306 = vrcp.pop %v4275
  %v4307 = vmul.f32 1.0, %v4306
  %v4308 = vrcp.pop %v4277
  %v4309 = vmul.f32 1.0, %v4308
  %v4310 = vrcp.pop %v4279
  %v4311 = vmul.f32 1.0, %v4310
  %v4312 = vrcp.pop %v4281
  %v4313 = vmul.f32 1.0, %v4312
  %v4314 = vrcp.pop %v4283
  %v4315 = vmul.f32 1.0, %v4314
  %v4316 = vrcp.pop %v4285
  %v4317 = vmul.f32 1.0, %v4316
  %v4318 = vrcp.pop %v4287
  %v4319 = vmul.f32 1.0, %v4318
  %v4320 = vrcp.pop %v4289
  %v4321 = vmul.f32 1.0, %v4320
  %v4322 = vmul.f32 %v4227, %v4291
  %v4323 = vmul.f32 %v4229, %v4293
  %v4324 = vmul.f32 %v4231, %v4295
  %v4325 = vmul.f32 %v4233, %v4297
  %v4326 = vmul.f32 %v4235, %v4299
  %v4327 = vmul.f32 %v4237, %v4301
  %v4328 = vmul.f32 %v4239, %v4303
  %v4329 = vmul.f32 %v4241, %v4305
  %v4330 = vmul.f32 %v4243, %v4307
  %v4331 = vmul.f32 %v4245, %v4309
  %v4332 = vmul.f32 %v4247, %v4311
  %v4333 = vmul.f32 %v4249, %v4313
  %v4334 = vmul.f32 %v4251, %v4315
  %v4335 = vmul.f32 %v4253, %v4317
  %v4336 = vmul.f32 %v4255, %v4319
  %v4337 = vmul.f32 %v4257, %v4321
  %4354 = vrot.lane.b32.xlu0 %v3456, 64
  %v4355 = vpop.permute.xlu0 %4354
  %4356 = vrot.lane.b32.xlu0 %v3457, 64
  %v4357 = vpop.permute.xlu0 %4356
  %4358 = vrot.lane.b32.xlu0 %v3458, 64
  %v4359 = vpop.permute.xlu0 %4358
  %4360 = vrot.lane.b32.xlu0 %v3459, 64
  %v4361 = vpop.permute.xlu0 %4360
  %4362 = vrot.lane.b32.xlu0 %v3460, 64
  %v4363 = vpop.permute.xlu0 %4362
  %4364 = vrot.lane.b32.xlu0 %v3461, 64
  %v4365 = vpop.permute.xlu0 %4364
  %4366 = vrot.lane.b32.xlu0 %v3462, 64
  %v4367 = vpop.permute.xlu0 %4366
  %4368 = vrot.lane.b32.xlu0 %v3463, 64
  %v4369 = vpop.permute.xlu0 %4368
  %4370 = vrot.lane.b32.xlu0 %v3464, 64
  %v4371 = vpop.permute.xlu0 %4370
  %4372 = vrot.lane.b32.xlu0 %v3465, 64
  %v4373 = vpop.permute.xlu0 %4372
  %4374 = vrot.lane.b32.xlu0 %v3466, 64
  %v4375 = vpop.permute.xlu0 %4374
  %4376 = vrot.lane.b32.xlu0 %v3467, 64
  %v4377 = vpop.permute.xlu0 %4376
  %4378 = vrot.lane.b32.xlu0 %v3468, 64
  %v4379 = vpop.permute.xlu0 %4378
  %4380 = vrot.lane.b32.xlu0 %v3469, 64
  %v4381 = vpop.permute.xlu0 %4380
  %4382 = vrot.lane.b32.xlu0 %v3470, 64
  %v4383 = vpop.permute.xlu0 %4382
  %4384 = vrot.lane.b32.xlu0 %v3471, 64
  %v4385 = vpop.permute.xlu0 %4384
  %4402 = vmatprep.subr.mxu0 0.0
  %4403 = vmatpush1.msra.mxu0 %v4355
  %4404 = vmatprep.subr.mxu0 0.0
  %4405 = vmatpush1.msra.mxu0 %v4357
  %4406 = vmatprep.subr.mxu0 0.0
  %4407 = vmatpush1.msra.mxu0 %v4359
  %4408 = vmatprep.subr.mxu0 0.0
  %4409 = vmatpush1.msra.mxu0 %v4361
  %4410 = vmatprep.subr.mxu0 0.0
  %4411 = vmatpush1.msra.mxu0 %v4363
  %4412 = vmatprep.subr.mxu0 0.0
  %4413 = vmatpush1.msra.mxu0 %v4365
  %4414 = vmatprep.subr.mxu0 0.0
  %4415 = vmatpush1.msra.mxu0 %v4367
  %4416 = vmatprep.subr.mxu0 0.0
  %4417 = vmatpush1.msra.mxu0 %v4369
  %4418 = vmatprep.subr.mxu0 0.0
  %4419 = vmatpush1.msra.mxu0 %v4371
  %4420 = vmatprep.subr.mxu0 0.0
  %4421 = vmatpush1.msra.mxu0 %v4373
  %4422 = vmatprep.subr.mxu0 0.0
  %4423 = vmatpush1.msra.mxu0 %v4375
  %4424 = vmatprep.subr.mxu0 0.0
  %4425 = vmatpush1.msra.mxu0 %v4377
  %4426 = vmatprep.subr.mxu0 0.0
  %4427 = vmatpush1.msra.mxu0 %v4379
  %4428 = vmatprep.subr.mxu0 0.0
  %4429 = vmatpush1.msra.mxu0 %v4381
  %4430 = vmatprep.subr.mxu0 0.0
  %4431 = vmatpush1.msra.mxu0 %v4383
  %4432 = vmatprep.subr.mxu0 0.0
  %4433 = vmatpush1.msra.mxu0 %v4385
  %4434 = vmatprep.subr.mxu0 0.0
  %4435 = vmatpush1.msra.mxu0 0.0
  %4436 = vmatprep.subr.mxu0 0.0
  %4437 = vmatpush1.msra.mxu0 0.0
  %4438 = vmatprep.subr.mxu0 0.0
  %4439 = vmatpush1.msra.mxu0 0.0
  %4440 = vmatprep.subr.mxu0 0.0
  %4441 = vmatpush1.msra.mxu0 0.0
  %4442 = vmatprep.subr.mxu0 0.0
  %4443 = vmatpush1.msra.mxu0 0.0
  %4444 = vmatprep.subr.mxu0 0.0
  %4445 = vmatpush1.msra.mxu0 0.0
  %4446 = vmatprep.subr.mxu0 0.0
  %4447 = vmatpush1.msra.mxu0 0.0
  %4448 = vmatprep.subr.mxu0 0.0
  %4449 = vmatpush1.msra.mxu0 0.0
  %4450 = vmatprep.subr.mxu0 0.0
  %4451 = vmatpush1.msra.mxu0 0.0
  %4452 = vmatprep.subr.mxu0 0.0
  %4453 = vmatpush1.msra.mxu0 0.0
  %4454 = vmatprep.subr.mxu0 0.0
  %4455 = vmatpush1.msra.mxu0 0.0
  %4456 = vmatprep.subr.mxu0 0.0
  %4457 = vmatpush1.msra.mxu0 0.0
  %4458 = vmatprep.subr.mxu0 0.0
  %4459 = vmatpush1.msra.mxu0 0.0
  %4460 = vmatprep.subr.mxu0 0.0
  %4461 = vmatpush1.msra.mxu0 0.0
  %4462 = vmatprep.subr.mxu0 0.0
  %4463 = vmatpush1.msra.mxu0 0.0
  %4464 = vmatprep.subr.mxu0 0.0
  %4465 = vmatpush1.msra.mxu0 0.0
  %4466 = vmatprep.mubr.f32.mxu0 0.0
  %4467 = vmatmul.mubr.f32.gmra.mrb[0].mxu0 %v4322
  %v4468 = vpop.f32.mrb[0].mxu0
  %v4469 = vadd.f32 0.0, %v4468
  %v4470 = vpop.f32.mrb[0].mxu0
  %4471 = vmatprep.mubr.f32.mxu0 0.0
  %4472 = vmatmul.mubr.f32.gmra.mrb[0].mxu0 %v4323
  %v4473 = vpop.f32.mrb[0].mxu0
  %v4474 = vadd.f32 0.0, %v4473
  %v4475 = vpop.f32.mrb[0].mxu0
  %4476 = vmatprep.mubr.f32.mxu0 0.0
  %4477 = vmatmul.mubr.f32.gmra.mrb[0].mxu0 %v4324
  %v4478 = vpop.f32.mrb[0].mxu0
  %v4479 = vadd.f32 0.0, %v4478
  %v4480 = vpop.f32.mrb[0].mxu0
  %4481 = vmatprep.mubr.f32.mxu0 0.0
  %4482 = vmatmul.mubr.f32.gmra.mrb[0].mxu0 %v4325
  %v4483 = vpop.f32.mrb[0].mxu0
  %v4484 = vadd.f32 0.0, %v4483
  %v4485 = vpop.f32.mrb[0].mxu0
  %4486 = vmatprep.mubr.f32.mxu0 0.0
  %4487 = vmatmul.mubr.f32.gmra.mrb[0].mxu0 %v4326
  %v4488 = vpop.f32.mrb[0].mxu0
  %v4489 = vadd.f32 0.0, %v4488
  %v4490 = vpop.f32.mrb[0].mxu0
  %4491 = vmatprep.mubr.f32.mxu0 0.0
  %4492 = vmatmul.mubr.f32.gmra.mrb[0].mxu0 %v4327
  %v4493 = vpop.f32.mrb[0].mxu0
  %v4494 = vadd.f32 0.0, %v4493
  %v4495 = vpop.f32.mrb[0].mxu0
  %4496 = vmatprep.mubr.f32.mxu0 0.0
  %4497 = vmatmul.mubr.f32.gmra.mrb[0].mxu0 %v4328
  %v4498 = vpop.f32.mrb[0].mxu0
  %v4499 = vadd.f32 0.0, %v4498
  %v4500 = vpop.f32.mrb[0].mxu0
  %4501 = vmatprep.mubr.f32.mxu0 0.0
  %4502 = vmatmul.mubr.f32.gmra.mrb[0].mxu0 %v4329
  %v4503 = vpop.f32.mrb[0].mxu0
  %v4504 = vadd.f32 0.0, %v4503
  %v4505 = vpop.f32.mrb[0].mxu0
  %4506 = vmatprep.mubr.f32.mxu0 0.0
  %4507 = vmatmul.mubr.f32.gmra.mrb[0].mxu0 %v4330
  %v4508 = vpop.f32.mrb[0].mxu0
  %v4509 = vadd.f32 0.0, %v4508
  %v4510 = vpop.f32.mrb[0].mxu0
  %4511 = vmatprep.mubr.f32.mxu0 0.0
  %4512 = vmatmul.mubr.f32.gmra.mrb[0].mxu0 %v4331
  %v4513 = vpop.f32.mrb[0].mxu0
  %v4514 = vadd.f32 0.0, %v4513
  %v4515 = vpop.f32.mrb[0].mxu0
  %4516 = vmatprep.mubr.f32.mxu0 0.0
  %4517 = vmatmul.mubr.f32.gmra.mrb[0].mxu0 %v4332
  %v4518 = vpop.f32.mrb[0].mxu0
  %v4519 = vadd.f32 0.0, %v4518
  %v4520 = vpop.f32.mrb[0].mxu0
  %4521 = vmatprep.mubr.f32.mxu0 0.0
  %4522 = vmatmul.mubr.f32.gmra.mrb[0].mxu0 %v4333
  %v4523 = vpop.f32.mrb[0].mxu0
  %v4524 = vadd.f32 0.0, %v4523
  %v4525 = vpop.f32.mrb[0].mxu0
  %4526 = vmatprep.mubr.f32.mxu0 0.0
  %4527 = vmatmul.mubr.f32.gmra.mrb[0].mxu0 %v4334
  %v4528 = vpop.f32.mrb[0].mxu0
  %v4529 = vadd.f32 0.0, %v4528
  %v4530 = vpop.f32.mrb[0].mxu0
  %4531 = vmatprep.mubr.f32.mxu0 0.0
  %4532 = vmatmul.mubr.f32.gmra.mrb[0].mxu0 %v4335
  %v4533 = vpop.f32.mrb[0].mxu0
  %v4534 = vadd.f32 0.0, %v4533
  %v4535 = vpop.f32.mrb[0].mxu0
  %4536 = vmatprep.mubr.f32.mxu0 0.0
  %4537 = vmatmul.mubr.f32.gmra.mrb[0].mxu0 %v4336
  %v4538 = vpop.f32.mrb[0].mxu0
  %v4539 = vadd.f32 0.0, %v4538
  %v4540 = vpop.f32.mrb[0].mxu0
  %4541 = vmatprep.mubr.f32.mxu0 0.0
  %4542 = vmatmul.mubr.f32.gmra.mrb[0].mxu0 %v4337
  %v4543 = vpop.f32.mrb[0].mxu0
  %v4544 = vadd.f32 0.0, %v4543
  %v4545 = vpop.f32.mrb[0].mxu0
  %4546 = vdwg.mxu0
  %4547 = vmatprep.subr.mxu0 0.0
  %4548 = vmatpush1.msra.mxu0 %v3456
  %4549 = vmatprep.subr.mxu0 0.0
  %4550 = vmatpush1.msra.mxu0 %v3457
  %4551 = vmatprep.subr.mxu0 0.0
  %4552 = vmatpush1.msra.mxu0 %v3458
  %4553 = vmatprep.subr.mxu0 0.0
  %4554 = vmatpush1.msra.mxu0 %v3459
  %4555 = vmatprep.subr.mxu0 0.0
  %4556 = vmatpush1.msra.mxu0 %v3460
  %4557 = vmatprep.subr.mxu0 0.0
  %4558 = vmatpush1.msra.mxu0 %v3461
  %4559 = vmatprep.subr.mxu0 0.0
  %4560 = vmatpush1.msra.mxu0 %v3462
  %4561 = vmatprep.subr.mxu0 0.0
  %4562 = vmatpush1.msra.mxu0 %v3463
  %4563 = vmatprep.subr.mxu0 0.0
  %4564 = vmatpush1.msra.mxu0 %v3464
  %4565 = vmatprep.subr.mxu0 0.0
  %4566 = vmatpush1.msra.mxu0 %v3465
  %4567 = vmatprep.subr.mxu0 0.0
  %4568 = vmatpush1.msra.mxu0 %v3466
  %4569 = vmatprep.subr.mxu0 0.0
  %4570 = vmatpush1.msra.mxu0 %v3467
  %4571 = vmatprep.subr.mxu0 0.0
  %4572 = vmatpush1.msra.mxu0 %v3468
  %4573 = vmatprep.subr.mxu0 0.0
  %4574 = vmatpush1.msra.mxu0 %v3469
  %4575 = vmatprep.subr.mxu0 0.0
  %4576 = vmatpush1.msra.mxu0 %v3470
  %4577 = vmatprep.subr.mxu0 0.0
  %4578 = vmatpush1.msra.mxu0 %v3471
  %4579 = vmatprep.subr.mxu0 0.0
  %4580 = vmatpush1.msra.mxu0 0.0
  %4581 = vmatprep.subr.mxu0 0.0
  %4582 = vmatpush1.msra.mxu0 0.0
  %4583 = vmatprep.subr.mxu0 0.0
  %4584 = vmatpush1.msra.mxu0 0.0
  %4585 = vmatprep.subr.mxu0 0.0
  %4586 = vmatpush1.msra.mxu0 0.0
  %4587 = vmatprep.subr.mxu0 0.0
  %4588 = vmatpush1.msra.mxu0 0.0
  %4589 = vmatprep.subr.mxu0 0.0
  %4590 = vmatpush1.msra.mxu0 0.0
  %4591 = vmatprep.subr.mxu0 0.0
  %4592 = vmatpush1.msra.mxu0 0.0
  %4593 = vmatprep.subr.mxu0 0.0
  %4594 = vmatpush1.msra.mxu0 0.0
  %4595 = vmatprep.subr.mxu0 0.0
  %4596 = vmatpush1.msra.mxu0 0.0
  %4597 = vmatprep.subr.mxu0 0.0
  %4598 = vmatpush1.msra.mxu0 0.0
  %4599 = vmatprep.subr.mxu0 0.0
  %4600 = vmatpush1.msra.mxu0 0.0
  %4601 = vmatprep.subr.mxu0 0.0
  %4602 = vmatpush1.msra.mxu0 0.0
  %4603 = vmatprep.subr.mxu0 0.0
  %4604 = vmatpush1.msra.mxu0 0.0
  %4605 = vmatprep.subr.mxu0 0.0
  %4606 = vmatpush1.msra.mxu0 0.0
  %4607 = vmatprep.subr.mxu0 0.0
  %4608 = vmatpush1.msra.mxu0 0.0
  %4609 = vmatprep.subr.mxu0 0.0
  %4610 = vmatpush1.msra.mxu0 0.0
  %4611 = vmatprep.mubr.f32.mxu0 0.0
  %4612 = vmatmul.mubr.f32.gmra.mrb[0].mxu0 %v3889
  %v4613 = vpop.f32.mrb[0].mxu0
  %v4614 = vadd.f32 %v4469, %v4613
  %v4615 = vpop.f32.mrb[0].mxu0
  %4616 = vmatprep.mubr.f32.mxu0 0.0
  %4617 = vmatmul.mubr.f32.gmra.mrb[0].mxu0 %v3890
  %v4618 = vpop.f32.mrb[0].mxu0
  %v4619 = vadd.f32 %v4474, %v4618
  %v4620 = vpop.f32.mrb[0].mxu0
  %4621 = vmatprep.mubr.f32.mxu0 0.0
  %4622 = vmatmul.mubr.f32.gmra.mrb[0].mxu0 %v3891
  %v4623 = vpop.f32.mrb[0].mxu0
  %v4624 = vadd.f32 %v4479, %v4623
  %v4625 = vpop.f32.mrb[0].mxu0
  %4626 = vmatprep.mubr.f32.mxu0 0.0
  %4627 = vmatmul.mubr.f32.gmra.mrb[0].mxu0 %v3892
  %v4628 = vpop.f32.mrb[0].mxu0
  %v4629 = vadd.f32 %v4484, %v4628
  %v4630 = vpop.f32.mrb[0].mxu0
  %4631 = vmatprep.mubr.f32.mxu0 0.0
  %4632 = vmatmul.mubr.f32.gmra.mrb[0].mxu0 %v3893
  %v4633 = vpop.f32.mrb[0].mxu0
  %v4634 = vadd.f32 %v4489, %v4633
  %v4635 = vpop.f32.mrb[0].mxu0
  %4636 = vmatprep.mubr.f32.mxu0 0.0
  %4637 = vmatmul.mubr.f32.gmra.mrb[0].mxu0 %v3894
  %v4638 = vpop.f32.mrb[0].mxu0
  %v4639 = vadd.f32 %v4494, %v4638
  %v4640 = vpop.f32.mrb[0].mxu0
  %4641 = vmatprep.mubr.f32.mxu0 0.0
  %4642 = vmatmul.mubr.f32.gmra.mrb[0].mxu0 %v3895
  %v4643 = vpop.f32.mrb[0].mxu0
  %v4644 = vadd.f32 %v4499, %v4643
  %v4645 = vpop.f32.mrb[0].mxu0
  %4646 = vmatprep.mubr.f32.mxu0 0.0
  %4647 = vmatmul.mubr.f32.gmra.mrb[0].mxu0 %v3896
  %v4648 = vpop.f32.mrb[0].mxu0
  %v4649 = vadd.f32 %v4504, %v4648
  %v4650 = vpop.f32.mrb[0].mxu0
  %4651 = vmatprep.mubr.f32.mxu0 0.0
  %4652 = vmatmul.mubr.f32.gmra.mrb[0].mxu0 %v3897
  %v4653 = vpop.f32.mrb[0].mxu0
  %v4654 = vadd.f32 %v4509, %v4653
  %v4655 = vpop.f32.mrb[0].mxu0
  %4656 = vmatprep.mubr.f32.mxu0 0.0
  %4657 = vmatmul.mubr.f32.gmra.mrb[0].mxu0 %v3898
  %v4658 = vpop.f32.mrb[0].mxu0
  %v4659 = vadd.f32 %v4514, %v4658
  %v4660 = vpop.f32.mrb[0].mxu0
  %4661 = vmatprep.mubr.f32.mxu0 0.0
  %4662 = vmatmul.mubr.f32.gmra.mrb[0].mxu0 %v3899
  %v4663 = vpop.f32.mrb[0].mxu0
  %v4664 = vadd.f32 %v4519, %v4663
  %v4665 = vpop.f32.mrb[0].mxu0
  %4666 = vmatprep.mubr.f32.mxu0 0.0
  %4667 = vmatmul.mubr.f32.gmra.mrb[0].mxu0 %v3900
  %v4668 = vpop.f32.mrb[0].mxu0
  %v4669 = vadd.f32 %v4524, %v4668
  %v4670 = vpop.f32.mrb[0].mxu0
  %4671 = vmatprep.mubr.f32.mxu0 0.0
  %4672 = vmatmul.mubr.f32.gmra.mrb[0].mxu0 %v3901
  %v4673 = vpop.f32.mrb[0].mxu0
  %v4674 = vadd.f32 %v4529, %v4673
  %v4675 = vpop.f32.mrb[0].mxu0
  %4676 = vmatprep.mubr.f32.mxu0 0.0
  %4677 = vmatmul.mubr.f32.gmra.mrb[0].mxu0 %v3902
  %v4678 = vpop.f32.mrb[0].mxu0
  %v4679 = vadd.f32 %v4534, %v4678
  %v4680 = vpop.f32.mrb[0].mxu0
  %4681 = vmatprep.mubr.f32.mxu0 0.0
  %4682 = vmatmul.mubr.f32.gmra.mrb[0].mxu0 %v3903
  %v4683 = vpop.f32.mrb[0].mxu0
  %v4684 = vadd.f32 %v4539, %v4683
  %v4685 = vpop.f32.mrb[0].mxu0
  %4686 = vmatprep.mubr.f32.mxu0 0.0
  %4687 = vmatmul.mubr.f32.gmra.mrb[0].mxu0 %v3904
  %v4688 = vpop.f32.mrb[0].mxu0
  %v4689 = vadd.f32 %v4544, %v4688
  %v4690 = vpop.f32.mrb[0].mxu0
  %4691 = vdwg.mxu0
  %v4692 = vld [vmem:[#allocation2 + $0x190] sm:$0xff]
  %v4693 = vld [vmem:[#allocation2 + $0x1a8] sm:$0xff]
  %v4694 = vld [vmem:[#allocation2 + $0x1c0] sm:$0xff]
  %v4695 = vld [vmem:[#allocation2 + $0x1d8] sm:$0xff]
  %v4696 = vld [vmem:[#allocation2 + $0x1f0] sm:$0xff]
  %v4697 = vld [vmem:[#allocation2 + $0x208] sm:$0xff]
  %v4698 = vld [vmem:[#allocation2 + $0x220] sm:$0xff]
  %v4699 = vld [vmem:[#allocation2 + $0x238] sm:$0xff]
  %v4700 = vld [vmem:[#allocation2 + $0x250] sm:$0xff]
  %v4701 = vld [vmem:[#allocation2 + $0x268] sm:$0xff]
  %v4702 = vld [vmem:[#allocation2 + $0x280] sm:$0xff]
  %v4703 = vld [vmem:[#allocation2 + $0x298] sm:$0xff]
  %v4704 = vld [vmem:[#allocation2 + $0x2b0] sm:$0xff]
  %v4705 = vld [vmem:[#allocation2 + $0x2c8] sm:$0xff]
  %v4706 = vld [vmem:[#allocation2 + $0x2e0] sm:$0xff]
  %v4707 = vld [vmem:[#allocation2 + $0x2f8] sm:$0xff]
  %4708 = vrot.lane.b32.xlu0 %v3440, 96
  %v4709 = vpop.permute.xlu0 %4708
  %4710 = vrot.lane.b32.xlu0 %v3441, 96
  %v4711 = vpop.permute.xlu0 %4710
  %4712 = vrot.lane.b32.xlu0 %v3442, 96
  %v4713 = vpop.permute.xlu0 %4712
  %4714 = vrot.lane.b32.xlu0 %v3443, 96
  %v4715 = vpop.permute.xlu0 %4714
  %4716 = vrot.lane.b32.xlu0 %v3444, 96
  %v4717 = vpop.permute.xlu0 %4716
  %4718 = vrot.lane.b32.xlu0 %v3445, 96
  %v4719 = vpop.permute.xlu0 %4718
  %4720 = vrot.lane.b32.xlu0 %v3446, 96
  %v4721 = vpop.permute.xlu0 %4720
  %4722 = vrot.lane.b32.xlu0 %v3447, 96
  %v4723 = vpop.permute.xlu0 %4722
  %4724 = vrot.lane.b32.xlu0 %v3448, 96
  %v4725 = vpop.permute.xlu0 %4724
  %4726 = vrot.lane.b32.xlu0 %v3449, 96
  %v4727 = vpop.permute.xlu0 %4726
  %4728 = vrot.lane.b32.xlu0 %v3450, 96
  %v4729 = vpop.permute.xlu0 %4728
  %4730 = vrot.lane.b32.xlu0 %v3451, 96
  %v4731 = vpop.permute.xlu0 %4730
  %4732 = vrot.lane.b32.xlu0 %v3452, 96
  %v4733 = vpop.permute.xlu0 %4732
  %4734 = vrot.lane.b32.xlu0 %v3453, 96
  %v4735 = vpop.permute.xlu0 %4734
  %4736 = vrot.lane.b32.xlu0 %v3454, 96
  %v4737 = vpop.permute.xlu0 %4736
  %4738 = vrot.lane.b32.xlu0 %v3455, 96
  %v4739 = vpop.permute.xlu0 %4738
  %4740 = vrot.lane.b32.xlu0 %v3440, 32
  %v4741 = vpop.permute.xlu0 %4740
  %4742 = vrot.lane.b32.xlu0 %v3441, 32
  %v4743 = vpop.permute.xlu0 %4742
  %4744 = vrot.lane.b32.xlu0 %v3442, 32
  %v4745 = vpop.permute.xlu0 %4744
  %4746 = vrot.lane.b32.xlu0 %v3443, 32
  %v4747 = vpop.permute.xlu0 %4746
  %4748 = vrot.lane.b32.xlu0 %v3444, 32
  %v4749 = vpop.permute.xlu0 %4748
  %4750 = vrot.lane.b32.xlu0 %v3445, 32
  %v4751 = vpop.permute.xlu0 %4750
  %4752 = vrot.lane.b32.xlu0 %v3446, 32
  %v4753 = vpop.permute.xlu0 %4752
  %4754 = vrot.lane.b32.xlu0 %v3447, 32
  %v4755 = vpop.permute.xlu0 %4754
  %4756 = vrot.lane.b32.xlu0 %v3448, 32
  %v4757 = vpop.permute.xlu0 %4756
  %4758 = vrot.lane.b32.xlu0 %v3449, 32
  %v4759 = vpop.permute.xlu0 %4758
  %4760 = vrot.lane.b32.xlu0 %v3450, 32
  %v4761 = vpop.permute.xlu0 %4760
  %4762 = vrot.lane.b32.xlu0 %v3451, 32
  %v4763 = vpop.permute.xlu0 %4762
  %4764 = vrot.lane.b32.xlu0 %v3452, 32
  %v4765 = vpop.permute.xlu0 %4764
  %4766 = vrot.lane.b32.xlu0 %v3453, 32
  %v4767 = vpop.permute.xlu0 %4766
  %4768 = vrot.lane.b32.xlu0 %v3454, 32
  %v4769 = vpop.permute.xlu0 %4768
  %4770 = vrot.lane.b32.xlu0 %v3455, 32
  %v4771 = vpop.permute.xlu0 %4770
  %v4772 = vsel %vm977, %v4709, 0
  %v4774 = vsel %vm977, %v4711, 0
  %v4776 = vsel %vm977, %v4713, 0
  %v4778 = vsel %vm977, %v4715, 0
  %v4780 = vsel %vm977, %v4717, 0
  %v4782 = vsel %vm977, %v4719, 0
  %v4784 = vsel %vm977, %v4721, 0
  %v4786 = vsel %vm977, %v4723, 0
  %v4788 = vsel %vm977, %v4725, 0
  %v4790 = vsel %vm977, %v4727, 0
  %v4792 = vsel %vm977, %v4729, 0
  %v4794 = vsel %vm977, %v4731, 0
  %v4796 = vsel %vm977, %v4733, 0
  %v4798 = vsel %vm977, %v4735, 0
  %v4800 = vsel %vm977, %v4737, 0
  %v4802 = vsel %vm977, %v4739, 0
  %v4804 = vsel %vm977, %v4741, 0
  %v4806 = vsel %vm977, %v4743, 0
  %v4808 = vsel %vm977, %v4745, 0
  %v4810 = vsel %vm977, %v4747, 0
  %v4812 = vsel %vm977, %v4749, 0
  %v4814 = vsel %vm977, %v4751, 0
  %v4816 = vsel %vm977, %v4753, 0
  %v4818 = vsel %vm977, %v4755, 0
  %v4820 = vsel %vm977, %v4757, 0
  %v4822 = vsel %vm977, %v4759, 0
  %v4824 = vsel %vm977, %v4761, 0
  %v4826 = vsel %vm977, %v4763, 0
  %v4828 = vsel %vm977, %v4765, 0
  %v4830 = vsel %vm977, %v4767, 0
  %v4832 = vsel %vm977, %v4769, 0
  %v4834 = vsel %vm977, %v4771, 0
  %4836 = vmatprep.subr.mxu0 0.0
  %4837 = vmatpush1.xpose.msra.mxu0 %v4804
  %4838 = vmatprep.subr.mxu0 0.0
  %4839 = vmatpush1.xpose.msra.mxu0 %v4806
  %4840 = vmatprep.subr.mxu0 0.0
  %4841 = vmatpush1.xpose.msra.mxu0 %v4808
  %4842 = vmatprep.subr.mxu0 0.0
  %4843 = vmatpush1.xpose.msra.mxu0 %v4810
  %4844 = vmatprep.subr.mxu0 0.0
  %4845 = vmatpush1.xpose.msra.mxu0 %v4812
  %4846 = vmatprep.subr.mxu0 0.0
  %4847 = vmatpush1.xpose.msra.mxu0 %v4814
  %4848 = vmatprep.subr.mxu0 0.0
  %4849 = vmatpush1.xpose.msra.mxu0 %v4816
  %4850 = vmatprep.subr.mxu0 0.0
  %4851 = vmatpush1.xpose.msra.mxu0 %v4818
  %4852 = vmatprep.subr.mxu0 0.0
  %4853 = vmatpush1.xpose.msra.mxu0 %v4820
  %4854 = vmatprep.subr.mxu0 0.0
  %4855 = vmatpush1.xpose.msra.mxu0 %v4822
  %4856 = vmatprep.subr.mxu0 0.0
  %4857 = vmatpush1.xpose.msra.mxu0 %v4824
  %4858 = vmatprep.subr.mxu0 0.0
  %4859 = vmatpush1.xpose.msra.mxu0 %v4826
  %4860 = vmatprep.subr.mxu0 0.0
  %4861 = vmatpush1.xpose.msra.mxu0 %v4828
  %4862 = vmatprep.subr.mxu0 0.0
  %4863 = vmatpush1.xpose.msra.mxu0 %v4830
  %4864 = vmatprep.subr.mxu0 0.0
  %4865 = vmatpush1.xpose.msra.mxu0 %v4832
  %4866 = vmatprep.subr.mxu0 0.0
  %4867 = vmatpush1.xpose.msra.mxu0 %v4834
  %4868 = vmatprep.subr.mxu0 0.0
  %4869 = vmatpush1.xpose.msra.mxu0 0.0
  %4870 = vmatprep.subr.mxu0 0.0
  %4871 = vmatpush1.xpose.msra.mxu0 0.0
  %4872 = vmatprep.subr.mxu0 0.0
  %4873 = vmatpush1.xpose.msra.mxu0 0.0
  %4874 = vmatprep.subr.mxu0 0.0
  %4875 = vmatpush1.xpose.msra.mxu0 0.0
  %4876 = vmatprep.subr.mxu0 0.0
  %4877 = vmatpush1.xpose.msra.mxu0 0.0
  %4878 = vmatprep.subr.mxu0 0.0
  %4879 = vmatpush1.xpose.msra.mxu0 0.0
  %4880 = vmatprep.subr.mxu0 0.0
  %4881 = vmatpush1.xpose.msra.mxu0 0.0
  %4882 = vmatprep.subr.mxu0 0.0
  %4883 = vmatpush1.xpose.msra.mxu0 0.0
  %4884 = vmatprep.subr.mxu0 0.0
  %4885 = vmatpush1.xpose.msra.mxu0 0.0
  %4886 = vmatprep.subr.mxu0 0.0
  %4887 = vmatpush1.xpose.msra.mxu0 0.0
  %4888 = vmatprep.subr.mxu0 0.0
  %4889 = vmatpush1.xpose.msra.mxu0 0.0
  %4890 = vmatprep.subr.mxu0 0.0
  %4891 = vmatpush1.xpose.msra.mxu0 0.0
  %4892 = vmatprep.subr.mxu0 0.0
  %4893 = vmatpush1.xpose.msra.mxu0 0.0
  %4894 = vmatprep.subr.mxu0 0.0
  %4895 = vmatpush1.xpose.msra.mxu0 0.0
  %4896 = vmatprep.subr.mxu0 0.0
  %4897 = vmatpush1.xpose.msra.mxu0 0.0
  %4898 = vmatprep.subr.mxu0 0.0
  %4899 = vmatpush1.xpose.msra.mxu0 0.0
  %4900 = vmatprep.mubr.f32.mxu0 0.0
  %4901 = vmatmul.mubr.f32.gmra.mrb[0].mxu0 %v4772
  %v4902 = vpop.f32.mrb[0].mxu0
  %v4903 = vadd.f32 %v3472, %v4902
  %v4904 = vpop.f32.mrb[0].mxu0
  %4905 = vmatprep.mubr.f32.mxu0 0.0
  %4906 = vmatmul.mubr.f32.gmra.mrb[0].mxu0 %v4774
  %v4907 = vpop.f32.mrb[0].mxu0
  %v4908 = vadd.f32 %v3473, %v4907
  %v4909 = vpop.f32.mrb[0].mxu0
  %4910 = vmatprep.mubr.f32.mxu0 0.0
  %4911 = vmatmul.mubr.f32.gmra.mrb[0].mxu0 %v4776
  %v4912 = vpop.f32.mrb[0].mxu0
  %v4913 = vadd.f32 %v3474, %v4912
  %v4914 = vpop.f32.mrb[0].mxu0
  %4915 = vmatprep.mubr.f32.mxu0 0.0
  %4916 = vmatmul.mubr.f32.gmra.mrb[0].mxu0 %v4778
  %v4917 = vpop.f32.mrb[0].mxu0
  %v4918 = vadd.f32 %v3475, %v4917
  %v4919 = vpop.f32.mrb[0].mxu0
  %4920 = vmatprep.mubr.f32.mxu0 0.0
  %4921 = vmatmul.mubr.f32.gmra.mrb[0].mxu0 %v4780
  %v4922 = vpop.f32.mrb[0].mxu0
  %v4923 = vadd.f32 %v3476, %v4922
  %v4924 = vpop.f32.mrb[0].mxu0
  %4925 = vmatprep.mubr.f32.mxu0 0.0
  %4926 = vmatmul.mubr.f32.gmra.mrb[0].mxu0 %v4782
  %v4927 = vpop.f32.mrb[0].mxu0
  %v4928 = vadd.f32 %v3477, %v4927
  %v4929 = vpop.f32.mrb[0].mxu0
  %4930 = vmatprep.mubr.f32.mxu0 0.0
  %4931 = vmatmul.mubr.f32.gmra.mrb[0].mxu0 %v4784
  %v4932 = vpop.f32.mrb[0].mxu0
  %v4933 = vadd.f32 %v3478, %v4932
  %v4934 = vpop.f32.mrb[0].mxu0
  %4935 = vmatprep.mubr.f32.mxu0 0.0
  %4936 = vmatmul.mubr.f32.gmra.mrb[0].mxu0 %v4786
  %v4937 = vpop.f32.mrb[0].mxu0
  %v4938 = vadd.f32 %v3479, %v4937
  %v4939 = vpop.f32.mrb[0].mxu0
  %4940 = vmatprep.mubr.f32.mxu0 0.0
  %4941 = vmatmul.mubr.f32.gmra.mrb[0].mxu0 %v4788
  %v4942 = vpop.f32.mrb[0].mxu0
  %v4943 = vadd.f32 %v3480, %v4942
  %v4944 = vpop.f32.mrb[0].mxu0
  %4945 = vmatprep.mubr.f32.mxu0 0.0
  %4946 = vmatmul.mubr.f32.gmra.mrb[0].mxu0 %v4790
  %v4947 = vpop.f32.mrb[0].mxu0
  %v4948 = vadd.f32 %v3481, %v4947
  %v4949 = vpop.f32.mrb[0].mxu0
  %4950 = vmatprep.mubr.f32.mxu0 0.0
  %4951 = vmatmul.mubr.f32.gmra.mrb[0].mxu0 %v4792
  %v4952 = vpop.f32.mrb[0].mxu0
  %v4953 = vadd.f32 %v3482, %v4952
  %v4954 = vpop.f32.mrb[0].mxu0
  %4955 = vmatprep.mubr.f32.mxu0 0.0
  %4956 = vmatmul.mubr.f32.gmra.mrb[0].mxu0 %v4794
  %v4957 = vpop.f32.mrb[0].mxu0
  %v4958 = vadd.f32 %v3483, %v4957
  %v4959 = vpop.f32.mrb[0].mxu0
  %4960 = vmatprep.mubr.f32.mxu0 0.0
  %4961 = vmatmul.mubr.f32.gmra.mrb[0].mxu0 %v4796
  %v4962 = vpop.f32.mrb[0].mxu0
  %v4963 = vadd.f32 %v3484, %v4962
  %v4964 = vpop.f32.mrb[0].mxu0
  %4965 = vmatprep.mubr.f32.mxu0 0.0
  %4966 = vmatmul.mubr.f32.gmra.mrb[0].mxu0 %v4798
  %v4967 = vpop.f32.mrb[0].mxu0
  %v4968 = vadd.f32 %v3485, %v4967
  %v4969 = vpop.f32.mrb[0].mxu0
  %4970 = vmatprep.mubr.f32.mxu0 0.0
  %4971 = vmatmul.mubr.f32.gmra.mrb[0].mxu0 %v4800
  %v4972 = vpop.f32.mrb[0].mxu0
  %v4973 = vadd.f32 %v3486, %v4972
  %v4974 = vpop.f32.mrb[0].mxu0
  %4975 = vmatprep.mubr.f32.mxu0 0.0
  %4976 = vmatmul.mubr.f32.gmra.mrb[0].mxu0 %v4802
  %v4977 = vpop.f32.mrb[0].mxu0
  %v4978 = vadd.f32 %v3487, %v4977
  %v4979 = vpop.f32.mrb[0].mxu0
  %4980 = vdwg.mxu0
  %4981 = vmax.xlane.f32.xlu0 %v4903
  %v4982 = vpop.xlane.xlu0 %4981
  %4983 = vmax.xlane.f32.xlu0 %v4908
  %v4984 = vpop.xlane.xlu0 %4983
  %4985 = vmax.xlane.f32.xlu0 %v4913
  %v4986 = vpop.xlane.xlu0 %4985
  %4987 = vmax.xlane.f32.xlu0 %v4918
  %v4988 = vpop.xlane.xlu0 %4987
  %4989 = vmax.xlane.f32.xlu0 %v4923
  %v4990 = vpop.xlane.xlu0 %4989
  %4991 = vmax.xlane.f32.xlu0 %v4928
  %v4992 = vpop.xlane.xlu0 %4991
  %4993 = vmax.xlane.f32.xlu0 %v4933
  %v4994 = vpop.xlane.xlu0 %4993
  %4995 = vmax.xlane.f32.xlu0 %v4938
  %v4996 = vpop.xlane.xlu0 %4995
  %4997 = vmax.xlane.f32.xlu0 %v4943
  %v4998 = vpop.xlane.xlu0 %4997
  %4999 = vmax.xlane.f32.xlu0 %v4948
  %v5000 = vpop.xlane.xlu0 %4999
  %5001 = vmax.xlane.f32.xlu0 %v4953
  %v5002 = vpop.xlane.xlu0 %5001
  %5003 = vmax.xlane.f32.xlu0 %v4958
  %v5004 = vpop.xlane.xlu0 %5003
  %5005 = vmax.xlane.f32.xlu0 %v4963
  %v5006 = vpop.xlane.xlu0 %5005
  %5007 = vmax.xlane.f32.xlu0 %v4968
  %v5008 = vpop.xlane.xlu0 %5007
  %5009 = vmax.xlane.f32.xlu0 %v4973
  %v5010 = vpop.xlane.xlu0 %5009
  %5011 = vmax.xlane.f32.xlu0 %v4978
  %v5012 = vpop.xlane.xlu0 %5011
  %v5013 = vsub.f32 %v4903, %v4982
  %v5014 = vsub.f32 %v4908, %v4984
  %v5015 = vsub.f32 %v4913, %v4986
  %v5016 = vsub.f32 %v4918, %v4988
  %v5017 = vsub.f32 %v4923, %v4990
  %v5018 = vsub.f32 %v4928, %v4992
  %v5019 = vsub.f32 %v4933, %v4994
  %v5020 = vsub.f32 %v4938, %v4996
  %v5021 = vsub.f32 %v4943, %v4998
  %v5022 = vsub.f32 %v4948, %v5000
  %v5023 = vsub.f32 %v4953, %v5002
  %v5024 = vsub.f32 %v4958, %v5004
  %v5025 = vsub.f32 %v4963, %v5006
  %v5026 = vsub.f32 %v4968, %v5008
  %v5027 = vsub.f32 %v4973, %v5010
  %v5028 = vsub.f32 %v4978, %v5012
  %v5029 = vmul.f32 %v5013, 1.442695
  %v5030 = vpow.pop %v5029
  %v5031 = vmul.f32 %v5014, 1.442695
  %v5032 = vpow.pop %v5031
  %v5033 = vmul.f32 %v5015, 1.442695
  %v5034 = vpow.pop %v5033
  %v5035 = vmul.f32 %v5016, 1.442695
  %v5036 = vpow.pop %v5035
  %v5037 = vmul.f32 %v5017, 1.442695
  %v5038 = vpow.pop %v5037
  %v5039 = vmul.f32 %v5018, 1.442695
  %v5040 = vpow.pop %v5039
  %v5041 = vmul.f32 %v5019, 1.442695
  %v5042 = vpow.pop %v5041
  %v5043 = vmul.f32 %v5020, 1.442695
  %v5044 = vpow.pop %v5043
  %v5045 = vmul.f32 %v5021, 1.442695
  %v5046 = vpow.pop %v5045
  %v5047 = vmul.f32 %v5022, 1.442695
  %v5048 = vpow.pop %v5047
  %v5049 = vmul.f32 %v5023, 1.442695
  %v5050 = vpow.pop %v5049
  %v5051 = vmul.f32 %v5024, 1.442695
  %v5052 = vpow.pop %v5051
  %v5053 = vmul.f32 %v5025, 1.442695
  %v5054 = vpow.pop %v5053
  %v5055 = vmul.f32 %v5026, 1.442695
  %v5056 = vpow.pop %v5055
  %v5057 = vmul.f32 %v5027, 1.442695
  %v5058 = vpow.pop %v5057
  %v5059 = vmul.f32 %v5028, 1.442695
  %v5060 = vpow.pop %v5059
  %5061 = vadd.xlane.f32.xlu0 %v5030
  %v5062 = vpop.xlane.xlu0 %5061
  %5063 = vadd.xlane.f32.xlu0 %v5032
  %v5064 = vpop.xlane.xlu0 %5063
  %5065 = vadd.xlane.f32.xlu0 %v5034
  %v5066 = vpop.xlane.xlu0 %5065
  %5067 = vadd.xlane.f32.xlu0 %v5036
  %v5068 = vpop.xlane.xlu0 %5067
  %5069 = vadd.xlane.f32.xlu0 %v5038
  %v5070 = vpop.xlane.xlu0 %5069
  %5071 = vadd.xlane.f32.xlu0 %v5040
  %v5072 = vpop.xlane.xlu0 %5071
  %5073 = vadd.xlane.f32.xlu0 %v5042
  %v5074 = vpop.xlane.xlu0 %5073
  %5075 = vadd.xlane.f32.xlu0 %v5044
  %v5076 = vpop.xlane.xlu0 %5075
  %5077 = vadd.xlane.f32.xlu0 %v5046
  %v5078 = vpop.xlane.xlu0 %5077
  %5079 = vadd.xlane.f32.xlu0 %v5048
  %v5080 = vpop.xlane.xlu0 %5079
  %5081 = vadd.xlane.f32.xlu0 %v5050
  %v5082 = vpop.xlane.xlu0 %5081
  %5083 = vadd.xlane.f32.xlu0 %v5052
  %v5084 = vpop.xlane.xlu0 %5083
  %5085 = vadd.xlane.f32.xlu0 %v5054
  %v5086 = vpop.xlane.xlu0 %5085
  %5087 = vadd.xlane.f32.xlu0 %v5056
  %v5088 = vpop.xlane.xlu0 %5087
  %5089 = vadd.xlane.f32.xlu0 %v5058
  %v5090 = vpop.xlane.xlu0 %5089
  %5091 = vadd.xlane.f32.xlu0 %v5060
  %v5092 = vpop.xlane.xlu0 %5091
  %v5093 = vrcp.pop %v5062
  %v5094 = vmul.f32 1.0, %v5093
  %v5095 = vrcp.pop %v5064
  %v5096 = vmul.f32 1.0, %v5095
  %v5097 = vrcp.pop %v5066
  %v5098 = vmul.f32 1.0, %v5097
  %v5099 = vrcp.pop %v5068
  %v5100 = vmul.f32 1.0, %v5099
  %v5101 = vrcp.pop %v5070
  %v5102 = vmul.f32 1.0, %v5101
  %v5103 = vrcp.pop %v5072
  %v5104 = vmul.f32 1.0, %v5103
  %v5105 = vrcp.pop %v5074
  %v5106 = vmul.f32 1.0, %v5105
  %v5107 = vrcp.pop %v5076
  %v5108 = vmul.f32 1.0, %v5107
  %v5109 = vrcp.pop %v5078
  %v5110 = vmul.f32 1.0, %v5109
  %v5111 = vrcp.pop %v5080
  %v5112 = vmul.f32 1.0, %v5111
  %v5113 = vrcp.pop %v5082
  %v5114 = vmul.f32 1.0, %v5113
  %v5115 = vrcp.pop %v5084
  %v5116 = vmul.f32 1.0, %v5115
  %v5117 = vrcp.pop %v5086
  %v5118 = vmul.f32 1.0, %v5117
  %v5119 = vrcp.pop %v5088
  %v5120 = vmul.f32 1.0, %v5119
  %v5121 = vrcp.pop %v5090
  %v5122 = vmul.f32 1.0, %v5121
  %v5123 = vrcp.pop %v5092
  %v5124 = vmul.f32 1.0, %v5123
  %v5125 = vmul.f32 %v5030, %v5094
  %v5126 = vmul.f32 %v5032, %v5096
  %v5127 = vmul.f32 %v5034, %v5098
  %v5128 = vmul.f32 %v5036, %v5100
  %v5129 = vmul.f32 %v5038, %v5102
  %v5130 = vmul.f32 %v5040, %v5104
  %v5131 = vmul.f32 %v5042, %v5106
  %v5132 = vmul.f32 %v5044, %v5108
  %v5133 = vmul.f32 %v5046, %v5110
  %v5134 = vmul.f32 %v5048, %v5112
  %v5135 = vmul.f32 %v5050, %v5114
  %v5136 = vmul.f32 %v5052, %v5116
  %v5137 = vmul.f32 %v5054, %v5118
  %v5138 = vmul.f32 %v5056, %v5120
  %v5139 = vmul.f32 %v5058, %v5122
  %v5140 = vmul.f32 %v5060, %v5124
  %5141 = vmatprep.subr.mxu0 0.0
  %5142 = vmatpush1.msra.mxu0 %v4692
  %5143 = vmatprep.subr.mxu0 0.0
  %5144 = vmatpush1.msra.mxu0 %v4693
  %5145 = vmatprep.subr.mxu0 0.0
  %5146 = vmatpush1.msra.mxu0 %v4694
  %5147 = vmatprep.subr.mxu0 0.0
  %5148 = vmatpush1.msra.mxu0 %v4695
  %5149 = vmatprep.subr.mxu0 0.0
  %5150 = vmatpush1.msra.mxu0 %v4696
  %5151 = vmatprep.subr.mxu0 0.0
  %5152 = vmatpush1.msra.mxu0 %v4697
  %5153 = vmatprep.subr.mxu0 0.0
  %5154 = vmatpush1.msra.mxu0 %v4698
  %5155 = vmatprep.subr.mxu0 0.0
  %5156 = vmatpush1.msra.mxu0 %v4699
  %5157 = vmatprep.subr.mxu0 0.0
  %5158 = vmatpush1.msra.mxu0 %v4700
  %5159 = vmatprep.subr.mxu0 0.0
  %5160 = vmatpush1.msra.mxu0 %v4701
  %5161 = vmatprep.subr.mxu0 0.0
  %5162 = vmatpush1.msra.mxu0 %v4702
  %5163 = vmatprep.subr.mxu0 0.0
  %5164 = vmatpush1.msra.mxu0 %v4703
  %5165 = vmatprep.subr.mxu0 0.0
  %5166 = vmatpush1.msra.mxu0 %v4704
  %5167 = vmatprep.subr.mxu0 0.0
  %5168 = vmatpush1.msra.mxu0 %v4705
  %5169 = vmatprep.subr.mxu0 0.0
  %5170 = vmatpush1.msra.mxu0 %v4706
  %5171 = vmatprep.subr.mxu0 0.0
  %5172 = vmatpush1.msra.mxu0 %v4707
  %5173 = vmatprep.subr.mxu0 0.0
  %5174 = vmatpush1.msra.mxu0 0.0
  %5175 = vmatprep.subr.mxu0 0.0
  %5176 = vmatpush1.msra.mxu0 0.0
  %5177 = vmatprep.subr.mxu0 0.0
  %5178 = vmatpush1.msra.mxu0 0.0
  %5179 = vmatprep.subr.mxu0 0.0
  %5180 = vmatpush1.msra.mxu0 0.0
  %5181 = vmatprep.subr.mxu0 0.0
  %5182 = vmatpush1.msra.mxu0 0.0
  %5183 = vmatprep.subr.mxu0 0.0
  %5184 = vmatpush1.msra.mxu0 0.0
  %5185 = vmatprep.subr.mxu0 0.0
  %5186 = vmatpush1.msra.mxu0 0.0
  %5187 = vmatprep.subr.mxu0 0.0
  %5188 = vmatpush1.msra.mxu0 0.0
  %5189 = vmatprep.subr.mxu0 0.0
  %5190 = vmatpush1.msra.mxu0 0.0
  %5191 = vmatprep.subr.mxu0 0.0
  %5192 = vmatpush1.msra.mxu0 0.0
  %5193 = vmatprep.subr.mxu0 0.0
  %5194 = vmatpush1.msra.mxu0 0.0
  %5195 = vmatprep.subr.mxu0 0.0
  %5196 = vmatpush1.msra.mxu0 0.0
  %5197 = vmatprep.subr.mxu0 0.0
  %5198 = vmatpush1.msra.mxu0 0.0
  %5199 = vmatprep.subr.mxu0 0.0
  %5200 = vmatpush1.msra.mxu0 0.0
  %5201 = vmatprep.subr.mxu0 0.0
  %5202 = vmatpush1.msra.mxu0 0.0
  %5203 = vmatprep.subr.mxu0 0.0
  %5204 = vmatpush1.msra.mxu0 0.0
  %5205 = vmatprep.mubr.f32.mxu0 0.0
  %5206 = vmatmul.mubr.f32.gmra.mrb[0].mxu0 %v5125
  %v5207 = vpop.f32.mrb[0].mxu0
  %v5208 = vadd.f32 0.0, %v5207
  %v5209 = vpop.f32.mrb[0].mxu0
  %5210 = vmatprep.mubr.f32.mxu0 0.0
  %5211 = vmatmul.mubr.f32.gmra.mrb[0].mxu0 %v5126
  %v5212 = vpop.f32.mrb[0].mxu0
  %v5213 = vadd.f32 0.0, %v5212
  %v5214 = vpop.f32.mrb[0].mxu0
  %5215 = vmatprep.mubr.f32.mxu0 0.0
  %5216 = vmatmul.mubr.f32.gmra.mrb[0].mxu0 %v5127
  %v5217 = vpop.f32.mrb[0].mxu0
  %v5218 = vadd.f32 0.0, %v5217
  %v5219 = vpop.f32.mrb[0].mxu0
  %5220 = vmatprep.mubr.f32.mxu0 0.0
  %5221 = vmatmul.mubr.f32.gmra.mrb[0].mxu0 %v5128
  %v5222 = vpop.f32.mrb[0].mxu0
  %v5223 = vadd.f32 0.0, %v5222
  %v5224 = vpop.f32.mrb[0].mxu0
  %5225 = vmatprep.mubr.f32.mxu0 0.0
  %5226 = vmatmul.mubr.f32.gmra.mrb[0].mxu0 %v5129
  %v5227 = vpop.f32.mrb[0].mxu0
  %v5228 = vadd.f32 0.0, %v5227
  %v5229 = vpop.f32.mrb[0].mxu0
  %5230 = vmatprep.mubr.f32.mxu0 0.0
  %5231 = vmatmul.mubr.f32.gmra.mrb[0].mxu0 %v5130
  %v5232 = vpop.f32.mrb[0].mxu0
  %v5233 = vadd.f32 0.0, %v5232
  %v5234 = vpop.f32.mrb[0].mxu0
  %5235 = vmatprep.mubr.f32.mxu0 0.0
  %5236 = vmatmul.mubr.f32.gmra.mrb[0].mxu0 %v5131
  %v5237 = vpop.f32.mrb[0].mxu0
  %v5238 = vadd.f32 0.0, %v5237
  %v5239 = vpop.f32.mrb[0].mxu0
  %5240 = vmatprep.mubr.f32.mxu0 0.0
  %5241 = vmatmul.mubr.f32.gmra.mrb[0].mxu0 %v5132
  %v5242 = vpop.f32.mrb[0].mxu0
  %v5243 = vadd.f32 0.0, %v5242
  %v5244 = vpop.f32.mrb[0].mxu0
  %5245 = vmatprep.mubr.f32.mxu0 0.0
  %5246 = vmatmul.mubr.f32.gmra.mrb[0].mxu0 %v5133
  %v5247 = vpop.f32.mrb[0].mxu0
  %v5248 = vadd.f32 0.0, %v5247
  %v5249 = vpop.f32.mrb[0].mxu0
  %5250 = vmatprep.mubr.f32.mxu0 0.0
  %5251 = vmatmul.mubr.f32.gmra.mrb[0].mxu0 %v5134
  %v5252 = vpop.f32.mrb[0].mxu0
  %v5253 = vadd.f32 0.0, %v5252
  %v5254 = vpop.f32.mrb[0].mxu0
  %5255 = vmatprep.mubr.f32.mxu0 0.0
  %5256 = vmatmul.mubr.f32.gmra.mrb[0].mxu0 %v5135
  %v5257 = vpop.f32.mrb[0].mxu0
  %v5258 = vadd.f32 0.0, %v5257
  %v5259 = vpop.f32.mrb[0].mxu0
  %5260 = vmatprep.mubr.f32.mxu0 0.0
  %5261 = vmatmul.mubr.f32.gmra.mrb[0].mxu0 %v5136
  %v5262 = vpop.f32.mrb[0].mxu0
  %v5263 = vadd.f32 0.0, %v5262
  %v5264 = vpop.f32.mrb[0].mxu0
  %5265 = vmatprep.mubr.f32.mxu0 0.0
  %5266 = vmatmul.mubr.f32.gmra.mrb[0].mxu0 %v5137
  %v5267 = vpop.f32.mrb[0].mxu0
  %v5268 = vadd.f32 0.0, %v5267
  %v5269 = vpop.f32.mrb[0].mxu0
  %5270 = vmatprep.mubr.f32.mxu0 0.0
  %5271 = vmatmul.mubr.f32.gmra.mrb[0].mxu0 %v5138
  %v5272 = vpop.f32.mrb[0].mxu0
  %v5273 = vadd.f32 0.0, %v5272
  %v5274 = vpop.f32.mrb[0].mxu0
  %5275 = vmatprep.mubr.f32.mxu0 0.0
  %5276 = vmatmul.mubr.f32.gmra.mrb[0].mxu0 %v5139
  %v5277 = vpop.f32.mrb[0].mxu0
  %v5278 = vadd.f32 0.0, %v5277
  %v5279 = vpop.f32.mrb[0].mxu0
  %5280 = vmatprep.mubr.f32.mxu0 0.0
  %5281 = vmatmul.mubr.f32.gmra.mrb[0].mxu0 %v5140
  %v5282 = vpop.f32.mrb[0].mxu0
  %v5283 = vadd.f32 0.0, %v5282
  %v5284 = vpop.f32.mrb[0].mxu0
  %5285 = vdwg.mxu0
  %v5286 = vadd.f32 %v4614, %v5208
  %v5287 = vadd.f32 %v4619, %v5213
  %v5288 = vadd.f32 %v4624, %v5218
  %v5289 = vadd.f32 %v4629, %v5223
  %v5290 = vadd.f32 %v4634, %v5228
  %v5291 = vadd.f32 %v4639, %v5233
  %v5292 = vadd.f32 %v4644, %v5238
  %v5293 = vadd.f32 %v4649, %v5243
  %v5294 = vadd.f32 %v4654, %v5248
  %v5295 = vadd.f32 %v4659, %v5253
  %v5296 = vadd.f32 %v4664, %v5258
  %v5297 = vadd.f32 %v4669, %v5263
  %v5298 = vadd.f32 %v4674, %v5268
  %v5299 = vadd.f32 %v4679, %v5273
  %v5300 = vadd.f32 %v4684, %v5278
  %v5301 = vadd.f32 %v4689, %v5283
  %5302 = vrot.lane.b32.xlu0 %v3440, 80
  %v5303 = vpop.permute.xlu0 %5302
  %5304 = vrot.lane.b32.xlu0 %v3441, 80
  %v5305 = vpop.permute.xlu0 %5304
  %5306 = vrot.lane.b32.xlu0 %v3442, 80
  %v5307 = vpop.permute.xlu0 %5306
  %5308 = vrot.lane.b32.xlu0 %v3443, 80
  %v5309 = vpop.permute.xlu0 %5308
  %5310 = vrot.lane.b32.xlu0 %v3444, 80
  %v5311 = vpop.permute.xlu0 %5310
  %5312 = vrot.lane.b32.xlu0 %v3445, 80
  %v5313 = vpop.permute.xlu0 %5312
  %5314 = vrot.lane.b32.xlu0 %v3446, 80
  %v5315 = vpop.permute.xlu0 %5314
  %5316 = vrot.lane.b32.xlu0 %v3447, 80
  %v5317 = vpop.permute.xlu0 %5316
  %5318 = vrot.lane.b32.xlu0 %v3448, 80
  %v5319 = vpop.permute.xlu0 %5318
  %5320 = vrot.lane.b32.xlu0 %v3449, 80
  %v5321 = vpop.permute.xlu0 %5320
  %5322 = vrot.lane.b32.xlu0 %v3450, 80
  %v5323 = vpop.permute.xlu0 %5322
  %5324 = vrot.lane.b32.xlu0 %v3451, 80
  %v5325 = vpop.permute.xlu0 %5324
  %5326 = vrot.lane.b32.xlu0 %v3452, 80
  %v5327 = vpop.permute.xlu0 %5326
  %5328 = vrot.lane.b32.xlu0 %v3453, 80
  %v5329 = vpop.permute.xlu0 %5328
  %5330 = vrot.lane.b32.xlu0 %v3454, 80
  %v5331 = vpop.permute.xlu0 %5330
  %5332 = vrot.lane.b32.xlu0 %v3455, 80
  %v5333 = vpop.permute.xlu0 %5332
  %5334 = vrot.lane.b32.xlu0 %v3440, 16
  %v5335 = vpop.permute.xlu0 %5334
  %5336 = vrot.lane.b32.xlu0 %v3441, 16
  %v5337 = vpop.permute.xlu0 %5336
  %5338 = vrot.lane.b32.xlu0 %v3442, 16
  %v5339 = vpop.permute.xlu0 %5338
  %5340 = vrot.lane.b32.xlu0 %v3443, 16
  %v5341 = vpop.permute.xlu0 %5340
  %5342 = vrot.lane.b32.xlu0 %v3444, 16
  %v5343 = vpop.permute.xlu0 %5342
  %5344 = vrot.lane.b32.xlu0 %v3445, 16
  %v5345 = vpop.permute.xlu0 %5344
  %5346 = vrot.lane.b32.xlu0 %v3446, 16
  %v5347 = vpop.permute.xlu0 %5346
  %5348 = vrot.lane.b32.xlu0 %v3447, 16
  %v5349 = vpop.permute.xlu0 %5348
  %5350 = vrot.lane.b32.xlu0 %v3448, 16
  %v5351 = vpop.permute.xlu0 %5350
  %5352 = vrot.lane.b32.xlu0 %v3449, 16
  %v5353 = vpop.permute.xlu0 %5352
  %5354 = vrot.lane.b32.xlu0 %v3450, 16
  %v5355 = vpop.permute.xlu0 %5354
  %5356 = vrot.lane.b32.xlu0 %v3451, 16
  %v5357 = vpop.permute.xlu0 %5356
  %5358 = vrot.lane.b32.xlu0 %v3452, 16
  %v5359 = vpop.permute.xlu0 %5358
  %5360 = vrot.lane.b32.xlu0 %v3453, 16
  %v5361 = vpop.permute.xlu0 %5360
  %5362 = vrot.lane.b32.xlu0 %v3454, 16
  %v5363 = vpop.permute.xlu0 %5362
  %5364 = vrot.lane.b32.xlu0 %v3455, 16
  %v5365 = vpop.permute.xlu0 %5364
  %v5366 = vsel %vm977, %v5303, 0
  %v5368 = vsel %vm977, %v5305, 0
  %v5370 = vsel %vm977, %v5307, 0
  %v5372 = vsel %vm977, %v5309, 0
  %v5374 = vsel %vm977, %v5311, 0
  %v5376 = vsel %vm977, %v5313, 0
  %v5378 = vsel %vm977, %v5315, 0
  %v5380 = vsel %vm977, %v5317, 0
  %v5382 = vsel %vm977, %v5319, 0
  %v5384 = vsel %vm977, %v5321, 0
  %v5386 = vsel %vm977, %v5323, 0
  %v5388 = vsel %vm977, %v5325, 0
  %v5390 = vsel %vm977, %v5327, 0
  %v5392 = vsel %vm977, %v5329, 0
  %v5394 = vsel %vm977, %v5331, 0
  %v5396 = vsel %vm977, %v5333, 0
  %v5398 = vsel %vm977, %v5335, 0
  %v5400 = vsel %vm977, %v5337, 0
  %v5402 = vsel %vm977, %v5339, 0
  %v5404 = vsel %vm977, %v5341, 0
  %v5406 = vsel %vm977, %v5343, 0
  %v5408 = vsel %vm977, %v5345, 0
  %v5410 = vsel %vm977, %v5347, 0
  %v5412 = vsel %vm977, %v5349, 0
  %v5414 = vsel %vm977, %v5351, 0
  %v5416 = vsel %vm977, %v5353, 0
  %v5418 = vsel %vm977, %v5355, 0
  %v5420 = vsel %vm977, %v5357, 0
  %v5422 = vsel %vm977, %v5359, 0
  %v5424 = vsel %vm977, %v5361, 0
  %v5426 = vsel %vm977, %v5363, 0
  %v5428 = vsel %vm977, %v5365, 0
  %5430 = vmatprep.subr.mxu0 0.0
  %5431 = vmatpush1.xpose.msra.mxu0 %v5398
  %5432 = vmatprep.subr.mxu0 0.0
  %5433 = vmatpush1.xpose.msra.mxu0 %v5400
  %5434 = vmatprep.subr.mxu0 0.0
  %5435 = vmatpush1.xpose.msra.mxu0 %v5402
  %5436 = vmatprep.subr.mxu0 0.0
  %5437 = vmatpush1.xpose.msra.mxu0 %v5404
  %5438 = vmatprep.subr.mxu0 0.0
  %5439 = vmatpush1.xpose.msra.mxu0 %v5406
  %5440 = vmatprep.subr.mxu0 0.0
  %5441 = vmatpush1.xpose.msra.mxu0 %v5408
  %5442 = vmatprep.subr.mxu0 0.0
  %5443 = vmatpush1.xpose.msra.mxu0 %v5410
  %5444 = vmatprep.subr.mxu0 0.0
  %5445 = vmatpush1.xpose.msra.mxu0 %v5412
  %5446 = vmatprep.subr.mxu0 0.0
  %5447 = vmatpush1.xpose.msra.mxu0 %v5414
  %5448 = vmatprep.subr.mxu0 0.0
  %5449 = vmatpush1.xpose.msra.mxu0 %v5416
  %5450 = vmatprep.subr.mxu0 0.0
  %5451 = vmatpush1.xpose.msra.mxu0 %v5418
  %5452 = vmatprep.subr.mxu0 0.0
  %5453 = vmatpush1.xpose.msra.mxu0 %v5420
  %5454 = vmatprep.subr.mxu0 0.0
  %5455 = vmatpush1.xpose.msra.mxu0 %v5422
  %5456 = vmatprep.subr.mxu0 0.0
  %5457 = vmatpush1.xpose.msra.mxu0 %v5424
  %5458 = vmatprep.subr.mxu0 0.0
  %5459 = vmatpush1.xpose.msra.mxu0 %v5426
  %5460 = vmatprep.subr.mxu0 0.0
  %5461 = vmatpush1.xpose.msra.mxu0 %v5428
  %5462 = vmatprep.subr.mxu0 0.0
  %5463 = vmatpush1.xpose.msra.mxu0 0.0
  %5464 = vmatprep.subr.mxu0 0.0
  %5465 = vmatpush1.xpose.msra.mxu0 0.0
  %5466 = vmatprep.subr.mxu0 0.0
  %5467 = vmatpush1.xpose.msra.mxu0 0.0
  %5468 = vmatprep.subr.mxu0 0.0
  %5469 = vmatpush1.xpose.msra.mxu0 0.0
  %5470 = vmatprep.subr.mxu0 0.0
  %5471 = vmatpush1.xpose.msra.mxu0 0.0
  %5472 = vmatprep.subr.mxu0 0.0
  %5473 = vmatpush1.xpose.msra.mxu0 0.0
  %5474 = vmatprep.subr.mxu0 0.0
  %5475 = vmatpush1.xpose.msra.mxu0 0.0
  %5476 = vmatprep.subr.mxu0 0.0
  %5477 = vmatpush1.xpose.msra.mxu0 0.0
  %5478 = vmatprep.subr.mxu0 0.0
  %5479 = vmatpush1.xpose.msra.mxu0 0.0
  %5480 = vmatprep.subr.mxu0 0.0
  %5481 = vmatpush1.xpose.msra.mxu0 0.0
  %5482 = vmatprep.subr.mxu0 0.0
  %5483 = vmatpush1.xpose.msra.mxu0 0.0
  %5484 = vmatprep.subr.mxu0 0.0
  %5485 = vmatpush1.xpose.msra.mxu0 0.0
  %5486 = vmatprep.subr.mxu0 0.0
  %5487 = vmatpush1.xpose.msra.mxu0 0.0
  %5488 = vmatprep.subr.mxu0 0.0
  %5489 = vmatpush1.xpose.msra.mxu0 0.0
  %5490 = vmatprep.subr.mxu0 0.0
  %5491 = vmatpush1.xpose.msra.mxu0 0.0
  %5492 = vmatprep.subr.mxu0 0.0
  %5493 = vmatpush1.xpose.msra.mxu0 0.0
  %5494 = vmatprep.mubr.f32.mxu0 0.0
  %5495 = vmatmul.mubr.f32.gmra.mrb[0].mxu0 %v5366
  %v5496 = vpop.f32.mrb[0].mxu0
  %v5497 = vadd.f32 %v3472, %v5496
  %v5498 = vpop.f32.mrb[0].mxu0
  %5499 = vmatprep.mubr.f32.mxu0 0.0
  %5500 = vmatmul.mubr.f32.gmra.mrb[0].mxu0 %v5368
  %v5501 = vpop.f32.mrb[0].mxu0
  %v5502 = vadd.f32 %v3473, %v5501
  %v5503 = vpop.f32.mrb[0].mxu0
  %5504 = vmatprep.mubr.f32.mxu0 0.0
  %5505 = vmatmul.mubr.f32.gmra.mrb[0].mxu0 %v5370
  %v5506 = vpop.f32.mrb[0].mxu0
  %v5507 = vadd.f32 %v3474, %v5506
  %v5508 = vpop.f32.mrb[0].mxu0
  %5509 = vmatprep.mubr.f32.mxu0 0.0
  %5510 = vmatmul.mubr.f32.gmra.mrb[0].mxu0 %v5372
  %v5511 = vpop.f32.mrb[0].mxu0
  %v5512 = vadd.f32 %v3475, %v5511
  %v5513 = vpop.f32.mrb[0].mxu0
  %5514 = vmatprep.mubr.f32.mxu0 0.0
  %5515 = vmatmul.mubr.f32.gmra.mrb[0].mxu0 %v5374
  %v5516 = vpop.f32.mrb[0].mxu0
  %v5517 = vadd.f32 %v3476, %v5516
  %v5518 = vpop.f32.mrb[0].mxu0
  %5519 = vmatprep.mubr.f32.mxu0 0.0
  %5520 = vmatmul.mubr.f32.gmra.mrb[0].mxu0 %v5376
  %v5521 = vpop.f32.mrb[0].mxu0
  %v5522 = vadd.f32 %v3477, %v5521
  %v5523 = vpop.f32.mrb[0].mxu0
  %5524 = vmatprep.mubr.f32.mxu0 0.0
  %5525 = vmatmul.mubr.f32.gmra.mrb[0].mxu0 %v5378
  %v5526 = vpop.f32.mrb[0].mxu0
  %v5527 = vadd.f32 %v3478, %v5526
  %v5528 = vpop.f32.mrb[0].mxu0
  %5529 = vmatprep.mubr.f32.mxu0 0.0
  %5530 = vmatmul.mubr.f32.gmra.mrb[0].mxu0 %v5380
  %v5531 = vpop.f32.mrb[0].mxu0
  %v5532 = vadd.f32 %v3479, %v5531
  %v5533 = vpop.f32.mrb[0].mxu0
  %5534 = vmatprep.mubr.f32.mxu0 0.0
  %5535 = vmatmul.mubr.f32.gmra.mrb[0].mxu0 %v5382
  %v5536 = vpop.f32.mrb[0].mxu0
  %v5537 = vadd.f32 %v3480, %v5536
  %v5538 = vpop.f32.mrb[0].mxu0
  %5539 = vmatprep.mubr.f32.mxu0 0.0
  %5540 = vmatmul.mubr.f32.gmra.mrb[0].mxu0 %v5384
  %v5541 = vpop.f32.mrb[0].mxu0
  %v5542 = vadd.f32 %v3481, %v5541
  %v5543 = vpop.f32.mrb[0].mxu0
  %5544 = vmatprep.mubr.f32.mxu0 0.0
  %5545 = vmatmul.mubr.f32.gmra.mrb[0].mxu0 %v5386
  %v5546 = vpop.f32.mrb[0].mxu0
  %v5547 = vadd.f32 %v3482, %v5546
  %v5548 = vpop.f32.mrb[0].mxu0
  %5549 = vmatprep.mubr.f32.mxu0 0.0
  %5550 = vmatmul.mubr.f32.gmra.mrb[0].mxu0 %v5388
  %v5551 = vpop.f32.mrb[0].mxu0
  %v5552 = vadd.f32 %v3483, %v5551
  %v5553 = vpop.f32.mrb[0].mxu0
  %5554 = vmatprep.mubr.f32.mxu0 0.0
  %5555 = vmatmul.mubr.f32.gmra.mrb[0].mxu0 %v5390
  %v5556 = vpop.f32.mrb[0].mxu0
  %v5557 = vadd.f32 %v3484, %v5556
  %v5558 = vpop.f32.mrb[0].mxu0
  %5559 = vmatprep.mubr.f32.mxu0 0.0
  %5560 = vmatmul.mubr.f32.gmra.mrb[0].mxu0 %v5392
  %v5561 = vpop.f32.mrb[0].mxu0
  %v5562 = vadd.f32 %v3485, %v5561
  %v5563 = vpop.f32.mrb[0].mxu0
  %5564 = vmatprep.mubr.f32.mxu0 0.0
  %5565 = vmatmul.mubr.f32.gmra.mrb[0].mxu0 %v5394
  %v5566 = vpop.f32.mrb[0].mxu0
  %v5567 = vadd.f32 %v3486, %v5566
  %v5568 = vpop.f32.mrb[0].mxu0
  %5569 = vmatprep.mubr.f32.mxu0 0.0
  %5570 = vmatmul.mubr.f32.gmra.mrb[0].mxu0 %v5396
  %v5571 = vpop.f32.mrb[0].mxu0
  %v5572 = vadd.f32 %v3487, %v5571
  %v5573 = vpop.f32.mrb[0].mxu0
  %5574 = vdwg.mxu0
  %5575 = vmax.xlane.f32.xlu0 %v5497
  %v5576 = vpop.xlane.xlu0 %5575
  %5577 = vmax.xlane.f32.xlu0 %v5502
  %v5578 = vpop.xlane.xlu0 %5577
  %5579 = vmax.xlane.f32.xlu0 %v5507
  %v5580 = vpop.xlane.xlu0 %5579
  %5581 = vmax.xlane.f32.xlu0 %v5512
  %v5582 = vpop.xlane.xlu0 %5581
  %5583 = vmax.xlane.f32.xlu0 %v5517
  %v5584 = vpop.xlane.xlu0 %5583
  %5585 = vmax.xlane.f32.xlu0 %v5522
  %v5586 = vpop.xlane.xlu0 %5585
  %5587 = vmax.xlane.f32.xlu0 %v5527
  %v5588 = vpop.xlane.xlu0 %5587
  %5589 = vmax.xlane.f32.xlu0 %v5532
  %v5590 = vpop.xlane.xlu0 %5589
  %5591 = vmax.xlane.f32.xlu0 %v5537
  %v5592 = vpop.xlane.xlu0 %5591
  %5593 = vmax.xlane.f32.xlu0 %v5542
  %v5594 = vpop.xlane.xlu0 %5593
  %5595 = vmax.xlane.f32.xlu0 %v5547
  %v5596 = vpop.xlane.xlu0 %5595
  %5597 = vmax.xlane.f32.xlu0 %v5552
  %v5598 = vpop.xlane.xlu0 %5597
  %5599 = vmax.xlane.f32.xlu0 %v5557
  %v5600 = vpop.xlane.xlu0 %5599
  %5601 = vmax.xlane.f32.xlu0 %v5562
  %v5602 = vpop.xlane.xlu0 %5601
  %5603 = vmax.xlane.f32.xlu0 %v5567
  %v5604 = vpop.xlane.xlu0 %5603
  %5605 = vmax.xlane.f32.xlu0 %v5572
  %v5606 = vpop.xlane.xlu0 %5605
  %v5607 = vsub.f32 %v5497, %v5576
  %v5608 = vsub.f32 %v5502, %v5578
  %v5609 = vsub.f32 %v5507, %v5580
  %v5610 = vsub.f32 %v5512, %v5582
  %v5611 = vsub.f32 %v5517, %v5584
  %v5612 = vsub.f32 %v5522, %v5586
  %v5613 = vsub.f32 %v5527, %v5588
  %v5614 = vsub.f32 %v5532, %v5590
  %v5615 = vsub.f32 %v5537, %v5592
  %v5616 = vsub.f32 %v5542, %v5594
  %v5617 = vsub.f32 %v5547, %v5596
  %v5618 = vsub.f32 %v5552, %v5598
  %v5619 = vsub.f32 %v5557, %v5600
  %v5620 = vsub.f32 %v5562, %v5602
  %v5621 = vsub.f32 %v5567, %v5604
  %v5622 = vsub.f32 %v5572, %v5606
  %v5623 = vmul.f32 %v5607, 1.442695
  %v5624 = vpow.pop %v5623
  %v5625 = vmul.f32 %v5608, 1.442695
  %v5626 = vpow.pop %v5625
  %v5627 = vmul.f32 %v5609, 1.442695
  %v5628 = vpow.pop %v5627
  %v5629 = vmul.f32 %v5610, 1.442695
  %v5630 = vpow.pop %v5629
  %v5631 = vmul.f32 %v5611, 1.442695
  %v5632 = vpow.pop %v5631
  %v5633 = vmul.f32 %v5612, 1.442695
  %v5634 = vpow.pop %v5633
  %v5635 = vmul.f32 %v5613, 1.442695
  %v5636 = vpow.pop %v5635
  %v5637 = vmul.f32 %v5614, 1.442695
  %v5638 = vpow.pop %v5637
  %v5639 = vmul.f32 %v5615, 1.442695
  %v5640 = vpow.pop %v5639
  %v5641 = vmul.f32 %v5616, 1.442695
  %v5642 = vpow.pop %v5641
  %v5643 = vmul.f32 %v5617, 1.442695
  %v5644 = vpow.pop %v5643
  %v5645 = vmul.f32 %v5618, 1.442695
  %v5646 = vpow.pop %v5645
  %v5647 = vmul.f32 %v5619, 1.442695
  %v5648 = vpow.pop %v5647
  %v5649 = vmul.f32 %v5620, 1.442695
  %v5650 = vpow.pop %v5649
  %v5651 = vmul.f32 %v5621, 1.442695
  %v5652 = vpow.pop %v5651
  %v5653 = vmul.f32 %v5622, 1.442695
  %v5654 = vpow.pop %v5653
  %5655 = vadd.xlane.f32.xlu0 %v5624
  %v5656 = vpop.xlane.xlu0 %5655
  %5657 = vadd.xlane.f32.xlu0 %v5626
  %v5658 = vpop.xlane.xlu0 %5657
  %5659 = vadd.xlane.f32.xlu0 %v5628
  %v5660 = vpop.xlane.xlu0 %5659
  %5661 = vadd.xlane.f32.xlu0 %v5630
  %v5662 = vpop.xlane.xlu0 %5661
  %5663 = vadd.xlane.f32.xlu0 %v5632
  %v5664 = vpop.xlane.xlu0 %5663
  %5665 = vadd.xlane.f32.xlu0 %v5634
  %v5666 = vpop.xlane.xlu0 %5665
  %5667 = vadd.xlane.f32.xlu0 %v5636
  %v5668 = vpop.xlane.xlu0 %5667
  %5669 = vadd.xlane.f32.xlu0 %v5638
  %v5670 = vpop.xlane.xlu0 %5669
  %5671 = vadd.xlane.f32.xlu0 %v5640
  %v5672 = vpop.xlane.xlu0 %5671
  %5673 = vadd.xlane.f32.xlu0 %v5642
  %v5674 = vpop.xlane.xlu0 %5673
  %5675 = vadd.xlane.f32.xlu0 %v5644
  %v5676 = vpop.xlane.xlu0 %5675
  %5677 = vadd.xlane.f32.xlu0 %v5646
  %v5678 = vpop.xlane.xlu0 %5677
  %5679 = vadd.xlane.f32.xlu0 %v5648
  %v5680 = vpop.xlane.xlu0 %5679
  %5681 = vadd.xlane.f32.xlu0 %v5650
  %v5682 = vpop.xlane.xlu0 %5681
  %5683 = vadd.xlane.f32.xlu0 %v5652
  %v5684 = vpop.xlane.xlu0 %5683
  %5685 = vadd.xlane.f32.xlu0 %v5654
  %v5686 = vpop.xlane.xlu0 %5685
  %v5687 = vrcp.pop %v5656
  %v5688 = vmul.f32 1.0, %v5687
  %v5689 = vrcp.pop %v5658
  %v5690 = vmul.f32 1.0, %v5689
  %v5691 = vrcp.pop %v5660
  %v5692 = vmul.f32 1.0, %v5691
  %v5693 = vrcp.pop %v5662
  %v5694 = vmul.f32 1.0, %v5693
  %v5695 = vrcp.pop %v5664
  %v5696 = vmul.f32 1.0, %v5695
  %v5697 = vrcp.pop %v5666
  %v5698 = vmul.f32 1.0, %v5697
  %v5699 = vrcp.pop %v5668
  %v5700 = vmul.f32 1.0, %v5699
  %v5701 = vrcp.pop %v5670
  %v5702 = vmul.f32 1.0, %v5701
  %v5703 = vrcp.pop %v5672
  %v5704 = vmul.f32 1.0, %v5703
  %v5705 = vrcp.pop %v5674
  %v5706 = vmul.f32 1.0, %v5705
  %v5707 = vrcp.pop %v5676
  %v5708 = vmul.f32 1.0, %v5707
  %v5709 = vrcp.pop %v5678
  %v5710 = vmul.f32 1.0, %v5709
  %v5711 = vrcp.pop %v5680
  %v5712 = vmul.f32 1.0, %v5711
  %v5713 = vrcp.pop %v5682
  %v5714 = vmul.f32 1.0, %v5713
  %v5715 = vrcp.pop %v5684
  %v5716 = vmul.f32 1.0, %v5715
  %v5717 = vrcp.pop %v5686
  %v5718 = vmul.f32 1.0, %v5717
  %v5719 = vmul.f32 %v5624, %v5688
  %v5720 = vmul.f32 %v5626, %v5690
  %v5721 = vmul.f32 %v5628, %v5692
  %v5722 = vmul.f32 %v5630, %v5694
  %v5723 = vmul.f32 %v5632, %v5696
  %v5724 = vmul.f32 %v5634, %v5698
  %v5725 = vmul.f32 %v5636, %v5700
  %v5726 = vmul.f32 %v5638, %v5702
  %v5727 = vmul.f32 %v5640, %v5704
  %v5728 = vmul.f32 %v5642, %v5706
  %v5729 = vmul.f32 %v5644, %v5708
  %v5730 = vmul.f32 %v5646, %v5710
  %v5731 = vmul.f32 %v5648, %v5712
  %v5732 = vmul.f32 %v5650, %v5714
  %v5733 = vmul.f32 %v5652, %v5716
  %v5734 = vmul.f32 %v5654, %v5718
  %5751 = vrot.lane.b32.xlu0 %v4692, 64
  %v5752 = vpop.permute.xlu0 %5751
  %5753 = vrot.lane.b32.xlu0 %v4693, 64
  %v5754 = vpop.permute.xlu0 %5753
  %5755 = vrot.lane.b32.xlu0 %v4694, 64
  %v5756 = vpop.permute.xlu0 %5755
  %5757 = vrot.lane.b32.xlu0 %v4695, 64
  %v5758 = vpop.permute.xlu0 %5757
  %5759 = vrot.lane.b32.xlu0 %v4696, 64
  %v5760 = vpop.permute.xlu0 %5759
  %5761 = vrot.lane.b32.xlu0 %v4697, 64
  %v5762 = vpop.permute.xlu0 %5761
  %5763 = vrot.lane.b32.xlu0 %v4698, 64
  %v5764 = vpop.permute.xlu0 %5763
  %5765 = vrot.lane.b32.xlu0 %v4699, 64
  %v5766 = vpop.permute.xlu0 %5765
  %5767 = vrot.lane.b32.xlu0 %v4700, 64
  %v5768 = vpop.permute.xlu0 %5767
  %5769 = vrot.lane.b32.xlu0 %v4701, 64
  %v5770 = vpop.permute.xlu0 %5769
  %5771 = vrot.lane.b32.xlu0 %v4702, 64
  %v5772 = vpop.permute.xlu0 %5771
  %5773 = vrot.lane.b32.xlu0 %v4703, 64
  %v5774 = vpop.permute.xlu0 %5773
  %5775 = vrot.lane.b32.xlu0 %v4704, 64
  %v5776 = vpop.permute.xlu0 %5775
  %5777 = vrot.lane.b32.xlu0 %v4705, 64
  %v5778 = vpop.permute.xlu0 %5777
  %5779 = vrot.lane.b32.xlu0 %v4706, 64
  %v5780 = vpop.permute.xlu0 %5779
  %5781 = vrot.lane.b32.xlu0 %v4707, 64
  %v5782 = vpop.permute.xlu0 %5781
  %5799 = vmatprep.subr.mxu0 0.0
  %5800 = vmatpush1.msra.mxu0 %v5752
  %5801 = vmatprep.subr.mxu0 0.0
  %5802 = vmatpush1.msra.mxu0 %v5754
  %5803 = vmatprep.subr.mxu0 0.0
  %5804 = vmatpush1.msra.mxu0 %v5756
  %5805 = vmatprep.subr.mxu0 0.0
  %5806 = vmatpush1.msra.mxu0 %v5758
  %5807 = vmatprep.subr.mxu0 0.0
  %5808 = vmatpush1.msra.mxu0 %v5760
  %5809 = vmatprep.subr.mxu0 0.0
  %5810 = vmatpush1.msra.mxu0 %v5762
  %5811 = vmatprep.subr.mxu0 0.0
  %5812 = vmatpush1.msra.mxu0 %v5764
  %5813 = vmatprep.subr.mxu0 0.0
  %5814 = vmatpush1.msra.mxu0 %v5766
  %5815 = vmatprep.subr.mxu0 0.0
  %5816 = vmatpush1.msra.mxu0 %v5768
  %5817 = vmatprep.subr.mxu0 0.0
  %5818 = vmatpush1.msra.mxu0 %v5770
  %5819 = vmatprep.subr.mxu0 0.0
  %5820 = vmatpush1.msra.mxu0 %v5772
  %5821 = vmatprep.subr.mxu0 0.0
  %5822 = vmatpush1.msra.mxu0 %v5774
  %5823 = vmatprep.subr.mxu0 0.0
  %5824 = vmatpush1.msra.mxu0 %v5776
  %5825 = vmatprep.subr.mxu0 0.0
  %5826 = vmatpush1.msra.mxu0 %v5778
  %5827 = vmatprep.subr.mxu0 0.0
  %5828 = vmatpush1.msra.mxu0 %v5780
  %5829 = vmatprep.subr.mxu0 0.0
  %5830 = vmatpush1.msra.mxu0 %v5782
  %5831 = vmatprep.subr.mxu0 0.0
  %5832 = vmatpush1.msra.mxu0 0.0
  %5833 = vmatprep.subr.mxu0 0.0
  %5834 = vmatpush1.msra.mxu0 0.0
  %5835 = vmatprep.subr.mxu0 0.0
  %5836 = vmatpush1.msra.mxu0 0.0
  %5837 = vmatprep.subr.mxu0 0.0
  %5838 = vmatpush1.msra.mxu0 0.0
  %5839 = vmatprep.subr.mxu0 0.0
  %5840 = vmatpush1.msra.mxu0 0.0
  %5841 = vmatprep.subr.mxu0 0.0
  %5842 = vmatpush1.msra.mxu0 0.0
  %5843 = vmatprep.subr.mxu0 0.0
  %5844 = vmatpush1.msra.mxu0 0.0
  %5845 = vmatprep.subr.mxu0 0.0
  %5846 = vmatpush1.msra.mxu0 0.0
  %5847 = vmatprep.subr.mxu0 0.0
  %5848 = vmatpush1.msra.mxu0 0.0
  %5849 = vmatprep.subr.mxu0 0.0
  %5850 = vmatpush1.msra.mxu0 0.0
  %5851 = vmatprep.subr.mxu0 0.0
  %5852 = vmatpush1.msra.mxu0 0.0
  %5853 = vmatprep.subr.mxu0 0.0
  %5854 = vmatpush1.msra.mxu0 0.0
  %5855 = vmatprep.subr.mxu0 0.0
  %5856 = vmatpush1.msra.mxu0 0.0
  %5857 = vmatprep.subr.mxu0 0.0
  %5858 = vmatpush1.msra.mxu0 0.0
  %5859 = vmatprep.subr.mxu0 0.0
  %5860 = vmatpush1.msra.mxu0 0.0
  %5861 = vmatprep.subr.mxu0 0.0
  %5862 = vmatpush1.msra.mxu0 0.0
  %5863 = vmatprep.mubr.f32.mxu0 0.0
  %5864 = vmatmul.mubr.f32.gmra.mrb[0].mxu0 %v5719
  %v5865 = vpop.f32.mrb[0].mxu0
  %v5866 = vadd.f32 0.0, %v5865
  %v5867 = vpop.f32.mrb[0].mxu0
  %5868 = vmatprep.mubr.f32.mxu0 0.0
  %5869 = vmatmul.mubr.f32.gmra.mrb[0].mxu0 %v5720
  %v5870 = vpop.f32.mrb[0].mxu0
  %v5871 = vadd.f32 0.0, %v5870
  %v5872 = vpop.f32.mrb[0].mxu0
  %5873 = vmatprep.mubr.f32.mxu0 0.0
  %5874 = vmatmul.mubr.f32.gmra.mrb[0].mxu0 %v5721
  %v5875 = vpop.f32.mrb[0].mxu0
  %v5876 = vadd.f32 0.0, %v5875
  %v5877 = vpop.f32.mrb[0].mxu0
  %5878 = vmatprep.mubr.f32.mxu0 0.0
  %5879 = vmatmul.mubr.f32.gmra.mrb[0].mxu0 %v5722
  %v5880 = vpop.f32.mrb[0].mxu0
  %v5881 = vadd.f32 0.0, %v5880
  %v5882 = vpop.f32.mrb[0].mxu0
  %5883 = vmatprep.mubr.f32.mxu0 0.0
  %5884 = vmatmul.mubr.f32.gmra.mrb[0].mxu0 %v5723
  %v5885 = vpop.f32.mrb[0].mxu0
  %v5886 = vadd.f32 0.0, %v5885
  %v5887 = vpop.f32.mrb[0].mxu0
  %5888 = vmatprep.mubr.f32.mxu0 0.0
  %5889 = vmatmul.mubr.f32.gmra.mrb[0].mxu0 %v5724
  %v5890 = vpop.f32.mrb[0].mxu0
  %v5891 = vadd.f32 0.0, %v5890
  %v5892 = vpop.f32.mrb[0].mxu0
  %5893 = vmatprep.mubr.f32.mxu0 0.0
  %5894 = vmatmul.mubr.f32.gmra.mrb[0].mxu0 %v5725
  %v5895 = vpop.f32.mrb[0].mxu0
  %v5896 = vadd.f32 0.0, %v5895
  %v5897 = vpop.f32.mrb[0].mxu0
  %5898 = vmatprep.mubr.f32.mxu0 0.0
  %5899 = vmatmul.mubr.f32.gmra.mrb[0].mxu0 %v5726
  %v5900 = vpop.f32.mrb[0].mxu0
  %v5901 = vadd.f32 0.0, %v5900
  %v5902 = vpop.f32.mrb[0].mxu0
  %5903 = vmatprep.mubr.f32.mxu0 0.0
  %5904 = vmatmul.mubr.f32.gmra.mrb[0].mxu0 %v5727
  %v5905 = vpop.f32.mrb[0].mxu0
  %v5906 = vadd.f32 0.0, %v5905
  %v5907 = vpop.f32.mrb[0].mxu0
  %5908 = vmatprep.mubr.f32.mxu0 0.0
  %5909 = vmatmul.mubr.f32.gmra.mrb[0].mxu0 %v5728
  %v5910 = vpop.f32.mrb[0].mxu0
  %v5911 = vadd.f32 0.0, %v5910
  %v5912 = vpop.f32.mrb[0].mxu0
  %5913 = vmatprep.mubr.f32.mxu0 0.0
  %5914 = vmatmul.mubr.f32.gmra.mrb[0].mxu0 %v5729
  %v5915 = vpop.f32.mrb[0].mxu0
  %v5916 = vadd.f32 0.0, %v5915
  %v5917 = vpop.f32.mrb[0].mxu0
  %5918 = vmatprep.mubr.f32.mxu0 0.0
  %5919 = vmatmul.mubr.f32.gmra.mrb[0].mxu0 %v5730
  %v5920 = vpop.f32.mrb[0].mxu0
  %v5921 = vadd.f32 0.0, %v5920
  %v5922 = vpop.f32.mrb[0].mxu0
  %5923 = vmatprep.mubr.f32.mxu0 0.0
  %5924 = vmatmul.mubr.f32.gmra.mrb[0].mxu0 %v5731
  %v5925 = vpop.f32.mrb[0].mxu0
  %v5926 = vadd.f32 0.0, %v5925
  %v5927 = vpop.f32.mrb[0].mxu0
  %5928 = vmatprep.mubr.f32.mxu0 0.0
  %5929 = vmatmul.mubr.f32.gmra.mrb[0].mxu0 %v5732
  %v5930 = vpop.f32.mrb[0].mxu0
  %v5931 = vadd.f32 0.0, %v5930
  %v5932 = vpop.f32.mrb[0].mxu0
  %5933 = vmatprep.mubr.f32.mxu0 0.0
  %5934 = vmatmul.mubr.f32.gmra.mrb[0].mxu0 %v5733
  %v5935 = vpop.f32.mrb[0].mxu0
  %v5936 = vadd.f32 0.0, %v5935
  %v5937 = vpop.f32.mrb[0].mxu0
  %5938 = vmatprep.mubr.f32.mxu0 0.0
  %5939 = vmatmul.mubr.f32.gmra.mrb[0].mxu0 %v5734
  %v5940 = vpop.f32.mrb[0].mxu0
  %v5941 = vadd.f32 0.0, %v5940
  %v5942 = vpop.f32.mrb[0].mxu0
  %5943 = vdwg.mxu0
  %v5944 = vadd.f32 %v5286, %v5866
  %v5945 = vadd.f32 %v5287, %v5871
  %v5946 = vadd.f32 %v5288, %v5876
  %v5947 = vadd.f32 %v5289, %v5881
  %v5948 = vadd.f32 %v5290, %v5886
  %v5949 = vadd.f32 %v5291, %v5891
  %v5950 = vadd.f32 %v5292, %v5896
  %v5951 = vadd.f32 %v5293, %v5901
  %v5952 = vadd.f32 %v5294, %v5906
  %v5953 = vadd.f32 %v5295, %v5911
  %v5954 = vadd.f32 %v5296, %v5916
  %v5955 = vadd.f32 %v5297, %v5921
  %v5956 = vadd.f32 %v5298, %v5926
  %v5957 = vadd.f32 %v5299, %v5931
  %v5958 = vadd.f32 %v5300, %v5936
  %v5959 = vadd.f32 %v5301, %v5941
  %v5960 = vadd.f32 %v5944, %v3406
  %v5961 = vadd.f32 %v5945, %v3406
  %v5962 = vadd.f32 %v5946, %v3406
  %v5963 = vadd.f32 %v5947, %v3406
  %v5964 = vadd.f32 %v5948, %v3406
  %v5965 = vadd.f32 %v5949, %v3406
  %v5966 = vadd.f32 %v5950, %v3406
  %v5967 = vadd.f32 %v5951, %v3406
  %v5968 = vadd.f32 %v5952, %v3406
  %v5969 = vadd.f32 %v5953, %v3406
  %v5970 = vadd.f32 %v5954, %v3406
  %v5971 = vadd.f32 %v5955, %v3406
  %v5972 = vadd.f32 %v5956, %v3406
  %v5973 = vadd.f32 %v5957, %v3406
  %v5974 = vadd.f32 %v5958, %v3406
  %v5975 = vadd.f32 %v5959, %v3406
  %5976 = vst.msk [vmem:[%s4 + $0x80] sm:$0xff] %vm90, %v5960
  %5977 = vst.msk [vmem:[%s4 + $0x88] sm:$0xff] %vm90, %v5961
  %5978 = vst.msk [vmem:[%s4 + $0x90] sm:$0xff] %vm90, %v5962
  %5979 = vst.msk [vmem:[%s4 + $0x98] sm:$0xff] %vm90, %v5963
  %5980 = vst.msk [vmem:[%s4 + $0xa0] sm:$0xff] %vm90, %v5964
  %5981 = vst.msk [vmem:[%s4 + $0xa8] sm:$0xff] %vm90, %v5965
  %5982 = vst.msk [vmem:[%s4 + $0xb0] sm:$0xff] %vm90, %v5966
  %5983 = vst.msk [vmem:[%s4 + $0xb8] sm:$0xff] %vm90, %v5967
  %5984 = vst.msk [vmem:[%s4 + $0xc0] sm:$0xff] %vm90, %v5968
  %5985 = vst.msk [vmem:[%s4 + $0xc8] sm:$0xff] %vm90, %v5969
  %5986 = vst.msk [vmem:[%s4 + $0xd0] sm:$0xff] %vm90, %v5970
  %5987 = vst.msk [vmem:[%s4 + $0xd8] sm:$0xff] %vm90, %v5971
  %5988 = vst.msk [vmem:[%s4 + $0xe0] sm:$0xff] %vm90, %v5972
  %5989 = vst.msk [vmem:[%s4 + $0xe8] sm:$0xff] %vm90, %v5973
  %5990 = vst.msk [vmem:[%s4 + $0xf0] sm:$0xff] %vm90, %v5974
  %5991 = vst.msk [vmem:[%s4 + $0xf8] sm:$0xff] %vm90, %v5975
  // Predicated region
  $region18: #{tpu_custom_call.1} parent=0 // pred_check
    _
  $region19: #{tpu_custom_call.1} parent=0 // pred_check_branch
    %5993 = sbr.rel (0) target = $region21
  $region20: #{tpu_custom_call.1} parent=0 // pred_region
    _
  $region21: #{tpu_custom_call.1} parent=0 // pred_fallthru
    _
  // Predicated region
  $region22: #{tpu_custom_call.1} parent=0 // pred_check
    _
  $region23: #{tpu_custom_call.1} parent=0 // pred_check_branch
    %5995 = sbr.rel (0) target = $region25
  $region24: #{tpu_custom_call.1} parent=0 // pred_region
    _
  $region25: #{tpu_custom_call.1} parent=0 // pred_fallthru
    _

</llo_original>
